<compile_context>
chip_gen: v7x
topology: tpu7x:2x2x1
jax: 0.10.0
libtpu: 0.0.40
codegen_flags: <defaults>
</compile_context>

<pallas_src>
import functools

import jax
import jax.numpy as jnp
from jax.experimental import pallas as pl
from jax.experimental.pallas import tpu as pltpu


def _round_up(x, m):
    return ((x + m - 1) // m) * m


# ---------------------------------------------------------------------------
# Pallas kernel: direct stride-1 conv + bias + ReLU for one image.
#   x_ref : (Cin,  Lpad)       bf16  flattened zero-padded image (row-major Hp x Wp)
#   w_ref : (kh*kw, Cout, Cin) bf16  per-tap weight matrices
#   b_ref : (Cout, 1)          f32
#   o_ref : (Cout, Lout)       f32   Lout = round_up(Ho*Wp, 128) (lane-dense)
# ---------------------------------------------------------------------------
def _conv_bias_relu_kernel(x_ref, w_ref, b_ref, o_ref, *, kh, kw, Wp, L):
    cout = o_ref.shape[0]
    acc = jnp.zeros((cout, L), jnp.float32)
    # Unrolled kh*kw taps: shifted lane-views of the flattened image feed
    # small bf16 MXU dots, accumulated in f32.
    for i in range(kh):
        for j in range(kw):
            xs = x_ref[:, pl.ds(i * Wp + j, L)]      # (Cin, L) shifted view
            wt = w_ref[i * kw + j]                   # (Cout, Cin)
            acc = acc + jnp.dot(wt, xs, preferred_element_type=jnp.float32)
    acc = acc + b_ref[...]                           # bias broadcast over lanes
    o_ref[...] = jnp.maximum(acc, 0.0).astype(o_ref.dtype)   # ReLU


# ---------------------------------------------------------------------------
# Wrapper: ZeroPad2d(padding) -> Conv2d(stride=1, bias) -> ReLU, NCHW in/out.
# ---------------------------------------------------------------------------
def conv2d_block_forward(x_nchw, weight, bias, *, stride=1, padding=0):
    assert stride == 1  # TODO(synk): stride-2 downsample Conv2dBlocks not in the Pallas path
    N, Cin, H, W = x_nchw.shape
    Cout, _, kh, kw = weight.shape
    Hp, Wp = H + 2 * padding, W + 2 * padding
    Ho, Wo = Hp - kh + 1, Wp - kw + 1

    # Compute Wp-wide output rows (extra columns are garbage, sliced off at
    # the end); round the lane axis up to a multiple of 128 for dense stores.
    L = Ho * Wp
    Lout = _round_up(L, 128)
    Lpad = _round_up(max(Hp * Wp, (kh - 1) * Wp + (kw - 1) + Lout), 128)

    # Zero-pad + flatten spatial onto the lane axis (single ~1x-size copy),
    # cast activations/weights to bf16 for the MXU.
    xp = jnp.pad(x_nchw, ((0, 0), (0, 0), (padding, padding), (padding, padding)))
    xf = xp.reshape(N, Cin, Hp * Wp)
    xf = jnp.pad(xf, ((0, 0), (0, 0), (0, Lpad - Hp * Wp))).astype(jnp.bfloat16)

    # Per-tap weight matrices: tap t = i*kw + j  ->  (Cout, Cin).
    w_taps = jnp.transpose(weight, (2, 3, 0, 1)).reshape(kh * kw, Cout, Cin)
    w_taps = w_taps.astype(jnp.bfloat16)
    b_col = bias.reshape(Cout, 1).astype(jnp.float32)

    kernel = functools.partial(_conv_bias_relu_kernel, kh=kh, kw=kw, Wp=Wp, L=Lout)

    flops = 2 * N * Cout * Cin * kh * kw * Lout
    bytes_accessed = (xf.size * 2 + w_taps.size * 2 + b_col.size * 4
                      + N * Cout * Lout * 4)

    out = pl.pallas_call(
        kernel,
        out_shape=jax.ShapeDtypeStruct((N, Cout, Lout), jnp.float32),
        grid_spec=pltpu.PrefetchScalarGridSpec(
            num_scalar_prefetch=0,
            grid=(N,),                                       # one image per step
            in_specs=[
                pl.BlockSpec((None, Cin, Lpad), lambda n: (n, 0, 0)),   # image
                pl.BlockSpec((kh * kw, Cout, Cin), lambda n: (0, 0, 0)),  # weights
                pl.BlockSpec((Cout, 1), lambda n: (0, 0)),               # bias
            ],
            out_specs=pl.BlockSpec((None, Cout, Lout), lambda n: (n, 0, 0)),
        ),
        compiler_params=pltpu.CompilerParams(
            dimension_semantics=("parallel",),               # batch across TCs (v7x)
            vmem_limit_bytes=32 * 1024 * 1024,
        ),
        cost_estimate=pl.CostEstimate(
            flops=flops, transcendentals=0, bytes_accessed=bytes_accessed),
    )(xf, w_taps, b_col)

    # Already NC(HW): drop padded lanes / garbage columns (cheap small slice).
    out = out[:, :, :L].reshape(N, Cout, Ho, Wp)[:, :, :, :Wo]
    return out


# ---------------------------------------------------------------------------
# Reference (XLA conv in full f32 precision on the same bf16-rounded operands).
# ---------------------------------------------------------------------------
def _reference(x, w, b, padding):
    xb = x.astype(jnp.bfloat16).astype(jnp.float32)
    wb = w.astype(jnp.bfloat16).astype(jnp.float32)
    ref = jax.lax.conv_general_dilated(
        xb, wb, window_strides=(1, 1),
        padding=[(padding, padding), (padding, padding)],
        dimension_numbers=("NCHW", "OIHW", "NCHW"),
        precision=jax.lax.Precision.HIGHEST)
    return jnp.maximum(ref + b.reshape(1, -1, 1, 1), 0.0)


# ---------------------------------------------------------------------------
# Main
# ---------------------------------------------------------------------------
if __name__ == "__main__":
    key = jax.random.PRNGKey(0)
    k1, k2, k3, k4, k5, k6 = jax.random.split(key, 6)

    checks = []

    # ContentEncoder first layer: Conv2dBlock(4, 8, 7, 1, 3, 'none', 'relu', 'zero')
    N, Cin, H, W = 2, 4, 16, 16
    Cout, ksz, pad = 8, 7, 3
    x = jax.random.normal(k1, (N, Cin, H, W), dtype=jnp.float32)
    bound = 1.0 / ((Cin * ksz * ksz) ** 0.5)
    w7 = jax.random.uniform(k2, (Cout, Cin, ksz, ksz),
                            minval=-bound, maxval=bound, dtype=jnp.float32)
    b7 = jax.random.uniform(k3, (Cout,), minval=-bound, maxval=bound,
                            dtype=jnp.float32)
    checks.append((x, w7, b7, pad))

    # ResBlock-style conv: Conv2dBlock(8, 8, 3, 1, 1, 'none', 'relu', 'zero')
    C2 = 8
    x2 = jax.random.normal(k4, (N, C2, H, W), dtype=jnp.float32)
    bound2 = 1.0 / ((C2 * 3 * 3) ** 0.5)
    w3 = jax.random.uniform(k5, (C2, C2, 3, 3),
                            minval=-bound2, maxval=bound2, dtype=jnp.float32)
    b3 = jax.random.uniform(k6, (C2,), minval=-bound2, maxval=bound2,
                            dtype=jnp.float32)
    checks.append((x2, w3, b3, 1))

    for xi, wi, bi, p in checks:
        fwd = jax.jit(functools.partial(conv2d_block_forward, stride=1, padding=p))
        out = jax.block_until_ready(fwd(xi, wi, bi))
        ref = _reference(xi, wi, bi, p)
        assert out.shape == ref.shape
        assert jnp.allclose(out, ref, atol=5e-3, rtol=5e-3), (
            "max abs diff = %f" % float(jnp.max(jnp.abs(out - ref))))

    print("KERNEL_OK")
</pallas_src>

<mosaic_0001>
module attributes {stable_mosaic.version = 11 : i64} {
  func.func @_conv_bias_relu_kernel(%arg0: i32, %arg1: memref<1x4x640xbf16, #tpu.memory_space<vmem>>, %arg2: memref<49x8x4xbf16, #tpu.memory_space<vmem>>, %arg3: memref<8x1xf32, #tpu.memory_space<vmem>>, %arg4: memref<1x8x384xf32, #tpu.memory_space<vmem>>) attributes {dimension_semantics = [#tpu.dimension_semantics<parallel>], iteration_bounds = array<i64: 2>, scalar_prefetch = 0 : i64, scratch_operands = 0 : i64, tpu.core_type = #tpu.core_type<tc>, window_params = [{transform_indices = @transform_0, window_bounds = array<i64: 1, 4, 640>}, {pipeline_mode = #tpu.pipeline_mode<synchronous>, transform_indices = @transform_1, window_bounds = array<i64: 49, 8, 4>}, {pipeline_mode = #tpu.pipeline_mode<synchronous>, transform_indices = @transform_2, window_bounds = array<i64: 8, 1>}, {transform_indices = @transform_3, window_bounds = array<i64: 1, 8, 384>}]} {
    %cst = arith.constant 0.000000e+00 : f32
    %0 = vector.broadcast %cst : f32 to vector<8x384xf32>
    %c0 = arith.constant 0 : index
    %c0_0 = arith.constant 0 : index
    %c0_1 = arith.constant 0 : index
    %1 = vector.load %arg1[%c0, %c0_0, %c0_1] : memref<1x4x640xbf16, #tpu.memory_space<vmem>>, vector<1x4x384xbf16>
    %2 = vector.shape_cast %1 : vector<1x4x384xbf16> to vector<4x384xbf16>
    %c0_2 = arith.constant 0 : index
    %c0_3 = arith.constant 0 : index
    %c0_4 = arith.constant 0 : index
    %3 = vector.load %arg2[%c0_2, %c0_3, %c0_4] : memref<49x8x4xbf16, #tpu.memory_space<vmem>>, vector<1x8x4xbf16>
    %4 = vector.shape_cast %3 : vector<1x8x4xbf16> to vector<8x4xbf16>
    %cst_5 = arith.constant dense<0.000000e+00> : vector<8x384xf32>
    %5 = tpu.matmul %4, %2, %cst_5 {dimension_numbers = #tpu.dot_dimension_numbers<[1], [0], [0], [1], [0, 0, 1, 1], [], []>} : vector<8x4xbf16>, vector<4x384xbf16>, vector<8x384xf32> -> vector<8x384xf32>
    %6 = arith.addf %0, %5 : vector<8x384xf32>
    %c0_6 = arith.constant 0 : index
    %c0_7 = arith.constant 0 : index
    %c1 = arith.constant 1 : index
    %7 = vector.load %arg1[%c0_6, %c0_7, %c1] : memref<1x4x640xbf16, #tpu.memory_space<vmem>>, vector<1x4x384xbf16>
    %8 = vector.shape_cast %7 : vector<1x4x384xbf16> to vector<4x384xbf16>
    %c1_8 = arith.constant 1 : index
    %c0_9 = arith.constant 0 : index
    %c0_10 = arith.constant 0 : index
    %9 = vector.load %arg2[%c1_8, %c0_9, %c0_10] : memref<49x8x4xbf16, #tpu.memory_space<vmem>>, vector<1x8x4xbf16>
    %10 = vector.shape_cast %9 : vector<1x8x4xbf16> to vector<8x4xbf16>
    %cst_11 = arith.constant dense<0.000000e+00> : vector<8x384xf32>
    %11 = tpu.matmul %10, %8, %cst_11 {dimension_numbers = #tpu.dot_dimension_numbers<[1], [0], [0], [1], [0, 0, 1, 1], [], []>} : vector<8x4xbf16>, vector<4x384xbf16>, vector<8x384xf32> -> vector<8x384xf32>
    %12 = arith.addf %6, %11 : vector<8x384xf32>
    %c0_12 = arith.constant 0 : index
    %c0_13 = arith.constant 0 : index
    %c2 = arith.constant 2 : index
    %13 = vector.load %arg1[%c0_12, %c0_13, %c2] : memref<1x4x640xbf16, #tpu.memory_space<vmem>>, vector<1x4x384xbf16>
    %14 = vector.shape_cast %13 : vector<1x4x384xbf16> to vector<4x384xbf16>
    %c2_14 = arith.constant 2 : index
    %c0_15 = arith.constant 0 : index
    %c0_16 = arith.constant 0 : index
    %15 = vector.load %arg2[%c2_14, %c0_15, %c0_16] : memref<49x8x4xbf16, #tpu.memory_space<vmem>>, vector<1x8x4xbf16>
    %16 = vector.shape_cast %15 : vector<1x8x4xbf16> to vector<8x4xbf16>
    %cst_17 = arith.constant dense<0.000000e+00> : vector<8x384xf32>
    %17 = tpu.matmul %16, %14, %cst_17 {dimension_numbers = #tpu.dot_dimension_numbers<[1], [0], [0], [1], [0, 0, 1, 1], [], []>} : vector<8x4xbf16>, vector<4x384xbf16>, vector<8x384xf32> -> vector<8x384xf32>
    %18 = arith.addf %12, %17 : vector<8x384xf32>
    %c0_18 = arith.constant 0 : index
    %c0_19 = arith.constant 0 : index
    %c3 = arith.constant 3 : index
    %19 = vector.load %arg1[%c0_18, %c0_19, %c3] : memref<1x4x640xbf16, #tpu.memory_space<vmem>>, vector<1x4x384xbf16>
    %20 = vector.shape_cast %19 : vector<1x4x384xbf16> to vector<4x384xbf16>
    %c3_20 = arith.constant 3 : index
    %c0_21 = arith.constant 0 : index
    %c0_22 = arith.constant 0 : index
    %21 = vector.load %arg2[%c3_20, %c0_21, %c0_22] : memref<49x8x4xbf16, #tpu.memory_space<vmem>>, vector<1x8x4xbf16>
    %22 = vector.shape_cast %21 : vector<1x8x4xbf16> to vector<8x4xbf16>
    %cst_23 = arith.constant dense<0.000000e+00> : vector<8x384xf32>
    %23 = tpu.matmul %22, %20, %cst_23 {dimension_numbers = #tpu.dot_dimension_numbers<[1], [0], [0], [1], [0, 0, 1, 1], [], []>} : vector<8x4xbf16>, vector<4x384xbf16>, vector<8x384xf32> -> vector<8x384xf32>
    %24 = arith.addf %18, %23 : vector<8x384xf32>
    %c0_24 = arith.constant 0 : index
    %c0_25 = arith.constant 0 : index
    %c4 = arith.constant 4 : index
    %25 = vector.load %arg1[%c0_24, %c0_25, %c4] : memref<1x4x640xbf16, #tpu.memory_space<vmem>>, vector<1x4x384xbf16>
    %26 = vector.shape_cast %25 : vector<1x4x384xbf16> to vector<4x384xbf16>
    %c4_26 = arith.constant 4 : index
    %c0_27 = arith.constant 0 : index
    %c0_28 = arith.constant 0 : index
    %27 = vector.load %arg2[%c4_26, %c0_27, %c0_28] : memref<49x8x4xbf16, #tpu.memory_space<vmem>>, vector<1x8x4xbf16>
    %28 = vector.shape_cast %27 : vector<1x8x4xbf16> to vector<8x4xbf16>
    %cst_29 = arith.constant dense<0.000000e+00> : vector<8x384xf32>
    %29 = tpu.matmul %28, %26, %cst_29 {dimension_numbers = #tpu.dot_dimension_numbers<[1], [0], [0], [1], [0, 0, 1, 1], [], []>} : vector<8x4xbf16>, vector<4x384xbf16>, vector<8x384xf32> -> vector<8x384xf32>
    %30 = arith.addf %24, %29 : vector<8x384xf32>
    %c0_30 = arith.constant 0 : index
    %c0_31 = arith.constant 0 : index
    %c5 = arith.constant 5 : index
    %31 = vector.load %arg1[%c0_30, %c0_31, %c5] : memref<1x4x640xbf16, #tpu.memory_space<vmem>>, vector<1x4x384xbf16>
    %32 = vector.shape_cast %31 : vector<1x4x384xbf16> to vector<4x384xbf16>
    %c5_32 = arith.constant 5 : index
    %c0_33 = arith.constant 0 : index
    %c0_34 = arith.constant 0 : index
    %33 = vector.load %arg2[%c5_32, %c0_33, %c0_34] : memref<49x8x4xbf16, #tpu.memory_space<vmem>>, vector<1x8x4xbf16>
    %34 = vector.shape_cast %33 : vector<1x8x4xbf16> to vector<8x4xbf16>
    %cst_35 = arith.constant dense<0.000000e+00> : vector<8x384xf32>
    %35 = tpu.matmul %34, %32, %cst_35 {dimension_numbers = #tpu.dot_dimension_numbers<[1], [0], [0], [1], [0, 0, 1, 1], [], []>} : vector<8x4xbf16>, vector<4x384xbf16>, vector<8x384xf32> -> vector<8x384xf32>
    %36 = arith.addf %30, %35 : vector<8x384xf32>
    %c0_36 = arith.constant 0 : index
    %c0_37 = arith.constant 0 : index
    %c6 = arith.constant 6 : index
    %37 = vector.load %arg1[%c0_36, %c0_37, %c6] : memref<1x4x640xbf16, #tpu.memory_space<vmem>>, vector<1x4x384xbf16>
    %38 = vector.shape_cast %37 : vector<1x4x384xbf16> to vector<4x384xbf16>
    %c6_38 = arith.constant 6 : index
    %c0_39 = arith.constant 0 : index
    %c0_40 = arith.constant 0 : index
    %39 = vector.load %arg2[%c6_38, %c0_39, %c0_40] : memref<49x8x4xbf16, #tpu.memory_space<vmem>>, vector<1x8x4xbf16>
    %40 = vector.shape_cast %39 : vector<1x8x4xbf16> to vector<8x4xbf16>
    %cst_41 = arith.constant dense<0.000000e+00> : vector<8x384xf32>
    %41 = tpu.matmul %40, %38, %cst_41 {dimension_numbers = #tpu.dot_dimension_numbers<[1], [0], [0], [1], [0, 0, 1, 1], [], []>} : vector<8x4xbf16>, vector<4x384xbf16>, vector<8x384xf32> -> vector<8x384xf32>
    %42 = arith.addf %36, %41 : vector<8x384xf32>
    %c0_42 = arith.constant 0 : index
    %c0_43 = arith.constant 0 : index
    %c22 = arith.constant 22 : index
    %43 = vector.load %arg1[%c0_42, %c0_43, %c22] : memref<1x4x640xbf16, #tpu.memory_space<vmem>>, vector<1x4x384xbf16>
    %44 = vector.shape_cast %43 : vector<1x4x384xbf16> to vector<4x384xbf16>
    %c7 = arith.constant 7 : index
    %c0_44 = arith.constant 0 : index
    %c0_45 = arith.constant 0 : index
    %45 = vector.load %arg2[%c7, %c0_44, %c0_45] : memref<49x8x4xbf16, #tpu.memory_space<vmem>>, vector<1x8x4xbf16>
    %46 = vector.shape_cast %45 : vector<1x8x4xbf16> to vector<8x4xbf16>
    %cst_46 = arith.constant dense<0.000000e+00> : vector<8x384xf32>
    %47 = tpu.matmul %46, %44, %cst_46 {dimension_numbers = #tpu.dot_dimension_numbers<[1], [0], [0], [1], [0, 0, 1, 1], [], []>} : vector<8x4xbf16>, vector<4x384xbf16>, vector<8x384xf32> -> vector<8x384xf32>
    %48 = arith.addf %42, %47 : vector<8x384xf32>
    %c0_47 = arith.constant 0 : index
    %c0_48 = arith.constant 0 : index
    %c23 = arith.constant 23 : index
    %49 = vector.load %arg1[%c0_47, %c0_48, %c23] : memref<1x4x640xbf16, #tpu.memory_space<vmem>>, vector<1x4x384xbf16>
    %50 = vector.shape_cast %49 : vector<1x4x384xbf16> to vector<4x384xbf16>
    %c8 = arith.constant 8 : index
    %c0_49 = arith.constant 0 : index
    %c0_50 = arith.constant 0 : index
    %51 = vector.load %arg2[%c8, %c0_49, %c0_50] : memref<49x8x4xbf16, #tpu.memory_space<vmem>>, vector<1x8x4xbf16>
    %52 = vector.shape_cast %51 : vector<1x8x4xbf16> to vector<8x4xbf16>
    %cst_51 = arith.constant dense<0.000000e+00> : vector<8x384xf32>
    %53 = tpu.matmul %52, %50, %cst_51 {dimension_numbers = #tpu.dot_dimension_numbers<[1], [0], [0], [1], [0, 0, 1, 1], [], []>} : vector<8x4xbf16>, vector<4x384xbf16>, vector<8x384xf32> -> vector<8x384xf32>
    %54 = arith.addf %48, %53 : vector<8x384xf32>
    %c0_52 = arith.constant 0 : index
    %c0_53 = arith.constant 0 : index
    %c24 = arith.constant 24 : index
    %55 = vector.load %arg1[%c0_52, %c0_53, %c24] : memref<1x4x640xbf16, #tpu.memory_space<vmem>>, vector<1x4x384xbf16>
    %56 = vector.shape_cast %55 : vector<1x4x384xbf16> to vector<4x384xbf16>
    %c9 = arith.constant 9 : index
    %c0_54 = arith.constant 0 : index
    %c0_55 = arith.constant 0 : index
    %57 = vector.load %arg2[%c9, %c0_54, %c0_55] : memref<49x8x4xbf16, #tpu.memory_space<vmem>>, vector<1x8x4xbf16>
    %58 = vector.shape_cast %57 : vector<1x8x4xbf16> to vector<8x4xbf16>
    %cst_56 = arith.constant dense<0.000000e+00> : vector<8x384xf32>
    %59 = tpu.matmul %58, %56, %cst_56 {dimension_numbers = #tpu.dot_dimension_numbers<[1], [0], [0], [1], [0, 0, 1, 1], [], []>} : vector<8x4xbf16>, vector<4x384xbf16>, vector<8x384xf32> -> vector<8x384xf32>
    %60 = arith.addf %54, %59 : vector<8x384xf32>
    %c0_57 = arith.constant 0 : index
    %c0_58 = arith.constant 0 : index
    %c25 = arith.constant 25 : index
    %61 = vector.load %arg1[%c0_57, %c0_58, %c25] : memref<1x4x640xbf16, #tpu.memory_space<vmem>>, vector<1x4x384xbf16>
    %62 = vector.shape_cast %61 : vector<1x4x384xbf16> to vector<4x384xbf16>
    %c10 = arith.constant 10 : index
    %c0_59 = arith.constant 0 : index
    %c0_60 = arith.constant 0 : index
    %63 = vector.load %arg2[%c10, %c0_59, %c0_60] : memref<49x8x4xbf16, #tpu.memory_space<vmem>>, vector<1x8x4xbf16>
    %64 = vector.shape_cast %63 : vector<1x8x4xbf16> to vector<8x4xbf16>
    %cst_61 = arith.constant dense<0.000000e+00> : vector<8x384xf32>
    %65 = tpu.matmul %64, %62, %cst_61 {dimension_numbers = #tpu.dot_dimension_numbers<[1], [0], [0], [1], [0, 0, 1, 1], [], []>} : vector<8x4xbf16>, vector<4x384xbf16>, vector<8x384xf32> -> vector<8x384xf32>
    %66 = arith.addf %60, %65 : vector<8x384xf32>
    %c0_62 = arith.constant 0 : index
    %c0_63 = arith.constant 0 : index
    %c26 = arith.constant 26 : index
    %67 = vector.load %arg1[%c0_62, %c0_63, %c26] : memref<1x4x640xbf16, #tpu.memory_space<vmem>>, vector<1x4x384xbf16>
    %68 = vector.shape_cast %67 : vector<1x4x384xbf16> to vector<4x384xbf16>
    %c11 = arith.constant 11 : index
    %c0_64 = arith.constant 0 : index
    %c0_65 = arith.constant 0 : index
    %69 = vector.load %arg2[%c11, %c0_64, %c0_65] : memref<49x8x4xbf16, #tpu.memory_space<vmem>>, vector<1x8x4xbf16>
    %70 = vector.shape_cast %69 : vector<1x8x4xbf16> to vector<8x4xbf16>
    %cst_66 = arith.constant dense<0.000000e+00> : vector<8x384xf32>
    %71 = tpu.matmul %70, %68, %cst_66 {dimension_numbers = #tpu.dot_dimension_numbers<[1], [0], [0], [1], [0, 0, 1, 1], [], []>} : vector<8x4xbf16>, vector<4x384xbf16>, vector<8x384xf32> -> vector<8x384xf32>
    %72 = arith.addf %66, %71 : vector<8x384xf32>
    %c0_67 = arith.constant 0 : index
    %c0_68 = arith.constant 0 : index
    %c27 = arith.constant 27 : index
    %73 = vector.load %arg1[%c0_67, %c0_68, %c27] : memref<1x4x640xbf16, #tpu.memory_space<vmem>>, vector<1x4x384xbf16>
    %74 = vector.shape_cast %73 : vector<1x4x384xbf16> to vector<4x384xbf16>
    %c12 = arith.constant 12 : index
    %c0_69 = arith.constant 0 : index
    %c0_70 = arith.constant 0 : index
    %75 = vector.load %arg2[%c12, %c0_69, %c0_70] : memref<49x8x4xbf16, #tpu.memory_space<vmem>>, vector<1x8x4xbf16>
    %76 = vector.shape_cast %75 : vector<1x8x4xbf16> to vector<8x4xbf16>
    %cst_71 = arith.constant dense<0.000000e+00> : vector<8x384xf32>
    %77 = tpu.matmul %76, %74, %cst_71 {dimension_numbers = #tpu.dot_dimension_numbers<[1], [0], [0], [1], [0, 0, 1, 1], [], []>} : vector<8x4xbf16>, vector<4x384xbf16>, vector<8x384xf32> -> vector<8x384xf32>
    %78 = arith.addf %72, %77 : vector<8x384xf32>
    %c0_72 = arith.constant 0 : index
    %c0_73 = arith.constant 0 : index
    %c28 = arith.constant 28 : index
    %79 = vector.load %arg1[%c0_72, %c0_73, %c28] : memref<1x4x640xbf16, #tpu.memory_space<vmem>>, vector<1x4x384xbf16>
    %80 = vector.shape_cast %79 : vector<1x4x384xbf16> to vector<4x384xbf16>
    %c13 = arith.constant 13 : index
    %c0_74 = arith.constant 0 : index
    %c0_75 = arith.constant 0 : index
    %81 = vector.load %arg2[%c13, %c0_74, %c0_75] : memref<49x8x4xbf16, #tpu.memory_space<vmem>>, vector<1x8x4xbf16>
    %82 = vector.shape_cast %81 : vector<1x8x4xbf16> to vector<8x4xbf16>
    %cst_76 = arith.constant dense<0.000000e+00> : vector<8x384xf32>
    %83 = tpu.matmul %82, %80, %cst_76 {dimension_numbers = #tpu.dot_dimension_numbers<[1], [0], [0], [1], [0, 0, 1, 1], [], []>} : vector<8x4xbf16>, vector<4x384xbf16>, vector<8x384xf32> -> vector<8x384xf32>
    %84 = arith.addf %78, %83 : vector<8x384xf32>
    %c0_77 = arith.constant 0 : index
    %c0_78 = arith.constant 0 : index
    %c44 = arith.constant 44 : index
    %85 = vector.load %arg1[%c0_77, %c0_78, %c44] : memref<1x4x640xbf16, #tpu.memory_space<vmem>>, vector<1x4x384xbf16>
    %86 = vector.shape_cast %85 : vector<1x4x384xbf16> to vector<4x384xbf16>
    %c14 = arith.constant 14 : index
    %c0_79 = arith.constant 0 : index
    %c0_80 = arith.constant 0 : index
    %87 = vector.load %arg2[%c14, %c0_79, %c0_80] : memref<49x8x4xbf16, #tpu.memory_space<vmem>>, vector<1x8x4xbf16>
    %88 = vector.shape_cast %87 : vector<1x8x4xbf16> to vector<8x4xbf16>
    %cst_81 = arith.constant dense<0.000000e+00> : vector<8x384xf32>
    %89 = tpu.matmul %88, %86, %cst_81 {dimension_numbers = #tpu.dot_dimension_numbers<[1], [0], [0], [1], [0, 0, 1, 1], [], []>} : vector<8x4xbf16>, vector<4x384xbf16>, vector<8x384xf32> -> vector<8x384xf32>
    %90 = arith.addf %84, %89 : vector<8x384xf32>
    %c0_82 = arith.constant 0 : index
    %c0_83 = arith.constant 0 : index
    %c45 = arith.constant 45 : index
    %91 = vector.load %arg1[%c0_82, %c0_83, %c45] : memref<1x4x640xbf16, #tpu.memory_space<vmem>>, vector<1x4x384xbf16>
    %92 = vector.shape_cast %91 : vector<1x4x384xbf16> to vector<4x384xbf16>
    %c15 = arith.constant 15 : index
    %c0_84 = arith.constant 0 : index
    %c0_85 = arith.constant 0 : index
    %93 = vector.load %arg2[%c15, %c0_84, %c0_85] : memref<49x8x4xbf16, #tpu.memory_space<vmem>>, vector<1x8x4xbf16>
    %94 = vector.shape_cast %93 : vector<1x8x4xbf16> to vector<8x4xbf16>
    %cst_86 = arith.constant dense<0.000000e+00> : vector<8x384xf32>
    %95 = tpu.matmul %94, %92, %cst_86 {dimension_numbers = #tpu.dot_dimension_numbers<[1], [0], [0], [1], [0, 0, 1, 1], [], []>} : vector<8x4xbf16>, vector<4x384xbf16>, vector<8x384xf32> -> vector<8x384xf32>
    %96 = arith.addf %90, %95 : vector<8x384xf32>
    %c0_87 = arith.constant 0 : index
    %c0_88 = arith.constant 0 : index
    %c46 = arith.constant 46 : index
    %97 = vector.load %arg1[%c0_87, %c0_88, %c46] : memref<1x4x640xbf16, #tpu.memory_space<vmem>>, vector<1x4x384xbf16>
    %98 = vector.shape_cast %97 : vector<1x4x384xbf16> to vector<4x384xbf16>
    %c16 = arith.constant 16 : index
    %c0_89 = arith.constant 0 : index
    %c0_90 = arith.constant 0 : index
    %99 = vector.load %arg2[%c16, %c0_89, %c0_90] : memref<49x8x4xbf16, #tpu.memory_space<vmem>>, vector<1x8x4xbf16>
    %100 = vector.shape_cast %99 : vector<1x8x4xbf16> to vector<8x4xbf16>
    %cst_91 = arith.constant dense<0.000000e+00> : vector<8x384xf32>
    %101 = tpu.matmul %100, %98, %cst_91 {dimension_numbers = #tpu.dot_dimension_numbers<[1], [0], [0], [1], [0, 0, 1, 1], [], []>} : vector<8x4xbf16>, vector<4x384xbf16>, vector<8x384xf32> -> vector<8x384xf32>
    %102 = arith.addf %96, %101 : vector<8x384xf32>
    %c0_92 = arith.constant 0 : index
    %c0_93 = arith.constant 0 : index
    %c47 = arith.constant 47 : index
    %103 = vector.load %arg1[%c0_92, %c0_93, %c47] : memref<1x4x640xbf16, #tpu.memory_space<vmem>>, vector<1x4x384xbf16>
    %104 = vector.shape_cast %103 : vector<1x4x384xbf16> to vector<4x384xbf16>
    %c17 = arith.constant 17 : index
    %c0_94 = arith.constant 0 : index
    %c0_95 = arith.constant 0 : index
    %105 = vector.load %arg2[%c17, %c0_94, %c0_95] : memref<49x8x4xbf16, #tpu.memory_space<vmem>>, vector<1x8x4xbf16>
    %106 = vector.shape_cast %105 : vector<1x8x4xbf16> to vector<8x4xbf16>
    %cst_96 = arith.constant dense<0.000000e+00> : vector<8x384xf32>
    %107 = tpu.matmul %106, %104, %cst_96 {dimension_numbers = #tpu.dot_dimension_numbers<[1], [0], [0], [1], [0, 0, 1, 1], [], []>} : vector<8x4xbf16>, vector<4x384xbf16>, vector<8x384xf32> -> vector<8x384xf32>
    %108 = arith.addf %102, %107 : vector<8x384xf32>
    %c0_97 = arith.constant 0 : index
    %c0_98 = arith.constant 0 : index
    %c48 = arith.constant 48 : index
    %109 = vector.load %arg1[%c0_97, %c0_98, %c48] : memref<1x4x640xbf16, #tpu.memory_space<vmem>>, vector<1x4x384xbf16>
    %110 = vector.shape_cast %109 : vector<1x4x384xbf16> to vector<4x384xbf16>
    %c18 = arith.constant 18 : index
    %c0_99 = arith.constant 0 : index
    %c0_100 = arith.constant 0 : index
    %111 = vector.load %arg2[%c18, %c0_99, %c0_100] : memref<49x8x4xbf16, #tpu.memory_space<vmem>>, vector<1x8x4xbf16>
    %112 = vector.shape_cast %111 : vector<1x8x4xbf16> to vector<8x4xbf16>
    %cst_101 = arith.constant dense<0.000000e+00> : vector<8x384xf32>
    %113 = tpu.matmul %112, %110, %cst_101 {dimension_numbers = #tpu.dot_dimension_numbers<[1], [0], [0], [1], [0, 0, 1, 1], [], []>} : vector<8x4xbf16>, vector<4x384xbf16>, vector<8x384xf32> -> vector<8x384xf32>
    %114 = arith.addf %108, %113 : vector<8x384xf32>
    %c0_102 = arith.constant 0 : index
    %c0_103 = arith.constant 0 : index
    %c49 = arith.constant 49 : index
    %115 = vector.load %arg1[%c0_102, %c0_103, %c49] : memref<1x4x640xbf16, #tpu.memory_space<vmem>>, vector<1x4x384xbf16>
    %116 = vector.shape_cast %115 : vector<1x4x384xbf16> to vector<4x384xbf16>
    %c19 = arith.constant 19 : index
    %c0_104 = arith.constant 0 : index
    %c0_105 = arith.constant 0 : index
    %117 = vector.load %arg2[%c19, %c0_104, %c0_105] : memref<49x8x4xbf16, #tpu.memory_space<vmem>>, vector<1x8x4xbf16>
    %118 = vector.shape_cast %117 : vector<1x8x4xbf16> to vector<8x4xbf16>
    %cst_106 = arith.constant dense<0.000000e+00> : vector<8x384xf32>
    %119 = tpu.matmul %118, %116, %cst_106 {dimension_numbers = #tpu.dot_dimension_numbers<[1], [0], [0], [1], [0, 0, 1, 1], [], []>} : vector<8x4xbf16>, vector<4x384xbf16>, vector<8x384xf32> -> vector<8x384xf32>
    %120 = arith.addf %114, %119 : vector<8x384xf32>
    %c0_107 = arith.constant 0 : index
    %c0_108 = arith.constant 0 : index
    %c50 = arith.constant 50 : index
    %121 = vector.load %arg1[%c0_107, %c0_108, %c50] : memref<1x4x640xbf16, #tpu.memory_space<vmem>>, vector<1x4x384xbf16>
    %122 = vector.shape_cast %121 : vector<1x4x384xbf16> to vector<4x384xbf16>
    %c20 = arith.constant 20 : index
    %c0_109 = arith.constant 0 : index
    %c0_110 = arith.constant 0 : index
    %123 = vector.load %arg2[%c20, %c0_109, %c0_110] : memref<49x8x4xbf16, #tpu.memory_space<vmem>>, vector<1x8x4xbf16>
    %124 = vector.shape_cast %123 : vector<1x8x4xbf16> to vector<8x4xbf16>
    %cst_111 = arith.constant dense<0.000000e+00> : vector<8x384xf32>
    %125 = tpu.matmul %124, %122, %cst_111 {dimension_numbers = #tpu.dot_dimension_numbers<[1], [0], [0], [1], [0, 0, 1, 1], [], []>} : vector<8x4xbf16>, vector<4x384xbf16>, vector<8x384xf32> -> vector<8x384xf32>
    %126 = arith.addf %120, %125 : vector<8x384xf32>
    %c0_112 = arith.constant 0 : index
    %c0_113 = arith.constant 0 : index
    %c66 = arith.constant 66 : index
    %127 = vector.load %arg1[%c0_112, %c0_113, %c66] : memref<1x4x640xbf16, #tpu.memory_space<vmem>>, vector<1x4x384xbf16>
    %128 = vector.shape_cast %127 : vector<1x4x384xbf16> to vector<4x384xbf16>
    %c21 = arith.constant 21 : index
    %c0_114 = arith.constant 0 : index
    %c0_115 = arith.constant 0 : index
    %129 = vector.load %arg2[%c21, %c0_114, %c0_115] : memref<49x8x4xbf16, #tpu.memory_space<vmem>>, vector<1x8x4xbf16>
    %130 = vector.shape_cast %129 : vector<1x8x4xbf16> to vector<8x4xbf16>
    %cst_116 = arith.constant dense<0.000000e+00> : vector<8x384xf32>
    %131 = tpu.matmul %130, %128, %cst_116 {dimension_numbers = #tpu.dot_dimension_numbers<[1], [0], [0], [1], [0, 0, 1, 1], [], []>} : vector<8x4xbf16>, vector<4x384xbf16>, vector<8x384xf32> -> vector<8x384xf32>
    %132 = arith.addf %126, %131 : vector<8x384xf32>
    %c0_117 = arith.constant 0 : index
    %c0_118 = arith.constant 0 : index
    %c67 = arith.constant 67 : index
    %133 = vector.load %arg1[%c0_117, %c0_118, %c67] : memref<1x4x640xbf16, #tpu.memory_space<vmem>>, vector<1x4x384xbf16>
    %134 = vector.shape_cast %133 : vector<1x4x384xbf16> to vector<4x384xbf16>
    %c22_119 = arith.constant 22 : index
    %c0_120 = arith.constant 0 : index
    %c0_121 = arith.constant 0 : index
    %135 = vector.load %arg2[%c22_119, %c0_120, %c0_121] : memref<49x8x4xbf16, #tpu.memory_space<vmem>>, vector<1x8x4xbf16>
    %136 = vector.shape_cast %135 : vector<1x8x4xbf16> to vector<8x4xbf16>
    %cst_122 = arith.constant dense<0.000000e+00> : vector<8x384xf32>
    %137 = tpu.matmul %136, %134, %cst_122 {dimension_numbers = #tpu.dot_dimension_numbers<[1], [0], [0], [1], [0, 0, 1, 1], [], []>} : vector<8x4xbf16>, vector<4x384xbf16>, vector<8x384xf32> -> vector<8x384xf32>
    %138 = arith.addf %132, %137 : vector<8x384xf32>
    %c0_123 = arith.constant 0 : index
    %c0_124 = arith.constant 0 : index
    %c68 = arith.constant 68 : index
    %139 = vector.load %arg1[%c0_123, %c0_124, %c68] : memref<1x4x640xbf16, #tpu.memory_space<vmem>>, vector<1x4x384xbf16>
    %140 = vector.shape_cast %139 : vector<1x4x384xbf16> to vector<4x384xbf16>
    %c23_125 = arith.constant 23 : index
    %c0_126 = arith.constant 0 : index
    %c0_127 = arith.constant 0 : index
    %141 = vector.load %arg2[%c23_125, %c0_126, %c0_127] : memref<49x8x4xbf16, #tpu.memory_space<vmem>>, vector<1x8x4xbf16>
    %142 = vector.shape_cast %141 : vector<1x8x4xbf16> to vector<8x4xbf16>
    %cst_128 = arith.constant dense<0.000000e+00> : vector<8x384xf32>
    %143 = tpu.matmul %142, %140, %cst_128 {dimension_numbers = #tpu.dot_dimension_numbers<[1], [0], [0], [1], [0, 0, 1, 1], [], []>} : vector<8x4xbf16>, vector<4x384xbf16>, vector<8x384xf32> -> vector<8x384xf32>
    %144 = arith.addf %138, %143 : vector<8x384xf32>
    %c0_129 = arith.constant 0 : index
    %c0_130 = arith.constant 0 : index
    %c69 = arith.constant 69 : index
    %145 = vector.load %arg1[%c0_129, %c0_130, %c69] : memref<1x4x640xbf16, #tpu.memory_space<vmem>>, vector<1x4x384xbf16>
    %146 = vector.shape_cast %145 : vector<1x4x384xbf16> to vector<4x384xbf16>
    %c24_131 = arith.constant 24 : index
    %c0_132 = arith.constant 0 : index
    %c0_133 = arith.constant 0 : index
    %147 = vector.load %arg2[%c24_131, %c0_132, %c0_133] : memref<49x8x4xbf16, #tpu.memory_space<vmem>>, vector<1x8x4xbf16>
    %148 = vector.shape_cast %147 : vector<1x8x4xbf16> to vector<8x4xbf16>
    %cst_134 = arith.constant dense<0.000000e+00> : vector<8x384xf32>
    %149 = tpu.matmul %148, %146, %cst_134 {dimension_numbers = #tpu.dot_dimension_numbers<[1], [0], [0], [1], [0, 0, 1, 1], [], []>} : vector<8x4xbf16>, vector<4x384xbf16>, vector<8x384xf32> -> vector<8x384xf32>
    %150 = arith.addf %144, %149 : vector<8x384xf32>
    %c0_135 = arith.constant 0 : index
    %c0_136 = arith.constant 0 : index
    %c70 = arith.constant 70 : index
    %151 = vector.load %arg1[%c0_135, %c0_136, %c70] : memref<1x4x640xbf16, #tpu.memory_space<vmem>>, vector<1x4x384xbf16>
    %152 = vector.shape_cast %151 : vector<1x4x384xbf16> to vector<4x384xbf16>
    %c25_137 = arith.constant 25 : index
    %c0_138 = arith.constant 0 : index
    %c0_139 = arith.constant 0 : index
    %153 = vector.load %arg2[%c25_137, %c0_138, %c0_139] : memref<49x8x4xbf16, #tpu.memory_space<vmem>>, vector<1x8x4xbf16>
    %154 = vector.shape_cast %153 : vector<1x8x4xbf16> to vector<8x4xbf16>
    %cst_140 = arith.constant dense<0.000000e+00> : vector<8x384xf32>
    %155 = tpu.matmul %154, %152, %cst_140 {dimension_numbers = #tpu.dot_dimension_numbers<[1], [0], [0], [1], [0, 0, 1, 1], [], []>} : vector<8x4xbf16>, vector<4x384xbf16>, vector<8x384xf32> -> vector<8x384xf32>
    %156 = arith.addf %150, %155 : vector<8x384xf32>
    %c0_141 = arith.constant 0 : index
    %c0_142 = arith.constant 0 : index
    %c71 = arith.constant 71 : index
    %157 = vector.load %arg1[%c0_141, %c0_142, %c71] : memref<1x4x640xbf16, #tpu.memory_space<vmem>>, vector<1x4x384xbf16>
    %158 = vector.shape_cast %157 : vector<1x4x384xbf16> to vector<4x384xbf16>
    %c26_143 = arith.constant 26 : index
    %c0_144 = arith.constant 0 : index
    %c0_145 = arith.constant 0 : index
    %159 = vector.load %arg2[%c26_143, %c0_144, %c0_145] : memref<49x8x4xbf16, #tpu.memory_space<vmem>>, vector<1x8x4xbf16>
    %160 = vector.shape_cast %159 : vector<1x8x4xbf16> to vector<8x4xbf16>
    %cst_146 = arith.constant dense<0.000000e+00> : vector<8x384xf32>
    %161 = tpu.matmul %160, %158, %cst_146 {dimension_numbers = #tpu.dot_dimension_numbers<[1], [0], [0], [1], [0, 0, 1, 1], [], []>} : vector<8x4xbf16>, vector<4x384xbf16>, vector<8x384xf32> -> vector<8x384xf32>
    %162 = arith.addf %156, %161 : vector<8x384xf32>
    %c0_147 = arith.constant 0 : index
    %c0_148 = arith.constant 0 : index
    %c72 = arith.constant 72 : index
    %163 = vector.load %arg1[%c0_147, %c0_148, %c72] : memref<1x4x640xbf16, #tpu.memory_space<vmem>>, vector<1x4x384xbf16>
    %164 = vector.shape_cast %163 : vector<1x4x384xbf16> to vector<4x384xbf16>
    %c27_149 = arith.constant 27 : index
    %c0_150 = arith.constant 0 : index
    %c0_151 = arith.constant 0 : index
    %165 = vector.load %arg2[%c27_149, %c0_150, %c0_151] : memref<49x8x4xbf16, #tpu.memory_space<vmem>>, vector<1x8x4xbf16>
    %166 = vector.shape_cast %165 : vector<1x8x4xbf16> to vector<8x4xbf16>
    %cst_152 = arith.constant dense<0.000000e+00> : vector<8x384xf32>
    %167 = tpu.matmul %166, %164, %cst_152 {dimension_numbers = #tpu.dot_dimension_numbers<[1], [0], [0], [1], [0, 0, 1, 1], [], []>} : vector<8x4xbf16>, vector<4x384xbf16>, vector<8x384xf32> -> vector<8x384xf32>
    %168 = arith.addf %162, %167 : vector<8x384xf32>
    %c0_153 = arith.constant 0 : index
    %c0_154 = arith.constant 0 : index
    %c88 = arith.constant 88 : index
    %169 = vector.load %arg1[%c0_153, %c0_154, %c88] : memref<1x4x640xbf16, #tpu.memory_space<vmem>>, vector<1x4x384xbf16>
    %170 = vector.shape_cast %169 : vector<1x4x384xbf16> to vector<4x384xbf16>
    %c28_155 = arith.constant 28 : index
    %c0_156 = arith.constant 0 : index
    %c0_157 = arith.constant 0 : index
    %171 = vector.load %arg2[%c28_155, %c0_156, %c0_157] : memref<49x8x4xbf16, #tpu.memory_space<vmem>>, vector<1x8x4xbf16>
    %172 = vector.shape_cast %171 : vector<1x8x4xbf16> to vector<8x4xbf16>
    %cst_158 = arith.constant dense<0.000000e+00> : vector<8x384xf32>
    %173 = tpu.matmul %172, %170, %cst_158 {dimension_numbers = #tpu.dot_dimension_numbers<[1], [0], [0], [1], [0, 0, 1, 1], [], []>} : vector<8x4xbf16>, vector<4x384xbf16>, vector<8x384xf32> -> vector<8x384xf32>
    %174 = arith.addf %168, %173 : vector<8x384xf32>
    %c0_159 = arith.constant 0 : index
    %c0_160 = arith.constant 0 : index
    %c89 = arith.constant 89 : index
    %175 = vector.load %arg1[%c0_159, %c0_160, %c89] : memref<1x4x640xbf16, #tpu.memory_space<vmem>>, vector<1x4x384xbf16>
    %176 = vector.shape_cast %175 : vector<1x4x384xbf16> to vector<4x384xbf16>
    %c29 = arith.constant 29 : index
    %c0_161 = arith.constant 0 : index
    %c0_162 = arith.constant 0 : index
    %177 = vector.load %arg2[%c29, %c0_161, %c0_162] : memref<49x8x4xbf16, #tpu.memory_space<vmem>>, vector<1x8x4xbf16>
    %178 = vector.shape_cast %177 : vector<1x8x4xbf16> to vector<8x4xbf16>
    %cst_163 = arith.constant dense<0.000000e+00> : vector<8x384xf32>
    %179 = tpu.matmul %178, %176, %cst_163 {dimension_numbers = #tpu.dot_dimension_numbers<[1], [0], [0], [1], [0, 0, 1, 1], [], []>} : vector<8x4xbf16>, vector<4x384xbf16>, vector<8x384xf32> -> vector<8x384xf32>
    %180 = arith.addf %174, %179 : vector<8x384xf32>
    %c0_164 = arith.constant 0 : index
    %c0_165 = arith.constant 0 : index
    %c90 = arith.constant 90 : index
    %181 = vector.load %arg1[%c0_164, %c0_165, %c90] : memref<1x4x640xbf16, #tpu.memory_space<vmem>>, vector<1x4x384xbf16>
    %182 = vector.shape_cast %181 : vector<1x4x384xbf16> to vector<4x384xbf16>
    %c30 = arith.constant 30 : index
    %c0_166 = arith.constant 0 : index
    %c0_167 = arith.constant 0 : index
    %183 = vector.load %arg2[%c30, %c0_166, %c0_167] : memref<49x8x4xbf16, #tpu.memory_space<vmem>>, vector<1x8x4xbf16>
    %184 = vector.shape_cast %183 : vector<1x8x4xbf16> to vector<8x4xbf16>
    %cst_168 = arith.constant dense<0.000000e+00> : vector<8x384xf32>
    %185 = tpu.matmul %184, %182, %cst_168 {dimension_numbers = #tpu.dot_dimension_numbers<[1], [0], [0], [1], [0, 0, 1, 1], [], []>} : vector<8x4xbf16>, vector<4x384xbf16>, vector<8x384xf32> -> vector<8x384xf32>
    %186 = arith.addf %180, %185 : vector<8x384xf32>
    %c0_169 = arith.constant 0 : index
    %c0_170 = arith.constant 0 : index
    %c91 = arith.constant 91 : index
    %187 = vector.load %arg1[%c0_169, %c0_170, %c91] : memref<1x4x640xbf16, #tpu.memory_space<vmem>>, vector<1x4x384xbf16>
    %188 = vector.shape_cast %187 : vector<1x4x384xbf16> to vector<4x384xbf16>
    %c31 = arith.constant 31 : index
    %c0_171 = arith.constant 0 : index
    %c0_172 = arith.constant 0 : index
    %189 = vector.load %arg2[%c31, %c0_171, %c0_172] : memref<49x8x4xbf16, #tpu.memory_space<vmem>>, vector<1x8x4xbf16>
    %190 = vector.shape_cast %189 : vector<1x8x4xbf16> to vector<8x4xbf16>
    %cst_173 = arith.constant dense<0.000000e+00> : vector<8x384xf32>
    %191 = tpu.matmul %190, %188, %cst_173 {dimension_numbers = #tpu.dot_dimension_numbers<[1], [0], [0], [1], [0, 0, 1, 1], [], []>} : vector<8x4xbf16>, vector<4x384xbf16>, vector<8x384xf32> -> vector<8x384xf32>
    %192 = arith.addf %186, %191 : vector<8x384xf32>
    %c0_174 = arith.constant 0 : index
    %c0_175 = arith.constant 0 : index
    %c92 = arith.constant 92 : index
    %193 = vector.load %arg1[%c0_174, %c0_175, %c92] : memref<1x4x640xbf16, #tpu.memory_space<vmem>>, vector<1x4x384xbf16>
    %194 = vector.shape_cast %193 : vector<1x4x384xbf16> to vector<4x384xbf16>
    %c32 = arith.constant 32 : index
    %c0_176 = arith.constant 0 : index
    %c0_177 = arith.constant 0 : index
    %195 = vector.load %arg2[%c32, %c0_176, %c0_177] : memref<49x8x4xbf16, #tpu.memory_space<vmem>>, vector<1x8x4xbf16>
    %196 = vector.shape_cast %195 : vector<1x8x4xbf16> to vector<8x4xbf16>
    %cst_178 = arith.constant dense<0.000000e+00> : vector<8x384xf32>
    %197 = tpu.matmul %196, %194, %cst_178 {dimension_numbers = #tpu.dot_dimension_numbers<[1], [0], [0], [1], [0, 0, 1, 1], [], []>} : vector<8x4xbf16>, vector<4x384xbf16>, vector<8x384xf32> -> vector<8x384xf32>
    %198 = arith.addf %192, %197 : vector<8x384xf32>
    %c0_179 = arith.constant 0 : index
    %c0_180 = arith.constant 0 : index
    %c93 = arith.constant 93 : index
    %199 = vector.load %arg1[%c0_179, %c0_180, %c93] : memref<1x4x640xbf16, #tpu.memory_space<vmem>>, vector<1x4x384xbf16>
    %200 = vector.shape_cast %199 : vector<1x4x384xbf16> to vector<4x384xbf16>
    %c33 = arith.constant 33 : index
    %c0_181 = arith.constant 0 : index
    %c0_182 = arith.constant 0 : index
    %201 = vector.load %arg2[%c33, %c0_181, %c0_182] : memref<49x8x4xbf16, #tpu.memory_space<vmem>>, vector<1x8x4xbf16>
    %202 = vector.shape_cast %201 : vector<1x8x4xbf16> to vector<8x4xbf16>
    %cst_183 = arith.constant dense<0.000000e+00> : vector<8x384xf32>
    %203 = tpu.matmul %202, %200, %cst_183 {dimension_numbers = #tpu.dot_dimension_numbers<[1], [0], [0], [1], [0, 0, 1, 1], [], []>} : vector<8x4xbf16>, vector<4x384xbf16>, vector<8x384xf32> -> vector<8x384xf32>
    %204 = arith.addf %198, %203 : vector<8x384xf32>
    %c0_184 = arith.constant 0 : index
    %c0_185 = arith.constant 0 : index
    %c94 = arith.constant 94 : index
    %205 = vector.load %arg1[%c0_184, %c0_185, %c94] : memref<1x4x640xbf16, #tpu.memory_space<vmem>>, vector<1x4x384xbf16>
    %206 = vector.shape_cast %205 : vector<1x4x384xbf16> to vector<4x384xbf16>
    %c34 = arith.constant 34 : index
    %c0_186 = arith.constant 0 : index
    %c0_187 = arith.constant 0 : index
    %207 = vector.load %arg2[%c34, %c0_186, %c0_187] : memref<49x8x4xbf16, #tpu.memory_space<vmem>>, vector<1x8x4xbf16>
    %208 = vector.shape_cast %207 : vector<1x8x4xbf16> to vector<8x4xbf16>
    %cst_188 = arith.constant dense<0.000000e+00> : vector<8x384xf32>
    %209 = tpu.matmul %208, %206, %cst_188 {dimension_numbers = #tpu.dot_dimension_numbers<[1], [0], [0], [1], [0, 0, 1, 1], [], []>} : vector<8x4xbf16>, vector<4x384xbf16>, vector<8x384xf32> -> vector<8x384xf32>
    %210 = arith.addf %204, %209 : vector<8x384xf32>
    %c0_189 = arith.constant 0 : index
    %c0_190 = arith.constant 0 : index
    %c110 = arith.constant 110 : index
    %211 = vector.load %arg1[%c0_189, %c0_190, %c110] : memref<1x4x640xbf16, #tpu.memory_space<vmem>>, vector<1x4x384xbf16>
    %212 = vector.shape_cast %211 : vector<1x4x384xbf16> to vector<4x384xbf16>
    %c35 = arith.constant 35 : index
    %c0_191 = arith.constant 0 : index
    %c0_192 = arith.constant 0 : index
    %213 = vector.load %arg2[%c35, %c0_191, %c0_192] : memref<49x8x4xbf16, #tpu.memory_space<vmem>>, vector<1x8x4xbf16>
    %214 = vector.shape_cast %213 : vector<1x8x4xbf16> to vector<8x4xbf16>
    %cst_193 = arith.constant dense<0.000000e+00> : vector<8x384xf32>
    %215 = tpu.matmul %214, %212, %cst_193 {dimension_numbers = #tpu.dot_dimension_numbers<[1], [0], [0], [1], [0, 0, 1, 1], [], []>} : vector<8x4xbf16>, vector<4x384xbf16>, vector<8x384xf32> -> vector<8x384xf32>
    %216 = arith.addf %210, %215 : vector<8x384xf32>
    %c0_194 = arith.constant 0 : index
    %c0_195 = arith.constant 0 : index
    %c111 = arith.constant 111 : index
    %217 = vector.load %arg1[%c0_194, %c0_195, %c111] : memref<1x4x640xbf16, #tpu.memory_space<vmem>>, vector<1x4x384xbf16>
    %218 = vector.shape_cast %217 : vector<1x4x384xbf16> to vector<4x384xbf16>
    %c36 = arith.constant 36 : index
    %c0_196 = arith.constant 0 : index
    %c0_197 = arith.constant 0 : index
    %219 = vector.load %arg2[%c36, %c0_196, %c0_197] : memref<49x8x4xbf16, #tpu.memory_space<vmem>>, vector<1x8x4xbf16>
    %220 = vector.shape_cast %219 : vector<1x8x4xbf16> to vector<8x4xbf16>
    %cst_198 = arith.constant dense<0.000000e+00> : vector<8x384xf32>
    %221 = tpu.matmul %220, %218, %cst_198 {dimension_numbers = #tpu.dot_dimension_numbers<[1], [0], [0], [1], [0, 0, 1, 1], [], []>} : vector<8x4xbf16>, vector<4x384xbf16>, vector<8x384xf32> -> vector<8x384xf32>
    %222 = arith.addf %216, %221 : vector<8x384xf32>
    %c0_199 = arith.constant 0 : index
    %c0_200 = arith.constant 0 : index
    %c112 = arith.constant 112 : index
    %223 = vector.load %arg1[%c0_199, %c0_200, %c112] : memref<1x4x640xbf16, #tpu.memory_space<vmem>>, vector<1x4x384xbf16>
    %224 = vector.shape_cast %223 : vector<1x4x384xbf16> to vector<4x384xbf16>
    %c37 = arith.constant 37 : index
    %c0_201 = arith.constant 0 : index
    %c0_202 = arith.constant 0 : index
    %225 = vector.load %arg2[%c37, %c0_201, %c0_202] : memref<49x8x4xbf16, #tpu.memory_space<vmem>>, vector<1x8x4xbf16>
    %226 = vector.shape_cast %225 : vector<1x8x4xbf16> to vector<8x4xbf16>
    %cst_203 = arith.constant dense<0.000000e+00> : vector<8x384xf32>
    %227 = tpu.matmul %226, %224, %cst_203 {dimension_numbers = #tpu.dot_dimension_numbers<[1], [0], [0], [1], [0, 0, 1, 1], [], []>} : vector<8x4xbf16>, vector<4x384xbf16>, vector<8x384xf32> -> vector<8x384xf32>
    %228 = arith.addf %222, %227 : vector<8x384xf32>
    %c0_204 = arith.constant 0 : index
    %c0_205 = arith.constant 0 : index
    %c113 = arith.constant 113 : index
    %229 = vector.load %arg1[%c0_204, %c0_205, %c113] : memref<1x4x640xbf16, #tpu.memory_space<vmem>>, vector<1x4x384xbf16>
    %230 = vector.shape_cast %229 : vector<1x4x384xbf16> to vector<4x384xbf16>
    %c38 = arith.constant 38 : index
    %c0_206 = arith.constant 0 : index
    %c0_207 = arith.constant 0 : index
    %231 = vector.load %arg2[%c38, %c0_206, %c0_207] : memref<49x8x4xbf16, #tpu.memory_space<vmem>>, vector<1x8x4xbf16>
    %232 = vector.shape_cast %231 : vector<1x8x4xbf16> to vector<8x4xbf16>
    %cst_208 = arith.constant dense<0.000000e+00> : vector<8x384xf32>
    %233 = tpu.matmul %232, %230, %cst_208 {dimension_numbers = #tpu.dot_dimension_numbers<[1], [0], [0], [1], [0, 0, 1, 1], [], []>} : vector<8x4xbf16>, vector<4x384xbf16>, vector<8x384xf32> -> vector<8x384xf32>
    %234 = arith.addf %228, %233 : vector<8x384xf32>
    %c0_209 = arith.constant 0 : index
    %c0_210 = arith.constant 0 : index
    %c114 = arith.constant 114 : index
    %235 = vector.load %arg1[%c0_209, %c0_210, %c114] : memref<1x4x640xbf16, #tpu.memory_space<vmem>>, vector<1x4x384xbf16>
    %236 = vector.shape_cast %235 : vector<1x4x384xbf16> to vector<4x384xbf16>
    %c39 = arith.constant 39 : index
    %c0_211 = arith.constant 0 : index
    %c0_212 = arith.constant 0 : index
    %237 = vector.load %arg2[%c39, %c0_211, %c0_212] : memref<49x8x4xbf16, #tpu.memory_space<vmem>>, vector<1x8x4xbf16>
    %238 = vector.shape_cast %237 : vector<1x8x4xbf16> to vector<8x4xbf16>
    %cst_213 = arith.constant dense<0.000000e+00> : vector<8x384xf32>
    %239 = tpu.matmul %238, %236, %cst_213 {dimension_numbers = #tpu.dot_dimension_numbers<[1], [0], [0], [1], [0, 0, 1, 1], [], []>} : vector<8x4xbf16>, vector<4x384xbf16>, vector<8x384xf32> -> vector<8x384xf32>
    %240 = arith.addf %234, %239 : vector<8x384xf32>
    %c0_214 = arith.constant 0 : index
    %c0_215 = arith.constant 0 : index
    %c115 = arith.constant 115 : index
    %241 = vector.load %arg1[%c0_214, %c0_215, %c115] : memref<1x4x640xbf16, #tpu.memory_space<vmem>>, vector<1x4x384xbf16>
    %242 = vector.shape_cast %241 : vector<1x4x384xbf16> to vector<4x384xbf16>
    %c40 = arith.constant 40 : index
    %c0_216 = arith.constant 0 : index
    %c0_217 = arith.constant 0 : index
    %243 = vector.load %arg2[%c40, %c0_216, %c0_217] : memref<49x8x4xbf16, #tpu.memory_space<vmem>>, vector<1x8x4xbf16>
    %244 = vector.shape_cast %243 : vector<1x8x4xbf16> to vector<8x4xbf16>
    %cst_218 = arith.constant dense<0.000000e+00> : vector<8x384xf32>
    %245 = tpu.matmul %244, %242, %cst_218 {dimension_numbers = #tpu.dot_dimension_numbers<[1], [0], [0], [1], [0, 0, 1, 1], [], []>} : vector<8x4xbf16>, vector<4x384xbf16>, vector<8x384xf32> -> vector<8x384xf32>
    %246 = arith.addf %240, %245 : vector<8x384xf32>
    %c0_219 = arith.constant 0 : index
    %c0_220 = arith.constant 0 : index
    %c116 = arith.constant 116 : index
    %247 = vector.load %arg1[%c0_219, %c0_220, %c116] : memref<1x4x640xbf16, #tpu.memory_space<vmem>>, vector<1x4x384xbf16>
    %248 = vector.shape_cast %247 : vector<1x4x384xbf16> to vector<4x384xbf16>
    %c41 = arith.constant 41 : index
    %c0_221 = arith.constant 0 : index
    %c0_222 = arith.constant 0 : index
    %249 = vector.load %arg2[%c41, %c0_221, %c0_222] : memref<49x8x4xbf16, #tpu.memory_space<vmem>>, vector<1x8x4xbf16>
    %250 = vector.shape_cast %249 : vector<1x8x4xbf16> to vector<8x4xbf16>
    %cst_223 = arith.constant dense<0.000000e+00> : vector<8x384xf32>
    %251 = tpu.matmul %250, %248, %cst_223 {dimension_numbers = #tpu.dot_dimension_numbers<[1], [0], [0], [1], [0, 0, 1, 1], [], []>} : vector<8x4xbf16>, vector<4x384xbf16>, vector<8x384xf32> -> vector<8x384xf32>
    %252 = arith.addf %246, %251 : vector<8x384xf32>
    %c0_224 = arith.constant 0 : index
    %c0_225 = arith.constant 0 : index
    %c132 = arith.constant 132 : index
    %253 = vector.load %arg1[%c0_224, %c0_225, %c132] : memref<1x4x640xbf16, #tpu.memory_space<vmem>>, vector<1x4x384xbf16>
    %254 = vector.shape_cast %253 : vector<1x4x384xbf16> to vector<4x384xbf16>
    %c42 = arith.constant 42 : index
    %c0_226 = arith.constant 0 : index
    %c0_227 = arith.constant 0 : index
    %255 = vector.load %arg2[%c42, %c0_226, %c0_227] : memref<49x8x4xbf16, #tpu.memory_space<vmem>>, vector<1x8x4xbf16>
    %256 = vector.shape_cast %255 : vector<1x8x4xbf16> to vector<8x4xbf16>
    %cst_228 = arith.constant dense<0.000000e+00> : vector<8x384xf32>
    %257 = tpu.matmul %256, %254, %cst_228 {dimension_numbers = #tpu.dot_dimension_numbers<[1], [0], [0], [1], [0, 0, 1, 1], [], []>} : vector<8x4xbf16>, vector<4x384xbf16>, vector<8x384xf32> -> vector<8x384xf32>
    %258 = arith.addf %252, %257 : vector<8x384xf32>
    %c0_229 = arith.constant 0 : index
    %c0_230 = arith.constant 0 : index
    %c133 = arith.constant 133 : index
    %259 = vector.load %arg1[%c0_229, %c0_230, %c133] : memref<1x4x640xbf16, #tpu.memory_space<vmem>>, vector<1x4x384xbf16>
    %260 = vector.shape_cast %259 : vector<1x4x384xbf16> to vector<4x384xbf16>
    %c43 = arith.constant 43 : index
    %c0_231 = arith.constant 0 : index
    %c0_232 = arith.constant 0 : index
    %261 = vector.load %arg2[%c43, %c0_231, %c0_232] : memref<49x8x4xbf16, #tpu.memory_space<vmem>>, vector<1x8x4xbf16>
    %262 = vector.shape_cast %261 : vector<1x8x4xbf16> to vector<8x4xbf16>
    %cst_233 = arith.constant dense<0.000000e+00> : vector<8x384xf32>
    %263 = tpu.matmul %262, %260, %cst_233 {dimension_numbers = #tpu.dot_dimension_numbers<[1], [0], [0], [1], [0, 0, 1, 1], [], []>} : vector<8x4xbf16>, vector<4x384xbf16>, vector<8x384xf32> -> vector<8x384xf32>
    %264 = arith.addf %258, %263 : vector<8x384xf32>
    %c0_234 = arith.constant 0 : index
    %c0_235 = arith.constant 0 : index
    %c134 = arith.constant 134 : index
    %265 = vector.load %arg1[%c0_234, %c0_235, %c134] : memref<1x4x640xbf16, #tpu.memory_space<vmem>>, vector<1x4x384xbf16>
    %266 = vector.shape_cast %265 : vector<1x4x384xbf16> to vector<4x384xbf16>
    %c44_236 = arith.constant 44 : index
    %c0_237 = arith.constant 0 : index
    %c0_238 = arith.constant 0 : index
    %267 = vector.load %arg2[%c44_236, %c0_237, %c0_238] : memref<49x8x4xbf16, #tpu.memory_space<vmem>>, vector<1x8x4xbf16>
    %268 = vector.shape_cast %267 : vector<1x8x4xbf16> to vector<8x4xbf16>
    %cst_239 = arith.constant dense<0.000000e+00> : vector<8x384xf32>
    %269 = tpu.matmul %268, %266, %cst_239 {dimension_numbers = #tpu.dot_dimension_numbers<[1], [0], [0], [1], [0, 0, 1, 1], [], []>} : vector<8x4xbf16>, vector<4x384xbf16>, vector<8x384xf32> -> vector<8x384xf32>
    %270 = arith.addf %264, %269 : vector<8x384xf32>
    %c0_240 = arith.constant 0 : index
    %c0_241 = arith.constant 0 : index
    %c135 = arith.constant 135 : index
    %271 = vector.load %arg1[%c0_240, %c0_241, %c135] : memref<1x4x640xbf16, #tpu.memory_space<vmem>>, vector<1x4x384xbf16>
    %272 = vector.shape_cast %271 : vector<1x4x384xbf16> to vector<4x384xbf16>
    %c45_242 = arith.constant 45 : index
    %c0_243 = arith.constant 0 : index
    %c0_244 = arith.constant 0 : index
    %273 = vector.load %arg2[%c45_242, %c0_243, %c0_244] : memref<49x8x4xbf16, #tpu.memory_space<vmem>>, vector<1x8x4xbf16>
    %274 = vector.shape_cast %273 : vector<1x8x4xbf16> to vector<8x4xbf16>
    %cst_245 = arith.constant dense<0.000000e+00> : vector<8x384xf32>
    %275 = tpu.matmul %274, %272, %cst_245 {dimension_numbers = #tpu.dot_dimension_numbers<[1], [0], [0], [1], [0, 0, 1, 1], [], []>} : vector<8x4xbf16>, vector<4x384xbf16>, vector<8x384xf32> -> vector<8x384xf32>
    %276 = arith.addf %270, %275 : vector<8x384xf32>
    %c0_246 = arith.constant 0 : index
    %c0_247 = arith.constant 0 : index
    %c136 = arith.constant 136 : index
    %277 = vector.load %arg1[%c0_246, %c0_247, %c136] : memref<1x4x640xbf16, #tpu.memory_space<vmem>>, vector<1x4x384xbf16>
    %278 = vector.shape_cast %277 : vector<1x4x384xbf16> to vector<4x384xbf16>
    %c46_248 = arith.constant 46 : index
    %c0_249 = arith.constant 0 : index
    %c0_250 = arith.constant 0 : index
    %279 = vector.load %arg2[%c46_248, %c0_249, %c0_250] : memref<49x8x4xbf16, #tpu.memory_space<vmem>>, vector<1x8x4xbf16>
    %280 = vector.shape_cast %279 : vector<1x8x4xbf16> to vector<8x4xbf16>
    %cst_251 = arith.constant dense<0.000000e+00> : vector<8x384xf32>
    %281 = tpu.matmul %280, %278, %cst_251 {dimension_numbers = #tpu.dot_dimension_numbers<[1], [0], [0], [1], [0, 0, 1, 1], [], []>} : vector<8x4xbf16>, vector<4x384xbf16>, vector<8x384xf32> -> vector<8x384xf32>
    %282 = arith.addf %276, %281 : vector<8x384xf32>
    %c0_252 = arith.constant 0 : index
    %c0_253 = arith.constant 0 : index
    %c137 = arith.constant 137 : index
    %283 = vector.load %arg1[%c0_252, %c0_253, %c137] : memref<1x4x640xbf16, #tpu.memory_space<vmem>>, vector<1x4x384xbf16>
    %284 = vector.shape_cast %283 : vector<1x4x384xbf16> to vector<4x384xbf16>
    %c47_254 = arith.constant 47 : index
    %c0_255 = arith.constant 0 : index
    %c0_256 = arith.constant 0 : index
    %285 = vector.load %arg2[%c47_254, %c0_255, %c0_256] : memref<49x8x4xbf16, #tpu.memory_space<vmem>>, vector<1x8x4xbf16>
    %286 = vector.shape_cast %285 : vector<1x8x4xbf16> to vector<8x4xbf16>
    %cst_257 = arith.constant dense<0.000000e+00> : vector<8x384xf32>
    %287 = tpu.matmul %286, %284, %cst_257 {dimension_numbers = #tpu.dot_dimension_numbers<[1], [0], [0], [1], [0, 0, 1, 1], [], []>} : vector<8x4xbf16>, vector<4x384xbf16>, vector<8x384xf32> -> vector<8x384xf32>
    %288 = arith.addf %282, %287 : vector<8x384xf32>
    %c0_258 = arith.constant 0 : index
    %c0_259 = arith.constant 0 : index
    %c138 = arith.constant 138 : index
    %289 = vector.load %arg1[%c0_258, %c0_259, %c138] : memref<1x4x640xbf16, #tpu.memory_space<vmem>>, vector<1x4x384xbf16>
    %290 = vector.shape_cast %289 : vector<1x4x384xbf16> to vector<4x384xbf16>
    %c48_260 = arith.constant 48 : index
    %c0_261 = arith.constant 0 : index
    %c0_262 = arith.constant 0 : index
    %291 = vector.load %arg2[%c48_260, %c0_261, %c0_262] : memref<49x8x4xbf16, #tpu.memory_space<vmem>>, vector<1x8x4xbf16>
    %292 = vector.shape_cast %291 : vector<1x8x4xbf16> to vector<8x4xbf16>
    %cst_263 = arith.constant dense<0.000000e+00> : vector<8x384xf32>
    %293 = tpu.matmul %292, %290, %cst_263 {dimension_numbers = #tpu.dot_dimension_numbers<[1], [0], [0], [1], [0, 0, 1, 1], [], []>} : vector<8x4xbf16>, vector<4x384xbf16>, vector<8x384xf32> -> vector<8x384xf32>
    %294 = arith.addf %288, %293 : vector<8x384xf32>
    %c0_264 = arith.constant 0 : index
    %c0_265 = arith.constant 0 : index
    %295 = vector.load %arg3[%c0_264, %c0_265] : memref<8x1xf32, #tpu.memory_space<vmem>>, vector<8x1xf32>
    %296 = vector.broadcast %295 : vector<8x1xf32> to vector<8x384xf32>
    %297 = arith.addf %294, %296 : vector<8x384xf32>
    %cst_266 = arith.constant 0.000000e+00 : f32
    %298 = vector.broadcast %cst_266 : f32 to vector<8x384xf32>
    %299 = arith.maximumf %297, %298 : vector<8x384xf32>
    %c0_267 = arith.constant 0 : index
    %c0_268 = arith.constant 0 : index
    %c0_269 = arith.constant 0 : index
    %300 = vector.load %arg4[%c0_267, %c0_268, %c0_269] : memref<1x8x384xf32, #tpu.memory_space<vmem>>, vector<1x8x384xf32>
    %301 = vector.shape_cast %300 : vector<1x8x384xf32> to vector<8x384xf32>
    %302 = vector.shape_cast %299 : vector<8x384xf32> to vector<1x8x384xf32>
    tpu.vector_store %arg4[%c0_267, %c0_268, %c0_269], %302 {strides = array<i32>} : memref<1x8x384xf32, #tpu.memory_space<vmem>>, vector<1x8x384xf32>,
    return
  }
  func.func @transform_0(%arg0: i32) -> (i32, i32, i32) {
    %c0_i32 = arith.constant 0 : i32
    %c0_i32_0 = arith.constant 0 : i32
    %c0_i32_1 = arith.constant 0 : i32
    return %arg0, %c0_i32, %c0_i32_0 : i32, i32, i32
  }
  func.func @transform_1(%arg0: i32) -> (i32, i32, i32) {
    %c0_i32 = arith.constant 0 : i32
    %c0_i32_0 = arith.constant 0 : i32
    %c0_i32_1 = arith.constant 0 : i32
    %c0_i32_2 = arith.constant 0 : i32
    return %c0_i32, %c0_i32_0, %c0_i32_1 : i32, i32, i32
  }
  func.func @transform_2(%arg0: i32) -> (i32, i32) {
    %c0_i32 = arith.constant 0 : i32
    %c0_i32_0 = arith.constant 0 : i32
    %c0_i32_1 = arith.constant 0 : i32
    return %c0_i32, %c0_i32_0 : i32, i32
  }
  func.func @transform_3(%arg0: i32) -> (i32, i32, i32) {
    %c0_i32 = arith.constant 0 : i32
    %c0_i32_0 = arith.constant 0 : i32
    %c0_i32_1 = arith.constant 0 : i32
    return %arg0, %c0_i32, %c0_i32_0 : i32, i32, i32
  }
}

</mosaic_0001>

<llo_original>
// kernel: conv2d_block_forward.1
$region0: #{conv2d_block_forward.1}
  #allocation0 [shape = 'u32[]', space=smem, size = 0x4, offset = 0x4, fixed_abs, tag = 'smem constant byte address 0x4 - core index']
  #allocation1 [shape = 'u32[144,128]{1,0:T(1,128)}', space=vmem, size = 0x12000, scoped, tag = 'internal scratch']
  %s0 = inlined_call_operand.vmem [shape: bf16[2,4,640], index: 0, kind: input, shape index: {}]
  %s1 = inlined_call_operand.vmem [shape: bf16[49,8,4], index: 1, kind: input, shape index: {}]
  %s2 = inlined_call_operand.vmem [shape: f32[8,1], index: 2, kind: input, shape index: {}]
  %s3 = inlined_call_operand.vmem [shape: f32[2,8,384], index: 3, kind: output, shape index: {}]
  %s4 = sld [smem:[#allocation0]]
  $region45: #{conv2d_block_forward.1} parent=0
    _
  %s6 = ssub.s32 1, %s4
  %s7 = scalar_select 0, %s6, %s4
  loop: start=0, step=1, limit=4
  $region2: #{conv2d_block_forward.1} parent=0 // loop_pre_header
    _
  $region3: #{conv2d_block_forward.1} parent=0 // loop_header
    %s9 = sphi 0, %s13
    %p10 = scmp.ge.s32.totalorder %s9, 4
    %s19 = sphi 0, %s21
    %s22 = sphi 0, %s19
    %s23 = sphi 0, %s22
    %s39 = sphi 0, %s23
    %s43 = sphi 0, %s43
    %s45 = sphi 0, %s43
    %s46 = sphi 0, %s45
    %s60 = sphi 0, %s46
    %s64 = sphi 0, %s64
    %s66 = sphi 0, %s64
    %s67 = sphi 0, %s66
    %s81 = sphi 0, %s67
    %s87 = sphi 0, %s89
    %s90 = sphi 0, %s87
    %s91 = sphi 0, %s90
    %s107 = sphi 0, %s91
  $region4: #{conv2d_block_forward.1} parent=0 // loop_header_branch
    %12 = sbr.rel (%p10) target = $region8
  $region5: #{conv2d_block_forward.1} parent=0 // loop_body
    %s14 = ssub.s32 %s9, 1
    %s15 = ssub.s32 %s9, 2
    %s16 = sadd.s32 %s9, 1
    %s17 = ssub.s32 %s9, %s16
    %p18 = scmp.eq.s32.totalorder %s17, 0
    %s20 = sadd.s32 %s19, 1
    %s21 = scalar_select %p18, %s19, %s20
    %p24 = pneg %p18
    %p25 = scmp.eq.s32.totalorder %s9, 1
    %p26 = por %p24, %p25
    %p27 = scmp.ne.s32.totalorder %s19, %s22
    %p28 = scmp.eq.s32.totalorder %s9, 0
    %p29 = por %p27, %p28
    %p30 = scmp.ne.s32.totalorder %s19, %s22
    %p31 = scmp.eq.s32.totalorder %s14, 1
    %p32 = por %p30, %p31
    %p33 = scmp.ne.s32.totalorder %s22, %s23
    %p34 = scmp.eq.s32.totalorder %s14, 0
    %p35 = por %p33, %p34
    %p36 = scmp.ne.s32.totalorder %s22, %s23
    %p37 = scmp.eq.s32.totalorder %s15, 1
    %p38 = por %p36, %p37
    %p40 = scmp.ne.s32.totalorder %s23, %s39
    %p41 = scmp.eq.s32.totalorder %s15, 0
    %p42 = por %p40, %p41
    %s44 = sadd.s32 %s43, 1
    %p47 = scmp.eq.s32.totalorder %s9, 1
    %p48 = scmp.ne.s32.totalorder %s43, %s45
    %p49 = scmp.eq.s32.totalorder %s9, 0
    %p50 = por %p48, %p49
    %p51 = scmp.ne.s32.totalorder %s43, %s45
    %p52 = scmp.eq.s32.totalorder %s14, 1
    %p53 = por %p51, %p52
    %p54 = scmp.ne.s32.totalorder %s45, %s46
    %p55 = scmp.eq.s32.totalorder %s14, 0
    %p56 = por %p54, %p55
    %p57 = scmp.ne.s32.totalorder %s45, %s46
    %p58 = scmp.eq.s32.totalorder %s15, 1
    %p59 = por %p57, %p58
    %p61 = scmp.ne.s32.totalorder %s46, %s60
    %p62 = scmp.eq.s32.totalorder %s15, 0
    %p63 = por %p61, %p62
    %s65 = sadd.s32 %s64, 1
    %p68 = scmp.eq.s32.totalorder %s9, 1
    %p69 = scmp.ne.s32.totalorder %s64, %s66
    %p70 = scmp.eq.s32.totalorder %s9, 0
    %p71 = por %p69, %p70
    %p72 = scmp.ne.s32.totalorder %s64, %s66
    %p73 = scmp.eq.s32.totalorder %s14, 1
    %p74 = por %p72, %p73
    %p75 = scmp.ne.s32.totalorder %s66, %s67
    %p76 = scmp.eq.s32.totalorder %s14, 0
    %p77 = por %p75, %p76
    %p78 = scmp.ne.s32.totalorder %s66, %s67
    %p79 = scmp.eq.s32.totalorder %s15, 1
    %p80 = por %p78, %p79
    %p82 = scmp.ne.s32.totalorder %s67, %s81
    %p83 = scmp.eq.s32.totalorder %s15, 0
    %p84 = por %p82, %p83
    %s85 = ssub.s32 %s9, %s16
    %p86 = scmp.eq.s32.totalorder %s85, 0
    %s88 = sadd.s32 %s87, 1
    %s89 = scalar_select %p86, %s87, %s88
    %p92 = pneg %p86
    %p93 = scmp.eq.s32.totalorder %s9, 1
    %p94 = por %p92, %p93
    %p95 = scmp.ne.s32.totalorder %s87, %s90
    %p96 = scmp.eq.s32.totalorder %s9, 0
    %p97 = por %p95, %p96
    %p98 = scmp.ne.s32.totalorder %s87, %s90
    %p99 = scmp.eq.s32.totalorder %s14, 1
    %p100 = por %p98, %p99
    %p101 = scmp.ne.s32.totalorder %s90, %s91
    %p102 = scmp.eq.s32.totalorder %s14, 0
    %p103 = por %p101, %p102
    %p104 = scmp.ne.s32.totalorder %s90, %s91
    %p105 = scmp.eq.s32.totalorder %s15, 1
    %p106 = por %p104, %p105
    %p108 = scmp.ne.s32.totalorder %s91, %s107
    %p109 = scmp.eq.s32.totalorder %s15, 0
    %p110 = por %p108, %p109
    %p111 = scmp.le.s32.totalorder 1, %s9
    %p112 = scmp.lt.s32.totalorder %s9, 3
    %p113 = pnand %p111, %p112
    %p114 = pneg %p113
    // Predicated region
    $region9: #{conv2d_block_forward.1} parent=5 // pred_check
      _
    $region10: #{conv2d_block_forward.1} parent=5 // pred_check_branch
      %116 = sbr.rel (%p113) target = $region12
    $region11: #{conv2d_block_forward.1} parent=5 // pred_region
      %s117 = ssub.s32 %s9, 1
      // Predicated region
      $region13: #{conv2d_block_forward.1} parent=11 // pred_check
        %p118 = pneg %p56
      $region14: #{conv2d_block_forward.1} parent=11 // pred_check_branch
        %120 = sbr.rel (%p118) target = $region16
      $region15: #{conv2d_block_forward.1} parent=11 // pred_region
        _
      $region16: #{conv2d_block_forward.1} parent=11 // pred_fallthru
        _
      // Predicated region
      $region17: #{conv2d_block_forward.1} parent=11 // pred_check
        %p121 = pneg %p77
      $region18: #{conv2d_block_forward.1} parent=11 // pred_check_branch
        %123 = sbr.rel (%p121) target = $region20
      $region19: #{conv2d_block_forward.1} parent=11 // pred_region
        _
      $region20: #{conv2d_block_forward.1} parent=11 // pred_fallthru
        _
    $region12: #{conv2d_block_forward.1} parent=5 // pred_fallthru
      _
    %p124 = scmp.lt.s32.totalorder %s9, 2
    // Predicated region
    $region21: #{conv2d_block_forward.1} parent=5 // pred_check
      %p125 = pneg %p124
    $region22: #{conv2d_block_forward.1} parent=5 // pred_check_branch
      %127 = sbr.rel (%p125) target = $region24
    $region23: #{conv2d_block_forward.1} parent=5 // pred_region
      // Predicated region
      $region25: #{conv2d_block_forward.1} parent=23 // pred_check
        %p128 = pneg %p29
      $region26: #{conv2d_block_forward.1} parent=23 // pred_check_branch
        %130 = sbr.rel (%p128) target = $region28
      $region27: #{conv2d_block_forward.1} parent=23 // pred_region
        %p131 = scmp.lt.s32.totalorder %s9, 1
        %s132 = scalar_select %p131, %s9, 1
        %s133 = smul.addr %s132, 5
        %s134 = smul.addr %s133, 2
        %s135 = scalar_lea.vmem %s0, %s134
      $region28: #{conv2d_block_forward.1} parent=23 // pred_fallthru
        _
    $region24: #{conv2d_block_forward.1} parent=5 // pred_fallthru
      _
    %p136 = scmp.le.s32.totalorder 1, %s9
    %p137 = scmp.lt.s32.totalorder %s9, 3
    %p138 = pnand %p136, %p137
    %p139 = pneg %p138
    // Predicated region
    $region29: #{conv2d_block_forward.1} parent=5 // pred_check
      _
    $region30: #{conv2d_block_forward.1} parent=5 // pred_check_branch
      %141 = sbr.rel (%p138) target = $region32
    $region31: #{conv2d_block_forward.1} parent=5 // pred_region
      %s142 = ssub.s32 %s9, 1
      %p143 = scmp.lt.s32.totalorder %s14, 1
      %s144 = scalar_select %p143, %s14, 1
      %s145 = smul.addr %s144, 5
      %s146 = smul.addr %s145, 2
      %s147 = scalar_lea.vmem %s0, %s146
      %p148 = pneg %p35
      %p149 = pneg %p32
      %p150 = pneg %p56
      %p151 = pneg %p53
      %p152 = pneg %p77
      %p153 = pneg %p74
      %p154 = pneg %p103
      %p155 = pneg %p100
      %p156 = scmp.lt.s32.totalorder %s14, 1
      %s157 = scalar_select %p156, %s14, 1
      %s158 = smul.addr %s157, 3
      %s159 = smul.addr %s158, 8
      %s160 = scalar_lea.vmem %s3, %s159
      %p161 = scmp.lt.s32.totalorder %s14, 1
      %s162 = scalar_select %p161, %s14, 1
      %s163 = smul.addr %s162, 5
      %s164 = smul.addr %s163, 2
      %s165 = scalar_lea.vmem %s0, %s164
      %p166 = scmp.lt.s32.totalorder %s14, 1
      %s167 = scalar_select %p166, %s14, 1
      %s168 = smul.addr %s167, 3
      %s169 = smul.addr %s168, 8
      %s170 = scalar_lea.vmem %s3, %s169
      %v172 = vld [vmem:[%s165] sm:$0x3f]
      %v173 = vld [vmem:[%s1] sm:$0xf]
      %v174 = vld [vmem:[%s165] sm:$0xff]
      %s175 = scalar_lea.vmem %s1, 4
      %v176 = vld [vmem:[%s175] sm:$0xf]
      %v178 = vcombine.high %v174, %v174
      %v180 = vunpack.c.l.s4 1983009808
      %v181 = vunpack.c.0.s8 %v180
      %v182 = vlaneseq
      %v183 = vshrl.u32 %v182, 7
      %v184 = vsub.s32 %v181, %v183
      %v185 = vrot.slane %v174, %v184
      %v187 = vunpack.c.l.s4 1983009808
      %v188 = vunpack.c.0.s8 %v187
      %v189 = vlaneseq
      %v190 = vshrl.u32 %v189, 7
      %v191 = vsub.s32 %v188, %v190
      %v192 = vrot.slane %v178, %v191
      %v193 = vcombine.high %v185, %v185
      %v194 = vcombine.high %v192, %v192
      %195 = vrot.lane.b32.xlu0 %v185, 127
      %v196 = vpop.permute.xlu0 %195
      %197 = vrot.lane.b32.xlu0 %v193, 127
      %v198 = vpop.permute.xlu0 %197
      %199 = vrot.lane.b32.xlu0 %v192, 127
      %v200 = vpop.permute.xlu0 %199
      %201 = vrot.lane.b32.xlu0 %v194, 127
      %v202 = vpop.permute.xlu0 %201
      %vm203 = vcmask 1039360
      %v204 = vsel %vm203, %v196, %v198
      %v205 = vsel %vm203, %v198, %v200
      %v206 = vsel %vm203, %v200, %v202
      %vm207 = vcmask 31744
      %v209 = vsel %vm207, %v176, 0
      %vm211 = vcmask 1041408
      %v213 = vsel %vm211, %v204, 0
      %v216 = vsel %vm211, %v205, 0
      %v219 = vsel %vm211, %v206, 0
      %221 = vmatprep.subr.bf16.mxu0 %v216
      %222 = vmatpush1.bf16.msra.mxu0 %v213
      %223 = vmatprep.subr.bf16.mxu0 0
      %224 = vmatpush1.bf16.msra.mxu0 0
      %225 = vmatprep.subr.bf16.mxu0 0
      %226 = vmatpush1.bf16.msra.mxu0 0
      %227 = vmatprep.subr.bf16.mxu0 0
      %228 = vmatpush1.bf16.msra.mxu0 0
      %229 = vmatprep.subr.bf16.mxu0 0
      %230 = vmatpush1.bf16.msra.mxu0 0
      %231 = vmatprep.subr.bf16.mxu0 0
      %232 = vmatpush1.bf16.msra.mxu0 0
      %233 = vmatprep.subr.bf16.mxu0 0
      %234 = vmatpush1.bf16.msra.mxu0 0
      %235 = vmatprep.subr.bf16.mxu0 0
      %236 = vmatpush1.bf16.msra.mxu0 0
      %237 = vmatprep.subr.bf16.mxu0 0
      %238 = vmatpush1.bf16.msra.mxu0 0
      %239 = vmatprep.subr.bf16.mxu0 0
      %240 = vmatpush1.bf16.msra.mxu0 0
      %241 = vmatprep.subr.bf16.mxu0 0
      %242 = vmatpush1.bf16.msra.mxu0 0
      %243 = vmatprep.subr.bf16.mxu0 0
      %244 = vmatpush1.bf16.msra.mxu0 0
      %245 = vmatprep.subr.bf16.mxu0 0
      %246 = vmatpush1.bf16.msra.mxu0 0
      %247 = vmatprep.subr.bf16.mxu0 0
      %248 = vmatpush1.bf16.msra.mxu0 0
      %249 = vmatprep.subr.bf16.mxu0 0
      %250 = vmatpush1.bf16.msra.mxu0 0
      %251 = vmatprep.subr.bf16.mxu0 0
      %252 = vmatpush1.bf16.msra.mxu0 0
      %253 = vmatprep.mubr.bf16.mxu0 0
      %254 = vmatmul.mubr.bf16.gmra.mrb[0].mxu0 %v209
      %v255 = vpop.f32.mrb[0].mxu0
      %v256 = vadd.f32 0.0, %v255
      %v257 = vpop.f32.mrb[0].mxu0
      %v258 = vadd.f32 0.0, %v257
      %v259 = vpop.f32.mrb[0].mxu0
      %v260 = vpop.f32.mrb[0].mxu0
      %261 = vdwg.mxu0
      %262 = vmatprep.subr.bf16.mxu0 0
      %263 = vmatpush1.bf16.msra.mxu0 %v219
      %264 = vmatprep.subr.bf16.mxu0 0
      %265 = vmatpush1.bf16.msra.mxu0 0
      %266 = vmatprep.subr.bf16.mxu0 0
      %267 = vmatpush1.bf16.msra.mxu0 0
      %268 = vmatprep.subr.bf16.mxu0 0
      %269 = vmatpush1.bf16.msra.mxu0 0
      %270 = vmatprep.subr.bf16.mxu0 0
      %271 = vmatpush1.bf16.msra.mxu0 0
      %272 = vmatprep.subr.bf16.mxu0 0
      %273 = vmatpush1.bf16.msra.mxu0 0
      %274 = vmatprep.subr.bf16.mxu0 0
      %275 = vmatpush1.bf16.msra.mxu0 0
      %276 = vmatprep.subr.bf16.mxu0 0
      %277 = vmatpush1.bf16.msra.mxu0 0
      %278 = vmatprep.subr.bf16.mxu0 0
      %279 = vmatpush1.bf16.msra.mxu0 0
      %280 = vmatprep.subr.bf16.mxu0 0
      %281 = vmatpush1.bf16.msra.mxu0 0
      %282 = vmatprep.subr.bf16.mxu0 0
      %283 = vmatpush1.bf16.msra.mxu0 0
      %284 = vmatprep.subr.bf16.mxu0 0
      %285 = vmatpush1.bf16.msra.mxu0 0
      %286 = vmatprep.subr.bf16.mxu0 0
      %287 = vmatpush1.bf16.msra.mxu0 0
      %288 = vmatprep.subr.bf16.mxu0 0
      %289 = vmatpush1.bf16.msra.mxu0 0
      %290 = vmatprep.subr.bf16.mxu0 0
      %291 = vmatpush1.bf16.msra.mxu0 0
      %292 = vmatprep.subr.bf16.mxu0 0
      %293 = vmatpush1.bf16.msra.mxu0 0
      %294 = vmatprep.mubr.bf16.mxu0 0
      %295 = vmatmul.mubr.bf16.gmra.mrb[0].mxu0 %v209
      %v296 = vpop.f32.mrb[0].mxu0
      %v297 = vadd.f32 0.0, %v296
      %v298 = vpop.f32.mrb[0].mxu0
      %v299 = vpop.f32.mrb[0].mxu0
      %v300 = vpop.f32.mrb[0].mxu0
      %301 = vdwg.mxu0
      %v303 = vcombine.high %v172, %v172
      %v305 = vunpack.c.l.s4 1983009808
      %v306 = vunpack.c.0.s8 %v305
      %v307 = vlaneseq
      %v308 = vshrl.u32 %v307, 7
      %v309 = vsub.s32 %v306, %v308
      %v310 = vrot.slane %v172, %v309
      %v312 = vunpack.c.l.s4 1983009808
      %v313 = vunpack.c.0.s8 %v312
      %v314 = vlaneseq
      %v315 = vshrl.u32 %v314, 7
      %v316 = vsub.s32 %v313, %v315
      %v317 = vrot.slane %v303, %v316
      %v318 = vcombine.high %v310, %v310
      %v320 = vsel %vm207, %v173, 0
      %v323 = vsel %vm211, %v310, 0
      %v326 = vsel %vm211, %v318, 0
      %v329 = vsel %vm211, %v317, 0
      %331 = vmatprep.subr.bf16.mxu0 %v326
      %332 = vmatpush1.bf16.msra.mxu0 %v323
      %333 = vmatprep.subr.bf16.mxu0 0
      %334 = vmatpush1.bf16.msra.mxu0 0
      %335 = vmatprep.subr.bf16.mxu0 0
      %336 = vmatpush1.bf16.msra.mxu0 0
      %337 = vmatprep.subr.bf16.mxu0 0
      %338 = vmatpush1.bf16.msra.mxu0 0
      %339 = vmatprep.subr.bf16.mxu0 0
      %340 = vmatpush1.bf16.msra.mxu0 0
      %341 = vmatprep.subr.bf16.mxu0 0
      %342 = vmatpush1.bf16.msra.mxu0 0
      %343 = vmatprep.subr.bf16.mxu0 0
      %344 = vmatpush1.bf16.msra.mxu0 0
      %345 = vmatprep.subr.bf16.mxu0 0
      %346 = vmatpush1.bf16.msra.mxu0 0
      %347 = vmatprep.subr.bf16.mxu0 0
      %348 = vmatpush1.bf16.msra.mxu0 0
      %349 = vmatprep.subr.bf16.mxu0 0
      %350 = vmatpush1.bf16.msra.mxu0 0
      %351 = vmatprep.subr.bf16.mxu0 0
      %352 = vmatpush1.bf16.msra.mxu0 0
      %353 = vmatprep.subr.bf16.mxu0 0
      %354 = vmatpush1.bf16.msra.mxu0 0
      %355 = vmatprep.subr.bf16.mxu0 0
      %356 = vmatpush1.bf16.msra.mxu0 0
      %357 = vmatprep.subr.bf16.mxu0 0
      %358 = vmatpush1.bf16.msra.mxu0 0
      %359 = vmatprep.subr.bf16.mxu0 0
      %360 = vmatpush1.bf16.msra.mxu0 0
      %361 = vmatprep.subr.bf16.mxu0 0
      %362 = vmatpush1.bf16.msra.mxu0 0
      %363 = vmatprep.mubr.bf16.mxu0 0
      %364 = vmatmul.mubr.bf16.gmra.mrb[0].mxu0 %v320
      %v365 = vpop.f32.mrb[0].mxu0
      %v366 = vadd.f32 %v256, %v365
      %v367 = vpop.f32.mrb[0].mxu0
      %v368 = vadd.f32 %v258, %v367
      %v369 = vpop.f32.mrb[0].mxu0
      %v370 = vpop.f32.mrb[0].mxu0
      %371 = vdwg.mxu0
      %372 = vmatprep.subr.bf16.mxu0 0
      %373 = vmatpush1.bf16.msra.mxu0 %v329
      %374 = vmatprep.subr.bf16.mxu0 0
      %375 = vmatpush1.bf16.msra.mxu0 0
      %376 = vmatprep.subr.bf16.mxu0 0
      %377 = vmatpush1.bf16.msra.mxu0 0
      %378 = vmatprep.subr.bf16.mxu0 0
      %379 = vmatpush1.bf16.msra.mxu0 0
      %380 = vmatprep.subr.bf16.mxu0 0
      %381 = vmatpush1.bf16.msra.mxu0 0
      %382 = vmatprep.subr.bf16.mxu0 0
      %383 = vmatpush1.bf16.msra.mxu0 0
      %384 = vmatprep.subr.bf16.mxu0 0
      %385 = vmatpush1.bf16.msra.mxu0 0
      %386 = vmatprep.subr.bf16.mxu0 0
      %387 = vmatpush1.bf16.msra.mxu0 0
      %388 = vmatprep.subr.bf16.mxu0 0
      %389 = vmatpush1.bf16.msra.mxu0 0
      %390 = vmatprep.subr.bf16.mxu0 0
      %391 = vmatpush1.bf16.msra.mxu0 0
      %392 = vmatprep.subr.bf16.mxu0 0
      %393 = vmatpush1.bf16.msra.mxu0 0
      %394 = vmatprep.subr.bf16.mxu0 0
      %395 = vmatpush1.bf16.msra.mxu0 0
      %396 = vmatprep.subr.bf16.mxu0 0
      %397 = vmatpush1.bf16.msra.mxu0 0
      %398 = vmatprep.subr.bf16.mxu0 0
      %399 = vmatpush1.bf16.msra.mxu0 0
      %400 = vmatprep.subr.bf16.mxu0 0
      %401 = vmatpush1.bf16.msra.mxu0 0
      %402 = vmatprep.subr.bf16.mxu0 0
      %403 = vmatpush1.bf16.msra.mxu0 0
      %404 = vmatprep.mubr.bf16.mxu0 0
      %405 = vmatmul.mubr.bf16.gmra.mrb[0].mxu0 %v320
      %v406 = vpop.f32.mrb[0].mxu0
      %v407 = vadd.f32 %v297, %v406
      %v408 = vpop.f32.mrb[0].mxu0
      %v409 = vpop.f32.mrb[0].mxu0
      %v410 = vpop.f32.mrb[0].mxu0
      %411 = vdwg.mxu0
      %v412 = vld [vmem:[%s165] sm:$0xff]
      %s413 = scalar_lea.vmem %s1, 8
      %v414 = vld [vmem:[%s413] sm:$0xf]
      %v416 = vcombine.high %v412, %v412
      %v418 = vunpack.c.l.s4 1983009808
      %v419 = vunpack.c.0.s8 %v418
      %v420 = vlaneseq
      %v421 = vshrl.u32 %v420, 7
      %v422 = vsub.s32 %v419, %v421
      %v423 = vrot.slane %v412, %v422
      %v425 = vunpack.c.l.s4 1983009808
      %v426 = vunpack.c.0.s8 %v425
      %v427 = vlaneseq
      %v428 = vshrl.u32 %v427, 7
      %v429 = vsub.s32 %v426, %v428
      %v430 = vrot.slane %v416, %v429
      %v431 = vcombine.high %v423, %v423
      %v432 = vcombine.high %v430, %v430
      %433 = vrot.lane.b32.xlu0 %v423, 126
      %v434 = vpop.permute.xlu0 %433
      %435 = vrot.lane.b32.xlu0 %v431, 126
      %v436 = vpop.permute.xlu0 %435
      %437 = vrot.lane.b32.xlu0 %v430, 126
      %v438 = vpop.permute.xlu0 %437
      %439 = vrot.lane.b32.xlu0 %v432, 126
      %v440 = vpop.permute.xlu0 %439
      %vm441 = vcmask 1031168
      %v442 = vsel %vm441, %v434, %v436
      %v443 = vsel %vm441, %v436, %v438
      %v444 = vsel %vm441, %v438, %v440
      %v446 = vsel %vm207, %v414, 0
      %v449 = vsel %vm211, %v442, 0
      %v452 = vsel %vm211, %v443, 0
      %v455 = vsel %vm211, %v444, 0
      %457 = vmatprep.subr.bf16.mxu0 %v452
      %458 = vmatpush1.bf16.msra.mxu0 %v449
      %459 = vmatprep.subr.bf16.mxu0 0
      %460 = vmatpush1.bf16.msra.mxu0 0
      %461 = vmatprep.subr.bf16.mxu0 0
      %462 = vmatpush1.bf16.msra.mxu0 0
      %463 = vmatprep.subr.bf16.mxu0 0
      %464 = vmatpush1.bf16.msra.mxu0 0
      %465 = vmatprep.subr.bf16.mxu0 0
      %466 = vmatpush1.bf16.msra.mxu0 0
      %467 = vmatprep.subr.bf16.mxu0 0
      %468 = vmatpush1.bf16.msra.mxu0 0
      %469 = vmatprep.subr.bf16.mxu0 0
      %470 = vmatpush1.bf16.msra.mxu0 0
      %471 = vmatprep.subr.bf16.mxu0 0
      %472 = vmatpush1.bf16.msra.mxu0 0
      %473 = vmatprep.subr.bf16.mxu0 0
      %474 = vmatpush1.bf16.msra.mxu0 0
      %475 = vmatprep.subr.bf16.mxu0 0
      %476 = vmatpush1.bf16.msra.mxu0 0
      %477 = vmatprep.subr.bf16.mxu0 0
      %478 = vmatpush1.bf16.msra.mxu0 0
      %479 = vmatprep.subr.bf16.mxu0 0
      %480 = vmatpush1.bf16.msra.mxu0 0
      %481 = vmatprep.subr.bf16.mxu0 0
      %482 = vmatpush1.bf16.msra.mxu0 0
      %483 = vmatprep.subr.bf16.mxu0 0
      %484 = vmatpush1.bf16.msra.mxu0 0
      %485 = vmatprep.subr.bf16.mxu0 0
      %486 = vmatpush1.bf16.msra.mxu0 0
      %487 = vmatprep.subr.bf16.mxu0 0
      %488 = vmatpush1.bf16.msra.mxu0 0
      %489 = vmatprep.mubr.bf16.mxu0 0
      %490 = vmatmul.mubr.bf16.gmra.mrb[0].mxu0 %v446
      %v491 = vpop.f32.mrb[0].mxu0
      %v492 = vadd.f32 0.0, %v491
      %v493 = vpop.f32.mrb[0].mxu0
      %v494 = vadd.f32 0.0, %v493
      %v495 = vpop.f32.mrb[0].mxu0
      %v496 = vpop.f32.mrb[0].mxu0
      %497 = vdwg.mxu0
      %498 = vmatprep.subr.bf16.mxu0 0
      %499 = vmatpush1.bf16.msra.mxu0 %v455
      %500 = vmatprep.subr.bf16.mxu0 0
      %501 = vmatpush1.bf16.msra.mxu0 0
      %502 = vmatprep.subr.bf16.mxu0 0
      %503 = vmatpush1.bf16.msra.mxu0 0
      %504 = vmatprep.subr.bf16.mxu0 0
      %505 = vmatpush1.bf16.msra.mxu0 0
      %506 = vmatprep.subr.bf16.mxu0 0
      %507 = vmatpush1.bf16.msra.mxu0 0
      %508 = vmatprep.subr.bf16.mxu0 0
      %509 = vmatpush1.bf16.msra.mxu0 0
      %510 = vmatprep.subr.bf16.mxu0 0
      %511 = vmatpush1.bf16.msra.mxu0 0
      %512 = vmatprep.subr.bf16.mxu0 0
      %513 = vmatpush1.bf16.msra.mxu0 0
      %514 = vmatprep.subr.bf16.mxu0 0
      %515 = vmatpush1.bf16.msra.mxu0 0
      %516 = vmatprep.subr.bf16.mxu0 0
      %517 = vmatpush1.bf16.msra.mxu0 0
      %518 = vmatprep.subr.bf16.mxu0 0
      %519 = vmatpush1.bf16.msra.mxu0 0
      %520 = vmatprep.subr.bf16.mxu0 0
      %521 = vmatpush1.bf16.msra.mxu0 0
      %522 = vmatprep.subr.bf16.mxu0 0
      %523 = vmatpush1.bf16.msra.mxu0 0
      %524 = vmatprep.subr.bf16.mxu0 0
      %525 = vmatpush1.bf16.msra.mxu0 0
      %526 = vmatprep.subr.bf16.mxu0 0
      %527 = vmatpush1.bf16.msra.mxu0 0
      %528 = vmatprep.subr.bf16.mxu0 0
      %529 = vmatpush1.bf16.msra.mxu0 0
      %530 = vmatprep.mubr.bf16.mxu0 0
      %531 = vmatmul.mubr.bf16.gmra.mrb[0].mxu0 %v446
      %v532 = vpop.f32.mrb[0].mxu0
      %v533 = vadd.f32 0.0, %v532
      %v534 = vpop.f32.mrb[0].mxu0
      %v535 = vpop.f32.mrb[0].mxu0
      %v536 = vpop.f32.mrb[0].mxu0
      %537 = vdwg.mxu0
      %v538 = vadd.f32 %v366, %v492
      %v539 = vadd.f32 %v368, %v494
      %v540 = vadd.f32 %v407, %v533
      %v541 = vld [vmem:[%s165] sm:$0xff]
      %s542 = scalar_lea.vmem %s1, 12
      %v543 = vld [vmem:[%s542] sm:$0xf]
      %v545 = vcombine.high %v541, %v541
      %v547 = vunpack.c.l.s4 1983009808
      %v548 = vunpack.c.0.s8 %v547
      %v549 = vlaneseq
      %v550 = vshrl.u32 %v549, 7
      %v551 = vsub.s32 %v548, %v550
      %v552 = vrot.slane %v541, %v551
      %v554 = vunpack.c.l.s4 1983009808
      %v555 = vunpack.c.0.s8 %v554
      %v556 = vlaneseq
      %v557 = vshrl.u32 %v556, 7
      %v558 = vsub.s32 %v555, %v557
      %v559 = vrot.slane %v545, %v558
      %v560 = vcombine.high %v552, %v552
      %v561 = vcombine.high %v559, %v559
      %562 = vrot.lane.b32.xlu0 %v552, 125
      %v563 = vpop.permute.xlu0 %562
      %564 = vrot.lane.b32.xlu0 %v560, 125
      %v565 = vpop.permute.xlu0 %564
      %566 = vrot.lane.b32.xlu0 %v559, 125
      %v567 = vpop.permute.xlu0 %566
      %568 = vrot.lane.b32.xlu0 %v561, 125
      %v569 = vpop.permute.xlu0 %568
      %vm570 = vcmask 1022976
      %v571 = vsel %vm570, %v563, %v565
      %v572 = vsel %vm570, %v565, %v567
      %v573 = vsel %vm570, %v567, %v569
      %v575 = vsel %vm207, %v543, 0
      %v578 = vsel %vm211, %v571, 0
      %v581 = vsel %vm211, %v572, 0
      %v584 = vsel %vm211, %v573, 0
      %586 = vmatprep.subr.bf16.mxu0 %v581
      %587 = vmatpush1.bf16.msra.mxu0 %v578
      %588 = vmatprep.subr.bf16.mxu0 0
      %589 = vmatpush1.bf16.msra.mxu0 0
      %590 = vmatprep.subr.bf16.mxu0 0
      %591 = vmatpush1.bf16.msra.mxu0 0
      %592 = vmatprep.subr.bf16.mxu0 0
      %593 = vmatpush1.bf16.msra.mxu0 0
      %594 = vmatprep.subr.bf16.mxu0 0
      %595 = vmatpush1.bf16.msra.mxu0 0
      %596 = vmatprep.subr.bf16.mxu0 0
      %597 = vmatpush1.bf16.msra.mxu0 0
      %598 = vmatprep.subr.bf16.mxu0 0
      %599 = vmatpush1.bf16.msra.mxu0 0
      %600 = vmatprep.subr.bf16.mxu0 0
      %601 = vmatpush1.bf16.msra.mxu0 0
      %602 = vmatprep.subr.bf16.mxu0 0
      %603 = vmatpush1.bf16.msra.mxu0 0
      %604 = vmatprep.subr.bf16.mxu0 0
      %605 = vmatpush1.bf16.msra.mxu0 0
      %606 = vmatprep.subr.bf16.mxu0 0
      %607 = vmatpush1.bf16.msra.mxu0 0
      %608 = vmatprep.subr.bf16.mxu0 0
      %609 = vmatpush1.bf16.msra.mxu0 0
      %610 = vmatprep.subr.bf16.mxu0 0
      %611 = vmatpush1.bf16.msra.mxu0 0
      %612 = vmatprep.subr.bf16.mxu0 0
      %613 = vmatpush1.bf16.msra.mxu0 0
      %614 = vmatprep.subr.bf16.mxu0 0
      %615 = vmatpush1.bf16.msra.mxu0 0
      %616 = vmatprep.subr.bf16.mxu0 0
      %617 = vmatpush1.bf16.msra.mxu0 0
      %618 = vmatprep.mubr.bf16.mxu0 0
      %619 = vmatmul.mubr.bf16.gmra.mrb[0].mxu0 %v575
      %v620 = vpop.f32.mrb[0].mxu0
      %v621 = vadd.f32 0.0, %v620
      %v622 = vpop.f32.mrb[0].mxu0
      %v623 = vadd.f32 0.0, %v622
      %v624 = vpop.f32.mrb[0].mxu0
      %v625 = vpop.f32.mrb[0].mxu0
      %626 = vdwg.mxu0
      %627 = vmatprep.subr.bf16.mxu0 0
      %628 = vmatpush1.bf16.msra.mxu0 %v584
      %629 = vmatprep.subr.bf16.mxu0 0
      %630 = vmatpush1.bf16.msra.mxu0 0
      %631 = vmatprep.subr.bf16.mxu0 0
      %632 = vmatpush1.bf16.msra.mxu0 0
      %633 = vmatprep.subr.bf16.mxu0 0
      %634 = vmatpush1.bf16.msra.mxu0 0
      %635 = vmatprep.subr.bf16.mxu0 0
      %636 = vmatpush1.bf16.msra.mxu0 0
      %637 = vmatprep.subr.bf16.mxu0 0
      %638 = vmatpush1.bf16.msra.mxu0 0
      %639 = vmatprep.subr.bf16.mxu0 0
      %640 = vmatpush1.bf16.msra.mxu0 0
      %641 = vmatprep.subr.bf16.mxu0 0
      %642 = vmatpush1.bf16.msra.mxu0 0
      %643 = vmatprep.subr.bf16.mxu0 0
      %644 = vmatpush1.bf16.msra.mxu0 0
      %645 = vmatprep.subr.bf16.mxu0 0
      %646 = vmatpush1.bf16.msra.mxu0 0
      %647 = vmatprep.subr.bf16.mxu0 0
      %648 = vmatpush1.bf16.msra.mxu0 0
      %649 = vmatprep.subr.bf16.mxu0 0
      %650 = vmatpush1.bf16.msra.mxu0 0
      %651 = vmatprep.subr.bf16.mxu0 0
      %652 = vmatpush1.bf16.msra.mxu0 0
      %653 = vmatprep.subr.bf16.mxu0 0
      %654 = vmatpush1.bf16.msra.mxu0 0
      %655 = vmatprep.subr.bf16.mxu0 0
      %656 = vmatpush1.bf16.msra.mxu0 0
      %657 = vmatprep.subr.bf16.mxu0 0
      %658 = vmatpush1.bf16.msra.mxu0 0
      %659 = vmatprep.mubr.bf16.mxu0 0
      %660 = vmatmul.mubr.bf16.gmra.mrb[0].mxu0 %v575
      %v661 = vpop.f32.mrb[0].mxu0
      %v662 = vadd.f32 0.0, %v661
      %v663 = vpop.f32.mrb[0].mxu0
      %v664 = vpop.f32.mrb[0].mxu0
      %v665 = vpop.f32.mrb[0].mxu0
      %666 = vdwg.mxu0
      %v667 = vadd.f32 %v538, %v621
      %v668 = vadd.f32 %v539, %v623
      %v669 = vadd.f32 %v540, %v662
      %v670 = vld [vmem:[%s165] sm:$0xff]
      %s671 = scalar_lea.vmem %s1, 16
      %v672 = vld [vmem:[%s671] sm:$0xf]
      %v674 = vcombine.high %v670, %v670
      %v676 = vunpack.c.l.s4 1983009808
      %v677 = vunpack.c.0.s8 %v676
      %v678 = vlaneseq
      %v679 = vshrl.u32 %v678, 7
      %v680 = vsub.s32 %v677, %v679
      %v681 = vrot.slane %v670, %v680
      %v683 = vunpack.c.l.s4 1983009808
      %v684 = vunpack.c.0.s8 %v683
      %v685 = vlaneseq
      %v686 = vshrl.u32 %v685, 7
      %v687 = vsub.s32 %v684, %v686
      %v688 = vrot.slane %v674, %v687
      %v689 = vcombine.high %v681, %v681
      %v690 = vcombine.high %v688, %v688
      %691 = vrot.lane.b32.xlu0 %v681, 124
      %v692 = vpop.permute.xlu0 %691
      %693 = vrot.lane.b32.xlu0 %v689, 124
      %v694 = vpop.permute.xlu0 %693
      %695 = vrot.lane.b32.xlu0 %v688, 124
      %v696 = vpop.permute.xlu0 %695
      %697 = vrot.lane.b32.xlu0 %v690, 124
      %v698 = vpop.permute.xlu0 %697
      %vm699 = vcmask 1014784
      %v700 = vsel %vm699, %v692, %v694
      %v701 = vsel %vm699, %v694, %v696
      %v702 = vsel %vm699, %v696, %v698
      %v704 = vsel %vm207, %v672, 0
      %v707 = vsel %vm211, %v700, 0
      %v710 = vsel %vm211, %v701, 0
      %v713 = vsel %vm211, %v702, 0
      %715 = vmatprep.subr.bf16.mxu0 %v710
      %716 = vmatpush1.bf16.msra.mxu0 %v707
      %717 = vmatprep.subr.bf16.mxu0 0
      %718 = vmatpush1.bf16.msra.mxu0 0
      %719 = vmatprep.subr.bf16.mxu0 0
      %720 = vmatpush1.bf16.msra.mxu0 0
      %721 = vmatprep.subr.bf16.mxu0 0
      %722 = vmatpush1.bf16.msra.mxu0 0
      %723 = vmatprep.subr.bf16.mxu0 0
      %724 = vmatpush1.bf16.msra.mxu0 0
      %725 = vmatprep.subr.bf16.mxu0 0
      %726 = vmatpush1.bf16.msra.mxu0 0
      %727 = vmatprep.subr.bf16.mxu0 0
      %728 = vmatpush1.bf16.msra.mxu0 0
      %729 = vmatprep.subr.bf16.mxu0 0
      %730 = vmatpush1.bf16.msra.mxu0 0
      %731 = vmatprep.subr.bf16.mxu0 0
      %732 = vmatpush1.bf16.msra.mxu0 0
      %733 = vmatprep.subr.bf16.mxu0 0
      %734 = vmatpush1.bf16.msra.mxu0 0
      %735 = vmatprep.subr.bf16.mxu0 0
      %736 = vmatpush1.bf16.msra.mxu0 0
      %737 = vmatprep.subr.bf16.mxu0 0
      %738 = vmatpush1.bf16.msra.mxu0 0
      %739 = vmatprep.subr.bf16.mxu0 0
      %740 = vmatpush1.bf16.msra.mxu0 0
      %741 = vmatprep.subr.bf16.mxu0 0
      %742 = vmatpush1.bf16.msra.mxu0 0
      %743 = vmatprep.subr.bf16.mxu0 0
      %744 = vmatpush1.bf16.msra.mxu0 0
      %745 = vmatprep.subr.bf16.mxu0 0
      %746 = vmatpush1.bf16.msra.mxu0 0
      %747 = vmatprep.mubr.bf16.mxu0 0
      %748 = vmatmul.mubr.bf16.gmra.mrb[0].mxu0 %v704
      %v749 = vpop.f32.mrb[0].mxu0
      %v750 = vadd.f32 0.0, %v749
      %v751 = vpop.f32.mrb[0].mxu0
      %v752 = vadd.f32 0.0, %v751
      %v753 = vpop.f32.mrb[0].mxu0
      %v754 = vpop.f32.mrb[0].mxu0
      %755 = vdwg.mxu0
      %756 = vmatprep.subr.bf16.mxu0 0
      %757 = vmatpush1.bf16.msra.mxu0 %v713
      %758 = vmatprep.subr.bf16.mxu0 0
      %759 = vmatpush1.bf16.msra.mxu0 0
      %760 = vmatprep.subr.bf16.mxu0 0
      %761 = vmatpush1.bf16.msra.mxu0 0
      %762 = vmatprep.subr.bf16.mxu0 0
      %763 = vmatpush1.bf16.msra.mxu0 0
      %764 = vmatprep.subr.bf16.mxu0 0
      %765 = vmatpush1.bf16.msra.mxu0 0
      %766 = vmatprep.subr.bf16.mxu0 0
      %767 = vmatpush1.bf16.msra.mxu0 0
      %768 = vmatprep.subr.bf16.mxu0 0
      %769 = vmatpush1.bf16.msra.mxu0 0
      %770 = vmatprep.subr.bf16.mxu0 0
      %771 = vmatpush1.bf16.msra.mxu0 0
      %772 = vmatprep.subr.bf16.mxu0 0
      %773 = vmatpush1.bf16.msra.mxu0 0
      %774 = vmatprep.subr.bf16.mxu0 0
      %775 = vmatpush1.bf16.msra.mxu0 0
      %776 = vmatprep.subr.bf16.mxu0 0
      %777 = vmatpush1.bf16.msra.mxu0 0
      %778 = vmatprep.subr.bf16.mxu0 0
      %779 = vmatpush1.bf16.msra.mxu0 0
      %780 = vmatprep.subr.bf16.mxu0 0
      %781 = vmatpush1.bf16.msra.mxu0 0
      %782 = vmatprep.subr.bf16.mxu0 0
      %783 = vmatpush1.bf16.msra.mxu0 0
      %784 = vmatprep.subr.bf16.mxu0 0
      %785 = vmatpush1.bf16.msra.mxu0 0
      %786 = vmatprep.subr.bf16.mxu0 0
      %787 = vmatpush1.bf16.msra.mxu0 0
      %788 = vmatprep.mubr.bf16.mxu0 0
      %789 = vmatmul.mubr.bf16.gmra.mrb[0].mxu0 %v704
      %v790 = vpop.f32.mrb[0].mxu0
      %v791 = vadd.f32 0.0, %v790
      %v792 = vpop.f32.mrb[0].mxu0
      %v793 = vpop.f32.mrb[0].mxu0
      %v794 = vpop.f32.mrb[0].mxu0
      %795 = vdwg.mxu0
      %v796 = vadd.f32 %v667, %v750
      %v797 = vadd.f32 %v668, %v752
      %v798 = vadd.f32 %v669, %v791
      %v799 = vld [vmem:[%s165] sm:$0xff]
      %s800 = scalar_lea.vmem %s1, 20
      %v801 = vld [vmem:[%s800] sm:$0xf]
      %v803 = vcombine.high %v799, %v799
      %v805 = vunpack.c.l.s4 1983009808
      %v806 = vunpack.c.0.s8 %v805
      %v807 = vlaneseq
      %v808 = vshrl.u32 %v807, 7
      %v809 = vsub.s32 %v806, %v808
      %v810 = vrot.slane %v799, %v809
      %v812 = vunpack.c.l.s4 1983009808
      %v813 = vunpack.c.0.s8 %v812
      %v814 = vlaneseq
      %v815 = vshrl.u32 %v814, 7
      %v816 = vsub.s32 %v813, %v815
      %v817 = vrot.slane %v803, %v816
      %v818 = vcombine.high %v810, %v810
      %v819 = vcombine.high %v817, %v817
      %820 = vrot.lane.b32.xlu0 %v810, 123
      %v821 = vpop.permute.xlu0 %820
      %822 = vrot.lane.b32.xlu0 %v818, 123
      %v823 = vpop.permute.xlu0 %822
      %824 = vrot.lane.b32.xlu0 %v817, 123
      %v825 = vpop.permute.xlu0 %824
      %826 = vrot.lane.b32.xlu0 %v819, 123
      %v827 = vpop.permute.xlu0 %826
      %vm828 = vcmask 1006592
      %v829 = vsel %vm828, %v821, %v823
      %v830 = vsel %vm828, %v823, %v825
      %v831 = vsel %vm828, %v825, %v827
      %v833 = vsel %vm207, %v801, 0
      %v836 = vsel %vm211, %v829, 0
      %v839 = vsel %vm211, %v830, 0
      %v842 = vsel %vm211, %v831, 0
      %844 = vmatprep.subr.bf16.mxu0 %v839
      %845 = vmatpush1.bf16.msra.mxu0 %v836
      %846 = vmatprep.subr.bf16.mxu0 0
      %847 = vmatpush1.bf16.msra.mxu0 0
      %848 = vmatprep.subr.bf16.mxu0 0
      %849 = vmatpush1.bf16.msra.mxu0 0
      %850 = vmatprep.subr.bf16.mxu0 0
      %851 = vmatpush1.bf16.msra.mxu0 0
      %852 = vmatprep.subr.bf16.mxu0 0
      %853 = vmatpush1.bf16.msra.mxu0 0
      %854 = vmatprep.subr.bf16.mxu0 0
      %855 = vmatpush1.bf16.msra.mxu0 0
      %856 = vmatprep.subr.bf16.mxu0 0
      %857 = vmatpush1.bf16.msra.mxu0 0
      %858 = vmatprep.subr.bf16.mxu0 0
      %859 = vmatpush1.bf16.msra.mxu0 0
      %860 = vmatprep.subr.bf16.mxu0 0
      %861 = vmatpush1.bf16.msra.mxu0 0
      %862 = vmatprep.subr.bf16.mxu0 0
      %863 = vmatpush1.bf16.msra.mxu0 0
      %864 = vmatprep.subr.bf16.mxu0 0
      %865 = vmatpush1.bf16.msra.mxu0 0
      %866 = vmatprep.subr.bf16.mxu0 0
      %867 = vmatpush1.bf16.msra.mxu0 0
      %868 = vmatprep.subr.bf16.mxu0 0
      %869 = vmatpush1.bf16.msra.mxu0 0
      %870 = vmatprep.subr.bf16.mxu0 0
      %871 = vmatpush1.bf16.msra.mxu0 0
      %872 = vmatprep.subr.bf16.mxu0 0
      %873 = vmatpush1.bf16.msra.mxu0 0
      %874 = vmatprep.subr.bf16.mxu0 0
      %875 = vmatpush1.bf16.msra.mxu0 0
      %876 = vmatprep.mubr.bf16.mxu0 0
      %877 = vmatmul.mubr.bf16.gmra.mrb[0].mxu0 %v833
      %v878 = vpop.f32.mrb[0].mxu0
      %v879 = vadd.f32 0.0, %v878
      %v880 = vpop.f32.mrb[0].mxu0
      %v881 = vadd.f32 0.0, %v880
      %v882 = vpop.f32.mrb[0].mxu0
      %v883 = vpop.f32.mrb[0].mxu0
      %884 = vdwg.mxu0
      %885 = vmatprep.subr.bf16.mxu0 0
      %886 = vmatpush1.bf16.msra.mxu0 %v842
      %887 = vmatprep.subr.bf16.mxu0 0
      %888 = vmatpush1.bf16.msra.mxu0 0
      %889 = vmatprep.subr.bf16.mxu0 0
      %890 = vmatpush1.bf16.msra.mxu0 0
      %891 = vmatprep.subr.bf16.mxu0 0
      %892 = vmatpush1.bf16.msra.mxu0 0
      %893 = vmatprep.subr.bf16.mxu0 0
      %894 = vmatpush1.bf16.msra.mxu0 0
      %895 = vmatprep.subr.bf16.mxu0 0
      %896 = vmatpush1.bf16.msra.mxu0 0
      %897 = vmatprep.subr.bf16.mxu0 0
      %898 = vmatpush1.bf16.msra.mxu0 0
      %899 = vmatprep.subr.bf16.mxu0 0
      %900 = vmatpush1.bf16.msra.mxu0 0
      %901 = vmatprep.subr.bf16.mxu0 0
      %902 = vmatpush1.bf16.msra.mxu0 0
      %903 = vmatprep.subr.bf16.mxu0 0
      %904 = vmatpush1.bf16.msra.mxu0 0
      %905 = vmatprep.subr.bf16.mxu0 0
      %906 = vmatpush1.bf16.msra.mxu0 0
      %907 = vmatprep.subr.bf16.mxu0 0
      %908 = vmatpush1.bf16.msra.mxu0 0
      %909 = vmatprep.subr.bf16.mxu0 0
      %910 = vmatpush1.bf16.msra.mxu0 0
      %911 = vmatprep.subr.bf16.mxu0 0
      %912 = vmatpush1.bf16.msra.mxu0 0
      %913 = vmatprep.subr.bf16.mxu0 0
      %914 = vmatpush1.bf16.msra.mxu0 0
      %915 = vmatprep.subr.bf16.mxu0 0
      %916 = vmatpush1.bf16.msra.mxu0 0
      %917 = vmatprep.mubr.bf16.mxu0 0
      %918 = vmatmul.mubr.bf16.gmra.mrb[0].mxu0 %v833
      %v919 = vpop.f32.mrb[0].mxu0
      %v920 = vadd.f32 0.0, %v919
      %v921 = vpop.f32.mrb[0].mxu0
      %v922 = vpop.f32.mrb[0].mxu0
      %v923 = vpop.f32.mrb[0].mxu0
      %924 = vdwg.mxu0
      %v925 = vadd.f32 %v796, %v879
      %v926 = vadd.f32 %v797, %v881
      %v927 = vadd.f32 %v798, %v920
      %v928 = vld [vmem:[%s165] sm:$0xff]
      %s929 = scalar_lea.vmem %s1, 24
      %v930 = vld [vmem:[%s929] sm:$0xf]
      %v932 = vcombine.high %v928, %v928
      %v934 = vunpack.c.l.s4 1983009808
      %v935 = vunpack.c.0.s8 %v934
      %v936 = vlaneseq
      %v937 = vshrl.u32 %v936, 7
      %v938 = vsub.s32 %v935, %v937
      %v939 = vrot.slane %v928, %v938
      %v941 = vunpack.c.l.s4 1983009808
      %v942 = vunpack.c.0.s8 %v941
      %v943 = vlaneseq
      %v944 = vshrl.u32 %v943, 7
      %v945 = vsub.s32 %v942, %v944
      %v946 = vrot.slane %v932, %v945
      %v947 = vcombine.high %v939, %v939
      %v948 = vcombine.high %v946, %v946
      %949 = vrot.lane.b32.xlu0 %v939, 122
      %v950 = vpop.permute.xlu0 %949
      %951 = vrot.lane.b32.xlu0 %v947, 122
      %v952 = vpop.permute.xlu0 %951
      %953 = vrot.lane.b32.xlu0 %v946, 122
      %v954 = vpop.permute.xlu0 %953
      %955 = vrot.lane.b32.xlu0 %v948, 122
      %v956 = vpop.permute.xlu0 %955
      %vm957 = vcmask 998400
      %v958 = vsel %vm957, %v950, %v952
      %v959 = vsel %vm957, %v952, %v954
      %v960 = vsel %vm957, %v954, %v956
      %v962 = vsel %vm207, %v930, 0
      %v965 = vsel %vm211, %v958, 0
      %v968 = vsel %vm211, %v959, 0
      %v971 = vsel %vm211, %v960, 0
      %973 = vmatprep.subr.bf16.mxu0 %v968
      %974 = vmatpush1.bf16.msra.mxu0 %v965
      %975 = vmatprep.subr.bf16.mxu0 0
      %976 = vmatpush1.bf16.msra.mxu0 0
      %977 = vmatprep.subr.bf16.mxu0 0
      %978 = vmatpush1.bf16.msra.mxu0 0
      %979 = vmatprep.subr.bf16.mxu0 0
      %980 = vmatpush1.bf16.msra.mxu0 0
      %981 = vmatprep.subr.bf16.mxu0 0
      %982 = vmatpush1.bf16.msra.mxu0 0
      %983 = vmatprep.subr.bf16.mxu0 0
      %984 = vmatpush1.bf16.msra.mxu0 0
      %985 = vmatprep.subr.bf16.mxu0 0
      %986 = vmatpush1.bf16.msra.mxu0 0
      %987 = vmatprep.subr.bf16.mxu0 0
      %988 = vmatpush1.bf16.msra.mxu0 0
      %989 = vmatprep.subr.bf16.mxu0 0
      %990 = vmatpush1.bf16.msra.mxu0 0
      %991 = vmatprep.subr.bf16.mxu0 0
      %992 = vmatpush1.bf16.msra.mxu0 0
      %993 = vmatprep.subr.bf16.mxu0 0
      %994 = vmatpush1.bf16.msra.mxu0 0
      %995 = vmatprep.subr.bf16.mxu0 0
      %996 = vmatpush1.bf16.msra.mxu0 0
      %997 = vmatprep.subr.bf16.mxu0 0
      %998 = vmatpush1.bf16.msra.mxu0 0
      %999 = vmatprep.subr.bf16.mxu0 0
      %1000 = vmatpush1.bf16.msra.mxu0 0
      %1001 = vmatprep.subr.bf16.mxu0 0
      %1002 = vmatpush1.bf16.msra.mxu0 0
      %1003 = vmatprep.subr.bf16.mxu0 0
      %1004 = vmatpush1.bf16.msra.mxu0 0
      %1005 = vmatprep.mubr.bf16.mxu0 0
      %1006 = vmatmul.mubr.bf16.gmra.mrb[0].mxu0 %v962
      %v1007 = vpop.f32.mrb[0].mxu0
      %v1008 = vadd.f32 0.0, %v1007
      %v1009 = vpop.f32.mrb[0].mxu0
      %v1010 = vadd.f32 0.0, %v1009
      %v1011 = vpop.f32.mrb[0].mxu0
      %v1012 = vpop.f32.mrb[0].mxu0
      %1013 = vdwg.mxu0
      %1014 = vmatprep.subr.bf16.mxu0 0
      %1015 = vmatpush1.bf16.msra.mxu0 %v971
      %1016 = vmatprep.subr.bf16.mxu0 0
      %1017 = vmatpush1.bf16.msra.mxu0 0
      %1018 = vmatprep.subr.bf16.mxu0 0
      %1019 = vmatpush1.bf16.msra.mxu0 0
      %1020 = vmatprep.subr.bf16.mxu0 0
      %1021 = vmatpush1.bf16.msra.mxu0 0
      %1022 = vmatprep.subr.bf16.mxu0 0
      %1023 = vmatpush1.bf16.msra.mxu0 0
      %1024 = vmatprep.subr.bf16.mxu0 0
      %1025 = vmatpush1.bf16.msra.mxu0 0
      %1026 = vmatprep.subr.bf16.mxu0 0
      %1027 = vmatpush1.bf16.msra.mxu0 0
      %1028 = vmatprep.subr.bf16.mxu0 0
      %1029 = vmatpush1.bf16.msra.mxu0 0
      %1030 = vmatprep.subr.bf16.mxu0 0
      %1031 = vmatpush1.bf16.msra.mxu0 0
      %1032 = vmatprep.subr.bf16.mxu0 0
      %1033 = vmatpush1.bf16.msra.mxu0 0
      %1034 = vmatprep.subr.bf16.mxu0 0
      %1035 = vmatpush1.bf16.msra.mxu0 0
      %1036 = vmatprep.subr.bf16.mxu0 0
      %1037 = vmatpush1.bf16.msra.mxu0 0
      %1038 = vmatprep.subr.bf16.mxu0 0
      %1039 = vmatpush1.bf16.msra.mxu0 0
      %1040 = vmatprep.subr.bf16.mxu0 0
      %1041 = vmatpush1.bf16.msra.mxu0 0
      %1042 = vmatprep.subr.bf16.mxu0 0
      %1043 = vmatpush1.bf16.msra.mxu0 0
      %1044 = vmatprep.subr.bf16.mxu0 0
      %1045 = vmatpush1.bf16.msra.mxu0 0
      %1046 = vmatprep.mubr.bf16.mxu0 0
      %1047 = vmatmul.mubr.bf16.gmra.mrb[0].mxu0 %v962
      %v1048 = vpop.f32.mrb[0].mxu0
      %v1049 = vadd.f32 0.0, %v1048
      %v1050 = vpop.f32.mrb[0].mxu0
      %v1051 = vpop.f32.mrb[0].mxu0
      %v1052 = vpop.f32.mrb[0].mxu0
      %1053 = vdwg.mxu0
      %v1054 = vadd.f32 %v925, %v1008
      %v1055 = vadd.f32 %v926, %v1010
      %v1056 = vadd.f32 %v927, %v1049
      %v1057 = vld [vmem:[%s165] sm:$0xff]
      %s1058 = scalar_lea.vmem %s1, 28
      %v1059 = vld [vmem:[%s1058] sm:$0xf]
      %v1061 = vcombine.high %v1057, %v1057
      %v1063 = vunpack.c.l.s4 1983009808
      %v1064 = vunpack.c.0.s8 %v1063
      %v1065 = vlaneseq
      %v1066 = vshrl.u32 %v1065, 7
      %v1067 = vsub.s32 %v1064, %v1066
      %v1068 = vrot.slane %v1057, %v1067
      %v1070 = vunpack.c.l.s4 1983009808
      %v1071 = vunpack.c.0.s8 %v1070
      %v1072 = vlaneseq
      %v1073 = vshrl.u32 %v1072, 7
      %v1074 = vsub.s32 %v1071, %v1073
      %v1075 = vrot.slane %v1061, %v1074
      %v1076 = vcombine.high %v1068, %v1068
      %v1077 = vcombine.high %v1075, %v1075
      %1078 = vrot.lane.b32.xlu0 %v1068, 106
      %v1079 = vpop.permute.xlu0 %1078
      %1080 = vrot.lane.b32.xlu0 %v1076, 106
      %v1081 = vpop.permute.xlu0 %1080
      %1082 = vrot.lane.b32.xlu0 %v1075, 106
      %v1083 = vpop.permute.xlu0 %1082
      %1084 = vrot.lane.b32.xlu0 %v1077, 106
      %v1085 = vpop.permute.xlu0 %1084
      %vm1086 = vcmask 867328
      %v1087 = vsel %vm1086, %v1079, %v1081
      %v1088 = vsel %vm1086, %v1081, %v1083
      %v1089 = vsel %vm1086, %v1083, %v1085
      %v1091 = vsel %vm207, %v1059, 0
      %v1094 = vsel %vm211, %v1087, 0
      %v1097 = vsel %vm211, %v1088, 0
      %v1100 = vsel %vm211, %v1089, 0
      %1102 = vmatprep.subr.bf16.mxu0 %v1097
      %1103 = vmatpush1.bf16.msra.mxu0 %v1094
      %1104 = vmatprep.subr.bf16.mxu0 0
      %1105 = vmatpush1.bf16.msra.mxu0 0
      %1106 = vmatprep.subr.bf16.mxu0 0
      %1107 = vmatpush1.bf16.msra.mxu0 0
      %1108 = vmatprep.subr.bf16.mxu0 0
      %1109 = vmatpush1.bf16.msra.mxu0 0
      %1110 = vmatprep.subr.bf16.mxu0 0
      %1111 = vmatpush1.bf16.msra.mxu0 0
      %1112 = vmatprep.subr.bf16.mxu0 0
      %1113 = vmatpush1.bf16.msra.mxu0 0
      %1114 = vmatprep.subr.bf16.mxu0 0
      %1115 = vmatpush1.bf16.msra.mxu0 0
      %1116 = vmatprep.subr.bf16.mxu0 0
      %1117 = vmatpush1.bf16.msra.mxu0 0
      %1118 = vmatprep.subr.bf16.mxu0 0
      %1119 = vmatpush1.bf16.msra.mxu0 0
      %1120 = vmatprep.subr.bf16.mxu0 0
      %1121 = vmatpush1.bf16.msra.mxu0 0
      %1122 = vmatprep.subr.bf16.mxu0 0
      %1123 = vmatpush1.bf16.msra.mxu0 0
      %1124 = vmatprep.subr.bf16.mxu0 0
      %1125 = vmatpush1.bf16.msra.mxu0 0
      %1126 = vmatprep.subr.bf16.mxu0 0
      %1127 = vmatpush1.bf16.msra.mxu0 0
      %1128 = vmatprep.subr.bf16.mxu0 0
      %1129 = vmatpush1.bf16.msra.mxu0 0
      %1130 = vmatprep.subr.bf16.mxu0 0
      %1131 = vmatpush1.bf16.msra.mxu0 0
      %1132 = vmatprep.subr.bf16.mxu0 0
      %1133 = vmatpush1.bf16.msra.mxu0 0
      %1134 = vmatprep.mubr.bf16.mxu0 0
      %1135 = vmatmul.mubr.bf16.gmra.mrb[0].mxu0 %v1091
      %v1136 = vpop.f32.mrb[0].mxu0
      %v1137 = vadd.f32 0.0, %v1136
      %v1138 = vpop.f32.mrb[0].mxu0
      %v1139 = vadd.f32 0.0, %v1138
      %v1140 = vpop.f32.mrb[0].mxu0
      %v1141 = vpop.f32.mrb[0].mxu0
      %1142 = vdwg.mxu0
      %1143 = vmatprep.subr.bf16.mxu0 0
      %1144 = vmatpush1.bf16.msra.mxu0 %v1100
      %1145 = vmatprep.subr.bf16.mxu0 0
      %1146 = vmatpush1.bf16.msra.mxu0 0
      %1147 = vmatprep.subr.bf16.mxu0 0
      %1148 = vmatpush1.bf16.msra.mxu0 0
      %1149 = vmatprep.subr.bf16.mxu0 0
      %1150 = vmatpush1.bf16.msra.mxu0 0
      %1151 = vmatprep.subr.bf16.mxu0 0
      %1152 = vmatpush1.bf16.msra.mxu0 0
      %1153 = vmatprep.subr.bf16.mxu0 0
      %1154 = vmatpush1.bf16.msra.mxu0 0
      %1155 = vmatprep.subr.bf16.mxu0 0
      %1156 = vmatpush1.bf16.msra.mxu0 0
      %1157 = vmatprep.subr.bf16.mxu0 0
      %1158 = vmatpush1.bf16.msra.mxu0 0
      %1159 = vmatprep.subr.bf16.mxu0 0
      %1160 = vmatpush1.bf16.msra.mxu0 0
      %1161 = vmatprep.subr.bf16.mxu0 0
      %1162 = vmatpush1.bf16.msra.mxu0 0
      %1163 = vmatprep.subr.bf16.mxu0 0
      %1164 = vmatpush1.bf16.msra.mxu0 0
      %1165 = vmatprep.subr.bf16.mxu0 0
      %1166 = vmatpush1.bf16.msra.mxu0 0
      %1167 = vmatprep.subr.bf16.mxu0 0
      %1168 = vmatpush1.bf16.msra.mxu0 0
      %1169 = vmatprep.subr.bf16.mxu0 0
      %1170 = vmatpush1.bf16.msra.mxu0 0
      %1171 = vmatprep.subr.bf16.mxu0 0
      %1172 = vmatpush1.bf16.msra.mxu0 0
      %1173 = vmatprep.subr.bf16.mxu0 0
      %1174 = vmatpush1.bf16.msra.mxu0 0
      %1175 = vmatprep.mubr.bf16.mxu0 0
      %1176 = vmatmul.mubr.bf16.gmra.mrb[0].mxu0 %v1091
      %v1177 = vpop.f32.mrb[0].mxu0
      %v1178 = vadd.f32 0.0, %v1177
      %v1179 = vpop.f32.mrb[0].mxu0
      %v1180 = vpop.f32.mrb[0].mxu0
      %v1181 = vpop.f32.mrb[0].mxu0
      %1182 = vdwg.mxu0
      %v1183 = vadd.f32 %v1054, %v1137
      %v1184 = vadd.f32 %v1055, %v1139
      %v1185 = vadd.f32 %v1056, %v1178
      %v1186 = vld [vmem:[%s165] sm:$0xff]
      %s1187 = scalar_lea.vmem %s1, 32
      %v1188 = vld [vmem:[%s1187] sm:$0xf]
      %v1190 = vcombine.high %v1186, %v1186
      %v1192 = vunpack.c.l.s4 1983009808
      %v1193 = vunpack.c.0.s8 %v1192
      %v1194 = vlaneseq
      %v1195 = vshrl.u32 %v1194, 7
      %v1196 = vsub.s32 %v1193, %v1195
      %v1197 = vrot.slane %v1186, %v1196
      %v1199 = vunpack.c.l.s4 1983009808
      %v1200 = vunpack.c.0.s8 %v1199
      %v1201 = vlaneseq
      %v1202 = vshrl.u32 %v1201, 7
      %v1203 = vsub.s32 %v1200, %v1202
      %v1204 = vrot.slane %v1190, %v1203
      %v1205 = vcombine.high %v1197, %v1197
      %v1206 = vcombine.high %v1204, %v1204
      %1207 = vrot.lane.b32.xlu0 %v1197, 105
      %v1208 = vpop.permute.xlu0 %1207
      %1209 = vrot.lane.b32.xlu0 %v1205, 105
      %v1210 = vpop.permute.xlu0 %1209
      %1211 = vrot.lane.b32.xlu0 %v1204, 105
      %v1212 = vpop.permute.xlu0 %1211
      %1213 = vrot.lane.b32.xlu0 %v1206, 105
      %v1214 = vpop.permute.xlu0 %1213
      %vm1215 = vcmask 859136
      %v1216 = vsel %vm1215, %v1208, %v1210
      %v1217 = vsel %vm1215, %v1210, %v1212
      %v1218 = vsel %vm1215, %v1212, %v1214
      %v1220 = vsel %vm207, %v1188, 0
      %v1223 = vsel %vm211, %v1216, 0
      %v1226 = vsel %vm211, %v1217, 0
      %v1229 = vsel %vm211, %v1218, 0
      %1231 = vmatprep.subr.bf16.mxu0 %v1226
      %1232 = vmatpush1.bf16.msra.mxu0 %v1223
      %1233 = vmatprep.subr.bf16.mxu0 0
      %1234 = vmatpush1.bf16.msra.mxu0 0
      %1235 = vmatprep.subr.bf16.mxu0 0
      %1236 = vmatpush1.bf16.msra.mxu0 0
      %1237 = vmatprep.subr.bf16.mxu0 0
      %1238 = vmatpush1.bf16.msra.mxu0 0
      %1239 = vmatprep.subr.bf16.mxu0 0
      %1240 = vmatpush1.bf16.msra.mxu0 0
      %1241 = vmatprep.subr.bf16.mxu0 0
      %1242 = vmatpush1.bf16.msra.mxu0 0
      %1243 = vmatprep.subr.bf16.mxu0 0
      %1244 = vmatpush1.bf16.msra.mxu0 0
      %1245 = vmatprep.subr.bf16.mxu0 0
      %1246 = vmatpush1.bf16.msra.mxu0 0
      %1247 = vmatprep.subr.bf16.mxu0 0
      %1248 = vmatpush1.bf16.msra.mxu0 0
      %1249 = vmatprep.subr.bf16.mxu0 0
      %1250 = vmatpush1.bf16.msra.mxu0 0
      %1251 = vmatprep.subr.bf16.mxu0 0
      %1252 = vmatpush1.bf16.msra.mxu0 0
      %1253 = vmatprep.subr.bf16.mxu0 0
      %1254 = vmatpush1.bf16.msra.mxu0 0
      %1255 = vmatprep.subr.bf16.mxu0 0
      %1256 = vmatpush1.bf16.msra.mxu0 0
      %1257 = vmatprep.subr.bf16.mxu0 0
      %1258 = vmatpush1.bf16.msra.mxu0 0
      %1259 = vmatprep.subr.bf16.mxu0 0
      %1260 = vmatpush1.bf16.msra.mxu0 0
      %1261 = vmatprep.subr.bf16.mxu0 0
      %1262 = vmatpush1.bf16.msra.mxu0 0
      %1263 = vmatprep.mubr.bf16.mxu0 0
      %1264 = vmatmul.mubr.bf16.gmra.mrb[0].mxu0 %v1220
      %v1265 = vpop.f32.mrb[0].mxu0
      %v1266 = vadd.f32 0.0, %v1265
      %v1267 = vpop.f32.mrb[0].mxu0
      %v1268 = vadd.f32 0.0, %v1267
      %v1269 = vpop.f32.mrb[0].mxu0
      %v1270 = vpop.f32.mrb[0].mxu0
      %1271 = vdwg.mxu0
      %1272 = vmatprep.subr.bf16.mxu0 0
      %1273 = vmatpush1.bf16.msra.mxu0 %v1229
      %1274 = vmatprep.subr.bf16.mxu0 0
      %1275 = vmatpush1.bf16.msra.mxu0 0
      %1276 = vmatprep.subr.bf16.mxu0 0
      %1277 = vmatpush1.bf16.msra.mxu0 0
      %1278 = vmatprep.subr.bf16.mxu0 0
      %1279 = vmatpush1.bf16.msra.mxu0 0
      %1280 = vmatprep.subr.bf16.mxu0 0
      %1281 = vmatpush1.bf16.msra.mxu0 0
      %1282 = vmatprep.subr.bf16.mxu0 0
      %1283 = vmatpush1.bf16.msra.mxu0 0
      %1284 = vmatprep.subr.bf16.mxu0 0
      %1285 = vmatpush1.bf16.msra.mxu0 0
      %1286 = vmatprep.subr.bf16.mxu0 0
      %1287 = vmatpush1.bf16.msra.mxu0 0
      %1288 = vmatprep.subr.bf16.mxu0 0
      %1289 = vmatpush1.bf16.msra.mxu0 0
      %1290 = vmatprep.subr.bf16.mxu0 0
      %1291 = vmatpush1.bf16.msra.mxu0 0
      %1292 = vmatprep.subr.bf16.mxu0 0
      %1293 = vmatpush1.bf16.msra.mxu0 0
      %1294 = vmatprep.subr.bf16.mxu0 0
      %1295 = vmatpush1.bf16.msra.mxu0 0
      %1296 = vmatprep.subr.bf16.mxu0 0
      %1297 = vmatpush1.bf16.msra.mxu0 0
      %1298 = vmatprep.subr.bf16.mxu0 0
      %1299 = vmatpush1.bf16.msra.mxu0 0
      %1300 = vmatprep.subr.bf16.mxu0 0
      %1301 = vmatpush1.bf16.msra.mxu0 0
      %1302 = vmatprep.subr.bf16.mxu0 0
      %1303 = vmatpush1.bf16.msra.mxu0 0
      %1304 = vmatprep.mubr.bf16.mxu0 0
      %1305 = vmatmul.mubr.bf16.gmra.mrb[0].mxu0 %v1220
      %v1306 = vpop.f32.mrb[0].mxu0
      %v1307 = vadd.f32 0.0, %v1306
      %v1308 = vpop.f32.mrb[0].mxu0
      %v1309 = vpop.f32.mrb[0].mxu0
      %v1310 = vpop.f32.mrb[0].mxu0
      %1311 = vdwg.mxu0
      %v1312 = vadd.f32 %v1183, %v1266
      %v1313 = vadd.f32 %v1184, %v1268
      %v1314 = vadd.f32 %v1185, %v1307
      %v1315 = vld [vmem:[%s165] sm:$0xff]
      %s1316 = scalar_lea.vmem %s1, 36
      %v1317 = vld [vmem:[%s1316] sm:$0xf]
      %v1319 = vcombine.high %v1315, %v1315
      %v1321 = vunpack.c.l.s4 1983009808
      %v1322 = vunpack.c.0.s8 %v1321
      %v1323 = vlaneseq
      %v1324 = vshrl.u32 %v1323, 7
      %v1325 = vsub.s32 %v1322, %v1324
      %v1326 = vrot.slane %v1315, %v1325
      %v1328 = vunpack.c.l.s4 1983009808
      %v1329 = vunpack.c.0.s8 %v1328
      %v1330 = vlaneseq
      %v1331 = vshrl.u32 %v1330, 7
      %v1332 = vsub.s32 %v1329, %v1331
      %v1333 = vrot.slane %v1319, %v1332
      %v1334 = vcombine.high %v1326, %v1326
      %v1335 = vcombine.high %v1333, %v1333
      %1336 = vrot.lane.b32.xlu0 %v1326, 104
      %v1337 = vpop.permute.xlu0 %1336
      %1338 = vrot.lane.b32.xlu0 %v1334, 104
      %v1339 = vpop.permute.xlu0 %1338
      %1340 = vrot.lane.b32.xlu0 %v1333, 104
      %v1341 = vpop.permute.xlu0 %1340
      %1342 = vrot.lane.b32.xlu0 %v1335, 104
      %v1343 = vpop.permute.xlu0 %1342
      %vm1344 = vcmask 850944
      %v1345 = vsel %vm1344, %v1337, %v1339
      %v1346 = vsel %vm1344, %v1339, %v1341
      %v1347 = vsel %vm1344, %v1341, %v1343
      %v1349 = vsel %vm207, %v1317, 0
      %v1352 = vsel %vm211, %v1345, 0
      %v1355 = vsel %vm211, %v1346, 0
      %v1358 = vsel %vm211, %v1347, 0
      %1360 = vmatprep.subr.bf16.mxu0 %v1355
      %1361 = vmatpush1.bf16.msra.mxu0 %v1352
      %1362 = vmatprep.subr.bf16.mxu0 0
      %1363 = vmatpush1.bf16.msra.mxu0 0
      %1364 = vmatprep.subr.bf16.mxu0 0
      %1365 = vmatpush1.bf16.msra.mxu0 0
      %1366 = vmatprep.subr.bf16.mxu0 0
      %1367 = vmatpush1.bf16.msra.mxu0 0
      %1368 = vmatprep.subr.bf16.mxu0 0
      %1369 = vmatpush1.bf16.msra.mxu0 0
      %1370 = vmatprep.subr.bf16.mxu0 0
      %1371 = vmatpush1.bf16.msra.mxu0 0
      %1372 = vmatprep.subr.bf16.mxu0 0
      %1373 = vmatpush1.bf16.msra.mxu0 0
      %1374 = vmatprep.subr.bf16.mxu0 0
      %1375 = vmatpush1.bf16.msra.mxu0 0
      %1376 = vmatprep.subr.bf16.mxu0 0
      %1377 = vmatpush1.bf16.msra.mxu0 0
      %1378 = vmatprep.subr.bf16.mxu0 0
      %1379 = vmatpush1.bf16.msra.mxu0 0
      %1380 = vmatprep.subr.bf16.mxu0 0
      %1381 = vmatpush1.bf16.msra.mxu0 0
      %1382 = vmatprep.subr.bf16.mxu0 0
      %1383 = vmatpush1.bf16.msra.mxu0 0
      %1384 = vmatprep.subr.bf16.mxu0 0
      %1385 = vmatpush1.bf16.msra.mxu0 0
      %1386 = vmatprep.subr.bf16.mxu0 0
      %1387 = vmatpush1.bf16.msra.mxu0 0
      %1388 = vmatprep.subr.bf16.mxu0 0
      %1389 = vmatpush1.bf16.msra.mxu0 0
      %1390 = vmatprep.subr.bf16.mxu0 0
      %1391 = vmatpush1.bf16.msra.mxu0 0
      %1392 = vmatprep.mubr.bf16.mxu0 0
      %1393 = vmatmul.mubr.bf16.gmra.mrb[0].mxu0 %v1349
      %v1394 = vpop.f32.mrb[0].mxu0
      %v1395 = vadd.f32 0.0, %v1394
      %v1396 = vpop.f32.mrb[0].mxu0
      %v1397 = vadd.f32 0.0, %v1396
      %v1398 = vpop.f32.mrb[0].mxu0
      %v1399 = vpop.f32.mrb[0].mxu0
      %1400 = vdwg.mxu0
      %1401 = vmatprep.subr.bf16.mxu0 0
      %1402 = vmatpush1.bf16.msra.mxu0 %v1358
      %1403 = vmatprep.subr.bf16.mxu0 0
      %1404 = vmatpush1.bf16.msra.mxu0 0
      %1405 = vmatprep.subr.bf16.mxu0 0
      %1406 = vmatpush1.bf16.msra.mxu0 0
      %1407 = vmatprep.subr.bf16.mxu0 0
      %1408 = vmatpush1.bf16.msra.mxu0 0
      %1409 = vmatprep.subr.bf16.mxu0 0
      %1410 = vmatpush1.bf16.msra.mxu0 0
      %1411 = vmatprep.subr.bf16.mxu0 0
      %1412 = vmatpush1.bf16.msra.mxu0 0
      %1413 = vmatprep.subr.bf16.mxu0 0
      %1414 = vmatpush1.bf16.msra.mxu0 0
      %1415 = vmatprep.subr.bf16.mxu0 0
      %1416 = vmatpush1.bf16.msra.mxu0 0
      %1417 = vmatprep.subr.bf16.mxu0 0
      %1418 = vmatpush1.bf16.msra.mxu0 0
      %1419 = vmatprep.subr.bf16.mxu0 0
      %1420 = vmatpush1.bf16.msra.mxu0 0
      %1421 = vmatprep.subr.bf16.mxu0 0
      %1422 = vmatpush1.bf16.msra.mxu0 0
      %1423 = vmatprep.subr.bf16.mxu0 0
      %1424 = vmatpush1.bf16.msra.mxu0 0
      %1425 = vmatprep.subr.bf16.mxu0 0
      %1426 = vmatpush1.bf16.msra.mxu0 0
      %1427 = vmatprep.subr.bf16.mxu0 0
      %1428 = vmatpush1.bf16.msra.mxu0 0
      %1429 = vmatprep.subr.bf16.mxu0 0
      %1430 = vmatpush1.bf16.msra.mxu0 0
      %1431 = vmatprep.subr.bf16.mxu0 0
      %1432 = vmatpush1.bf16.msra.mxu0 0
      %1433 = vmatprep.mubr.bf16.mxu0 0
      %1434 = vmatmul.mubr.bf16.gmra.mrb[0].mxu0 %v1349
      %v1435 = vpop.f32.mrb[0].mxu0
      %v1436 = vadd.f32 0.0, %v1435
      %v1437 = vpop.f32.mrb[0].mxu0
      %v1438 = vpop.f32.mrb[0].mxu0
      %v1439 = vpop.f32.mrb[0].mxu0
      %1440 = vdwg.mxu0
      %v1441 = vadd.f32 %v1312, %v1395
      %v1442 = vadd.f32 %v1313, %v1397
      %v1443 = vadd.f32 %v1314, %v1436
      %v1444 = vld [vmem:[%s165] sm:$0xff]
      %s1445 = scalar_lea.vmem %s1, 40
      %v1446 = vld [vmem:[%s1445] sm:$0xf]
      %v1448 = vcombine.high %v1444, %v1444
      %v1450 = vunpack.c.l.s4 1983009808
      %v1451 = vunpack.c.0.s8 %v1450
      %v1452 = vlaneseq
      %v1453 = vshrl.u32 %v1452, 7
      %v1454 = vsub.s32 %v1451, %v1453
      %v1455 = vrot.slane %v1444, %v1454
      %v1457 = vunpack.c.l.s4 1983009808
      %v1458 = vunpack.c.0.s8 %v1457
      %v1459 = vlaneseq
      %v1460 = vshrl.u32 %v1459, 7
      %v1461 = vsub.s32 %v1458, %v1460
      %v1462 = vrot.slane %v1448, %v1461
      %v1463 = vcombine.high %v1455, %v1455
      %v1464 = vcombine.high %v1462, %v1462
      %1465 = vrot.lane.b32.xlu0 %v1455, 103
      %v1466 = vpop.permute.xlu0 %1465
      %1467 = vrot.lane.b32.xlu0 %v1463, 103
      %v1468 = vpop.permute.xlu0 %1467
      %1469 = vrot.lane.b32.xlu0 %v1462, 103
      %v1470 = vpop.permute.xlu0 %1469
      %1471 = vrot.lane.b32.xlu0 %v1464, 103
      %v1472 = vpop.permute.xlu0 %1471
      %vm1473 = vcmask 842752
      %v1474 = vsel %vm1473, %v1466, %v1468
      %v1475 = vsel %vm1473, %v1468, %v1470
      %v1476 = vsel %vm1473, %v1470, %v1472
      %v1478 = vsel %vm207, %v1446, 0
      %v1481 = vsel %vm211, %v1474, 0
      %v1484 = vsel %vm211, %v1475, 0
      %v1487 = vsel %vm211, %v1476, 0
      %1489 = vmatprep.subr.bf16.mxu0 %v1484
      %1490 = vmatpush1.bf16.msra.mxu0 %v1481
      %1491 = vmatprep.subr.bf16.mxu0 0
      %1492 = vmatpush1.bf16.msra.mxu0 0
      %1493 = vmatprep.subr.bf16.mxu0 0
      %1494 = vmatpush1.bf16.msra.mxu0 0
      %1495 = vmatprep.subr.bf16.mxu0 0
      %1496 = vmatpush1.bf16.msra.mxu0 0
      %1497 = vmatprep.subr.bf16.mxu0 0
      %1498 = vmatpush1.bf16.msra.mxu0 0
      %1499 = vmatprep.subr.bf16.mxu0 0
      %1500 = vmatpush1.bf16.msra.mxu0 0
      %1501 = vmatprep.subr.bf16.mxu0 0
      %1502 = vmatpush1.bf16.msra.mxu0 0
      %1503 = vmatprep.subr.bf16.mxu0 0
      %1504 = vmatpush1.bf16.msra.mxu0 0
      %1505 = vmatprep.subr.bf16.mxu0 0
      %1506 = vmatpush1.bf16.msra.mxu0 0
      %1507 = vmatprep.subr.bf16.mxu0 0
      %1508 = vmatpush1.bf16.msra.mxu0 0
      %1509 = vmatprep.subr.bf16.mxu0 0
      %1510 = vmatpush1.bf16.msra.mxu0 0
      %1511 = vmatprep.subr.bf16.mxu0 0
      %1512 = vmatpush1.bf16.msra.mxu0 0
      %1513 = vmatprep.subr.bf16.mxu0 0
      %1514 = vmatpush1.bf16.msra.mxu0 0
      %1515 = vmatprep.subr.bf16.mxu0 0
      %1516 = vmatpush1.bf16.msra.mxu0 0
      %1517 = vmatprep.subr.bf16.mxu0 0
      %1518 = vmatpush1.bf16.msra.mxu0 0
      %1519 = vmatprep.subr.bf16.mxu0 0
      %1520 = vmatpush1.bf16.msra.mxu0 0
      %1521 = vmatprep.mubr.bf16.mxu0 0
      %1522 = vmatmul.mubr.bf16.gmra.mrb[0].mxu0 %v1478
      %v1523 = vpop.f32.mrb[0].mxu0
      %v1524 = vadd.f32 0.0, %v1523
      %v1525 = vpop.f32.mrb[0].mxu0
      %v1526 = vadd.f32 0.0, %v1525
      %v1527 = vpop.f32.mrb[0].mxu0
      %v1528 = vpop.f32.mrb[0].mxu0
      %1529 = vdwg.mxu0
      %1530 = vmatprep.subr.bf16.mxu0 0
      %1531 = vmatpush1.bf16.msra.mxu0 %v1487
      %1532 = vmatprep.subr.bf16.mxu0 0
      %1533 = vmatpush1.bf16.msra.mxu0 0
      %1534 = vmatprep.subr.bf16.mxu0 0
      %1535 = vmatpush1.bf16.msra.mxu0 0
      %1536 = vmatprep.subr.bf16.mxu0 0
      %1537 = vmatpush1.bf16.msra.mxu0 0
      %1538 = vmatprep.subr.bf16.mxu0 0
      %1539 = vmatpush1.bf16.msra.mxu0 0
      %1540 = vmatprep.subr.bf16.mxu0 0
      %1541 = vmatpush1.bf16.msra.mxu0 0
      %1542 = vmatprep.subr.bf16.mxu0 0
      %1543 = vmatpush1.bf16.msra.mxu0 0
      %1544 = vmatprep.subr.bf16.mxu0 0
      %1545 = vmatpush1.bf16.msra.mxu0 0
      %1546 = vmatprep.subr.bf16.mxu0 0
      %1547 = vmatpush1.bf16.msra.mxu0 0
      %1548 = vmatprep.subr.bf16.mxu0 0
      %1549 = vmatpush1.bf16.msra.mxu0 0
      %1550 = vmatprep.subr.bf16.mxu0 0
      %1551 = vmatpush1.bf16.msra.mxu0 0
      %1552 = vmatprep.subr.bf16.mxu0 0
      %1553 = vmatpush1.bf16.msra.mxu0 0
      %1554 = vmatprep.subr.bf16.mxu0 0
      %1555 = vmatpush1.bf16.msra.mxu0 0
      %1556 = vmatprep.subr.bf16.mxu0 0
      %1557 = vmatpush1.bf16.msra.mxu0 0
      %1558 = vmatprep.subr.bf16.mxu0 0
      %1559 = vmatpush1.bf16.msra.mxu0 0
      %1560 = vmatprep.subr.bf16.mxu0 0
      %1561 = vmatpush1.bf16.msra.mxu0 0
      %1562 = vmatprep.mubr.bf16.mxu0 0
      %1563 = vmatmul.mubr.bf16.gmra.mrb[0].mxu0 %v1478
      %v1564 = vpop.f32.mrb[0].mxu0
      %v1565 = vadd.f32 0.0, %v1564
      %v1566 = vpop.f32.mrb[0].mxu0
      %v1567 = vpop.f32.mrb[0].mxu0
      %v1568 = vpop.f32.mrb[0].mxu0
      %1569 = vdwg.mxu0
      %v1570 = vadd.f32 %v1441, %v1524
      %v1571 = vadd.f32 %v1442, %v1526
      %v1572 = vadd.f32 %v1443, %v1565
      %v1573 = vld [vmem:[%s165] sm:$0xff]
      %s1574 = scalar_lea.vmem %s1, 44
      %v1575 = vld [vmem:[%s1574] sm:$0xf]
      %v1577 = vcombine.high %v1573, %v1573
      %v1579 = vunpack.c.l.s4 1983009808
      %v1580 = vunpack.c.0.s8 %v1579
      %v1581 = vlaneseq
      %v1582 = vshrl.u32 %v1581, 7
      %v1583 = vsub.s32 %v1580, %v1582
      %v1584 = vrot.slane %v1573, %v1583
      %v1586 = vunpack.c.l.s4 1983009808
      %v1587 = vunpack.c.0.s8 %v1586
      %v1588 = vlaneseq
      %v1589 = vshrl.u32 %v1588, 7
      %v1590 = vsub.s32 %v1587, %v1589
      %v1591 = vrot.slane %v1577, %v1590
      %v1592 = vcombine.high %v1584, %v1584
      %v1593 = vcombine.high %v1591, %v1591
      %1594 = vrot.lane.b32.xlu0 %v1584, 102
      %v1595 = vpop.permute.xlu0 %1594
      %1596 = vrot.lane.b32.xlu0 %v1592, 102
      %v1597 = vpop.permute.xlu0 %1596
      %1598 = vrot.lane.b32.xlu0 %v1591, 102
      %v1599 = vpop.permute.xlu0 %1598
      %1600 = vrot.lane.b32.xlu0 %v1593, 102
      %v1601 = vpop.permute.xlu0 %1600
      %vm1602 = vcmask 834560
      %v1603 = vsel %vm1602, %v1595, %v1597
      %v1604 = vsel %vm1602, %v1597, %v1599
      %v1605 = vsel %vm1602, %v1599, %v1601
      %v1607 = vsel %vm207, %v1575, 0
      %v1610 = vsel %vm211, %v1603, 0
      %v1613 = vsel %vm211, %v1604, 0
      %v1616 = vsel %vm211, %v1605, 0
      %1618 = vmatprep.subr.bf16.mxu0 %v1613
      %1619 = vmatpush1.bf16.msra.mxu0 %v1610
      %1620 = vmatprep.subr.bf16.mxu0 0
      %1621 = vmatpush1.bf16.msra.mxu0 0
      %1622 = vmatprep.subr.bf16.mxu0 0
      %1623 = vmatpush1.bf16.msra.mxu0 0
      %1624 = vmatprep.subr.bf16.mxu0 0
      %1625 = vmatpush1.bf16.msra.mxu0 0
      %1626 = vmatprep.subr.bf16.mxu0 0
      %1627 = vmatpush1.bf16.msra.mxu0 0
      %1628 = vmatprep.subr.bf16.mxu0 0
      %1629 = vmatpush1.bf16.msra.mxu0 0
      %1630 = vmatprep.subr.bf16.mxu0 0
      %1631 = vmatpush1.bf16.msra.mxu0 0
      %1632 = vmatprep.subr.bf16.mxu0 0
      %1633 = vmatpush1.bf16.msra.mxu0 0
      %1634 = vmatprep.subr.bf16.mxu0 0
      %1635 = vmatpush1.bf16.msra.mxu0 0
      %1636 = vmatprep.subr.bf16.mxu0 0
      %1637 = vmatpush1.bf16.msra.mxu0 0
      %1638 = vmatprep.subr.bf16.mxu0 0
      %1639 = vmatpush1.bf16.msra.mxu0 0
      %1640 = vmatprep.subr.bf16.mxu0 0
      %1641 = vmatpush1.bf16.msra.mxu0 0
      %1642 = vmatprep.subr.bf16.mxu0 0
      %1643 = vmatpush1.bf16.msra.mxu0 0
      %1644 = vmatprep.subr.bf16.mxu0 0
      %1645 = vmatpush1.bf16.msra.mxu0 0
      %1646 = vmatprep.subr.bf16.mxu0 0
      %1647 = vmatpush1.bf16.msra.mxu0 0
      %1648 = vmatprep.subr.bf16.mxu0 0
      %1649 = vmatpush1.bf16.msra.mxu0 0
      %1650 = vmatprep.mubr.bf16.mxu0 0
      %1651 = vmatmul.mubr.bf16.gmra.mrb[0].mxu0 %v1607
      %v1652 = vpop.f32.mrb[0].mxu0
      %v1653 = vadd.f32 0.0, %v1652
      %v1654 = vpop.f32.mrb[0].mxu0
      %v1655 = vadd.f32 0.0, %v1654
      %v1656 = vpop.f32.mrb[0].mxu0
      %v1657 = vpop.f32.mrb[0].mxu0
      %1658 = vdwg.mxu0
      %1659 = vmatprep.subr.bf16.mxu0 0
      %1660 = vmatpush1.bf16.msra.mxu0 %v1616
      %1661 = vmatprep.subr.bf16.mxu0 0
      %1662 = vmatpush1.bf16.msra.mxu0 0
      %1663 = vmatprep.subr.bf16.mxu0 0
      %1664 = vmatpush1.bf16.msra.mxu0 0
      %1665 = vmatprep.subr.bf16.mxu0 0
      %1666 = vmatpush1.bf16.msra.mxu0 0
      %1667 = vmatprep.subr.bf16.mxu0 0
      %1668 = vmatpush1.bf16.msra.mxu0 0
      %1669 = vmatprep.subr.bf16.mxu0 0
      %1670 = vmatpush1.bf16.msra.mxu0 0
      %1671 = vmatprep.subr.bf16.mxu0 0
      %1672 = vmatpush1.bf16.msra.mxu0 0
      %1673 = vmatprep.subr.bf16.mxu0 0
      %1674 = vmatpush1.bf16.msra.mxu0 0
      %1675 = vmatprep.subr.bf16.mxu0 0
      %1676 = vmatpush1.bf16.msra.mxu0 0
      %1677 = vmatprep.subr.bf16.mxu0 0
      %1678 = vmatpush1.bf16.msra.mxu0 0
      %1679 = vmatprep.subr.bf16.mxu0 0
      %1680 = vmatpush1.bf16.msra.mxu0 0
      %1681 = vmatprep.subr.bf16.mxu0 0
      %1682 = vmatpush1.bf16.msra.mxu0 0
      %1683 = vmatprep.subr.bf16.mxu0 0
      %1684 = vmatpush1.bf16.msra.mxu0 0
      %1685 = vmatprep.subr.bf16.mxu0 0
      %1686 = vmatpush1.bf16.msra.mxu0 0
      %1687 = vmatprep.subr.bf16.mxu0 0
      %1688 = vmatpush1.bf16.msra.mxu0 0
      %1689 = vmatprep.subr.bf16.mxu0 0
      %1690 = vmatpush1.bf16.msra.mxu0 0
      %1691 = vmatprep.mubr.bf16.mxu0 0
      %1692 = vmatmul.mubr.bf16.gmra.mrb[0].mxu0 %v1607
      %v1693 = vpop.f32.mrb[0].mxu0
      %v1694 = vadd.f32 0.0, %v1693
      %v1695 = vpop.f32.mrb[0].mxu0
      %v1696 = vpop.f32.mrb[0].mxu0
      %v1697 = vpop.f32.mrb[0].mxu0
      %1698 = vdwg.mxu0
      %v1699 = vadd.f32 %v1570, %v1653
      %v1700 = vadd.f32 %v1571, %v1655
      %v1701 = vadd.f32 %v1572, %v1694
      %v1702 = vld [vmem:[%s165] sm:$0xff]
      %s1703 = scalar_lea.vmem %s1, 48
      %v1704 = vld [vmem:[%s1703] sm:$0xf]
      %v1706 = vcombine.high %v1702, %v1702
      %v1708 = vunpack.c.l.s4 1983009808
      %v1709 = vunpack.c.0.s8 %v1708
      %v1710 = vlaneseq
      %v1711 = vshrl.u32 %v1710, 7
      %v1712 = vsub.s32 %v1709, %v1711
      %v1713 = vrot.slane %v1702, %v1712
      %v1715 = vunpack.c.l.s4 1983009808
      %v1716 = vunpack.c.0.s8 %v1715
      %v1717 = vlaneseq
      %v1718 = vshrl.u32 %v1717, 7
      %v1719 = vsub.s32 %v1716, %v1718
      %v1720 = vrot.slane %v1706, %v1719
      %v1721 = vcombine.high %v1713, %v1713
      %v1722 = vcombine.high %v1720, %v1720
      %1723 = vrot.lane.b32.xlu0 %v1713, 101
      %v1724 = vpop.permute.xlu0 %1723
      %1725 = vrot.lane.b32.xlu0 %v1721, 101
      %v1726 = vpop.permute.xlu0 %1725
      %1727 = vrot.lane.b32.xlu0 %v1720, 101
      %v1728 = vpop.permute.xlu0 %1727
      %1729 = vrot.lane.b32.xlu0 %v1722, 101
      %v1730 = vpop.permute.xlu0 %1729
      %vm1731 = vcmask 826368
      %v1732 = vsel %vm1731, %v1724, %v1726
      %v1733 = vsel %vm1731, %v1726, %v1728
      %v1734 = vsel %vm1731, %v1728, %v1730
      %v1736 = vsel %vm207, %v1704, 0
      %v1739 = vsel %vm211, %v1732, 0
      %v1742 = vsel %vm211, %v1733, 0
      %v1745 = vsel %vm211, %v1734, 0
      %1747 = vmatprep.subr.bf16.mxu0 %v1742
      %1748 = vmatpush1.bf16.msra.mxu0 %v1739
      %1749 = vmatprep.subr.bf16.mxu0 0
      %1750 = vmatpush1.bf16.msra.mxu0 0
      %1751 = vmatprep.subr.bf16.mxu0 0
      %1752 = vmatpush1.bf16.msra.mxu0 0
      %1753 = vmatprep.subr.bf16.mxu0 0
      %1754 = vmatpush1.bf16.msra.mxu0 0
      %1755 = vmatprep.subr.bf16.mxu0 0
      %1756 = vmatpush1.bf16.msra.mxu0 0
      %1757 = vmatprep.subr.bf16.mxu0 0
      %1758 = vmatpush1.bf16.msra.mxu0 0
      %1759 = vmatprep.subr.bf16.mxu0 0
      %1760 = vmatpush1.bf16.msra.mxu0 0
      %1761 = vmatprep.subr.bf16.mxu0 0
      %1762 = vmatpush1.bf16.msra.mxu0 0
      %1763 = vmatprep.subr.bf16.mxu0 0
      %1764 = vmatpush1.bf16.msra.mxu0 0
      %1765 = vmatprep.subr.bf16.mxu0 0
      %1766 = vmatpush1.bf16.msra.mxu0 0
      %1767 = vmatprep.subr.bf16.mxu0 0
      %1768 = vmatpush1.bf16.msra.mxu0 0
      %1769 = vmatprep.subr.bf16.mxu0 0
      %1770 = vmatpush1.bf16.msra.mxu0 0
      %1771 = vmatprep.subr.bf16.mxu0 0
      %1772 = vmatpush1.bf16.msra.mxu0 0
      %1773 = vmatprep.subr.bf16.mxu0 0
      %1774 = vmatpush1.bf16.msra.mxu0 0
      %1775 = vmatprep.subr.bf16.mxu0 0
      %1776 = vmatpush1.bf16.msra.mxu0 0
      %1777 = vmatprep.subr.bf16.mxu0 0
      %1778 = vmatpush1.bf16.msra.mxu0 0
      %1779 = vmatprep.mubr.bf16.mxu0 0
      %1780 = vmatmul.mubr.bf16.gmra.mrb[0].mxu0 %v1736
      %v1781 = vpop.f32.mrb[0].mxu0
      %v1782 = vadd.f32 0.0, %v1781
      %v1783 = vpop.f32.mrb[0].mxu0
      %v1784 = vadd.f32 0.0, %v1783
      %v1785 = vpop.f32.mrb[0].mxu0
      %v1786 = vpop.f32.mrb[0].mxu0
      %1787 = vdwg.mxu0
      %1788 = vmatprep.subr.bf16.mxu0 0
      %1789 = vmatpush1.bf16.msra.mxu0 %v1745
      %1790 = vmatprep.subr.bf16.mxu0 0
      %1791 = vmatpush1.bf16.msra.mxu0 0
      %1792 = vmatprep.subr.bf16.mxu0 0
      %1793 = vmatpush1.bf16.msra.mxu0 0
      %1794 = vmatprep.subr.bf16.mxu0 0
      %1795 = vmatpush1.bf16.msra.mxu0 0
      %1796 = vmatprep.subr.bf16.mxu0 0
      %1797 = vmatpush1.bf16.msra.mxu0 0
      %1798 = vmatprep.subr.bf16.mxu0 0
      %1799 = vmatpush1.bf16.msra.mxu0 0
      %1800 = vmatprep.subr.bf16.mxu0 0
      %1801 = vmatpush1.bf16.msra.mxu0 0
      %1802 = vmatprep.subr.bf16.mxu0 0
      %1803 = vmatpush1.bf16.msra.mxu0 0
      %1804 = vmatprep.subr.bf16.mxu0 0
      %1805 = vmatpush1.bf16.msra.mxu0 0
      %1806 = vmatprep.subr.bf16.mxu0 0
      %1807 = vmatpush1.bf16.msra.mxu0 0
      %1808 = vmatprep.subr.bf16.mxu0 0
      %1809 = vmatpush1.bf16.msra.mxu0 0
      %1810 = vmatprep.subr.bf16.mxu0 0
      %1811 = vmatpush1.bf16.msra.mxu0 0
      %1812 = vmatprep.subr.bf16.mxu0 0
      %1813 = vmatpush1.bf16.msra.mxu0 0
      %1814 = vmatprep.subr.bf16.mxu0 0
      %1815 = vmatpush1.bf16.msra.mxu0 0
      %1816 = vmatprep.subr.bf16.mxu0 0
      %1817 = vmatpush1.bf16.msra.mxu0 0
      %1818 = vmatprep.subr.bf16.mxu0 0
      %1819 = vmatpush1.bf16.msra.mxu0 0
      %1820 = vmatprep.mubr.bf16.mxu0 0
      %1821 = vmatmul.mubr.bf16.gmra.mrb[0].mxu0 %v1736
      %v1822 = vpop.f32.mrb[0].mxu0
      %v1823 = vadd.f32 0.0, %v1822
      %v1824 = vpop.f32.mrb[0].mxu0
      %v1825 = vpop.f32.mrb[0].mxu0
      %v1826 = vpop.f32.mrb[0].mxu0
      %1827 = vdwg.mxu0
      %v1828 = vadd.f32 %v1699, %v1782
      %v1829 = vadd.f32 %v1700, %v1784
      %v1830 = vadd.f32 %v1701, %v1823
      %v1831 = vld [vmem:[%s165] sm:$0xff]
      %s1832 = scalar_lea.vmem %s1, 52
      %v1833 = vld [vmem:[%s1832] sm:$0xf]
      %v1835 = vcombine.high %v1831, %v1831
      %v1837 = vunpack.c.l.s4 1983009808
      %v1838 = vunpack.c.0.s8 %v1837
      %v1839 = vlaneseq
      %v1840 = vshrl.u32 %v1839, 7
      %v1841 = vsub.s32 %v1838, %v1840
      %v1842 = vrot.slane %v1831, %v1841
      %v1844 = vunpack.c.l.s4 1983009808
      %v1845 = vunpack.c.0.s8 %v1844
      %v1846 = vlaneseq
      %v1847 = vshrl.u32 %v1846, 7
      %v1848 = vsub.s32 %v1845, %v1847
      %v1849 = vrot.slane %v1835, %v1848
      %v1850 = vcombine.high %v1842, %v1842
      %v1851 = vcombine.high %v1849, %v1849
      %1852 = vrot.lane.b32.xlu0 %v1842, 100
      %v1853 = vpop.permute.xlu0 %1852
      %1854 = vrot.lane.b32.xlu0 %v1850, 100
      %v1855 = vpop.permute.xlu0 %1854
      %1856 = vrot.lane.b32.xlu0 %v1849, 100
      %v1857 = vpop.permute.xlu0 %1856
      %1858 = vrot.lane.b32.xlu0 %v1851, 100
      %v1859 = vpop.permute.xlu0 %1858
      %vm1860 = vcmask 818176
      %v1861 = vsel %vm1860, %v1853, %v1855
      %v1862 = vsel %vm1860, %v1855, %v1857
      %v1863 = vsel %vm1860, %v1857, %v1859
      %v1865 = vsel %vm207, %v1833, 0
      %v1868 = vsel %vm211, %v1861, 0
      %v1871 = vsel %vm211, %v1862, 0
      %v1874 = vsel %vm211, %v1863, 0
      %1876 = vmatprep.subr.bf16.mxu0 %v1871
      %1877 = vmatpush1.bf16.msra.mxu0 %v1868
      %1878 = vmatprep.subr.bf16.mxu0 0
      %1879 = vmatpush1.bf16.msra.mxu0 0
      %1880 = vmatprep.subr.bf16.mxu0 0
      %1881 = vmatpush1.bf16.msra.mxu0 0
      %1882 = vmatprep.subr.bf16.mxu0 0
      %1883 = vmatpush1.bf16.msra.mxu0 0
      %1884 = vmatprep.subr.bf16.mxu0 0
      %1885 = vmatpush1.bf16.msra.mxu0 0
      %1886 = vmatprep.subr.bf16.mxu0 0
      %1887 = vmatpush1.bf16.msra.mxu0 0
      %1888 = vmatprep.subr.bf16.mxu0 0
      %1889 = vmatpush1.bf16.msra.mxu0 0
      %1890 = vmatprep.subr.bf16.mxu0 0
      %1891 = vmatpush1.bf16.msra.mxu0 0
      %1892 = vmatprep.subr.bf16.mxu0 0
      %1893 = vmatpush1.bf16.msra.mxu0 0
      %1894 = vmatprep.subr.bf16.mxu0 0
      %1895 = vmatpush1.bf16.msra.mxu0 0
      %1896 = vmatprep.subr.bf16.mxu0 0
      %1897 = vmatpush1.bf16.msra.mxu0 0
      %1898 = vmatprep.subr.bf16.mxu0 0
      %1899 = vmatpush1.bf16.msra.mxu0 0
      %1900 = vmatprep.subr.bf16.mxu0 0
      %1901 = vmatpush1.bf16.msra.mxu0 0
      %1902 = vmatprep.subr.bf16.mxu0 0
      %1903 = vmatpush1.bf16.msra.mxu0 0
      %1904 = vmatprep.subr.bf16.mxu0 0
      %1905 = vmatpush1.bf16.msra.mxu0 0
      %1906 = vmatprep.subr.bf16.mxu0 0
      %1907 = vmatpush1.bf16.msra.mxu0 0
      %1908 = vmatprep.mubr.bf16.mxu0 0
      %1909 = vmatmul.mubr.bf16.gmra.mrb[0].mxu0 %v1865
      %v1910 = vpop.f32.mrb[0].mxu0
      %v1911 = vadd.f32 0.0, %v1910
      %v1912 = vpop.f32.mrb[0].mxu0
      %v1913 = vadd.f32 0.0, %v1912
      %v1914 = vpop.f32.mrb[0].mxu0
      %v1915 = vpop.f32.mrb[0].mxu0
      %1916 = vdwg.mxu0
      %1917 = vmatprep.subr.bf16.mxu0 0
      %1918 = vmatpush1.bf16.msra.mxu0 %v1874
      %1919 = vmatprep.subr.bf16.mxu0 0
      %1920 = vmatpush1.bf16.msra.mxu0 0
      %1921 = vmatprep.subr.bf16.mxu0 0
      %1922 = vmatpush1.bf16.msra.mxu0 0
      %1923 = vmatprep.subr.bf16.mxu0 0
      %1924 = vmatpush1.bf16.msra.mxu0 0
      %1925 = vmatprep.subr.bf16.mxu0 0
      %1926 = vmatpush1.bf16.msra.mxu0 0
      %1927 = vmatprep.subr.bf16.mxu0 0
      %1928 = vmatpush1.bf16.msra.mxu0 0
      %1929 = vmatprep.subr.bf16.mxu0 0
      %1930 = vmatpush1.bf16.msra.mxu0 0
      %1931 = vmatprep.subr.bf16.mxu0 0
      %1932 = vmatpush1.bf16.msra.mxu0 0
      %1933 = vmatprep.subr.bf16.mxu0 0
      %1934 = vmatpush1.bf16.msra.mxu0 0
      %1935 = vmatprep.subr.bf16.mxu0 0
      %1936 = vmatpush1.bf16.msra.mxu0 0
      %1937 = vmatprep.subr.bf16.mxu0 0
      %1938 = vmatpush1.bf16.msra.mxu0 0
      %1939 = vmatprep.subr.bf16.mxu0 0
      %1940 = vmatpush1.bf16.msra.mxu0 0
      %1941 = vmatprep.subr.bf16.mxu0 0
      %1942 = vmatpush1.bf16.msra.mxu0 0
      %1943 = vmatprep.subr.bf16.mxu0 0
      %1944 = vmatpush1.bf16.msra.mxu0 0
      %1945 = vmatprep.subr.bf16.mxu0 0
      %1946 = vmatpush1.bf16.msra.mxu0 0
      %1947 = vmatprep.subr.bf16.mxu0 0
      %1948 = vmatpush1.bf16.msra.mxu0 0
      %1949 = vmatprep.mubr.bf16.mxu0 0
      %1950 = vmatmul.mubr.bf16.gmra.mrb[0].mxu0 %v1865
      %v1951 = vpop.f32.mrb[0].mxu0
      %v1952 = vadd.f32 0.0, %v1951
      %v1953 = vpop.f32.mrb[0].mxu0
      %v1954 = vpop.f32.mrb[0].mxu0
      %v1955 = vpop.f32.mrb[0].mxu0
      %1956 = vdwg.mxu0
      %v1957 = vadd.f32 %v1828, %v1911
      %v1958 = vadd.f32 %v1829, %v1913
      %v1959 = vadd.f32 %v1830, %v1952
      %v1960 = vld [vmem:[%s165] sm:$0xff]
      %s1961 = scalar_lea.vmem %s1, 56
      %v1962 = vld [vmem:[%s1961] sm:$0xf]
      %v1964 = vcombine.high %v1960, %v1960
      %v1966 = vunpack.c.l.s4 1983009808
      %v1967 = vunpack.c.0.s8 %v1966
      %v1968 = vlaneseq
      %v1969 = vshrl.u32 %v1968, 7
      %v1970 = vsub.s32 %v1967, %v1969
      %v1971 = vrot.slane %v1960, %v1970
      %v1973 = vunpack.c.l.s4 1983009808
      %v1974 = vunpack.c.0.s8 %v1973
      %v1975 = vlaneseq
      %v1976 = vshrl.u32 %v1975, 7
      %v1977 = vsub.s32 %v1974, %v1976
      %v1978 = vrot.slane %v1964, %v1977
      %v1979 = vcombine.high %v1971, %v1971
      %v1980 = vcombine.high %v1978, %v1978
      %1981 = vrot.lane.b32.xlu0 %v1971, 84
      %v1982 = vpop.permute.xlu0 %1981
      %1983 = vrot.lane.b32.xlu0 %v1979, 84
      %v1984 = vpop.permute.xlu0 %1983
      %1985 = vrot.lane.b32.xlu0 %v1978, 84
      %v1986 = vpop.permute.xlu0 %1985
      %1987 = vrot.lane.b32.xlu0 %v1980, 84
      %v1988 = vpop.permute.xlu0 %1987
      %vm1989 = vcmask 687104
      %v1990 = vsel %vm1989, %v1982, %v1984
      %v1991 = vsel %vm1989, %v1984, %v1986
      %v1992 = vsel %vm1989, %v1986, %v1988
      %v1994 = vsel %vm207, %v1962, 0
      %v1997 = vsel %vm211, %v1990, 0
      %v2000 = vsel %vm211, %v1991, 0
      %v2003 = vsel %vm211, %v1992, 0
      %2005 = vmatprep.subr.bf16.mxu0 %v2000
      %2006 = vmatpush1.bf16.msra.mxu0 %v1997
      %2007 = vmatprep.subr.bf16.mxu0 0
      %2008 = vmatpush1.bf16.msra.mxu0 0
      %2009 = vmatprep.subr.bf16.mxu0 0
      %2010 = vmatpush1.bf16.msra.mxu0 0
      %2011 = vmatprep.subr.bf16.mxu0 0
      %2012 = vmatpush1.bf16.msra.mxu0 0
      %2013 = vmatprep.subr.bf16.mxu0 0
      %2014 = vmatpush1.bf16.msra.mxu0 0
      %2015 = vmatprep.subr.bf16.mxu0 0
      %2016 = vmatpush1.bf16.msra.mxu0 0
      %2017 = vmatprep.subr.bf16.mxu0 0
      %2018 = vmatpush1.bf16.msra.mxu0 0
      %2019 = vmatprep.subr.bf16.mxu0 0
      %2020 = vmatpush1.bf16.msra.mxu0 0
      %2021 = vmatprep.subr.bf16.mxu0 0
      %2022 = vmatpush1.bf16.msra.mxu0 0
      %2023 = vmatprep.subr.bf16.mxu0 0
      %2024 = vmatpush1.bf16.msra.mxu0 0
      %2025 = vmatprep.subr.bf16.mxu0 0
      %2026 = vmatpush1.bf16.msra.mxu0 0
      %2027 = vmatprep.subr.bf16.mxu0 0
      %2028 = vmatpush1.bf16.msra.mxu0 0
      %2029 = vmatprep.subr.bf16.mxu0 0
      %2030 = vmatpush1.bf16.msra.mxu0 0
      %2031 = vmatprep.subr.bf16.mxu0 0
      %2032 = vmatpush1.bf16.msra.mxu0 0
      %2033 = vmatprep.subr.bf16.mxu0 0
      %2034 = vmatpush1.bf16.msra.mxu0 0
      %2035 = vmatprep.subr.bf16.mxu0 0
      %2036 = vmatpush1.bf16.msra.mxu0 0
      %2037 = vmatprep.mubr.bf16.mxu0 0
      %2038 = vmatmul.mubr.bf16.gmra.mrb[0].mxu0 %v1994
      %v2039 = vpop.f32.mrb[0].mxu0
      %v2040 = vadd.f32 0.0, %v2039
      %v2041 = vpop.f32.mrb[0].mxu0
      %v2042 = vadd.f32 0.0, %v2041
      %v2043 = vpop.f32.mrb[0].mxu0
      %v2044 = vpop.f32.mrb[0].mxu0
      %2045 = vdwg.mxu0
      %2046 = vmatprep.subr.bf16.mxu0 0
      %2047 = vmatpush1.bf16.msra.mxu0 %v2003
      %2048 = vmatprep.subr.bf16.mxu0 0
      %2049 = vmatpush1.bf16.msra.mxu0 0
      %2050 = vmatprep.subr.bf16.mxu0 0
      %2051 = vmatpush1.bf16.msra.mxu0 0
      %2052 = vmatprep.subr.bf16.mxu0 0
      %2053 = vmatpush1.bf16.msra.mxu0 0
      %2054 = vmatprep.subr.bf16.mxu0 0
      %2055 = vmatpush1.bf16.msra.mxu0 0
      %2056 = vmatprep.subr.bf16.mxu0 0
      %2057 = vmatpush1.bf16.msra.mxu0 0
      %2058 = vmatprep.subr.bf16.mxu0 0
      %2059 = vmatpush1.bf16.msra.mxu0 0
      %2060 = vmatprep.subr.bf16.mxu0 0
      %2061 = vmatpush1.bf16.msra.mxu0 0
      %2062 = vmatprep.subr.bf16.mxu0 0
      %2063 = vmatpush1.bf16.msra.mxu0 0
      %2064 = vmatprep.subr.bf16.mxu0 0
      %2065 = vmatpush1.bf16.msra.mxu0 0
      %2066 = vmatprep.subr.bf16.mxu0 0
      %2067 = vmatpush1.bf16.msra.mxu0 0
      %2068 = vmatprep.subr.bf16.mxu0 0
      %2069 = vmatpush1.bf16.msra.mxu0 0
      %2070 = vmatprep.subr.bf16.mxu0 0
      %2071 = vmatpush1.bf16.msra.mxu0 0
      %2072 = vmatprep.subr.bf16.mxu0 0
      %2073 = vmatpush1.bf16.msra.mxu0 0
      %2074 = vmatprep.subr.bf16.mxu0 0
      %2075 = vmatpush1.bf16.msra.mxu0 0
      %2076 = vmatprep.subr.bf16.mxu0 0
      %2077 = vmatpush1.bf16.msra.mxu0 0
      %2078 = vmatprep.mubr.bf16.mxu0 0
      %2079 = vmatmul.mubr.bf16.gmra.mrb[0].mxu0 %v1994
      %v2080 = vpop.f32.mrb[0].mxu0
      %v2081 = vadd.f32 0.0, %v2080
      %v2082 = vpop.f32.mrb[0].mxu0
      %v2083 = vpop.f32.mrb[0].mxu0
      %v2084 = vpop.f32.mrb[0].mxu0
      %2085 = vdwg.mxu0
      %v2086 = vadd.f32 %v1957, %v2040
      %v2087 = vadd.f32 %v1958, %v2042
      %v2088 = vadd.f32 %v1959, %v2081
      %v2089 = vld [vmem:[%s165] sm:$0xff]
      %s2090 = scalar_lea.vmem %s1, 60
      %v2091 = vld [vmem:[%s2090] sm:$0xf]
      %v2093 = vcombine.high %v2089, %v2089
      %v2095 = vunpack.c.l.s4 1983009808
      %v2096 = vunpack.c.0.s8 %v2095
      %v2097 = vlaneseq
      %v2098 = vshrl.u32 %v2097, 7
      %v2099 = vsub.s32 %v2096, %v2098
      %v2100 = vrot.slane %v2089, %v2099
      %v2102 = vunpack.c.l.s4 1983009808
      %v2103 = vunpack.c.0.s8 %v2102
      %v2104 = vlaneseq
      %v2105 = vshrl.u32 %v2104, 7
      %v2106 = vsub.s32 %v2103, %v2105
      %v2107 = vrot.slane %v2093, %v2106
      %v2108 = vcombine.high %v2100, %v2100
      %v2109 = vcombine.high %v2107, %v2107
      %2110 = vrot.lane.b32.xlu0 %v2100, 83
      %v2111 = vpop.permute.xlu0 %2110
      %2112 = vrot.lane.b32.xlu0 %v2108, 83
      %v2113 = vpop.permute.xlu0 %2112
      %2114 = vrot.lane.b32.xlu0 %v2107, 83
      %v2115 = vpop.permute.xlu0 %2114
      %2116 = vrot.lane.b32.xlu0 %v2109, 83
      %v2117 = vpop.permute.xlu0 %2116
      %vm2118 = vcmask 678912
      %v2119 = vsel %vm2118, %v2111, %v2113
      %v2120 = vsel %vm2118, %v2113, %v2115
      %v2121 = vsel %vm2118, %v2115, %v2117
      %v2123 = vsel %vm207, %v2091, 0
      %v2126 = vsel %vm211, %v2119, 0
      %v2129 = vsel %vm211, %v2120, 0
      %v2132 = vsel %vm211, %v2121, 0
      %2134 = vmatprep.subr.bf16.mxu0 %v2129
      %2135 = vmatpush1.bf16.msra.mxu0 %v2126
      %2136 = vmatprep.subr.bf16.mxu0 0
      %2137 = vmatpush1.bf16.msra.mxu0 0
      %2138 = vmatprep.subr.bf16.mxu0 0
      %2139 = vmatpush1.bf16.msra.mxu0 0
      %2140 = vmatprep.subr.bf16.mxu0 0
      %2141 = vmatpush1.bf16.msra.mxu0 0
      %2142 = vmatprep.subr.bf16.mxu0 0
      %2143 = vmatpush1.bf16.msra.mxu0 0
      %2144 = vmatprep.subr.bf16.mxu0 0
      %2145 = vmatpush1.bf16.msra.mxu0 0
      %2146 = vmatprep.subr.bf16.mxu0 0
      %2147 = vmatpush1.bf16.msra.mxu0 0
      %2148 = vmatprep.subr.bf16.mxu0 0
      %2149 = vmatpush1.bf16.msra.mxu0 0
      %2150 = vmatprep.subr.bf16.mxu0 0
      %2151 = vmatpush1.bf16.msra.mxu0 0
      %2152 = vmatprep.subr.bf16.mxu0 0
      %2153 = vmatpush1.bf16.msra.mxu0 0
      %2154 = vmatprep.subr.bf16.mxu0 0
      %2155 = vmatpush1.bf16.msra.mxu0 0
      %2156 = vmatprep.subr.bf16.mxu0 0
      %2157 = vmatpush1.bf16.msra.mxu0 0
      %2158 = vmatprep.subr.bf16.mxu0 0
      %2159 = vmatpush1.bf16.msra.mxu0 0
      %2160 = vmatprep.subr.bf16.mxu0 0
      %2161 = vmatpush1.bf16.msra.mxu0 0
      %2162 = vmatprep.subr.bf16.mxu0 0
      %2163 = vmatpush1.bf16.msra.mxu0 0
      %2164 = vmatprep.subr.bf16.mxu0 0
      %2165 = vmatpush1.bf16.msra.mxu0 0
      %2166 = vmatprep.mubr.bf16.mxu0 0
      %2167 = vmatmul.mubr.bf16.gmra.mrb[0].mxu0 %v2123
      %v2168 = vpop.f32.mrb[0].mxu0
      %v2169 = vadd.f32 0.0, %v2168
      %v2170 = vpop.f32.mrb[0].mxu0
      %v2171 = vadd.f32 0.0, %v2170
      %v2172 = vpop.f32.mrb[0].mxu0
      %v2173 = vpop.f32.mrb[0].mxu0
      %2174 = vdwg.mxu0
      %2175 = vmatprep.subr.bf16.mxu0 0
      %2176 = vmatpush1.bf16.msra.mxu0 %v2132
      %2177 = vmatprep.subr.bf16.mxu0 0
      %2178 = vmatpush1.bf16.msra.mxu0 0
      %2179 = vmatprep.subr.bf16.mxu0 0
      %2180 = vmatpush1.bf16.msra.mxu0 0
      %2181 = vmatprep.subr.bf16.mxu0 0
      %2182 = vmatpush1.bf16.msra.mxu0 0
      %2183 = vmatprep.subr.bf16.mxu0 0
      %2184 = vmatpush1.bf16.msra.mxu0 0
      %2185 = vmatprep.subr.bf16.mxu0 0
      %2186 = vmatpush1.bf16.msra.mxu0 0
      %2187 = vmatprep.subr.bf16.mxu0 0
      %2188 = vmatpush1.bf16.msra.mxu0 0
      %2189 = vmatprep.subr.bf16.mxu0 0
      %2190 = vmatpush1.bf16.msra.mxu0 0
      %2191 = vmatprep.subr.bf16.mxu0 0
      %2192 = vmatpush1.bf16.msra.mxu0 0
      %2193 = vmatprep.subr.bf16.mxu0 0
      %2194 = vmatpush1.bf16.msra.mxu0 0
      %2195 = vmatprep.subr.bf16.mxu0 0
      %2196 = vmatpush1.bf16.msra.mxu0 0
      %2197 = vmatprep.subr.bf16.mxu0 0
      %2198 = vmatpush1.bf16.msra.mxu0 0
      %2199 = vmatprep.subr.bf16.mxu0 0
      %2200 = vmatpush1.bf16.msra.mxu0 0
      %2201 = vmatprep.subr.bf16.mxu0 0
      %2202 = vmatpush1.bf16.msra.mxu0 0
      %2203 = vmatprep.subr.bf16.mxu0 0
      %2204 = vmatpush1.bf16.msra.mxu0 0
      %2205 = vmatprep.subr.bf16.mxu0 0
      %2206 = vmatpush1.bf16.msra.mxu0 0
      %2207 = vmatprep.mubr.bf16.mxu0 0
      %2208 = vmatmul.mubr.bf16.gmra.mrb[0].mxu0 %v2123
      %v2209 = vpop.f32.mrb[0].mxu0
      %v2210 = vadd.f32 0.0, %v2209
      %v2211 = vpop.f32.mrb[0].mxu0
      %v2212 = vpop.f32.mrb[0].mxu0
      %v2213 = vpop.f32.mrb[0].mxu0
      %2214 = vdwg.mxu0
      %v2215 = vadd.f32 %v2086, %v2169
      %v2216 = vadd.f32 %v2087, %v2171
      %v2217 = vadd.f32 %v2088, %v2210
      %v2218 = vld [vmem:[%s165] sm:$0xff]
      %s2219 = scalar_lea.vmem %s1, 64
      %v2220 = vld [vmem:[%s2219] sm:$0xf]
      %v2222 = vcombine.high %v2218, %v2218
      %v2224 = vunpack.c.l.s4 1983009808
      %v2225 = vunpack.c.0.s8 %v2224
      %v2226 = vlaneseq
      %v2227 = vshrl.u32 %v2226, 7
      %v2228 = vsub.s32 %v2225, %v2227
      %v2229 = vrot.slane %v2218, %v2228
      %v2231 = vunpack.c.l.s4 1983009808
      %v2232 = vunpack.c.0.s8 %v2231
      %v2233 = vlaneseq
      %v2234 = vshrl.u32 %v2233, 7
      %v2235 = vsub.s32 %v2232, %v2234
      %v2236 = vrot.slane %v2222, %v2235
      %v2237 = vcombine.high %v2229, %v2229
      %v2238 = vcombine.high %v2236, %v2236
      %2239 = vrot.lane.b32.xlu0 %v2229, 82
      %v2240 = vpop.permute.xlu0 %2239
      %2241 = vrot.lane.b32.xlu0 %v2237, 82
      %v2242 = vpop.permute.xlu0 %2241
      %2243 = vrot.lane.b32.xlu0 %v2236, 82
      %v2244 = vpop.permute.xlu0 %2243
      %2245 = vrot.lane.b32.xlu0 %v2238, 82
      %v2246 = vpop.permute.xlu0 %2245
      %vm2247 = vcmask 670720
      %v2248 = vsel %vm2247, %v2240, %v2242
      %v2249 = vsel %vm2247, %v2242, %v2244
      %v2250 = vsel %vm2247, %v2244, %v2246
      %v2252 = vsel %vm207, %v2220, 0
      %v2255 = vsel %vm211, %v2248, 0
      %v2258 = vsel %vm211, %v2249, 0
      %v2261 = vsel %vm211, %v2250, 0
      %2263 = vmatprep.subr.bf16.mxu0 %v2258
      %2264 = vmatpush1.bf16.msra.mxu0 %v2255
      %2265 = vmatprep.subr.bf16.mxu0 0
      %2266 = vmatpush1.bf16.msra.mxu0 0
      %2267 = vmatprep.subr.bf16.mxu0 0
      %2268 = vmatpush1.bf16.msra.mxu0 0
      %2269 = vmatprep.subr.bf16.mxu0 0
      %2270 = vmatpush1.bf16.msra.mxu0 0
      %2271 = vmatprep.subr.bf16.mxu0 0
      %2272 = vmatpush1.bf16.msra.mxu0 0
      %2273 = vmatprep.subr.bf16.mxu0 0
      %2274 = vmatpush1.bf16.msra.mxu0 0
      %2275 = vmatprep.subr.bf16.mxu0 0
      %2276 = vmatpush1.bf16.msra.mxu0 0
      %2277 = vmatprep.subr.bf16.mxu0 0
      %2278 = vmatpush1.bf16.msra.mxu0 0
      %2279 = vmatprep.subr.bf16.mxu0 0
      %2280 = vmatpush1.bf16.msra.mxu0 0
      %2281 = vmatprep.subr.bf16.mxu0 0
      %2282 = vmatpush1.bf16.msra.mxu0 0
      %2283 = vmatprep.subr.bf16.mxu0 0
      %2284 = vmatpush1.bf16.msra.mxu0 0
      %2285 = vmatprep.subr.bf16.mxu0 0
      %2286 = vmatpush1.bf16.msra.mxu0 0
      %2287 = vmatprep.subr.bf16.mxu0 0
      %2288 = vmatpush1.bf16.msra.mxu0 0
      %2289 = vmatprep.subr.bf16.mxu0 0
      %2290 = vmatpush1.bf16.msra.mxu0 0
      %2291 = vmatprep.subr.bf16.mxu0 0
      %2292 = vmatpush1.bf16.msra.mxu0 0
      %2293 = vmatprep.subr.bf16.mxu0 0
      %2294 = vmatpush1.bf16.msra.mxu0 0
      %2295 = vmatprep.mubr.bf16.mxu0 0
      %2296 = vmatmul.mubr.bf16.gmra.mrb[0].mxu0 %v2252
      %v2297 = vpop.f32.mrb[0].mxu0
      %v2298 = vadd.f32 0.0, %v2297
      %v2299 = vpop.f32.mrb[0].mxu0
      %v2300 = vadd.f32 0.0, %v2299
      %v2301 = vpop.f32.mrb[0].mxu0
      %v2302 = vpop.f32.mrb[0].mxu0
      %2303 = vdwg.mxu0
      %2304 = vmatprep.subr.bf16.mxu0 0
      %2305 = vmatpush1.bf16.msra.mxu0 %v2261
      %2306 = vmatprep.subr.bf16.mxu0 0
      %2307 = vmatpush1.bf16.msra.mxu0 0
      %2308 = vmatprep.subr.bf16.mxu0 0
      %2309 = vmatpush1.bf16.msra.mxu0 0
      %2310 = vmatprep.subr.bf16.mxu0 0
      %2311 = vmatpush1.bf16.msra.mxu0 0
      %2312 = vmatprep.subr.bf16.mxu0 0
      %2313 = vmatpush1.bf16.msra.mxu0 0
      %2314 = vmatprep.subr.bf16.mxu0 0
      %2315 = vmatpush1.bf16.msra.mxu0 0
      %2316 = vmatprep.subr.bf16.mxu0 0
      %2317 = vmatpush1.bf16.msra.mxu0 0
      %2318 = vmatprep.subr.bf16.mxu0 0
      %2319 = vmatpush1.bf16.msra.mxu0 0
      %2320 = vmatprep.subr.bf16.mxu0 0
      %2321 = vmatpush1.bf16.msra.mxu0 0
      %2322 = vmatprep.subr.bf16.mxu0 0
      %2323 = vmatpush1.bf16.msra.mxu0 0
      %2324 = vmatprep.subr.bf16.mxu0 0
      %2325 = vmatpush1.bf16.msra.mxu0 0
      %2326 = vmatprep.subr.bf16.mxu0 0
      %2327 = vmatpush1.bf16.msra.mxu0 0
      %2328 = vmatprep.subr.bf16.mxu0 0
      %2329 = vmatpush1.bf16.msra.mxu0 0
      %2330 = vmatprep.subr.bf16.mxu0 0
      %2331 = vmatpush1.bf16.msra.mxu0 0
      %2332 = vmatprep.subr.bf16.mxu0 0
      %2333 = vmatpush1.bf16.msra.mxu0 0
      %2334 = vmatprep.subr.bf16.mxu0 0
      %2335 = vmatpush1.bf16.msra.mxu0 0
      %2336 = vmatprep.mubr.bf16.mxu0 0
      %2337 = vmatmul.mubr.bf16.gmra.mrb[0].mxu0 %v2252
      %v2338 = vpop.f32.mrb[0].mxu0
      %v2339 = vadd.f32 0.0, %v2338
      %v2340 = vpop.f32.mrb[0].mxu0
      %v2341 = vpop.f32.mrb[0].mxu0
      %v2342 = vpop.f32.mrb[0].mxu0
      %2343 = vdwg.mxu0
      %v2344 = vadd.f32 %v2215, %v2298
      %v2345 = vadd.f32 %v2216, %v2300
      %v2346 = vadd.f32 %v2217, %v2339
      %v2347 = vld [vmem:[%s165] sm:$0xff]
      %s2348 = scalar_lea.vmem %s1, 68
      %v2349 = vld [vmem:[%s2348] sm:$0xf]
      %v2351 = vcombine.high %v2347, %v2347
      %v2353 = vunpack.c.l.s4 1983009808
      %v2354 = vunpack.c.0.s8 %v2353
      %v2355 = vlaneseq
      %v2356 = vshrl.u32 %v2355, 7
      %v2357 = vsub.s32 %v2354, %v2356
      %v2358 = vrot.slane %v2347, %v2357
      %v2360 = vunpack.c.l.s4 1983009808
      %v2361 = vunpack.c.0.s8 %v2360
      %v2362 = vlaneseq
      %v2363 = vshrl.u32 %v2362, 7
      %v2364 = vsub.s32 %v2361, %v2363
      %v2365 = vrot.slane %v2351, %v2364
      %v2366 = vcombine.high %v2358, %v2358
      %v2367 = vcombine.high %v2365, %v2365
      %2368 = vrot.lane.b32.xlu0 %v2358, 81
      %v2369 = vpop.permute.xlu0 %2368
      %2370 = vrot.lane.b32.xlu0 %v2366, 81
      %v2371 = vpop.permute.xlu0 %2370
      %2372 = vrot.lane.b32.xlu0 %v2365, 81
      %v2373 = vpop.permute.xlu0 %2372
      %2374 = vrot.lane.b32.xlu0 %v2367, 81
      %v2375 = vpop.permute.xlu0 %2374
      %vm2376 = vcmask 662528
      %v2377 = vsel %vm2376, %v2369, %v2371
      %v2378 = vsel %vm2376, %v2371, %v2373
      %v2379 = vsel %vm2376, %v2373, %v2375
      %v2381 = vsel %vm207, %v2349, 0
      %v2384 = vsel %vm211, %v2377, 0
      %v2387 = vsel %vm211, %v2378, 0
      %v2390 = vsel %vm211, %v2379, 0
      %2392 = vmatprep.subr.bf16.mxu0 %v2387
      %2393 = vmatpush1.bf16.msra.mxu0 %v2384
      %2394 = vmatprep.subr.bf16.mxu0 0
      %2395 = vmatpush1.bf16.msra.mxu0 0
      %2396 = vmatprep.subr.bf16.mxu0 0
      %2397 = vmatpush1.bf16.msra.mxu0 0
      %2398 = vmatprep.subr.bf16.mxu0 0
      %2399 = vmatpush1.bf16.msra.mxu0 0
      %2400 = vmatprep.subr.bf16.mxu0 0
      %2401 = vmatpush1.bf16.msra.mxu0 0
      %2402 = vmatprep.subr.bf16.mxu0 0
      %2403 = vmatpush1.bf16.msra.mxu0 0
      %2404 = vmatprep.subr.bf16.mxu0 0
      %2405 = vmatpush1.bf16.msra.mxu0 0
      %2406 = vmatprep.subr.bf16.mxu0 0
      %2407 = vmatpush1.bf16.msra.mxu0 0
      %2408 = vmatprep.subr.bf16.mxu0 0
      %2409 = vmatpush1.bf16.msra.mxu0 0
      %2410 = vmatprep.subr.bf16.mxu0 0
      %2411 = vmatpush1.bf16.msra.mxu0 0
      %2412 = vmatprep.subr.bf16.mxu0 0
      %2413 = vmatpush1.bf16.msra.mxu0 0
      %2414 = vmatprep.subr.bf16.mxu0 0
      %2415 = vmatpush1.bf16.msra.mxu0 0
      %2416 = vmatprep.subr.bf16.mxu0 0
      %2417 = vmatpush1.bf16.msra.mxu0 0
      %2418 = vmatprep.subr.bf16.mxu0 0
      %2419 = vmatpush1.bf16.msra.mxu0 0
      %2420 = vmatprep.subr.bf16.mxu0 0
      %2421 = vmatpush1.bf16.msra.mxu0 0
      %2422 = vmatprep.subr.bf16.mxu0 0
      %2423 = vmatpush1.bf16.msra.mxu0 0
      %2424 = vmatprep.mubr.bf16.mxu0 0
      %2425 = vmatmul.mubr.bf16.gmra.mrb[0].mxu0 %v2381
      %v2426 = vpop.f32.mrb[0].mxu0
      %v2427 = vadd.f32 0.0, %v2426
      %v2428 = vpop.f32.mrb[0].mxu0
      %v2429 = vadd.f32 0.0, %v2428
      %v2430 = vpop.f32.mrb[0].mxu0
      %v2431 = vpop.f32.mrb[0].mxu0
      %2432 = vdwg.mxu0
      %2433 = vmatprep.subr.bf16.mxu0 0
      %2434 = vmatpush1.bf16.msra.mxu0 %v2390
      %2435 = vmatprep.subr.bf16.mxu0 0
      %2436 = vmatpush1.bf16.msra.mxu0 0
      %2437 = vmatprep.subr.bf16.mxu0 0
      %2438 = vmatpush1.bf16.msra.mxu0 0
      %2439 = vmatprep.subr.bf16.mxu0 0
      %2440 = vmatpush1.bf16.msra.mxu0 0
      %2441 = vmatprep.subr.bf16.mxu0 0
      %2442 = vmatpush1.bf16.msra.mxu0 0
      %2443 = vmatprep.subr.bf16.mxu0 0
      %2444 = vmatpush1.bf16.msra.mxu0 0
      %2445 = vmatprep.subr.bf16.mxu0 0
      %2446 = vmatpush1.bf16.msra.mxu0 0
      %2447 = vmatprep.subr.bf16.mxu0 0
      %2448 = vmatpush1.bf16.msra.mxu0 0
      %2449 = vmatprep.subr.bf16.mxu0 0
      %2450 = vmatpush1.bf16.msra.mxu0 0
      %2451 = vmatprep.subr.bf16.mxu0 0
      %2452 = vmatpush1.bf16.msra.mxu0 0
      %2453 = vmatprep.subr.bf16.mxu0 0
      %2454 = vmatpush1.bf16.msra.mxu0 0
      %2455 = vmatprep.subr.bf16.mxu0 0
      %2456 = vmatpush1.bf16.msra.mxu0 0
      %2457 = vmatprep.subr.bf16.mxu0 0
      %2458 = vmatpush1.bf16.msra.mxu0 0
      %2459 = vmatprep.subr.bf16.mxu0 0
      %2460 = vmatpush1.bf16.msra.mxu0 0
      %2461 = vmatprep.subr.bf16.mxu0 0
      %2462 = vmatpush1.bf16.msra.mxu0 0
      %2463 = vmatprep.subr.bf16.mxu0 0
      %2464 = vmatpush1.bf16.msra.mxu0 0
      %2465 = vmatprep.mubr.bf16.mxu0 0
      %2466 = vmatmul.mubr.bf16.gmra.mrb[0].mxu0 %v2381
      %v2467 = vpop.f32.mrb[0].mxu0
      %v2468 = vadd.f32 0.0, %v2467
      %v2469 = vpop.f32.mrb[0].mxu0
      %v2470 = vpop.f32.mrb[0].mxu0
      %v2471 = vpop.f32.mrb[0].mxu0
      %2472 = vdwg.mxu0
      %v2473 = vadd.f32 %v2344, %v2427
      %v2474 = vadd.f32 %v2345, %v2429
      %v2475 = vadd.f32 %v2346, %v2468
      %v2476 = vld [vmem:[%s165] sm:$0xff]
      %s2477 = scalar_lea.vmem %s1, 72
      %v2478 = vld [vmem:[%s2477] sm:$0xf]
      %v2480 = vcombine.high %v2476, %v2476
      %v2482 = vunpack.c.l.s4 1983009808
      %v2483 = vunpack.c.0.s8 %v2482
      %v2484 = vlaneseq
      %v2485 = vshrl.u32 %v2484, 7
      %v2486 = vsub.s32 %v2483, %v2485
      %v2487 = vrot.slane %v2476, %v2486
      %v2489 = vunpack.c.l.s4 1983009808
      %v2490 = vunpack.c.0.s8 %v2489
      %v2491 = vlaneseq
      %v2492 = vshrl.u32 %v2491, 7
      %v2493 = vsub.s32 %v2490, %v2492
      %v2494 = vrot.slane %v2480, %v2493
      %v2495 = vcombine.high %v2487, %v2487
      %v2496 = vcombine.high %v2494, %v2494
      %2497 = vrot.lane.b32.xlu0 %v2487, 80
      %v2498 = vpop.permute.xlu0 %2497
      %2499 = vrot.lane.b32.xlu0 %v2495, 80
      %v2500 = vpop.permute.xlu0 %2499
      %2501 = vrot.lane.b32.xlu0 %v2494, 80
      %v2502 = vpop.permute.xlu0 %2501
      %2503 = vrot.lane.b32.xlu0 %v2496, 80
      %v2504 = vpop.permute.xlu0 %2503
      %vm2505 = vcmask 654336
      %v2506 = vsel %vm2505, %v2498, %v2500
      %v2507 = vsel %vm2505, %v2500, %v2502
      %v2508 = vsel %vm2505, %v2502, %v2504
      %v2510 = vsel %vm207, %v2478, 0
      %v2513 = vsel %vm211, %v2506, 0
      %v2516 = vsel %vm211, %v2507, 0
      %v2519 = vsel %vm211, %v2508, 0
      %2521 = vmatprep.subr.bf16.mxu0 %v2516
      %2522 = vmatpush1.bf16.msra.mxu0 %v2513
      %2523 = vmatprep.subr.bf16.mxu0 0
      %2524 = vmatpush1.bf16.msra.mxu0 0
      %2525 = vmatprep.subr.bf16.mxu0 0
      %2526 = vmatpush1.bf16.msra.mxu0 0
      %2527 = vmatprep.subr.bf16.mxu0 0
      %2528 = vmatpush1.bf16.msra.mxu0 0
      %2529 = vmatprep.subr.bf16.mxu0 0
      %2530 = vmatpush1.bf16.msra.mxu0 0
      %2531 = vmatprep.subr.bf16.mxu0 0
      %2532 = vmatpush1.bf16.msra.mxu0 0
      %2533 = vmatprep.subr.bf16.mxu0 0
      %2534 = vmatpush1.bf16.msra.mxu0 0
      %2535 = vmatprep.subr.bf16.mxu0 0
      %2536 = vmatpush1.bf16.msra.mxu0 0
      %2537 = vmatprep.subr.bf16.mxu0 0
      %2538 = vmatpush1.bf16.msra.mxu0 0
      %2539 = vmatprep.subr.bf16.mxu0 0
      %2540 = vmatpush1.bf16.msra.mxu0 0
      %2541 = vmatprep.subr.bf16.mxu0 0
      %2542 = vmatpush1.bf16.msra.mxu0 0
      %2543 = vmatprep.subr.bf16.mxu0 0
      %2544 = vmatpush1.bf16.msra.mxu0 0
      %2545 = vmatprep.subr.bf16.mxu0 0
      %2546 = vmatpush1.bf16.msra.mxu0 0
      %2547 = vmatprep.subr.bf16.mxu0 0
      %2548 = vmatpush1.bf16.msra.mxu0 0
      %2549 = vmatprep.subr.bf16.mxu0 0
      %2550 = vmatpush1.bf16.msra.mxu0 0
      %2551 = vmatprep.subr.bf16.mxu0 0
      %2552 = vmatpush1.bf16.msra.mxu0 0
      %2553 = vmatprep.mubr.bf16.mxu0 0
      %2554 = vmatmul.mubr.bf16.gmra.mrb[0].mxu0 %v2510
      %v2555 = vpop.f32.mrb[0].mxu0
      %v2556 = vadd.f32 0.0, %v2555
      %v2557 = vpop.f32.mrb[0].mxu0
      %v2558 = vadd.f32 0.0, %v2557
      %v2559 = vpop.f32.mrb[0].mxu0
      %v2560 = vpop.f32.mrb[0].mxu0
      %2561 = vdwg.mxu0
      %2562 = vmatprep.subr.bf16.mxu0 0
      %2563 = vmatpush1.bf16.msra.mxu0 %v2519
      %2564 = vmatprep.subr.bf16.mxu0 0
      %2565 = vmatpush1.bf16.msra.mxu0 0
      %2566 = vmatprep.subr.bf16.mxu0 0
      %2567 = vmatpush1.bf16.msra.mxu0 0
      %2568 = vmatprep.subr.bf16.mxu0 0
      %2569 = vmatpush1.bf16.msra.mxu0 0
      %2570 = vmatprep.subr.bf16.mxu0 0
      %2571 = vmatpush1.bf16.msra.mxu0 0
      %2572 = vmatprep.subr.bf16.mxu0 0
      %2573 = vmatpush1.bf16.msra.mxu0 0
      %2574 = vmatprep.subr.bf16.mxu0 0
      %2575 = vmatpush1.bf16.msra.mxu0 0
      %2576 = vmatprep.subr.bf16.mxu0 0
      %2577 = vmatpush1.bf16.msra.mxu0 0
      %2578 = vmatprep.subr.bf16.mxu0 0
      %2579 = vmatpush1.bf16.msra.mxu0 0
      %2580 = vmatprep.subr.bf16.mxu0 0
      %2581 = vmatpush1.bf16.msra.mxu0 0
      %2582 = vmatprep.subr.bf16.mxu0 0
      %2583 = vmatpush1.bf16.msra.mxu0 0
      %2584 = vmatprep.subr.bf16.mxu0 0
      %2585 = vmatpush1.bf16.msra.mxu0 0
      %2586 = vmatprep.subr.bf16.mxu0 0
      %2587 = vmatpush1.bf16.msra.mxu0 0
      %2588 = vmatprep.subr.bf16.mxu0 0
      %2589 = vmatpush1.bf16.msra.mxu0 0
      %2590 = vmatprep.subr.bf16.mxu0 0
      %2591 = vmatpush1.bf16.msra.mxu0 0
      %2592 = vmatprep.subr.bf16.mxu0 0
      %2593 = vmatpush1.bf16.msra.mxu0 0
      %2594 = vmatprep.mubr.bf16.mxu0 0
      %2595 = vmatmul.mubr.bf16.gmra.mrb[0].mxu0 %v2510
      %v2596 = vpop.f32.mrb[0].mxu0
      %v2597 = vadd.f32 0.0, %v2596
      %v2598 = vpop.f32.mrb[0].mxu0
      %v2599 = vpop.f32.mrb[0].mxu0
      %v2600 = vpop.f32.mrb[0].mxu0
      %2601 = vdwg.mxu0
      %v2602 = vadd.f32 %v2473, %v2556
      %v2603 = vadd.f32 %v2474, %v2558
      %v2604 = vadd.f32 %v2475, %v2597
      %v2605 = vld [vmem:[%s165] sm:$0xff]
      %s2606 = scalar_lea.vmem %s1, 76
      %v2607 = vld [vmem:[%s2606] sm:$0xf]
      %v2609 = vcombine.high %v2605, %v2605
      %v2611 = vunpack.c.l.s4 1983009808
      %v2612 = vunpack.c.0.s8 %v2611
      %v2613 = vlaneseq
      %v2614 = vshrl.u32 %v2613, 7
      %v2615 = vsub.s32 %v2612, %v2614
      %v2616 = vrot.slane %v2605, %v2615
      %v2618 = vunpack.c.l.s4 1983009808
      %v2619 = vunpack.c.0.s8 %v2618
      %v2620 = vlaneseq
      %v2621 = vshrl.u32 %v2620, 7
      %v2622 = vsub.s32 %v2619, %v2621
      %v2623 = vrot.slane %v2609, %v2622
      %v2624 = vcombine.high %v2616, %v2616
      %v2625 = vcombine.high %v2623, %v2623
      %2626 = vrot.lane.b32.xlu0 %v2616, 79
      %v2627 = vpop.permute.xlu0 %2626
      %2628 = vrot.lane.b32.xlu0 %v2624, 79
      %v2629 = vpop.permute.xlu0 %2628
      %2630 = vrot.lane.b32.xlu0 %v2623, 79
      %v2631 = vpop.permute.xlu0 %2630
      %2632 = vrot.lane.b32.xlu0 %v2625, 79
      %v2633 = vpop.permute.xlu0 %2632
      %vm2634 = vcmask 646144
      %v2635 = vsel %vm2634, %v2627, %v2629
      %v2636 = vsel %vm2634, %v2629, %v2631
      %v2637 = vsel %vm2634, %v2631, %v2633
      %v2639 = vsel %vm207, %v2607, 0
      %v2642 = vsel %vm211, %v2635, 0
      %v2645 = vsel %vm211, %v2636, 0
      %v2648 = vsel %vm211, %v2637, 0
      %2650 = vmatprep.subr.bf16.mxu0 %v2645
      %2651 = vmatpush1.bf16.msra.mxu0 %v2642
      %2652 = vmatprep.subr.bf16.mxu0 0
      %2653 = vmatpush1.bf16.msra.mxu0 0
      %2654 = vmatprep.subr.bf16.mxu0 0
      %2655 = vmatpush1.bf16.msra.mxu0 0
      %2656 = vmatprep.subr.bf16.mxu0 0
      %2657 = vmatpush1.bf16.msra.mxu0 0
      %2658 = vmatprep.subr.bf16.mxu0 0
      %2659 = vmatpush1.bf16.msra.mxu0 0
      %2660 = vmatprep.subr.bf16.mxu0 0
      %2661 = vmatpush1.bf16.msra.mxu0 0
      %2662 = vmatprep.subr.bf16.mxu0 0
      %2663 = vmatpush1.bf16.msra.mxu0 0
      %2664 = vmatprep.subr.bf16.mxu0 0
      %2665 = vmatpush1.bf16.msra.mxu0 0
      %2666 = vmatprep.subr.bf16.mxu0 0
      %2667 = vmatpush1.bf16.msra.mxu0 0
      %2668 = vmatprep.subr.bf16.mxu0 0
      %2669 = vmatpush1.bf16.msra.mxu0 0
      %2670 = vmatprep.subr.bf16.mxu0 0
      %2671 = vmatpush1.bf16.msra.mxu0 0
      %2672 = vmatprep.subr.bf16.mxu0 0
      %2673 = vmatpush1.bf16.msra.mxu0 0
      %2674 = vmatprep.subr.bf16.mxu0 0
      %2675 = vmatpush1.bf16.msra.mxu0 0
      %2676 = vmatprep.subr.bf16.mxu0 0
      %2677 = vmatpush1.bf16.msra.mxu0 0
      %2678 = vmatprep.subr.bf16.mxu0 0
      %2679 = vmatpush1.bf16.msra.mxu0 0
      %2680 = vmatprep.subr.bf16.mxu0 0
      %2681 = vmatpush1.bf16.msra.mxu0 0
      %2682 = vmatprep.mubr.bf16.mxu0 0
      %2683 = vmatmul.mubr.bf16.gmra.mrb[0].mxu0 %v2639
      %v2684 = vpop.f32.mrb[0].mxu0
      %v2685 = vadd.f32 0.0, %v2684
      %v2686 = vpop.f32.mrb[0].mxu0
      %v2687 = vadd.f32 0.0, %v2686
      %v2688 = vpop.f32.mrb[0].mxu0
      %v2689 = vpop.f32.mrb[0].mxu0
      %2690 = vdwg.mxu0
      %2691 = vmatprep.subr.bf16.mxu0 0
      %2692 = vmatpush1.bf16.msra.mxu0 %v2648
      %2693 = vmatprep.subr.bf16.mxu0 0
      %2694 = vmatpush1.bf16.msra.mxu0 0
      %2695 = vmatprep.subr.bf16.mxu0 0
      %2696 = vmatpush1.bf16.msra.mxu0 0
      %2697 = vmatprep.subr.bf16.mxu0 0
      %2698 = vmatpush1.bf16.msra.mxu0 0
      %2699 = vmatprep.subr.bf16.mxu0 0
      %2700 = vmatpush1.bf16.msra.mxu0 0
      %2701 = vmatprep.subr.bf16.mxu0 0
      %2702 = vmatpush1.bf16.msra.mxu0 0
      %2703 = vmatprep.subr.bf16.mxu0 0
      %2704 = vmatpush1.bf16.msra.mxu0 0
      %2705 = vmatprep.subr.bf16.mxu0 0
      %2706 = vmatpush1.bf16.msra.mxu0 0
      %2707 = vmatprep.subr.bf16.mxu0 0
      %2708 = vmatpush1.bf16.msra.mxu0 0
      %2709 = vmatprep.subr.bf16.mxu0 0
      %2710 = vmatpush1.bf16.msra.mxu0 0
      %2711 = vmatprep.subr.bf16.mxu0 0
      %2712 = vmatpush1.bf16.msra.mxu0 0
      %2713 = vmatprep.subr.bf16.mxu0 0
      %2714 = vmatpush1.bf16.msra.mxu0 0
      %2715 = vmatprep.subr.bf16.mxu0 0
      %2716 = vmatpush1.bf16.msra.mxu0 0
      %2717 = vmatprep.subr.bf16.mxu0 0
      %2718 = vmatpush1.bf16.msra.mxu0 0
      %2719 = vmatprep.subr.bf16.mxu0 0
      %2720 = vmatpush1.bf16.msra.mxu0 0
      %2721 = vmatprep.subr.bf16.mxu0 0
      %2722 = vmatpush1.bf16.msra.mxu0 0
      %2723 = vmatprep.mubr.bf16.mxu0 0
      %2724 = vmatmul.mubr.bf16.gmra.mrb[0].mxu0 %v2639
      %v2725 = vpop.f32.mrb[0].mxu0
      %v2726 = vadd.f32 0.0, %v2725
      %v2727 = vpop.f32.mrb[0].mxu0
      %v2728 = vpop.f32.mrb[0].mxu0
      %v2729 = vpop.f32.mrb[0].mxu0
      %2730 = vdwg.mxu0
      %v2731 = vadd.f32 %v2602, %v2685
      %v2732 = vadd.f32 %v2603, %v2687
      %v2733 = vadd.f32 %v2604, %v2726
      %v2734 = vld [vmem:[%s165] sm:$0xff]
      %s2735 = scalar_lea.vmem %s1, 80
      %v2736 = vld [vmem:[%s2735] sm:$0xf]
      %v2738 = vcombine.high %v2734, %v2734
      %v2740 = vunpack.c.l.s4 1983009808
      %v2741 = vunpack.c.0.s8 %v2740
      %v2742 = vlaneseq
      %v2743 = vshrl.u32 %v2742, 7
      %v2744 = vsub.s32 %v2741, %v2743
      %v2745 = vrot.slane %v2734, %v2744
      %v2747 = vunpack.c.l.s4 1983009808
      %v2748 = vunpack.c.0.s8 %v2747
      %v2749 = vlaneseq
      %v2750 = vshrl.u32 %v2749, 7
      %v2751 = vsub.s32 %v2748, %v2750
      %v2752 = vrot.slane %v2738, %v2751
      %v2753 = vcombine.high %v2745, %v2745
      %v2754 = vcombine.high %v2752, %v2752
      %2755 = vrot.lane.b32.xlu0 %v2745, 78
      %v2756 = vpop.permute.xlu0 %2755
      %2757 = vrot.lane.b32.xlu0 %v2753, 78
      %v2758 = vpop.permute.xlu0 %2757
      %2759 = vrot.lane.b32.xlu0 %v2752, 78
      %v2760 = vpop.permute.xlu0 %2759
      %2761 = vrot.lane.b32.xlu0 %v2754, 78
      %v2762 = vpop.permute.xlu0 %2761
      %vm2763 = vcmask 637952
      %v2764 = vsel %vm2763, %v2756, %v2758
      %v2765 = vsel %vm2763, %v2758, %v2760
      %v2766 = vsel %vm2763, %v2760, %v2762
      %v2768 = vsel %vm207, %v2736, 0
      %v2771 = vsel %vm211, %v2764, 0
      %v2774 = vsel %vm211, %v2765, 0
      %v2777 = vsel %vm211, %v2766, 0
      %2779 = vmatprep.subr.bf16.mxu0 %v2774
      %2780 = vmatpush1.bf16.msra.mxu0 %v2771
      %2781 = vmatprep.subr.bf16.mxu0 0
      %2782 = vmatpush1.bf16.msra.mxu0 0
      %2783 = vmatprep.subr.bf16.mxu0 0
      %2784 = vmatpush1.bf16.msra.mxu0 0
      %2785 = vmatprep.subr.bf16.mxu0 0
      %2786 = vmatpush1.bf16.msra.mxu0 0
      %2787 = vmatprep.subr.bf16.mxu0 0
      %2788 = vmatpush1.bf16.msra.mxu0 0
      %2789 = vmatprep.subr.bf16.mxu0 0
      %2790 = vmatpush1.bf16.msra.mxu0 0
      %2791 = vmatprep.subr.bf16.mxu0 0
      %2792 = vmatpush1.bf16.msra.mxu0 0
      %2793 = vmatprep.subr.bf16.mxu0 0
      %2794 = vmatpush1.bf16.msra.mxu0 0
      %2795 = vmatprep.subr.bf16.mxu0 0
      %2796 = vmatpush1.bf16.msra.mxu0 0
      %2797 = vmatprep.subr.bf16.mxu0 0
      %2798 = vmatpush1.bf16.msra.mxu0 0
      %2799 = vmatprep.subr.bf16.mxu0 0
      %2800 = vmatpush1.bf16.msra.mxu0 0
      %2801 = vmatprep.subr.bf16.mxu0 0
      %2802 = vmatpush1.bf16.msra.mxu0 0
      %2803 = vmatprep.subr.bf16.mxu0 0
      %2804 = vmatpush1.bf16.msra.mxu0 0
      %2805 = vmatprep.subr.bf16.mxu0 0
      %2806 = vmatpush1.bf16.msra.mxu0 0
      %2807 = vmatprep.subr.bf16.mxu0 0
      %2808 = vmatpush1.bf16.msra.mxu0 0
      %2809 = vmatprep.subr.bf16.mxu0 0
      %2810 = vmatpush1.bf16.msra.mxu0 0
      %2811 = vmatprep.mubr.bf16.mxu0 0
      %2812 = vmatmul.mubr.bf16.gmra.mrb[0].mxu0 %v2768
      %v2813 = vpop.f32.mrb[0].mxu0
      %v2814 = vadd.f32 0.0, %v2813
      %v2815 = vpop.f32.mrb[0].mxu0
      %v2816 = vadd.f32 0.0, %v2815
      %v2817 = vpop.f32.mrb[0].mxu0
      %v2818 = vpop.f32.mrb[0].mxu0
      %2819 = vdwg.mxu0
      %2820 = vmatprep.subr.bf16.mxu0 0
      %2821 = vmatpush1.bf16.msra.mxu0 %v2777
      %2822 = vmatprep.subr.bf16.mxu0 0
      %2823 = vmatpush1.bf16.msra.mxu0 0
      %2824 = vmatprep.subr.bf16.mxu0 0
      %2825 = vmatpush1.bf16.msra.mxu0 0
      %2826 = vmatprep.subr.bf16.mxu0 0
      %2827 = vmatpush1.bf16.msra.mxu0 0
      %2828 = vmatprep.subr.bf16.mxu0 0
      %2829 = vmatpush1.bf16.msra.mxu0 0
      %2830 = vmatprep.subr.bf16.mxu0 0
      %2831 = vmatpush1.bf16.msra.mxu0 0
      %2832 = vmatprep.subr.bf16.mxu0 0
      %2833 = vmatpush1.bf16.msra.mxu0 0
      %2834 = vmatprep.subr.bf16.mxu0 0
      %2835 = vmatpush1.bf16.msra.mxu0 0
      %2836 = vmatprep.subr.bf16.mxu0 0
      %2837 = vmatpush1.bf16.msra.mxu0 0
      %2838 = vmatprep.subr.bf16.mxu0 0
      %2839 = vmatpush1.bf16.msra.mxu0 0
      %2840 = vmatprep.subr.bf16.mxu0 0
      %2841 = vmatpush1.bf16.msra.mxu0 0
      %2842 = vmatprep.subr.bf16.mxu0 0
      %2843 = vmatpush1.bf16.msra.mxu0 0
      %2844 = vmatprep.subr.bf16.mxu0 0
      %2845 = vmatpush1.bf16.msra.mxu0 0
      %2846 = vmatprep.subr.bf16.mxu0 0
      %2847 = vmatpush1.bf16.msra.mxu0 0
      %2848 = vmatprep.subr.bf16.mxu0 0
      %2849 = vmatpush1.bf16.msra.mxu0 0
      %2850 = vmatprep.subr.bf16.mxu0 0
      %2851 = vmatpush1.bf16.msra.mxu0 0
      %2852 = vmatprep.mubr.bf16.mxu0 0
      %2853 = vmatmul.mubr.bf16.gmra.mrb[0].mxu0 %v2768
      %v2854 = vpop.f32.mrb[0].mxu0
      %v2855 = vadd.f32 0.0, %v2854
      %v2856 = vpop.f32.mrb[0].mxu0
      %v2857 = vpop.f32.mrb[0].mxu0
      %v2858 = vpop.f32.mrb[0].mxu0
      %2859 = vdwg.mxu0
      %v2860 = vadd.f32 %v2731, %v2814
      %v2861 = vadd.f32 %v2732, %v2816
      %v2862 = vadd.f32 %v2733, %v2855
      %v2863 = vld [vmem:[%s165] sm:$0xff]
      %s2864 = scalar_lea.vmem %s1, 84
      %v2865 = vld [vmem:[%s2864] sm:$0xf]
      %v2867 = vcombine.high %v2863, %v2863
      %v2869 = vunpack.c.l.s4 1983009808
      %v2870 = vunpack.c.0.s8 %v2869
      %v2871 = vlaneseq
      %v2872 = vshrl.u32 %v2871, 7
      %v2873 = vsub.s32 %v2870, %v2872
      %v2874 = vrot.slane %v2863, %v2873
      %v2876 = vunpack.c.l.s4 1983009808
      %v2877 = vunpack.c.0.s8 %v2876
      %v2878 = vlaneseq
      %v2879 = vshrl.u32 %v2878, 7
      %v2880 = vsub.s32 %v2877, %v2879
      %v2881 = vrot.slane %v2867, %v2880
      %v2882 = vcombine.high %v2874, %v2874
      %v2883 = vcombine.high %v2881, %v2881
      %2884 = vrot.lane.b32.xlu0 %v2874, 62
      %v2885 = vpop.permute.xlu0 %2884
      %2886 = vrot.lane.b32.xlu0 %v2882, 62
      %v2887 = vpop.permute.xlu0 %2886
      %2888 = vrot.lane.b32.xlu0 %v2881, 62
      %v2889 = vpop.permute.xlu0 %2888
      %2890 = vrot.lane.b32.xlu0 %v2883, 62
      %v2891 = vpop.permute.xlu0 %2890
      %vm2892 = vcmask 506880
      %v2893 = vsel %vm2892, %v2885, %v2887
      %v2894 = vsel %vm2892, %v2887, %v2889
      %v2895 = vsel %vm2892, %v2889, %v2891
      %v2897 = vsel %vm207, %v2865, 0
      %v2900 = vsel %vm211, %v2893, 0
      %v2903 = vsel %vm211, %v2894, 0
      %v2906 = vsel %vm211, %v2895, 0
      %2908 = vmatprep.subr.bf16.mxu0 %v2903
      %2909 = vmatpush1.bf16.msra.mxu0 %v2900
      %2910 = vmatprep.subr.bf16.mxu0 0
      %2911 = vmatpush1.bf16.msra.mxu0 0
      %2912 = vmatprep.subr.bf16.mxu0 0
      %2913 = vmatpush1.bf16.msra.mxu0 0
      %2914 = vmatprep.subr.bf16.mxu0 0
      %2915 = vmatpush1.bf16.msra.mxu0 0
      %2916 = vmatprep.subr.bf16.mxu0 0
      %2917 = vmatpush1.bf16.msra.mxu0 0
      %2918 = vmatprep.subr.bf16.mxu0 0
      %2919 = vmatpush1.bf16.msra.mxu0 0
      %2920 = vmatprep.subr.bf16.mxu0 0
      %2921 = vmatpush1.bf16.msra.mxu0 0
      %2922 = vmatprep.subr.bf16.mxu0 0
      %2923 = vmatpush1.bf16.msra.mxu0 0
      %2924 = vmatprep.subr.bf16.mxu0 0
      %2925 = vmatpush1.bf16.msra.mxu0 0
      %2926 = vmatprep.subr.bf16.mxu0 0
      %2927 = vmatpush1.bf16.msra.mxu0 0
      %2928 = vmatprep.subr.bf16.mxu0 0
      %2929 = vmatpush1.bf16.msra.mxu0 0
      %2930 = vmatprep.subr.bf16.mxu0 0
      %2931 = vmatpush1.bf16.msra.mxu0 0
      %2932 = vmatprep.subr.bf16.mxu0 0
      %2933 = vmatpush1.bf16.msra.mxu0 0
      %2934 = vmatprep.subr.bf16.mxu0 0
      %2935 = vmatpush1.bf16.msra.mxu0 0
      %2936 = vmatprep.subr.bf16.mxu0 0
      %2937 = vmatpush1.bf16.msra.mxu0 0
      %2938 = vmatprep.subr.bf16.mxu0 0
      %2939 = vmatpush1.bf16.msra.mxu0 0
      %2940 = vmatprep.mubr.bf16.mxu0 0
      %2941 = vmatmul.mubr.bf16.gmra.mrb[0].mxu0 %v2897
      %v2942 = vpop.f32.mrb[0].mxu0
      %v2943 = vadd.f32 0.0, %v2942
      %v2944 = vpop.f32.mrb[0].mxu0
      %v2945 = vadd.f32 0.0, %v2944
      %v2946 = vpop.f32.mrb[0].mxu0
      %v2947 = vpop.f32.mrb[0].mxu0
      %2948 = vdwg.mxu0
      %2949 = vmatprep.subr.bf16.mxu0 0
      %2950 = vmatpush1.bf16.msra.mxu0 %v2906
      %2951 = vmatprep.subr.bf16.mxu0 0
      %2952 = vmatpush1.bf16.msra.mxu0 0
      %2953 = vmatprep.subr.bf16.mxu0 0
      %2954 = vmatpush1.bf16.msra.mxu0 0
      %2955 = vmatprep.subr.bf16.mxu0 0
      %2956 = vmatpush1.bf16.msra.mxu0 0
      %2957 = vmatprep.subr.bf16.mxu0 0
      %2958 = vmatpush1.bf16.msra.mxu0 0
      %2959 = vmatprep.subr.bf16.mxu0 0
      %2960 = vmatpush1.bf16.msra.mxu0 0
      %2961 = vmatprep.subr.bf16.mxu0 0
      %2962 = vmatpush1.bf16.msra.mxu0 0
      %2963 = vmatprep.subr.bf16.mxu0 0
      %2964 = vmatpush1.bf16.msra.mxu0 0
      %2965 = vmatprep.subr.bf16.mxu0 0
      %2966 = vmatpush1.bf16.msra.mxu0 0
      %2967 = vmatprep.subr.bf16.mxu0 0
      %2968 = vmatpush1.bf16.msra.mxu0 0
      %2969 = vmatprep.subr.bf16.mxu0 0
      %2970 = vmatpush1.bf16.msra.mxu0 0
      %2971 = vmatprep.subr.bf16.mxu0 0
      %2972 = vmatpush1.bf16.msra.mxu0 0
      %2973 = vmatprep.subr.bf16.mxu0 0
      %2974 = vmatpush1.bf16.msra.mxu0 0
      %2975 = vmatprep.subr.bf16.mxu0 0
      %2976 = vmatpush1.bf16.msra.mxu0 0
      %2977 = vmatprep.subr.bf16.mxu0 0
      %2978 = vmatpush1.bf16.msra.mxu0 0
      %2979 = vmatprep.subr.bf16.mxu0 0
      %2980 = vmatpush1.bf16.msra.mxu0 0
      %2981 = vmatprep.mubr.bf16.mxu0 0
      %2982 = vmatmul.mubr.bf16.gmra.mrb[0].mxu0 %v2897
      %v2983 = vpop.f32.mrb[0].mxu0
      %v2984 = vadd.f32 0.0, %v2983
      %v2985 = vpop.f32.mrb[0].mxu0
      %v2986 = vpop.f32.mrb[0].mxu0
      %v2987 = vpop.f32.mrb[0].mxu0
      %2988 = vdwg.mxu0
      %v2989 = vadd.f32 %v2860, %v2943
      %v2990 = vadd.f32 %v2861, %v2945
      %v2991 = vadd.f32 %v2862, %v2984
      %v2992 = vld [vmem:[%s165] sm:$0xff]
      %s2993 = scalar_lea.vmem %s1, 88
      %v2994 = vld [vmem:[%s2993] sm:$0xf]
      %v2996 = vcombine.high %v2992, %v2992
      %v2998 = vunpack.c.l.s4 1983009808
      %v2999 = vunpack.c.0.s8 %v2998
      %v3000 = vlaneseq
      %v3001 = vshrl.u32 %v3000, 7
      %v3002 = vsub.s32 %v2999, %v3001
      %v3003 = vrot.slane %v2992, %v3002
      %v3005 = vunpack.c.l.s4 1983009808
      %v3006 = vunpack.c.0.s8 %v3005
      %v3007 = vlaneseq
      %v3008 = vshrl.u32 %v3007, 7
      %v3009 = vsub.s32 %v3006, %v3008
      %v3010 = vrot.slane %v2996, %v3009
      %v3011 = vcombine.high %v3003, %v3003
      %v3012 = vcombine.high %v3010, %v3010
      %3013 = vrot.lane.b32.xlu0 %v3003, 61
      %v3014 = vpop.permute.xlu0 %3013
      %3015 = vrot.lane.b32.xlu0 %v3011, 61
      %v3016 = vpop.permute.xlu0 %3015
      %3017 = vrot.lane.b32.xlu0 %v3010, 61
      %v3018 = vpop.permute.xlu0 %3017
      %3019 = vrot.lane.b32.xlu0 %v3012, 61
      %v3020 = vpop.permute.xlu0 %3019
      %vm3021 = vcmask 498688
      %v3022 = vsel %vm3021, %v3014, %v3016
      %v3023 = vsel %vm3021, %v3016, %v3018
      %v3024 = vsel %vm3021, %v3018, %v3020
      %v3026 = vsel %vm207, %v2994, 0
      %v3029 = vsel %vm211, %v3022, 0
      %v3032 = vsel %vm211, %v3023, 0
      %v3035 = vsel %vm211, %v3024, 0
      %3037 = vmatprep.subr.bf16.mxu0 %v3032
      %3038 = vmatpush1.bf16.msra.mxu0 %v3029
      %3039 = vmatprep.subr.bf16.mxu0 0
      %3040 = vmatpush1.bf16.msra.mxu0 0
      %3041 = vmatprep.subr.bf16.mxu0 0
      %3042 = vmatpush1.bf16.msra.mxu0 0
      %3043 = vmatprep.subr.bf16.mxu0 0
      %3044 = vmatpush1.bf16.msra.mxu0 0
      %3045 = vmatprep.subr.bf16.mxu0 0
      %3046 = vmatpush1.bf16.msra.mxu0 0
      %3047 = vmatprep.subr.bf16.mxu0 0
      %3048 = vmatpush1.bf16.msra.mxu0 0
      %3049 = vmatprep.subr.bf16.mxu0 0
      %3050 = vmatpush1.bf16.msra.mxu0 0
      %3051 = vmatprep.subr.bf16.mxu0 0
      %3052 = vmatpush1.bf16.msra.mxu0 0
      %3053 = vmatprep.subr.bf16.mxu0 0
      %3054 = vmatpush1.bf16.msra.mxu0 0
      %3055 = vmatprep.subr.bf16.mxu0 0
      %3056 = vmatpush1.bf16.msra.mxu0 0
      %3057 = vmatprep.subr.bf16.mxu0 0
      %3058 = vmatpush1.bf16.msra.mxu0 0
      %3059 = vmatprep.subr.bf16.mxu0 0
      %3060 = vmatpush1.bf16.msra.mxu0 0
      %3061 = vmatprep.subr.bf16.mxu0 0
      %3062 = vmatpush1.bf16.msra.mxu0 0
      %3063 = vmatprep.subr.bf16.mxu0 0
      %3064 = vmatpush1.bf16.msra.mxu0 0
      %3065 = vmatprep.subr.bf16.mxu0 0
      %3066 = vmatpush1.bf16.msra.mxu0 0
      %3067 = vmatprep.subr.bf16.mxu0 0
      %3068 = vmatpush1.bf16.msra.mxu0 0
      %3069 = vmatprep.mubr.bf16.mxu0 0
      %3070 = vmatmul.mubr.bf16.gmra.mrb[0].mxu0 %v3026
      %v3071 = vpop.f32.mrb[0].mxu0
      %v3072 = vadd.f32 0.0, %v3071
      %v3073 = vpop.f32.mrb[0].mxu0
      %v3074 = vadd.f32 0.0, %v3073
      %v3075 = vpop.f32.mrb[0].mxu0
      %v3076 = vpop.f32.mrb[0].mxu0
      %3077 = vdwg.mxu0
      %3078 = vmatprep.subr.bf16.mxu0 0
      %3079 = vmatpush1.bf16.msra.mxu0 %v3035
      %3080 = vmatprep.subr.bf16.mxu0 0
      %3081 = vmatpush1.bf16.msra.mxu0 0
      %3082 = vmatprep.subr.bf16.mxu0 0
      %3083 = vmatpush1.bf16.msra.mxu0 0
      %3084 = vmatprep.subr.bf16.mxu0 0
      %3085 = vmatpush1.bf16.msra.mxu0 0
      %3086 = vmatprep.subr.bf16.mxu0 0
      %3087 = vmatpush1.bf16.msra.mxu0 0
      %3088 = vmatprep.subr.bf16.mxu0 0
      %3089 = vmatpush1.bf16.msra.mxu0 0
      %3090 = vmatprep.subr.bf16.mxu0 0
      %3091 = vmatpush1.bf16.msra.mxu0 0
      %3092 = vmatprep.subr.bf16.mxu0 0
      %3093 = vmatpush1.bf16.msra.mxu0 0
      %3094 = vmatprep.subr.bf16.mxu0 0
      %3095 = vmatpush1.bf16.msra.mxu0 0
      %3096 = vmatprep.subr.bf16.mxu0 0
      %3097 = vmatpush1.bf16.msra.mxu0 0
      %3098 = vmatprep.subr.bf16.mxu0 0
      %3099 = vmatpush1.bf16.msra.mxu0 0
      %3100 = vmatprep.subr.bf16.mxu0 0
      %3101 = vmatpush1.bf16.msra.mxu0 0
      %3102 = vmatprep.subr.bf16.mxu0 0
      %3103 = vmatpush1.bf16.msra.mxu0 0
      %3104 = vmatprep.subr.bf16.mxu0 0
      %3105 = vmatpush1.bf16.msra.mxu0 0
      %3106 = vmatprep.subr.bf16.mxu0 0
      %3107 = vmatpush1.bf16.msra.mxu0 0
      %3108 = vmatprep.subr.bf16.mxu0 0
      %3109 = vmatpush1.bf16.msra.mxu0 0
      %3110 = vmatprep.mubr.bf16.mxu0 0
      %3111 = vmatmul.mubr.bf16.gmra.mrb[0].mxu0 %v3026
      %v3112 = vpop.f32.mrb[0].mxu0
      %v3113 = vadd.f32 0.0, %v3112
      %v3114 = vpop.f32.mrb[0].mxu0
      %v3115 = vpop.f32.mrb[0].mxu0
      %v3116 = vpop.f32.mrb[0].mxu0
      %3117 = vdwg.mxu0
      %v3118 = vadd.f32 %v2989, %v3072
      %v3119 = vadd.f32 %v2990, %v3074
      %v3120 = vadd.f32 %v2991, %v3113
      %v3121 = vld [vmem:[%s165] sm:$0xff]
      %s3122 = scalar_lea.vmem %s1, 92
      %v3123 = vld [vmem:[%s3122] sm:$0xf]
      %v3125 = vcombine.high %v3121, %v3121
      %v3127 = vunpack.c.l.s4 1983009808
      %v3128 = vunpack.c.0.s8 %v3127
      %v3129 = vlaneseq
      %v3130 = vshrl.u32 %v3129, 7
      %v3131 = vsub.s32 %v3128, %v3130
      %v3132 = vrot.slane %v3121, %v3131
      %v3134 = vunpack.c.l.s4 1983009808
      %v3135 = vunpack.c.0.s8 %v3134
      %v3136 = vlaneseq
      %v3137 = vshrl.u32 %v3136, 7
      %v3138 = vsub.s32 %v3135, %v3137
      %v3139 = vrot.slane %v3125, %v3138
      %v3140 = vcombine.high %v3132, %v3132
      %v3141 = vcombine.high %v3139, %v3139
      %3142 = vrot.lane.b32.xlu0 %v3132, 60
      %v3143 = vpop.permute.xlu0 %3142
      %3144 = vrot.lane.b32.xlu0 %v3140, 60
      %v3145 = vpop.permute.xlu0 %3144
      %3146 = vrot.lane.b32.xlu0 %v3139, 60
      %v3147 = vpop.permute.xlu0 %3146
      %3148 = vrot.lane.b32.xlu0 %v3141, 60
      %v3149 = vpop.permute.xlu0 %3148
      %vm3150 = vcmask 490496
      %v3151 = vsel %vm3150, %v3143, %v3145
      %v3152 = vsel %vm3150, %v3145, %v3147
      %v3153 = vsel %vm3150, %v3147, %v3149
      %v3155 = vsel %vm207, %v3123, 0
      %v3158 = vsel %vm211, %v3151, 0
      %v3161 = vsel %vm211, %v3152, 0
      %v3164 = vsel %vm211, %v3153, 0
      %3166 = vmatprep.subr.bf16.mxu0 %v3161
      %3167 = vmatpush1.bf16.msra.mxu0 %v3158
      %3168 = vmatprep.subr.bf16.mxu0 0
      %3169 = vmatpush1.bf16.msra.mxu0 0
      %3170 = vmatprep.subr.bf16.mxu0 0
      %3171 = vmatpush1.bf16.msra.mxu0 0
      %3172 = vmatprep.subr.bf16.mxu0 0
      %3173 = vmatpush1.bf16.msra.mxu0 0
      %3174 = vmatprep.subr.bf16.mxu0 0
      %3175 = vmatpush1.bf16.msra.mxu0 0
      %3176 = vmatprep.subr.bf16.mxu0 0
      %3177 = vmatpush1.bf16.msra.mxu0 0
      %3178 = vmatprep.subr.bf16.mxu0 0
      %3179 = vmatpush1.bf16.msra.mxu0 0
      %3180 = vmatprep.subr.bf16.mxu0 0
      %3181 = vmatpush1.bf16.msra.mxu0 0
      %3182 = vmatprep.subr.bf16.mxu0 0
      %3183 = vmatpush1.bf16.msra.mxu0 0
      %3184 = vmatprep.subr.bf16.mxu0 0
      %3185 = vmatpush1.bf16.msra.mxu0 0
      %3186 = vmatprep.subr.bf16.mxu0 0
      %3187 = vmatpush1.bf16.msra.mxu0 0
      %3188 = vmatprep.subr.bf16.mxu0 0
      %3189 = vmatpush1.bf16.msra.mxu0 0
      %3190 = vmatprep.subr.bf16.mxu0 0
      %3191 = vmatpush1.bf16.msra.mxu0 0
      %3192 = vmatprep.subr.bf16.mxu0 0
      %3193 = vmatpush1.bf16.msra.mxu0 0
      %3194 = vmatprep.subr.bf16.mxu0 0
      %3195 = vmatpush1.bf16.msra.mxu0 0
      %3196 = vmatprep.subr.bf16.mxu0 0
      %3197 = vmatpush1.bf16.msra.mxu0 0
      %3198 = vmatprep.mubr.bf16.mxu0 0
      %3199 = vmatmul.mubr.bf16.gmra.mrb[0].mxu0 %v3155
      %v3200 = vpop.f32.mrb[0].mxu0
      %v3201 = vadd.f32 0.0, %v3200
      %v3202 = vpop.f32.mrb[0].mxu0
      %v3203 = vadd.f32 0.0, %v3202
      %v3204 = vpop.f32.mrb[0].mxu0
      %v3205 = vpop.f32.mrb[0].mxu0
      %3206 = vdwg.mxu0
      %3207 = vmatprep.subr.bf16.mxu0 0
      %3208 = vmatpush1.bf16.msra.mxu0 %v3164
      %3209 = vmatprep.subr.bf16.mxu0 0
      %3210 = vmatpush1.bf16.msra.mxu0 0
      %3211 = vmatprep.subr.bf16.mxu0 0
      %3212 = vmatpush1.bf16.msra.mxu0 0
      %3213 = vmatprep.subr.bf16.mxu0 0
      %3214 = vmatpush1.bf16.msra.mxu0 0
      %3215 = vmatprep.subr.bf16.mxu0 0
      %3216 = vmatpush1.bf16.msra.mxu0 0
      %3217 = vmatprep.subr.bf16.mxu0 0
      %3218 = vmatpush1.bf16.msra.mxu0 0
      %3219 = vmatprep.subr.bf16.mxu0 0
      %3220 = vmatpush1.bf16.msra.mxu0 0
      %3221 = vmatprep.subr.bf16.mxu0 0
      %3222 = vmatpush1.bf16.msra.mxu0 0
      %3223 = vmatprep.subr.bf16.mxu0 0
      %3224 = vmatpush1.bf16.msra.mxu0 0
      %3225 = vmatprep.subr.bf16.mxu0 0
      %3226 = vmatpush1.bf16.msra.mxu0 0
      %3227 = vmatprep.subr.bf16.mxu0 0
      %3228 = vmatpush1.bf16.msra.mxu0 0
      %3229 = vmatprep.subr.bf16.mxu0 0
      %3230 = vmatpush1.bf16.msra.mxu0 0
      %3231 = vmatprep.subr.bf16.mxu0 0
      %3232 = vmatpush1.bf16.msra.mxu0 0
      %3233 = vmatprep.subr.bf16.mxu0 0
      %3234 = vmatpush1.bf16.msra.mxu0 0
      %3235 = vmatprep.subr.bf16.mxu0 0
      %3236 = vmatpush1.bf16.msra.mxu0 0
      %3237 = vmatprep.subr.bf16.mxu0 0
      %3238 = vmatpush1.bf16.msra.mxu0 0
      %3239 = vmatprep.mubr.bf16.mxu0 0
      %3240 = vmatmul.mubr.bf16.gmra.mrb[0].mxu0 %v3155
      %v3241 = vpop.f32.mrb[0].mxu0
      %v3242 = vadd.f32 0.0, %v3241
      %v3243 = vpop.f32.mrb[0].mxu0
      %v3244 = vpop.f32.mrb[0].mxu0
      %v3245 = vpop.f32.mrb[0].mxu0
      %3246 = vdwg.mxu0
      %v3247 = vadd.f32 %v3118, %v3201
      %v3248 = vadd.f32 %v3119, %v3203
      %v3249 = vadd.f32 %v3120, %v3242
      %v3250 = vld [vmem:[%s165] sm:$0xff]
      %s3251 = scalar_lea.vmem %s1, 96
      %v3252 = vld [vmem:[%s3251] sm:$0xf]
      %v3254 = vcombine.high %v3250, %v3250
      %v3256 = vunpack.c.l.s4 1983009808
      %v3257 = vunpack.c.0.s8 %v3256
      %v3258 = vlaneseq
      %v3259 = vshrl.u32 %v3258, 7
      %v3260 = vsub.s32 %v3257, %v3259
      %v3261 = vrot.slane %v3250, %v3260
      %v3263 = vunpack.c.l.s4 1983009808
      %v3264 = vunpack.c.0.s8 %v3263
      %v3265 = vlaneseq
      %v3266 = vshrl.u32 %v3265, 7
      %v3267 = vsub.s32 %v3264, %v3266
      %v3268 = vrot.slane %v3254, %v3267
      %v3269 = vcombine.high %v3261, %v3261
      %v3270 = vcombine.high %v3268, %v3268
      %3271 = vrot.lane.b32.xlu0 %v3261, 59
      %v3272 = vpop.permute.xlu0 %3271
      %3273 = vrot.lane.b32.xlu0 %v3269, 59
      %v3274 = vpop.permute.xlu0 %3273
      %3275 = vrot.lane.b32.xlu0 %v3268, 59
      %v3276 = vpop.permute.xlu0 %3275
      %3277 = vrot.lane.b32.xlu0 %v3270, 59
      %v3278 = vpop.permute.xlu0 %3277
      %vm3279 = vcmask 482304
      %v3280 = vsel %vm3279, %v3272, %v3274
      %v3281 = vsel %vm3279, %v3274, %v3276
      %v3282 = vsel %vm3279, %v3276, %v3278
      %v3284 = vsel %vm207, %v3252, 0
      %v3287 = vsel %vm211, %v3280, 0
      %v3290 = vsel %vm211, %v3281, 0
      %v3293 = vsel %vm211, %v3282, 0
      %3295 = vmatprep.subr.bf16.mxu0 %v3290
      %3296 = vmatpush1.bf16.msra.mxu0 %v3287
      %3297 = vmatprep.subr.bf16.mxu0 0
      %3298 = vmatpush1.bf16.msra.mxu0 0
      %3299 = vmatprep.subr.bf16.mxu0 0
      %3300 = vmatpush1.bf16.msra.mxu0 0
      %3301 = vmatprep.subr.bf16.mxu0 0
      %3302 = vmatpush1.bf16.msra.mxu0 0
      %3303 = vmatprep.subr.bf16.mxu0 0
      %3304 = vmatpush1.bf16.msra.mxu0 0
      %3305 = vmatprep.subr.bf16.mxu0 0
      %3306 = vmatpush1.bf16.msra.mxu0 0
      %3307 = vmatprep.subr.bf16.mxu0 0
      %3308 = vmatpush1.bf16.msra.mxu0 0
      %3309 = vmatprep.subr.bf16.mxu0 0
      %3310 = vmatpush1.bf16.msra.mxu0 0
      %3311 = vmatprep.subr.bf16.mxu0 0
      %3312 = vmatpush1.bf16.msra.mxu0 0
      %3313 = vmatprep.subr.bf16.mxu0 0
      %3314 = vmatpush1.bf16.msra.mxu0 0
      %3315 = vmatprep.subr.bf16.mxu0 0
      %3316 = vmatpush1.bf16.msra.mxu0 0
      %3317 = vmatprep.subr.bf16.mxu0 0
      %3318 = vmatpush1.bf16.msra.mxu0 0
      %3319 = vmatprep.subr.bf16.mxu0 0
      %3320 = vmatpush1.bf16.msra.mxu0 0
      %3321 = vmatprep.subr.bf16.mxu0 0
      %3322 = vmatpush1.bf16.msra.mxu0 0
      %3323 = vmatprep.subr.bf16.mxu0 0
      %3324 = vmatpush1.bf16.msra.mxu0 0
      %3325 = vmatprep.subr.bf16.mxu0 0
      %3326 = vmatpush1.bf16.msra.mxu0 0
      %3327 = vmatprep.mubr.bf16.mxu0 0
      %3328 = vmatmul.mubr.bf16.gmra.mrb[0].mxu0 %v3284
      %v3329 = vpop.f32.mrb[0].mxu0
      %v3330 = vadd.f32 0.0, %v3329
      %v3331 = vpop.f32.mrb[0].mxu0
      %v3332 = vadd.f32 0.0, %v3331
      %v3333 = vpop.f32.mrb[0].mxu0
      %v3334 = vpop.f32.mrb[0].mxu0
      %3335 = vdwg.mxu0
      %3336 = vmatprep.subr.bf16.mxu0 0
      %3337 = vmatpush1.bf16.msra.mxu0 %v3293
      %3338 = vmatprep.subr.bf16.mxu0 0
      %3339 = vmatpush1.bf16.msra.mxu0 0
      %3340 = vmatprep.subr.bf16.mxu0 0
      %3341 = vmatpush1.bf16.msra.mxu0 0
      %3342 = vmatprep.subr.bf16.mxu0 0
      %3343 = vmatpush1.bf16.msra.mxu0 0
      %3344 = vmatprep.subr.bf16.mxu0 0
      %3345 = vmatpush1.bf16.msra.mxu0 0
      %3346 = vmatprep.subr.bf16.mxu0 0
      %3347 = vmatpush1.bf16.msra.mxu0 0
      %3348 = vmatprep.subr.bf16.mxu0 0
      %3349 = vmatpush1.bf16.msra.mxu0 0
      %3350 = vmatprep.subr.bf16.mxu0 0
      %3351 = vmatpush1.bf16.msra.mxu0 0
      %3352 = vmatprep.subr.bf16.mxu0 0
      %3353 = vmatpush1.bf16.msra.mxu0 0
      %3354 = vmatprep.subr.bf16.mxu0 0
      %3355 = vmatpush1.bf16.msra.mxu0 0
      %3356 = vmatprep.subr.bf16.mxu0 0
      %3357 = vmatpush1.bf16.msra.mxu0 0
      %3358 = vmatprep.subr.bf16.mxu0 0
      %3359 = vmatpush1.bf16.msra.mxu0 0
      %3360 = vmatprep.subr.bf16.mxu0 0
      %3361 = vmatpush1.bf16.msra.mxu0 0
      %3362 = vmatprep.subr.bf16.mxu0 0
      %3363 = vmatpush1.bf16.msra.mxu0 0
      %3364 = vmatprep.subr.bf16.mxu0 0
      %3365 = vmatpush1.bf16.msra.mxu0 0
      %3366 = vmatprep.subr.bf16.mxu0 0
      %3367 = vmatpush1.bf16.msra.mxu0 0
      %3368 = vmatprep.mubr.bf16.mxu0 0
      %3369 = vmatmul.mubr.bf16.gmra.mrb[0].mxu0 %v3284
      %v3370 = vpop.f32.mrb[0].mxu0
      %v3371 = vadd.f32 0.0, %v3370
      %v3372 = vpop.f32.mrb[0].mxu0
      %v3373 = vpop.f32.mrb[0].mxu0
      %v3374 = vpop.f32.mrb[0].mxu0
      %3375 = vdwg.mxu0
      %v3376 = vadd.f32 %v3247, %v3330
      %v3377 = vadd.f32 %v3248, %v3332
      %v3378 = vadd.f32 %v3249, %v3371
      %v3379 = vld [vmem:[%s165] sm:$0xff]
      %s3380 = scalar_lea.vmem %s1, 100
      %v3381 = vld [vmem:[%s3380] sm:$0xf]
      %v3383 = vcombine.high %v3379, %v3379
      %v3385 = vunpack.c.l.s4 1983009808
      %v3386 = vunpack.c.0.s8 %v3385
      %v3387 = vlaneseq
      %v3388 = vshrl.u32 %v3387, 7
      %v3389 = vsub.s32 %v3386, %v3388
      %v3390 = vrot.slane %v3379, %v3389
      %v3392 = vunpack.c.l.s4 1983009808
      %v3393 = vunpack.c.0.s8 %v3392
      %v3394 = vlaneseq
      %v3395 = vshrl.u32 %v3394, 7
      %v3396 = vsub.s32 %v3393, %v3395
      %v3397 = vrot.slane %v3383, %v3396
      %v3398 = vcombine.high %v3390, %v3390
      %v3399 = vcombine.high %v3397, %v3397
      %3400 = vrot.lane.b32.xlu0 %v3390, 58
      %v3401 = vpop.permute.xlu0 %3400
      %3402 = vrot.lane.b32.xlu0 %v3398, 58
      %v3403 = vpop.permute.xlu0 %3402
      %3404 = vrot.lane.b32.xlu0 %v3397, 58
      %v3405 = vpop.permute.xlu0 %3404
      %3406 = vrot.lane.b32.xlu0 %v3399, 58
      %v3407 = vpop.permute.xlu0 %3406
      %vm3408 = vcmask 474112
      %v3409 = vsel %vm3408, %v3401, %v3403
      %v3410 = vsel %vm3408, %v3403, %v3405
      %v3411 = vsel %vm3408, %v3405, %v3407
      %v3413 = vsel %vm207, %v3381, 0
      %v3416 = vsel %vm211, %v3409, 0
      %v3419 = vsel %vm211, %v3410, 0
      %v3422 = vsel %vm211, %v3411, 0
      %3424 = vmatprep.subr.bf16.mxu0 %v3419
      %3425 = vmatpush1.bf16.msra.mxu0 %v3416
      %3426 = vmatprep.subr.bf16.mxu0 0
      %3427 = vmatpush1.bf16.msra.mxu0 0
      %3428 = vmatprep.subr.bf16.mxu0 0
      %3429 = vmatpush1.bf16.msra.mxu0 0
      %3430 = vmatprep.subr.bf16.mxu0 0
      %3431 = vmatpush1.bf16.msra.mxu0 0
      %3432 = vmatprep.subr.bf16.mxu0 0
      %3433 = vmatpush1.bf16.msra.mxu0 0
      %3434 = vmatprep.subr.bf16.mxu0 0
      %3435 = vmatpush1.bf16.msra.mxu0 0
      %3436 = vmatprep.subr.bf16.mxu0 0
      %3437 = vmatpush1.bf16.msra.mxu0 0
      %3438 = vmatprep.subr.bf16.mxu0 0
      %3439 = vmatpush1.bf16.msra.mxu0 0
      %3440 = vmatprep.subr.bf16.mxu0 0
      %3441 = vmatpush1.bf16.msra.mxu0 0
      %3442 = vmatprep.subr.bf16.mxu0 0
      %3443 = vmatpush1.bf16.msra.mxu0 0
      %3444 = vmatprep.subr.bf16.mxu0 0
      %3445 = vmatpush1.bf16.msra.mxu0 0
      %3446 = vmatprep.subr.bf16.mxu0 0
      %3447 = vmatpush1.bf16.msra.mxu0 0
      %3448 = vmatprep.subr.bf16.mxu0 0
      %3449 = vmatpush1.bf16.msra.mxu0 0
      %3450 = vmatprep.subr.bf16.mxu0 0
      %3451 = vmatpush1.bf16.msra.mxu0 0
      %3452 = vmatprep.subr.bf16.mxu0 0
      %3453 = vmatpush1.bf16.msra.mxu0 0
      %3454 = vmatprep.subr.bf16.mxu0 0
      %3455 = vmatpush1.bf16.msra.mxu0 0
      %3456 = vmatprep.mubr.bf16.mxu0 0
      %3457 = vmatmul.mubr.bf16.gmra.mrb[0].mxu0 %v3413
      %v3458 = vpop.f32.mrb[0].mxu0
      %v3459 = vadd.f32 0.0, %v3458
      %v3460 = vpop.f32.mrb[0].mxu0
      %v3461 = vadd.f32 0.0, %v3460
      %v3462 = vpop.f32.mrb[0].mxu0
      %v3463 = vpop.f32.mrb[0].mxu0
      %3464 = vdwg.mxu0
      %3465 = vmatprep.subr.bf16.mxu0 0
      %3466 = vmatpush1.bf16.msra.mxu0 %v3422
      %3467 = vmatprep.subr.bf16.mxu0 0
      %3468 = vmatpush1.bf16.msra.mxu0 0
      %3469 = vmatprep.subr.bf16.mxu0 0
      %3470 = vmatpush1.bf16.msra.mxu0 0
      %3471 = vmatprep.subr.bf16.mxu0 0
      %3472 = vmatpush1.bf16.msra.mxu0 0
      %3473 = vmatprep.subr.bf16.mxu0 0
      %3474 = vmatpush1.bf16.msra.mxu0 0
      %3475 = vmatprep.subr.bf16.mxu0 0
      %3476 = vmatpush1.bf16.msra.mxu0 0
      %3477 = vmatprep.subr.bf16.mxu0 0
      %3478 = vmatpush1.bf16.msra.mxu0 0
      %3479 = vmatprep.subr.bf16.mxu0 0
      %3480 = vmatpush1.bf16.msra.mxu0 0
      %3481 = vmatprep.subr.bf16.mxu0 0
      %3482 = vmatpush1.bf16.msra.mxu0 0
      %3483 = vmatprep.subr.bf16.mxu0 0
      %3484 = vmatpush1.bf16.msra.mxu0 0
      %3485 = vmatprep.subr.bf16.mxu0 0
      %3486 = vmatpush1.bf16.msra.mxu0 0
      %3487 = vmatprep.subr.bf16.mxu0 0
      %3488 = vmatpush1.bf16.msra.mxu0 0
      %3489 = vmatprep.subr.bf16.mxu0 0
      %3490 = vmatpush1.bf16.msra.mxu0 0
      %3491 = vmatprep.subr.bf16.mxu0 0
      %3492 = vmatpush1.bf16.msra.mxu0 0
      %3493 = vmatprep.subr.bf16.mxu0 0
      %3494 = vmatpush1.bf16.msra.mxu0 0
      %3495 = vmatprep.subr.bf16.mxu0 0
      %3496 = vmatpush1.bf16.msra.mxu0 0
      %3497 = vmatprep.mubr.bf16.mxu0 0
      %3498 = vmatmul.mubr.bf16.gmra.mrb[0].mxu0 %v3413
      %v3499 = vpop.f32.mrb[0].mxu0
      %v3500 = vadd.f32 0.0, %v3499
      %v3501 = vpop.f32.mrb[0].mxu0
      %v3502 = vpop.f32.mrb[0].mxu0
      %v3503 = vpop.f32.mrb[0].mxu0
      %3504 = vdwg.mxu0
      %v3505 = vadd.f32 %v3376, %v3459
      %v3506 = vadd.f32 %v3377, %v3461
      %v3507 = vadd.f32 %v3378, %v3500
      %v3508 = vld [vmem:[%s165] sm:$0xff]
      %s3509 = scalar_lea.vmem %s1, 104
      %v3510 = vld [vmem:[%s3509] sm:$0xf]
      %v3512 = vcombine.high %v3508, %v3508
      %v3514 = vunpack.c.l.s4 1983009808
      %v3515 = vunpack.c.0.s8 %v3514
      %v3516 = vlaneseq
      %v3517 = vshrl.u32 %v3516, 7
      %v3518 = vsub.s32 %v3515, %v3517
      %v3519 = vrot.slane %v3508, %v3518
      %v3521 = vunpack.c.l.s4 1983009808
      %v3522 = vunpack.c.0.s8 %v3521
      %v3523 = vlaneseq
      %v3524 = vshrl.u32 %v3523, 7
      %v3525 = vsub.s32 %v3522, %v3524
      %v3526 = vrot.slane %v3512, %v3525
      %v3527 = vcombine.high %v3519, %v3519
      %v3528 = vcombine.high %v3526, %v3526
      %3529 = vrot.lane.b32.xlu0 %v3519, 57
      %v3530 = vpop.permute.xlu0 %3529
      %3531 = vrot.lane.b32.xlu0 %v3527, 57
      %v3532 = vpop.permute.xlu0 %3531
      %3533 = vrot.lane.b32.xlu0 %v3526, 57
      %v3534 = vpop.permute.xlu0 %3533
      %3535 = vrot.lane.b32.xlu0 %v3528, 57
      %v3536 = vpop.permute.xlu0 %3535
      %vm3537 = vcmask 465920
      %v3538 = vsel %vm3537, %v3530, %v3532
      %v3539 = vsel %vm3537, %v3532, %v3534
      %v3540 = vsel %vm3537, %v3534, %v3536
      %v3542 = vsel %vm207, %v3510, 0
      %v3545 = vsel %vm211, %v3538, 0
      %v3548 = vsel %vm211, %v3539, 0
      %v3551 = vsel %vm211, %v3540, 0
      %3553 = vmatprep.subr.bf16.mxu0 %v3548
      %3554 = vmatpush1.bf16.msra.mxu0 %v3545
      %3555 = vmatprep.subr.bf16.mxu0 0
      %3556 = vmatpush1.bf16.msra.mxu0 0
      %3557 = vmatprep.subr.bf16.mxu0 0
      %3558 = vmatpush1.bf16.msra.mxu0 0
      %3559 = vmatprep.subr.bf16.mxu0 0
      %3560 = vmatpush1.bf16.msra.mxu0 0
      %3561 = vmatprep.subr.bf16.mxu0 0
      %3562 = vmatpush1.bf16.msra.mxu0 0
      %3563 = vmatprep.subr.bf16.mxu0 0
      %3564 = vmatpush1.bf16.msra.mxu0 0
      %3565 = vmatprep.subr.bf16.mxu0 0
      %3566 = vmatpush1.bf16.msra.mxu0 0
      %3567 = vmatprep.subr.bf16.mxu0 0
      %3568 = vmatpush1.bf16.msra.mxu0 0
      %3569 = vmatprep.subr.bf16.mxu0 0
      %3570 = vmatpush1.bf16.msra.mxu0 0
      %3571 = vmatprep.subr.bf16.mxu0 0
      %3572 = vmatpush1.bf16.msra.mxu0 0
      %3573 = vmatprep.subr.bf16.mxu0 0
      %3574 = vmatpush1.bf16.msra.mxu0 0
      %3575 = vmatprep.subr.bf16.mxu0 0
      %3576 = vmatpush1.bf16.msra.mxu0 0
      %3577 = vmatprep.subr.bf16.mxu0 0
      %3578 = vmatpush1.bf16.msra.mxu0 0
      %3579 = vmatprep.subr.bf16.mxu0 0
      %3580 = vmatpush1.bf16.msra.mxu0 0
      %3581 = vmatprep.subr.bf16.mxu0 0
      %3582 = vmatpush1.bf16.msra.mxu0 0
      %3583 = vmatprep.subr.bf16.mxu0 0
      %3584 = vmatpush1.bf16.msra.mxu0 0
      %3585 = vmatprep.mubr.bf16.mxu0 0
      %3586 = vmatmul.mubr.bf16.gmra.mrb[0].mxu0 %v3542
      %v3587 = vpop.f32.mrb[0].mxu0
      %v3588 = vadd.f32 0.0, %v3587
      %v3589 = vpop.f32.mrb[0].mxu0
      %v3590 = vadd.f32 0.0, %v3589
      %v3591 = vpop.f32.mrb[0].mxu0
      %v3592 = vpop.f32.mrb[0].mxu0
      %3593 = vdwg.mxu0
      %3594 = vmatprep.subr.bf16.mxu0 0
      %3595 = vmatpush1.bf16.msra.mxu0 %v3551
      %3596 = vmatprep.subr.bf16.mxu0 0
      %3597 = vmatpush1.bf16.msra.mxu0 0
      %3598 = vmatprep.subr.bf16.mxu0 0
      %3599 = vmatpush1.bf16.msra.mxu0 0
      %3600 = vmatprep.subr.bf16.mxu0 0
      %3601 = vmatpush1.bf16.msra.mxu0 0
      %3602 = vmatprep.subr.bf16.mxu0 0
      %3603 = vmatpush1.bf16.msra.mxu0 0
      %3604 = vmatprep.subr.bf16.mxu0 0
      %3605 = vmatpush1.bf16.msra.mxu0 0
      %3606 = vmatprep.subr.bf16.mxu0 0
      %3607 = vmatpush1.bf16.msra.mxu0 0
      %3608 = vmatprep.subr.bf16.mxu0 0
      %3609 = vmatpush1.bf16.msra.mxu0 0
      %3610 = vmatprep.subr.bf16.mxu0 0
      %3611 = vmatpush1.bf16.msra.mxu0 0
      %3612 = vmatprep.subr.bf16.mxu0 0
      %3613 = vmatpush1.bf16.msra.mxu0 0
      %3614 = vmatprep.subr.bf16.mxu0 0
      %3615 = vmatpush1.bf16.msra.mxu0 0
      %3616 = vmatprep.subr.bf16.mxu0 0
      %3617 = vmatpush1.bf16.msra.mxu0 0
      %3618 = vmatprep.subr.bf16.mxu0 0
      %3619 = vmatpush1.bf16.msra.mxu0 0
      %3620 = vmatprep.subr.bf16.mxu0 0
      %3621 = vmatpush1.bf16.msra.mxu0 0
      %3622 = vmatprep.subr.bf16.mxu0 0
      %3623 = vmatpush1.bf16.msra.mxu0 0
      %3624 = vmatprep.subr.bf16.mxu0 0
      %3625 = vmatpush1.bf16.msra.mxu0 0
      %3626 = vmatprep.mubr.bf16.mxu0 0
      %3627 = vmatmul.mubr.bf16.gmra.mrb[0].mxu0 %v3542
      %v3628 = vpop.f32.mrb[0].mxu0
      %v3629 = vadd.f32 0.0, %v3628
      %v3630 = vpop.f32.mrb[0].mxu0
      %v3631 = vpop.f32.mrb[0].mxu0
      %v3632 = vpop.f32.mrb[0].mxu0
      %3633 = vdwg.mxu0
      %v3634 = vadd.f32 %v3505, %v3588
      %v3635 = vadd.f32 %v3506, %v3590
      %v3636 = vadd.f32 %v3507, %v3629
      %v3637 = vld [vmem:[%s165] sm:$0xff]
      %s3638 = scalar_lea.vmem %s1, 108
      %v3639 = vld [vmem:[%s3638] sm:$0xf]
      %v3641 = vcombine.high %v3637, %v3637
      %v3643 = vunpack.c.l.s4 1983009808
      %v3644 = vunpack.c.0.s8 %v3643
      %v3645 = vlaneseq
      %v3646 = vshrl.u32 %v3645, 7
      %v3647 = vsub.s32 %v3644, %v3646
      %v3648 = vrot.slane %v3637, %v3647
      %v3650 = vunpack.c.l.s4 1983009808
      %v3651 = vunpack.c.0.s8 %v3650
      %v3652 = vlaneseq
      %v3653 = vshrl.u32 %v3652, 7
      %v3654 = vsub.s32 %v3651, %v3653
      %v3655 = vrot.slane %v3641, %v3654
      %v3656 = vcombine.high %v3648, %v3648
      %v3657 = vcombine.high %v3655, %v3655
      %3658 = vrot.lane.b32.xlu0 %v3648, 56
      %v3659 = vpop.permute.xlu0 %3658
      %3660 = vrot.lane.b32.xlu0 %v3656, 56
      %v3661 = vpop.permute.xlu0 %3660
      %3662 = vrot.lane.b32.xlu0 %v3655, 56
      %v3663 = vpop.permute.xlu0 %3662
      %3664 = vrot.lane.b32.xlu0 %v3657, 56
      %v3665 = vpop.permute.xlu0 %3664
      %vm3666 = vcmask 457728
      %v3667 = vsel %vm3666, %v3659, %v3661
      %v3668 = vsel %vm3666, %v3661, %v3663
      %v3669 = vsel %vm3666, %v3663, %v3665
      %v3671 = vsel %vm207, %v3639, 0
      %v3674 = vsel %vm211, %v3667, 0
      %v3677 = vsel %vm211, %v3668, 0
      %v3680 = vsel %vm211, %v3669, 0
      %3682 = vmatprep.subr.bf16.mxu0 %v3677
      %3683 = vmatpush1.bf16.msra.mxu0 %v3674
      %3684 = vmatprep.subr.bf16.mxu0 0
      %3685 = vmatpush1.bf16.msra.mxu0 0
      %3686 = vmatprep.subr.bf16.mxu0 0
      %3687 = vmatpush1.bf16.msra.mxu0 0
      %3688 = vmatprep.subr.bf16.mxu0 0
      %3689 = vmatpush1.bf16.msra.mxu0 0
      %3690 = vmatprep.subr.bf16.mxu0 0
      %3691 = vmatpush1.bf16.msra.mxu0 0
      %3692 = vmatprep.subr.bf16.mxu0 0
      %3693 = vmatpush1.bf16.msra.mxu0 0
      %3694 = vmatprep.subr.bf16.mxu0 0
      %3695 = vmatpush1.bf16.msra.mxu0 0
      %3696 = vmatprep.subr.bf16.mxu0 0
      %3697 = vmatpush1.bf16.msra.mxu0 0
      %3698 = vmatprep.subr.bf16.mxu0 0
      %3699 = vmatpush1.bf16.msra.mxu0 0
      %3700 = vmatprep.subr.bf16.mxu0 0
      %3701 = vmatpush1.bf16.msra.mxu0 0
      %3702 = vmatprep.subr.bf16.mxu0 0
      %3703 = vmatpush1.bf16.msra.mxu0 0
      %3704 = vmatprep.subr.bf16.mxu0 0
      %3705 = vmatpush1.bf16.msra.mxu0 0
      %3706 = vmatprep.subr.bf16.mxu0 0
      %3707 = vmatpush1.bf16.msra.mxu0 0
      %3708 = vmatprep.subr.bf16.mxu0 0
      %3709 = vmatpush1.bf16.msra.mxu0 0
      %3710 = vmatprep.subr.bf16.mxu0 0
      %3711 = vmatpush1.bf16.msra.mxu0 0
      %3712 = vmatprep.subr.bf16.mxu0 0
      %3713 = vmatpush1.bf16.msra.mxu0 0
      %3714 = vmatprep.mubr.bf16.mxu0 0
      %3715 = vmatmul.mubr.bf16.gmra.mrb[0].mxu0 %v3671
      %v3716 = vpop.f32.mrb[0].mxu0
      %v3717 = vadd.f32 0.0, %v3716
      %v3718 = vpop.f32.mrb[0].mxu0
      %v3719 = vadd.f32 0.0, %v3718
      %v3720 = vpop.f32.mrb[0].mxu0
      %v3721 = vpop.f32.mrb[0].mxu0
      %3722 = vdwg.mxu0
      %3723 = vmatprep.subr.bf16.mxu0 0
      %3724 = vmatpush1.bf16.msra.mxu0 %v3680
      %3725 = vmatprep.subr.bf16.mxu0 0
      %3726 = vmatpush1.bf16.msra.mxu0 0
      %3727 = vmatprep.subr.bf16.mxu0 0
      %3728 = vmatpush1.bf16.msra.mxu0 0
      %3729 = vmatprep.subr.bf16.mxu0 0
      %3730 = vmatpush1.bf16.msra.mxu0 0
      %3731 = vmatprep.subr.bf16.mxu0 0
      %3732 = vmatpush1.bf16.msra.mxu0 0
      %3733 = vmatprep.subr.bf16.mxu0 0
      %3734 = vmatpush1.bf16.msra.mxu0 0
      %3735 = vmatprep.subr.bf16.mxu0 0
      %3736 = vmatpush1.bf16.msra.mxu0 0
      %3737 = vmatprep.subr.bf16.mxu0 0
      %3738 = vmatpush1.bf16.msra.mxu0 0
      %3739 = vmatprep.subr.bf16.mxu0 0
      %3740 = vmatpush1.bf16.msra.mxu0 0
      %3741 = vmatprep.subr.bf16.mxu0 0
      %3742 = vmatpush1.bf16.msra.mxu0 0
      %3743 = vmatprep.subr.bf16.mxu0 0
      %3744 = vmatpush1.bf16.msra.mxu0 0
      %3745 = vmatprep.subr.bf16.mxu0 0
      %3746 = vmatpush1.bf16.msra.mxu0 0
      %3747 = vmatprep.subr.bf16.mxu0 0
      %3748 = vmatpush1.bf16.msra.mxu0 0
      %3749 = vmatprep.subr.bf16.mxu0 0
      %3750 = vmatpush1.bf16.msra.mxu0 0
      %3751 = vmatprep.subr.bf16.mxu0 0
      %3752 = vmatpush1.bf16.msra.mxu0 0
      %3753 = vmatprep.subr.bf16.mxu0 0
      %3754 = vmatpush1.bf16.msra.mxu0 0
      %3755 = vmatprep.mubr.bf16.mxu0 0
      %3756 = vmatmul.mubr.bf16.gmra.mrb[0].mxu0 %v3671
      %v3757 = vpop.f32.mrb[0].mxu0
      %v3758 = vadd.f32 0.0, %v3757
      %v3759 = vpop.f32.mrb[0].mxu0
      %v3760 = vpop.f32.mrb[0].mxu0
      %v3761 = vpop.f32.mrb[0].mxu0
      %3762 = vdwg.mxu0
      %v3763 = vadd.f32 %v3634, %v3717
      %v3764 = vadd.f32 %v3635, %v3719
      %v3765 = vadd.f32 %v3636, %v3758
      %v3766 = vld [vmem:[%s165] sm:$0xff]
      %s3767 = scalar_lea.vmem %s1, 112
      %v3768 = vld [vmem:[%s3767] sm:$0xf]
      %v3770 = vcombine.high %v3766, %v3766
      %v3772 = vunpack.c.l.s4 1983009808
      %v3773 = vunpack.c.0.s8 %v3772
      %v3774 = vlaneseq
      %v3775 = vshrl.u32 %v3774, 7
      %v3776 = vsub.s32 %v3773, %v3775
      %v3777 = vrot.slane %v3766, %v3776
      %v3779 = vunpack.c.l.s4 1983009808
      %v3780 = vunpack.c.0.s8 %v3779
      %v3781 = vlaneseq
      %v3782 = vshrl.u32 %v3781, 7
      %v3783 = vsub.s32 %v3780, %v3782
      %v3784 = vrot.slane %v3770, %v3783
      %v3785 = vcombine.high %v3777, %v3777
      %v3786 = vcombine.high %v3784, %v3784
      %3787 = vrot.lane.b32.xlu0 %v3777, 40
      %v3788 = vpop.permute.xlu0 %3787
      %3789 = vrot.lane.b32.xlu0 %v3785, 40
      %v3790 = vpop.permute.xlu0 %3789
      %3791 = vrot.lane.b32.xlu0 %v3784, 40
      %v3792 = vpop.permute.xlu0 %3791
      %3793 = vrot.lane.b32.xlu0 %v3786, 40
      %v3794 = vpop.permute.xlu0 %3793
      %vm3795 = vcmask 326656
      %v3796 = vsel %vm3795, %v3788, %v3790
      %v3797 = vsel %vm3795, %v3790, %v3792
      %v3798 = vsel %vm3795, %v3792, %v3794
      %v3800 = vsel %vm207, %v3768, 0
      %v3803 = vsel %vm211, %v3796, 0
      %v3806 = vsel %vm211, %v3797, 0
      %v3809 = vsel %vm211, %v3798, 0
      %3811 = vmatprep.subr.bf16.mxu0 %v3806
      %3812 = vmatpush1.bf16.msra.mxu0 %v3803
      %3813 = vmatprep.subr.bf16.mxu0 0
      %3814 = vmatpush1.bf16.msra.mxu0 0
      %3815 = vmatprep.subr.bf16.mxu0 0
      %3816 = vmatpush1.bf16.msra.mxu0 0
      %3817 = vmatprep.subr.bf16.mxu0 0
      %3818 = vmatpush1.bf16.msra.mxu0 0
      %3819 = vmatprep.subr.bf16.mxu0 0
      %3820 = vmatpush1.bf16.msra.mxu0 0
      %3821 = vmatprep.subr.bf16.mxu0 0
      %3822 = vmatpush1.bf16.msra.mxu0 0
      %3823 = vmatprep.subr.bf16.mxu0 0
      %3824 = vmatpush1.bf16.msra.mxu0 0
      %3825 = vmatprep.subr.bf16.mxu0 0
      %3826 = vmatpush1.bf16.msra.mxu0 0
      %3827 = vmatprep.subr.bf16.mxu0 0
      %3828 = vmatpush1.bf16.msra.mxu0 0
      %3829 = vmatprep.subr.bf16.mxu0 0
      %3830 = vmatpush1.bf16.msra.mxu0 0
      %3831 = vmatprep.subr.bf16.mxu0 0
      %3832 = vmatpush1.bf16.msra.mxu0 0
      %3833 = vmatprep.subr.bf16.mxu0 0
      %3834 = vmatpush1.bf16.msra.mxu0 0
      %3835 = vmatprep.subr.bf16.mxu0 0
      %3836 = vmatpush1.bf16.msra.mxu0 0
      %3837 = vmatprep.subr.bf16.mxu0 0
      %3838 = vmatpush1.bf16.msra.mxu0 0
      %3839 = vmatprep.subr.bf16.mxu0 0
      %3840 = vmatpush1.bf16.msra.mxu0 0
      %3841 = vmatprep.subr.bf16.mxu0 0
      %3842 = vmatpush1.bf16.msra.mxu0 0
      %3843 = vmatprep.mubr.bf16.mxu0 0
      %3844 = vmatmul.mubr.bf16.gmra.mrb[0].mxu0 %v3800
      %v3845 = vpop.f32.mrb[0].mxu0
      %v3846 = vadd.f32 0.0, %v3845
      %v3847 = vpop.f32.mrb[0].mxu0
      %v3848 = vadd.f32 0.0, %v3847
      %v3849 = vpop.f32.mrb[0].mxu0
      %v3850 = vpop.f32.mrb[0].mxu0
      %3851 = vdwg.mxu0
      %3852 = vmatprep.subr.bf16.mxu0 0
      %3853 = vmatpush1.bf16.msra.mxu0 %v3809
      %3854 = vmatprep.subr.bf16.mxu0 0
      %3855 = vmatpush1.bf16.msra.mxu0 0
      %3856 = vmatprep.subr.bf16.mxu0 0
      %3857 = vmatpush1.bf16.msra.mxu0 0
      %3858 = vmatprep.subr.bf16.mxu0 0
      %3859 = vmatpush1.bf16.msra.mxu0 0
      %3860 = vmatprep.subr.bf16.mxu0 0
      %3861 = vmatpush1.bf16.msra.mxu0 0
      %3862 = vmatprep.subr.bf16.mxu0 0
      %3863 = vmatpush1.bf16.msra.mxu0 0
      %3864 = vmatprep.subr.bf16.mxu0 0
      %3865 = vmatpush1.bf16.msra.mxu0 0
      %3866 = vmatprep.subr.bf16.mxu0 0
      %3867 = vmatpush1.bf16.msra.mxu0 0
      %3868 = vmatprep.subr.bf16.mxu0 0
      %3869 = vmatpush1.bf16.msra.mxu0 0
      %3870 = vmatprep.subr.bf16.mxu0 0
      %3871 = vmatpush1.bf16.msra.mxu0 0
      %3872 = vmatprep.subr.bf16.mxu0 0
      %3873 = vmatpush1.bf16.msra.mxu0 0
      %3874 = vmatprep.subr.bf16.mxu0 0
      %3875 = vmatpush1.bf16.msra.mxu0 0
      %3876 = vmatprep.subr.bf16.mxu0 0
      %3877 = vmatpush1.bf16.msra.mxu0 0
      %3878 = vmatprep.subr.bf16.mxu0 0
      %3879 = vmatpush1.bf16.msra.mxu0 0
      %3880 = vmatprep.subr.bf16.mxu0 0
      %3881 = vmatpush1.bf16.msra.mxu0 0
      %3882 = vmatprep.subr.bf16.mxu0 0
      %3883 = vmatpush1.bf16.msra.mxu0 0
      %3884 = vmatprep.mubr.bf16.mxu0 0
      %3885 = vmatmul.mubr.bf16.gmra.mrb[0].mxu0 %v3800
      %v3886 = vpop.f32.mrb[0].mxu0
      %v3887 = vadd.f32 0.0, %v3886
      %v3888 = vpop.f32.mrb[0].mxu0
      %v3889 = vpop.f32.mrb[0].mxu0
      %v3890 = vpop.f32.mrb[0].mxu0
      %3891 = vdwg.mxu0
      %v3892 = vadd.f32 %v3763, %v3846
      %v3893 = vadd.f32 %v3764, %v3848
      %v3894 = vadd.f32 %v3765, %v3887
      %v3895 = vld [vmem:[%s165] sm:$0xff]
      %s3896 = scalar_lea.vmem %s1, 116
      %v3897 = vld [vmem:[%s3896] sm:$0xf]
      %v3899 = vcombine.high %v3895, %v3895
      %v3901 = vunpack.c.l.s4 1983009808
      %v3902 = vunpack.c.0.s8 %v3901
      %v3903 = vlaneseq
      %v3904 = vshrl.u32 %v3903, 7
      %v3905 = vsub.s32 %v3902, %v3904
      %v3906 = vrot.slane %v3895, %v3905
      %v3908 = vunpack.c.l.s4 1983009808
      %v3909 = vunpack.c.0.s8 %v3908
      %v3910 = vlaneseq
      %v3911 = vshrl.u32 %v3910, 7
      %v3912 = vsub.s32 %v3909, %v3911
      %v3913 = vrot.slane %v3899, %v3912
      %v3914 = vcombine.high %v3906, %v3906
      %v3915 = vcombine.high %v3913, %v3913
      %3916 = vrot.lane.b32.xlu0 %v3906, 39
      %v3917 = vpop.permute.xlu0 %3916
      %3918 = vrot.lane.b32.xlu0 %v3914, 39
      %v3919 = vpop.permute.xlu0 %3918
      %3920 = vrot.lane.b32.xlu0 %v3913, 39
      %v3921 = vpop.permute.xlu0 %3920
      %3922 = vrot.lane.b32.xlu0 %v3915, 39
      %v3923 = vpop.permute.xlu0 %3922
      %vm3924 = vcmask 318464
      %v3925 = vsel %vm3924, %v3917, %v3919
      %v3926 = vsel %vm3924, %v3919, %v3921
      %v3927 = vsel %vm3924, %v3921, %v3923
      %v3929 = vsel %vm207, %v3897, 0
      %v3932 = vsel %vm211, %v3925, 0
      %v3935 = vsel %vm211, %v3926, 0
      %v3938 = vsel %vm211, %v3927, 0
      %3940 = vmatprep.subr.bf16.mxu0 %v3935
      %3941 = vmatpush1.bf16.msra.mxu0 %v3932
      %3942 = vmatprep.subr.bf16.mxu0 0
      %3943 = vmatpush1.bf16.msra.mxu0 0
      %3944 = vmatprep.subr.bf16.mxu0 0
      %3945 = vmatpush1.bf16.msra.mxu0 0
      %3946 = vmatprep.subr.bf16.mxu0 0
      %3947 = vmatpush1.bf16.msra.mxu0 0
      %3948 = vmatprep.subr.bf16.mxu0 0
      %3949 = vmatpush1.bf16.msra.mxu0 0
      %3950 = vmatprep.subr.bf16.mxu0 0
      %3951 = vmatpush1.bf16.msra.mxu0 0
      %3952 = vmatprep.subr.bf16.mxu0 0
      %3953 = vmatpush1.bf16.msra.mxu0 0
      %3954 = vmatprep.subr.bf16.mxu0 0
      %3955 = vmatpush1.bf16.msra.mxu0 0
      %3956 = vmatprep.subr.bf16.mxu0 0
      %3957 = vmatpush1.bf16.msra.mxu0 0
      %3958 = vmatprep.subr.bf16.mxu0 0
      %3959 = vmatpush1.bf16.msra.mxu0 0
      %3960 = vmatprep.subr.bf16.mxu0 0
      %3961 = vmatpush1.bf16.msra.mxu0 0
      %3962 = vmatprep.subr.bf16.mxu0 0
      %3963 = vmatpush1.bf16.msra.mxu0 0
      %3964 = vmatprep.subr.bf16.mxu0 0
      %3965 = vmatpush1.bf16.msra.mxu0 0
      %3966 = vmatprep.subr.bf16.mxu0 0
      %3967 = vmatpush1.bf16.msra.mxu0 0
      %3968 = vmatprep.subr.bf16.mxu0 0
      %3969 = vmatpush1.bf16.msra.mxu0 0
      %3970 = vmatprep.subr.bf16.mxu0 0
      %3971 = vmatpush1.bf16.msra.mxu0 0
      %3972 = vmatprep.mubr.bf16.mxu0 0
      %3973 = vmatmul.mubr.bf16.gmra.mrb[0].mxu0 %v3929
      %v3974 = vpop.f32.mrb[0].mxu0
      %v3975 = vadd.f32 0.0, %v3974
      %v3976 = vpop.f32.mrb[0].mxu0
      %v3977 = vadd.f32 0.0, %v3976
      %v3978 = vpop.f32.mrb[0].mxu0
      %v3979 = vpop.f32.mrb[0].mxu0
      %3980 = vdwg.mxu0
      %3981 = vmatprep.subr.bf16.mxu0 0
      %3982 = vmatpush1.bf16.msra.mxu0 %v3938
      %3983 = vmatprep.subr.bf16.mxu0 0
      %3984 = vmatpush1.bf16.msra.mxu0 0
      %3985 = vmatprep.subr.bf16.mxu0 0
      %3986 = vmatpush1.bf16.msra.mxu0 0
      %3987 = vmatprep.subr.bf16.mxu0 0
      %3988 = vmatpush1.bf16.msra.mxu0 0
      %3989 = vmatprep.subr.bf16.mxu0 0
      %3990 = vmatpush1.bf16.msra.mxu0 0
      %3991 = vmatprep.subr.bf16.mxu0 0
      %3992 = vmatpush1.bf16.msra.mxu0 0
      %3993 = vmatprep.subr.bf16.mxu0 0
      %3994 = vmatpush1.bf16.msra.mxu0 0
      %3995 = vmatprep.subr.bf16.mxu0 0
      %3996 = vmatpush1.bf16.msra.mxu0 0
      %3997 = vmatprep.subr.bf16.mxu0 0
      %3998 = vmatpush1.bf16.msra.mxu0 0
      %3999 = vmatprep.subr.bf16.mxu0 0
      %4000 = vmatpush1.bf16.msra.mxu0 0
      %4001 = vmatprep.subr.bf16.mxu0 0
      %4002 = vmatpush1.bf16.msra.mxu0 0
      %4003 = vmatprep.subr.bf16.mxu0 0
      %4004 = vmatpush1.bf16.msra.mxu0 0
      %4005 = vmatprep.subr.bf16.mxu0 0
      %4006 = vmatpush1.bf16.msra.mxu0 0
      %4007 = vmatprep.subr.bf16.mxu0 0
      %4008 = vmatpush1.bf16.msra.mxu0 0
      %4009 = vmatprep.subr.bf16.mxu0 0
      %4010 = vmatpush1.bf16.msra.mxu0 0
      %4011 = vmatprep.subr.bf16.mxu0 0
      %4012 = vmatpush1.bf16.msra.mxu0 0
      %4013 = vmatprep.mubr.bf16.mxu0 0
      %4014 = vmatmul.mubr.bf16.gmra.mrb[0].mxu0 %v3929
      %v4015 = vpop.f32.mrb[0].mxu0
      %v4016 = vadd.f32 0.0, %v4015
      %v4017 = vpop.f32.mrb[0].mxu0
      %v4018 = vpop.f32.mrb[0].mxu0
      %v4019 = vpop.f32.mrb[0].mxu0
      %4020 = vdwg.mxu0
      %v4021 = vadd.f32 %v3892, %v3975
      %v4022 = vadd.f32 %v3893, %v3977
      %v4023 = vadd.f32 %v3894, %v4016
      %v4024 = vld [vmem:[%s165] sm:$0xff]
      %s4025 = scalar_lea.vmem %s1, 120
      %v4026 = vld [vmem:[%s4025] sm:$0xf]
      %v4028 = vcombine.high %v4024, %v4024
      %v4030 = vunpack.c.l.s4 1983009808
      %v4031 = vunpack.c.0.s8 %v4030
      %v4032 = vlaneseq
      %v4033 = vshrl.u32 %v4032, 7
      %v4034 = vsub.s32 %v4031, %v4033
      %v4035 = vrot.slane %v4024, %v4034
      %v4037 = vunpack.c.l.s4 1983009808
      %v4038 = vunpack.c.0.s8 %v4037
      %v4039 = vlaneseq
      %v4040 = vshrl.u32 %v4039, 7
      %v4041 = vsub.s32 %v4038, %v4040
      %v4042 = vrot.slane %v4028, %v4041
      %v4043 = vcombine.high %v4035, %v4035
      %v4044 = vcombine.high %v4042, %v4042
      %4045 = vrot.lane.b32.xlu0 %v4035, 38
      %v4046 = vpop.permute.xlu0 %4045
      %4047 = vrot.lane.b32.xlu0 %v4043, 38
      %v4048 = vpop.permute.xlu0 %4047
      %4049 = vrot.lane.b32.xlu0 %v4042, 38
      %v4050 = vpop.permute.xlu0 %4049
      %4051 = vrot.lane.b32.xlu0 %v4044, 38
      %v4052 = vpop.permute.xlu0 %4051
      %vm4053 = vcmask 310272
      %v4054 = vsel %vm4053, %v4046, %v4048
      %v4055 = vsel %vm4053, %v4048, %v4050
      %v4056 = vsel %vm4053, %v4050, %v4052
      %v4058 = vsel %vm207, %v4026, 0
      %v4061 = vsel %vm211, %v4054, 0
      %v4064 = vsel %vm211, %v4055, 0
      %v4067 = vsel %vm211, %v4056, 0
      %4069 = vmatprep.subr.bf16.mxu0 %v4064
      %4070 = vmatpush1.bf16.msra.mxu0 %v4061
      %4071 = vmatprep.subr.bf16.mxu0 0
      %4072 = vmatpush1.bf16.msra.mxu0 0
      %4073 = vmatprep.subr.bf16.mxu0 0
      %4074 = vmatpush1.bf16.msra.mxu0 0
      %4075 = vmatprep.subr.bf16.mxu0 0
      %4076 = vmatpush1.bf16.msra.mxu0 0
      %4077 = vmatprep.subr.bf16.mxu0 0
      %4078 = vmatpush1.bf16.msra.mxu0 0
      %4079 = vmatprep.subr.bf16.mxu0 0
      %4080 = vmatpush1.bf16.msra.mxu0 0
      %4081 = vmatprep.subr.bf16.mxu0 0
      %4082 = vmatpush1.bf16.msra.mxu0 0
      %4083 = vmatprep.subr.bf16.mxu0 0
      %4084 = vmatpush1.bf16.msra.mxu0 0
      %4085 = vmatprep.subr.bf16.mxu0 0
      %4086 = vmatpush1.bf16.msra.mxu0 0
      %4087 = vmatprep.subr.bf16.mxu0 0
      %4088 = vmatpush1.bf16.msra.mxu0 0
      %4089 = vmatprep.subr.bf16.mxu0 0
      %4090 = vmatpush1.bf16.msra.mxu0 0
      %4091 = vmatprep.subr.bf16.mxu0 0
      %4092 = vmatpush1.bf16.msra.mxu0 0
      %4093 = vmatprep.subr.bf16.mxu0 0
      %4094 = vmatpush1.bf16.msra.mxu0 0
      %4095 = vmatprep.subr.bf16.mxu0 0
      %4096 = vmatpush1.bf16.msra.mxu0 0
      %4097 = vmatprep.subr.bf16.mxu0 0
      %4098 = vmatpush1.bf16.msra.mxu0 0
      %4099 = vmatprep.subr.bf16.mxu0 0
      %4100 = vmatpush1.bf16.msra.mxu0 0
      %4101 = vmatprep.mubr.bf16.mxu0 0
      %4102 = vmatmul.mubr.bf16.gmra.mrb[0].mxu0 %v4058
      %v4103 = vpop.f32.mrb[0].mxu0
      %v4104 = vadd.f32 0.0, %v4103
      %v4105 = vpop.f32.mrb[0].mxu0
      %v4106 = vadd.f32 0.0, %v4105
      %v4107 = vpop.f32.mrb[0].mxu0
      %v4108 = vpop.f32.mrb[0].mxu0
      %4109 = vdwg.mxu0
      %4110 = vmatprep.subr.bf16.mxu0 0
      %4111 = vmatpush1.bf16.msra.mxu0 %v4067
      %4112 = vmatprep.subr.bf16.mxu0 0
      %4113 = vmatpush1.bf16.msra.mxu0 0
      %4114 = vmatprep.subr.bf16.mxu0 0
      %4115 = vmatpush1.bf16.msra.mxu0 0
      %4116 = vmatprep.subr.bf16.mxu0 0
      %4117 = vmatpush1.bf16.msra.mxu0 0
      %4118 = vmatprep.subr.bf16.mxu0 0
      %4119 = vmatpush1.bf16.msra.mxu0 0
      %4120 = vmatprep.subr.bf16.mxu0 0
      %4121 = vmatpush1.bf16.msra.mxu0 0
      %4122 = vmatprep.subr.bf16.mxu0 0
      %4123 = vmatpush1.bf16.msra.mxu0 0
      %4124 = vmatprep.subr.bf16.mxu0 0
      %4125 = vmatpush1.bf16.msra.mxu0 0
      %4126 = vmatprep.subr.bf16.mxu0 0
      %4127 = vmatpush1.bf16.msra.mxu0 0
      %4128 = vmatprep.subr.bf16.mxu0 0
      %4129 = vmatpush1.bf16.msra.mxu0 0
      %4130 = vmatprep.subr.bf16.mxu0 0
      %4131 = vmatpush1.bf16.msra.mxu0 0
      %4132 = vmatprep.subr.bf16.mxu0 0
      %4133 = vmatpush1.bf16.msra.mxu0 0
      %4134 = vmatprep.subr.bf16.mxu0 0
      %4135 = vmatpush1.bf16.msra.mxu0 0
      %4136 = vmatprep.subr.bf16.mxu0 0
      %4137 = vmatpush1.bf16.msra.mxu0 0
      %4138 = vmatprep.subr.bf16.mxu0 0
      %4139 = vmatpush1.bf16.msra.mxu0 0
      %4140 = vmatprep.subr.bf16.mxu0 0
      %4141 = vmatpush1.bf16.msra.mxu0 0
      %4142 = vmatprep.mubr.bf16.mxu0 0
      %4143 = vmatmul.mubr.bf16.gmra.mrb[0].mxu0 %v4058
      %v4144 = vpop.f32.mrb[0].mxu0
      %v4145 = vadd.f32 0.0, %v4144
      %v4146 = vpop.f32.mrb[0].mxu0
      %v4147 = vpop.f32.mrb[0].mxu0
      %v4148 = vpop.f32.mrb[0].mxu0
      %4149 = vdwg.mxu0
      %v4150 = vadd.f32 %v4021, %v4104
      %v4151 = vadd.f32 %v4022, %v4106
      %v4152 = vadd.f32 %v4023, %v4145
      %v4153 = vld [vmem:[%s165] sm:$0xff]
      %s4154 = scalar_lea.vmem %s1, 124
      %v4155 = vld [vmem:[%s4154] sm:$0xf]
      %v4157 = vcombine.high %v4153, %v4153
      %v4159 = vunpack.c.l.s4 1983009808
      %v4160 = vunpack.c.0.s8 %v4159
      %v4161 = vlaneseq
      %v4162 = vshrl.u32 %v4161, 7
      %v4163 = vsub.s32 %v4160, %v4162
      %v4164 = vrot.slane %v4153, %v4163
      %v4166 = vunpack.c.l.s4 1983009808
      %v4167 = vunpack.c.0.s8 %v4166
      %v4168 = vlaneseq
      %v4169 = vshrl.u32 %v4168, 7
      %v4170 = vsub.s32 %v4167, %v4169
      %v4171 = vrot.slane %v4157, %v4170
      %v4172 = vcombine.high %v4164, %v4164
      %v4173 = vcombine.high %v4171, %v4171
      %4174 = vrot.lane.b32.xlu0 %v4164, 37
      %v4175 = vpop.permute.xlu0 %4174
      %4176 = vrot.lane.b32.xlu0 %v4172, 37
      %v4177 = vpop.permute.xlu0 %4176
      %4178 = vrot.lane.b32.xlu0 %v4171, 37
      %v4179 = vpop.permute.xlu0 %4178
      %4180 = vrot.lane.b32.xlu0 %v4173, 37
      %v4181 = vpop.permute.xlu0 %4180
      %vm4182 = vcmask 302080
      %v4183 = vsel %vm4182, %v4175, %v4177
      %v4184 = vsel %vm4182, %v4177, %v4179
      %v4185 = vsel %vm4182, %v4179, %v4181
      %v4187 = vsel %vm207, %v4155, 0
      %v4190 = vsel %vm211, %v4183, 0
      %v4193 = vsel %vm211, %v4184, 0
      %v4196 = vsel %vm211, %v4185, 0
      %4198 = vmatprep.subr.bf16.mxu0 %v4193
      %4199 = vmatpush1.bf16.msra.mxu0 %v4190
      %4200 = vmatprep.subr.bf16.mxu0 0
      %4201 = vmatpush1.bf16.msra.mxu0 0
      %4202 = vmatprep.subr.bf16.mxu0 0
      %4203 = vmatpush1.bf16.msra.mxu0 0
      %4204 = vmatprep.subr.bf16.mxu0 0
      %4205 = vmatpush1.bf16.msra.mxu0 0
      %4206 = vmatprep.subr.bf16.mxu0 0
      %4207 = vmatpush1.bf16.msra.mxu0 0
      %4208 = vmatprep.subr.bf16.mxu0 0
      %4209 = vmatpush1.bf16.msra.mxu0 0
      %4210 = vmatprep.subr.bf16.mxu0 0
      %4211 = vmatpush1.bf16.msra.mxu0 0
      %4212 = vmatprep.subr.bf16.mxu0 0
      %4213 = vmatpush1.bf16.msra.mxu0 0
      %4214 = vmatprep.subr.bf16.mxu0 0
      %4215 = vmatpush1.bf16.msra.mxu0 0
      %4216 = vmatprep.subr.bf16.mxu0 0
      %4217 = vmatpush1.bf16.msra.mxu0 0
      %4218 = vmatprep.subr.bf16.mxu0 0
      %4219 = vmatpush1.bf16.msra.mxu0 0
      %4220 = vmatprep.subr.bf16.mxu0 0
      %4221 = vmatpush1.bf16.msra.mxu0 0
      %4222 = vmatprep.subr.bf16.mxu0 0
      %4223 = vmatpush1.bf16.msra.mxu0 0
      %4224 = vmatprep.subr.bf16.mxu0 0
      %4225 = vmatpush1.bf16.msra.mxu0 0
      %4226 = vmatprep.subr.bf16.mxu0 0
      %4227 = vmatpush1.bf16.msra.mxu0 0
      %4228 = vmatprep.subr.bf16.mxu0 0
      %4229 = vmatpush1.bf16.msra.mxu0 0
      %4230 = vmatprep.mubr.bf16.mxu0 0
      %4231 = vmatmul.mubr.bf16.gmra.mrb[0].mxu0 %v4187
      %v4232 = vpop.f32.mrb[0].mxu0
      %v4233 = vadd.f32 0.0, %v4232
      %v4234 = vpop.f32.mrb[0].mxu0
      %v4235 = vadd.f32 0.0, %v4234
      %v4236 = vpop.f32.mrb[0].mxu0
      %v4237 = vpop.f32.mrb[0].mxu0
      %4238 = vdwg.mxu0
      %4239 = vmatprep.subr.bf16.mxu0 0
      %4240 = vmatpush1.bf16.msra.mxu0 %v4196
      %4241 = vmatprep.subr.bf16.mxu0 0
      %4242 = vmatpush1.bf16.msra.mxu0 0
      %4243 = vmatprep.subr.bf16.mxu0 0
      %4244 = vmatpush1.bf16.msra.mxu0 0
      %4245 = vmatprep.subr.bf16.mxu0 0
      %4246 = vmatpush1.bf16.msra.mxu0 0
      %4247 = vmatprep.subr.bf16.mxu0 0
      %4248 = vmatpush1.bf16.msra.mxu0 0
      %4249 = vmatprep.subr.bf16.mxu0 0
      %4250 = vmatpush1.bf16.msra.mxu0 0
      %4251 = vmatprep.subr.bf16.mxu0 0
      %4252 = vmatpush1.bf16.msra.mxu0 0
      %4253 = vmatprep.subr.bf16.mxu0 0
      %4254 = vmatpush1.bf16.msra.mxu0 0
      %4255 = vmatprep.subr.bf16.mxu0 0
      %4256 = vmatpush1.bf16.msra.mxu0 0
      %4257 = vmatprep.subr.bf16.mxu0 0
      %4258 = vmatpush1.bf16.msra.mxu0 0
      %4259 = vmatprep.subr.bf16.mxu0 0
      %4260 = vmatpush1.bf16.msra.mxu0 0
      %4261 = vmatprep.subr.bf16.mxu0 0
      %4262 = vmatpush1.bf16.msra.mxu0 0
      %4263 = vmatprep.subr.bf16.mxu0 0
      %4264 = vmatpush1.bf16.msra.mxu0 0
      %4265 = vmatprep.subr.bf16.mxu0 0
      %4266 = vmatpush1.bf16.msra.mxu0 0
      %4267 = vmatprep.subr.bf16.mxu0 0
      %4268 = vmatpush1.bf16.msra.mxu0 0
      %4269 = vmatprep.subr.bf16.mxu0 0
      %4270 = vmatpush1.bf16.msra.mxu0 0
      %4271 = vmatprep.mubr.bf16.mxu0 0
      %4272 = vmatmul.mubr.bf16.gmra.mrb[0].mxu0 %v4187
      %v4273 = vpop.f32.mrb[0].mxu0
      %v4274 = vadd.f32 0.0, %v4273
      %v4275 = vpop.f32.mrb[0].mxu0
      %v4276 = vpop.f32.mrb[0].mxu0
      %v4277 = vpop.f32.mrb[0].mxu0
      %4278 = vdwg.mxu0
      %v4279 = vadd.f32 %v4150, %v4233
      %v4280 = vadd.f32 %v4151, %v4235
      %v4281 = vadd.f32 %v4152, %v4274
      %v4282 = vld [vmem:[%s165] sm:$0xff]
      %s4283 = scalar_lea.vmem %s1, 128
      %v4284 = vld [vmem:[%s4283] sm:$0xf]
      %v4286 = vcombine.high %v4282, %v4282
      %v4288 = vunpack.c.l.s4 1983009808
      %v4289 = vunpack.c.0.s8 %v4288
      %v4290 = vlaneseq
      %v4291 = vshrl.u32 %v4290, 7
      %v4292 = vsub.s32 %v4289, %v4291
      %v4293 = vrot.slane %v4282, %v4292
      %v4295 = vunpack.c.l.s4 1983009808
      %v4296 = vunpack.c.0.s8 %v4295
      %v4297 = vlaneseq
      %v4298 = vshrl.u32 %v4297, 7
      %v4299 = vsub.s32 %v4296, %v4298
      %v4300 = vrot.slane %v4286, %v4299
      %v4301 = vcombine.high %v4293, %v4293
      %v4302 = vcombine.high %v4300, %v4300
      %4303 = vrot.lane.b32.xlu0 %v4293, 36
      %v4304 = vpop.permute.xlu0 %4303
      %4305 = vrot.lane.b32.xlu0 %v4301, 36
      %v4306 = vpop.permute.xlu0 %4305
      %4307 = vrot.lane.b32.xlu0 %v4300, 36
      %v4308 = vpop.permute.xlu0 %4307
      %4309 = vrot.lane.b32.xlu0 %v4302, 36
      %v4310 = vpop.permute.xlu0 %4309
      %vm4311 = vcmask 293888
      %v4312 = vsel %vm4311, %v4304, %v4306
      %v4313 = vsel %vm4311, %v4306, %v4308
      %v4314 = vsel %vm4311, %v4308, %v4310
      %v4316 = vsel %vm207, %v4284, 0
      %v4319 = vsel %vm211, %v4312, 0
      %v4322 = vsel %vm211, %v4313, 0
      %v4325 = vsel %vm211, %v4314, 0
      %4327 = vmatprep.subr.bf16.mxu0 %v4322
      %4328 = vmatpush1.bf16.msra.mxu0 %v4319
      %4329 = vmatprep.subr.bf16.mxu0 0
      %4330 = vmatpush1.bf16.msra.mxu0 0
      %4331 = vmatprep.subr.bf16.mxu0 0
      %4332 = vmatpush1.bf16.msra.mxu0 0
      %4333 = vmatprep.subr.bf16.mxu0 0
      %4334 = vmatpush1.bf16.msra.mxu0 0
      %4335 = vmatprep.subr.bf16.mxu0 0
      %4336 = vmatpush1.bf16.msra.mxu0 0
      %4337 = vmatprep.subr.bf16.mxu0 0
      %4338 = vmatpush1.bf16.msra.mxu0 0
      %4339 = vmatprep.subr.bf16.mxu0 0
      %4340 = vmatpush1.bf16.msra.mxu0 0
      %4341 = vmatprep.subr.bf16.mxu0 0
      %4342 = vmatpush1.bf16.msra.mxu0 0
      %4343 = vmatprep.subr.bf16.mxu0 0
      %4344 = vmatpush1.bf16.msra.mxu0 0
      %4345 = vmatprep.subr.bf16.mxu0 0
      %4346 = vmatpush1.bf16.msra.mxu0 0
      %4347 = vmatprep.subr.bf16.mxu0 0
      %4348 = vmatpush1.bf16.msra.mxu0 0
      %4349 = vmatprep.subr.bf16.mxu0 0
      %4350 = vmatpush1.bf16.msra.mxu0 0
      %4351 = vmatprep.subr.bf16.mxu0 0
      %4352 = vmatpush1.bf16.msra.mxu0 0
      %4353 = vmatprep.subr.bf16.mxu0 0
      %4354 = vmatpush1.bf16.msra.mxu0 0
      %4355 = vmatprep.subr.bf16.mxu0 0
      %4356 = vmatpush1.bf16.msra.mxu0 0
      %4357 = vmatprep.subr.bf16.mxu0 0
      %4358 = vmatpush1.bf16.msra.mxu0 0
      %4359 = vmatprep.mubr.bf16.mxu0 0
      %4360 = vmatmul.mubr.bf16.gmra.mrb[0].mxu0 %v4316
      %v4361 = vpop.f32.mrb[0].mxu0
      %v4362 = vadd.f32 0.0, %v4361
      %v4363 = vpop.f32.mrb[0].mxu0
      %v4364 = vadd.f32 0.0, %v4363
      %v4365 = vpop.f32.mrb[0].mxu0
      %v4366 = vpop.f32.mrb[0].mxu0
      %4367 = vdwg.mxu0
      %4368 = vmatprep.subr.bf16.mxu0 0
      %4369 = vmatpush1.bf16.msra.mxu0 %v4325
      %4370 = vmatprep.subr.bf16.mxu0 0
      %4371 = vmatpush1.bf16.msra.mxu0 0
      %4372 = vmatprep.subr.bf16.mxu0 0
      %4373 = vmatpush1.bf16.msra.mxu0 0
      %4374 = vmatprep.subr.bf16.mxu0 0
      %4375 = vmatpush1.bf16.msra.mxu0 0
      %4376 = vmatprep.subr.bf16.mxu0 0
      %4377 = vmatpush1.bf16.msra.mxu0 0
      %4378 = vmatprep.subr.bf16.mxu0 0
      %4379 = vmatpush1.bf16.msra.mxu0 0
      %4380 = vmatprep.subr.bf16.mxu0 0
      %4381 = vmatpush1.bf16.msra.mxu0 0
      %4382 = vmatprep.subr.bf16.mxu0 0
      %4383 = vmatpush1.bf16.msra.mxu0 0
      %4384 = vmatprep.subr.bf16.mxu0 0
      %4385 = vmatpush1.bf16.msra.mxu0 0
      %4386 = vmatprep.subr.bf16.mxu0 0
      %4387 = vmatpush1.bf16.msra.mxu0 0
      %4388 = vmatprep.subr.bf16.mxu0 0
      %4389 = vmatpush1.bf16.msra.mxu0 0
      %4390 = vmatprep.subr.bf16.mxu0 0
      %4391 = vmatpush1.bf16.msra.mxu0 0
      %4392 = vmatprep.subr.bf16.mxu0 0
      %4393 = vmatpush1.bf16.msra.mxu0 0
      %4394 = vmatprep.subr.bf16.mxu0 0
      %4395 = vmatpush1.bf16.msra.mxu0 0
      %4396 = vmatprep.subr.bf16.mxu0 0
      %4397 = vmatpush1.bf16.msra.mxu0 0
      %4398 = vmatprep.subr.bf16.mxu0 0
      %4399 = vmatpush1.bf16.msra.mxu0 0
      %4400 = vmatprep.mubr.bf16.mxu0 0
      %4401 = vmatmul.mubr.bf16.gmra.mrb[0].mxu0 %v4316
      %v4402 = vpop.f32.mrb[0].mxu0
      %v4403 = vadd.f32 0.0, %v4402
      %v4404 = vpop.f32.mrb[0].mxu0
      %v4405 = vpop.f32.mrb[0].mxu0
      %v4406 = vpop.f32.mrb[0].mxu0
      %4407 = vdwg.mxu0
      %v4408 = vadd.f32 %v4279, %v4362
      %v4409 = vadd.f32 %v4280, %v4364
      %v4410 = vadd.f32 %v4281, %v4403
      %v4411 = vld [vmem:[%s165] sm:$0xff]
      %s4412 = scalar_lea.vmem %s1, 132
      %v4413 = vld [vmem:[%s4412] sm:$0xf]
      %v4415 = vcombine.high %v4411, %v4411
      %v4417 = vunpack.c.l.s4 1983009808
      %v4418 = vunpack.c.0.s8 %v4417
      %v4419 = vlaneseq
      %v4420 = vshrl.u32 %v4419, 7
      %v4421 = vsub.s32 %v4418, %v4420
      %v4422 = vrot.slane %v4411, %v4421
      %v4424 = vunpack.c.l.s4 1983009808
      %v4425 = vunpack.c.0.s8 %v4424
      %v4426 = vlaneseq
      %v4427 = vshrl.u32 %v4426, 7
      %v4428 = vsub.s32 %v4425, %v4427
      %v4429 = vrot.slane %v4415, %v4428
      %v4430 = vcombine.high %v4422, %v4422
      %v4431 = vcombine.high %v4429, %v4429
      %4432 = vrot.lane.b32.xlu0 %v4422, 35
      %v4433 = vpop.permute.xlu0 %4432
      %4434 = vrot.lane.b32.xlu0 %v4430, 35
      %v4435 = vpop.permute.xlu0 %4434
      %4436 = vrot.lane.b32.xlu0 %v4429, 35
      %v4437 = vpop.permute.xlu0 %4436
      %4438 = vrot.lane.b32.xlu0 %v4431, 35
      %v4439 = vpop.permute.xlu0 %4438
      %vm4440 = vcmask 285696
      %v4441 = vsel %vm4440, %v4433, %v4435
      %v4442 = vsel %vm4440, %v4435, %v4437
      %v4443 = vsel %vm4440, %v4437, %v4439
      %v4445 = vsel %vm207, %v4413, 0
      %v4448 = vsel %vm211, %v4441, 0
      %v4451 = vsel %vm211, %v4442, 0
      %v4454 = vsel %vm211, %v4443, 0
      %4456 = vmatprep.subr.bf16.mxu0 %v4451
      %4457 = vmatpush1.bf16.msra.mxu0 %v4448
      %4458 = vmatprep.subr.bf16.mxu0 0
      %4459 = vmatpush1.bf16.msra.mxu0 0
      %4460 = vmatprep.subr.bf16.mxu0 0
      %4461 = vmatpush1.bf16.msra.mxu0 0
      %4462 = vmatprep.subr.bf16.mxu0 0
      %4463 = vmatpush1.bf16.msra.mxu0 0
      %4464 = vmatprep.subr.bf16.mxu0 0
      %4465 = vmatpush1.bf16.msra.mxu0 0
      %4466 = vmatprep.subr.bf16.mxu0 0
      %4467 = vmatpush1.bf16.msra.mxu0 0
      %4468 = vmatprep.subr.bf16.mxu0 0
      %4469 = vmatpush1.bf16.msra.mxu0 0
      %4470 = vmatprep.subr.bf16.mxu0 0
      %4471 = vmatpush1.bf16.msra.mxu0 0
      %4472 = vmatprep.subr.bf16.mxu0 0
      %4473 = vmatpush1.bf16.msra.mxu0 0
      %4474 = vmatprep.subr.bf16.mxu0 0
      %4475 = vmatpush1.bf16.msra.mxu0 0
      %4476 = vmatprep.subr.bf16.mxu0 0
      %4477 = vmatpush1.bf16.msra.mxu0 0
      %4478 = vmatprep.subr.bf16.mxu0 0
      %4479 = vmatpush1.bf16.msra.mxu0 0
      %4480 = vmatprep.subr.bf16.mxu0 0
      %4481 = vmatpush1.bf16.msra.mxu0 0
      %4482 = vmatprep.subr.bf16.mxu0 0
      %4483 = vmatpush1.bf16.msra.mxu0 0
      %4484 = vmatprep.subr.bf16.mxu0 0
      %4485 = vmatpush1.bf16.msra.mxu0 0
      %4486 = vmatprep.subr.bf16.mxu0 0
      %4487 = vmatpush1.bf16.msra.mxu0 0
      %4488 = vmatprep.mubr.bf16.mxu0 0
      %4489 = vmatmul.mubr.bf16.gmra.mrb[0].mxu0 %v4445
      %v4490 = vpop.f32.mrb[0].mxu0
      %v4491 = vadd.f32 0.0, %v4490
      %v4492 = vpop.f32.mrb[0].mxu0
      %v4493 = vadd.f32 0.0, %v4492
      %v4494 = vpop.f32.mrb[0].mxu0
      %v4495 = vpop.f32.mrb[0].mxu0
      %4496 = vdwg.mxu0
      %4497 = vmatprep.subr.bf16.mxu0 0
      %4498 = vmatpush1.bf16.msra.mxu0 %v4454
      %4499 = vmatprep.subr.bf16.mxu0 0
      %4500 = vmatpush1.bf16.msra.mxu0 0
      %4501 = vmatprep.subr.bf16.mxu0 0
      %4502 = vmatpush1.bf16.msra.mxu0 0
      %4503 = vmatprep.subr.bf16.mxu0 0
      %4504 = vmatpush1.bf16.msra.mxu0 0
      %4505 = vmatprep.subr.bf16.mxu0 0
      %4506 = vmatpush1.bf16.msra.mxu0 0
      %4507 = vmatprep.subr.bf16.mxu0 0
      %4508 = vmatpush1.bf16.msra.mxu0 0
      %4509 = vmatprep.subr.bf16.mxu0 0
      %4510 = vmatpush1.bf16.msra.mxu0 0
      %4511 = vmatprep.subr.bf16.mxu0 0
      %4512 = vmatpush1.bf16.msra.mxu0 0
      %4513 = vmatprep.subr.bf16.mxu0 0
      %4514 = vmatpush1.bf16.msra.mxu0 0
      %4515 = vmatprep.subr.bf16.mxu0 0
      %4516 = vmatpush1.bf16.msra.mxu0 0
      %4517 = vmatprep.subr.bf16.mxu0 0
      %4518 = vmatpush1.bf16.msra.mxu0 0
      %4519 = vmatprep.subr.bf16.mxu0 0
      %4520 = vmatpush1.bf16.msra.mxu0 0
      %4521 = vmatprep.subr.bf16.mxu0 0
      %4522 = vmatpush1.bf16.msra.mxu0 0
      %4523 = vmatprep.subr.bf16.mxu0 0
      %4524 = vmatpush1.bf16.msra.mxu0 0
      %4525 = vmatprep.subr.bf16.mxu0 0
      %4526 = vmatpush1.bf16.msra.mxu0 0
      %4527 = vmatprep.subr.bf16.mxu0 0
      %4528 = vmatpush1.bf16.msra.mxu0 0
      %4529 = vmatprep.mubr.bf16.mxu0 0
      %4530 = vmatmul.mubr.bf16.gmra.mrb[0].mxu0 %v4445
      %v4531 = vpop.f32.mrb[0].mxu0
      %v4532 = vadd.f32 0.0, %v4531
      %v4533 = vpop.f32.mrb[0].mxu0
      %v4534 = vpop.f32.mrb[0].mxu0
      %v4535 = vpop.f32.mrb[0].mxu0
      %4536 = vdwg.mxu0
      %v4537 = vadd.f32 %v4408, %v4491
      %v4538 = vadd.f32 %v4409, %v4493
      %v4539 = vadd.f32 %v4410, %v4532
      %v4540 = vld [vmem:[%s165] sm:$0xff]
      %s4541 = scalar_lea.vmem %s1, 136
      %v4542 = vld [vmem:[%s4541] sm:$0xf]
      %v4544 = vcombine.high %v4540, %v4540
      %v4546 = vunpack.c.l.s4 1983009808
      %v4547 = vunpack.c.0.s8 %v4546
      %v4548 = vlaneseq
      %v4549 = vshrl.u32 %v4548, 7
      %v4550 = vsub.s32 %v4547, %v4549
      %v4551 = vrot.slane %v4540, %v4550
      %v4553 = vunpack.c.l.s4 1983009808
      %v4554 = vunpack.c.0.s8 %v4553
      %v4555 = vlaneseq
      %v4556 = vshrl.u32 %v4555, 7
      %v4557 = vsub.s32 %v4554, %v4556
      %v4558 = vrot.slane %v4544, %v4557
      %v4559 = vcombine.high %v4551, %v4551
      %v4560 = vcombine.high %v4558, %v4558
      %4561 = vrot.lane.b32.xlu0 %v4551, 34
      %v4562 = vpop.permute.xlu0 %4561
      %4563 = vrot.lane.b32.xlu0 %v4559, 34
      %v4564 = vpop.permute.xlu0 %4563
      %4565 = vrot.lane.b32.xlu0 %v4558, 34
      %v4566 = vpop.permute.xlu0 %4565
      %4567 = vrot.lane.b32.xlu0 %v4560, 34
      %v4568 = vpop.permute.xlu0 %4567
      %vm4569 = vcmask 277504
      %v4570 = vsel %vm4569, %v4562, %v4564
      %v4571 = vsel %vm4569, %v4564, %v4566
      %v4572 = vsel %vm4569, %v4566, %v4568
      %v4574 = vsel %vm207, %v4542, 0
      %v4577 = vsel %vm211, %v4570, 0
      %v4580 = vsel %vm211, %v4571, 0
      %v4583 = vsel %vm211, %v4572, 0
      %4585 = vmatprep.subr.bf16.mxu0 %v4580
      %4586 = vmatpush1.bf16.msra.mxu0 %v4577
      %4587 = vmatprep.subr.bf16.mxu0 0
      %4588 = vmatpush1.bf16.msra.mxu0 0
      %4589 = vmatprep.subr.bf16.mxu0 0
      %4590 = vmatpush1.bf16.msra.mxu0 0
      %4591 = vmatprep.subr.bf16.mxu0 0
      %4592 = vmatpush1.bf16.msra.mxu0 0
      %4593 = vmatprep.subr.bf16.mxu0 0
      %4594 = vmatpush1.bf16.msra.mxu0 0
      %4595 = vmatprep.subr.bf16.mxu0 0
      %4596 = vmatpush1.bf16.msra.mxu0 0
      %4597 = vmatprep.subr.bf16.mxu0 0
      %4598 = vmatpush1.bf16.msra.mxu0 0
      %4599 = vmatprep.subr.bf16.mxu0 0
      %4600 = vmatpush1.bf16.msra.mxu0 0
      %4601 = vmatprep.subr.bf16.mxu0 0
      %4602 = vmatpush1.bf16.msra.mxu0 0
      %4603 = vmatprep.subr.bf16.mxu0 0
      %4604 = vmatpush1.bf16.msra.mxu0 0
      %4605 = vmatprep.subr.bf16.mxu0 0
      %4606 = vmatpush1.bf16.msra.mxu0 0
      %4607 = vmatprep.subr.bf16.mxu0 0
      %4608 = vmatpush1.bf16.msra.mxu0 0
      %4609 = vmatprep.subr.bf16.mxu0 0
      %4610 = vmatpush1.bf16.msra.mxu0 0
      %4611 = vmatprep.subr.bf16.mxu0 0
      %4612 = vmatpush1.bf16.msra.mxu0 0
      %4613 = vmatprep.subr.bf16.mxu0 0
      %4614 = vmatpush1.bf16.msra.mxu0 0
      %4615 = vmatprep.subr.bf16.mxu0 0
      %4616 = vmatpush1.bf16.msra.mxu0 0
      %4617 = vmatprep.mubr.bf16.mxu0 0
      %4618 = vmatmul.mubr.bf16.gmra.mrb[0].mxu0 %v4574
      %v4619 = vpop.f32.mrb[0].mxu0
      %v4620 = vadd.f32 0.0, %v4619
      %v4621 = vpop.f32.mrb[0].mxu0
      %v4622 = vadd.f32 0.0, %v4621
      %v4623 = vpop.f32.mrb[0].mxu0
      %v4624 = vpop.f32.mrb[0].mxu0
      %4625 = vdwg.mxu0
      %4626 = vmatprep.subr.bf16.mxu0 0
      %4627 = vmatpush1.bf16.msra.mxu0 %v4583
      %4628 = vmatprep.subr.bf16.mxu0 0
      %4629 = vmatpush1.bf16.msra.mxu0 0
      %4630 = vmatprep.subr.bf16.mxu0 0
      %4631 = vmatpush1.bf16.msra.mxu0 0
      %4632 = vmatprep.subr.bf16.mxu0 0
      %4633 = vmatpush1.bf16.msra.mxu0 0
      %4634 = vmatprep.subr.bf16.mxu0 0
      %4635 = vmatpush1.bf16.msra.mxu0 0
      %4636 = vmatprep.subr.bf16.mxu0 0
      %4637 = vmatpush1.bf16.msra.mxu0 0
      %4638 = vmatprep.subr.bf16.mxu0 0
      %4639 = vmatpush1.bf16.msra.mxu0 0
      %4640 = vmatprep.subr.bf16.mxu0 0
      %4641 = vmatpush1.bf16.msra.mxu0 0
      %4642 = vmatprep.subr.bf16.mxu0 0
      %4643 = vmatpush1.bf16.msra.mxu0 0
      %4644 = vmatprep.subr.bf16.mxu0 0
      %4645 = vmatpush1.bf16.msra.mxu0 0
      %4646 = vmatprep.subr.bf16.mxu0 0
      %4647 = vmatpush1.bf16.msra.mxu0 0
      %4648 = vmatprep.subr.bf16.mxu0 0
      %4649 = vmatpush1.bf16.msra.mxu0 0
      %4650 = vmatprep.subr.bf16.mxu0 0
      %4651 = vmatpush1.bf16.msra.mxu0 0
      %4652 = vmatprep.subr.bf16.mxu0 0
      %4653 = vmatpush1.bf16.msra.mxu0 0
      %4654 = vmatprep.subr.bf16.mxu0 0
      %4655 = vmatpush1.bf16.msra.mxu0 0
      %4656 = vmatprep.subr.bf16.mxu0 0
      %4657 = vmatpush1.bf16.msra.mxu0 0
      %4658 = vmatprep.mubr.bf16.mxu0 0
      %4659 = vmatmul.mubr.bf16.gmra.mrb[0].mxu0 %v4574
      %v4660 = vpop.f32.mrb[0].mxu0
      %v4661 = vadd.f32 0.0, %v4660
      %v4662 = vpop.f32.mrb[0].mxu0
      %v4663 = vpop.f32.mrb[0].mxu0
      %v4664 = vpop.f32.mrb[0].mxu0
      %4665 = vdwg.mxu0
      %v4666 = vadd.f32 %v4537, %v4620
      %v4667 = vadd.f32 %v4538, %v4622
      %v4668 = vadd.f32 %v4539, %v4661
      %v4669 = vld [vmem:[%s165] sm:$0xff]
      %s4670 = scalar_lea.vmem %s1, 140
      %v4671 = vld [vmem:[%s4670] sm:$0xf]
      %v4673 = vcombine.high %v4669, %v4669
      %v4675 = vunpack.c.l.s4 1983009808
      %v4676 = vunpack.c.0.s8 %v4675
      %v4677 = vlaneseq
      %v4678 = vshrl.u32 %v4677, 7
      %v4679 = vsub.s32 %v4676, %v4678
      %v4680 = vrot.slane %v4669, %v4679
      %v4682 = vunpack.c.l.s4 1983009808
      %v4683 = vunpack.c.0.s8 %v4682
      %v4684 = vlaneseq
      %v4685 = vshrl.u32 %v4684, 7
      %v4686 = vsub.s32 %v4683, %v4685
      %v4687 = vrot.slane %v4673, %v4686
      %v4688 = vcombine.high %v4680, %v4680
      %v4689 = vcombine.high %v4687, %v4687
      %4690 = vrot.lane.b32.xlu0 %v4680, 18
      %v4691 = vpop.permute.xlu0 %4690
      %4692 = vrot.lane.b32.xlu0 %v4688, 18
      %v4693 = vpop.permute.xlu0 %4692
      %4694 = vrot.lane.b32.xlu0 %v4687, 18
      %v4695 = vpop.permute.xlu0 %4694
      %4696 = vrot.lane.b32.xlu0 %v4689, 18
      %v4697 = vpop.permute.xlu0 %4696
      %vm4698 = vcmask 146432
      %v4699 = vsel %vm4698, %v4691, %v4693
      %v4700 = vsel %vm4698, %v4693, %v4695
      %v4701 = vsel %vm4698, %v4695, %v4697
      %v4703 = vsel %vm207, %v4671, 0
      %v4706 = vsel %vm211, %v4699, 0
      %v4709 = vsel %vm211, %v4700, 0
      %v4712 = vsel %vm211, %v4701, 0
      %4714 = vmatprep.subr.bf16.mxu0 %v4709
      %4715 = vmatpush1.bf16.msra.mxu0 %v4706
      %4716 = vmatprep.subr.bf16.mxu0 0
      %4717 = vmatpush1.bf16.msra.mxu0 0
      %4718 = vmatprep.subr.bf16.mxu0 0
      %4719 = vmatpush1.bf16.msra.mxu0 0
      %4720 = vmatprep.subr.bf16.mxu0 0
      %4721 = vmatpush1.bf16.msra.mxu0 0
      %4722 = vmatprep.subr.bf16.mxu0 0
      %4723 = vmatpush1.bf16.msra.mxu0 0
      %4724 = vmatprep.subr.bf16.mxu0 0
      %4725 = vmatpush1.bf16.msra.mxu0 0
      %4726 = vmatprep.subr.bf16.mxu0 0
      %4727 = vmatpush1.bf16.msra.mxu0 0
      %4728 = vmatprep.subr.bf16.mxu0 0
      %4729 = vmatpush1.bf16.msra.mxu0 0
      %4730 = vmatprep.subr.bf16.mxu0 0
      %4731 = vmatpush1.bf16.msra.mxu0 0
      %4732 = vmatprep.subr.bf16.mxu0 0
      %4733 = vmatpush1.bf16.msra.mxu0 0
      %4734 = vmatprep.subr.bf16.mxu0 0
      %4735 = vmatpush1.bf16.msra.mxu0 0
      %4736 = vmatprep.subr.bf16.mxu0 0
      %4737 = vmatpush1.bf16.msra.mxu0 0
      %4738 = vmatprep.subr.bf16.mxu0 0
      %4739 = vmatpush1.bf16.msra.mxu0 0
      %4740 = vmatprep.subr.bf16.mxu0 0
      %4741 = vmatpush1.bf16.msra.mxu0 0
      %4742 = vmatprep.subr.bf16.mxu0 0
      %4743 = vmatpush1.bf16.msra.mxu0 0
      %4744 = vmatprep.subr.bf16.mxu0 0
      %4745 = vmatpush1.bf16.msra.mxu0 0
      %4746 = vmatprep.mubr.bf16.mxu0 0
      %4747 = vmatmul.mubr.bf16.gmra.mrb[0].mxu0 %v4703
      %v4748 = vpop.f32.mrb[0].mxu0
      %v4749 = vadd.f32 0.0, %v4748
      %v4750 = vpop.f32.mrb[0].mxu0
      %v4751 = vadd.f32 0.0, %v4750
      %v4752 = vpop.f32.mrb[0].mxu0
      %v4753 = vpop.f32.mrb[0].mxu0
      %4754 = vdwg.mxu0
      %4755 = vmatprep.subr.bf16.mxu0 0
      %4756 = vmatpush1.bf16.msra.mxu0 %v4712
      %4757 = vmatprep.subr.bf16.mxu0 0
      %4758 = vmatpush1.bf16.msra.mxu0 0
      %4759 = vmatprep.subr.bf16.mxu0 0
      %4760 = vmatpush1.bf16.msra.mxu0 0
      %4761 = vmatprep.subr.bf16.mxu0 0
      %4762 = vmatpush1.bf16.msra.mxu0 0
      %4763 = vmatprep.subr.bf16.mxu0 0
      %4764 = vmatpush1.bf16.msra.mxu0 0
      %4765 = vmatprep.subr.bf16.mxu0 0
      %4766 = vmatpush1.bf16.msra.mxu0 0
      %4767 = vmatprep.subr.bf16.mxu0 0
      %4768 = vmatpush1.bf16.msra.mxu0 0
      %4769 = vmatprep.subr.bf16.mxu0 0
      %4770 = vmatpush1.bf16.msra.mxu0 0
      %4771 = vmatprep.subr.bf16.mxu0 0
      %4772 = vmatpush1.bf16.msra.mxu0 0
      %4773 = vmatprep.subr.bf16.mxu0 0
      %4774 = vmatpush1.bf16.msra.mxu0 0
      %4775 = vmatprep.subr.bf16.mxu0 0
      %4776 = vmatpush1.bf16.msra.mxu0 0
      %4777 = vmatprep.subr.bf16.mxu0 0
      %4778 = vmatpush1.bf16.msra.mxu0 0
      %4779 = vmatprep.subr.bf16.mxu0 0
      %4780 = vmatpush1.bf16.msra.mxu0 0
      %4781 = vmatprep.subr.bf16.mxu0 0
      %4782 = vmatpush1.bf16.msra.mxu0 0
      %4783 = vmatprep.subr.bf16.mxu0 0
      %4784 = vmatpush1.bf16.msra.mxu0 0
      %4785 = vmatprep.subr.bf16.mxu0 0
      %4786 = vmatpush1.bf16.msra.mxu0 0
      %4787 = vmatprep.mubr.bf16.mxu0 0
      %4788 = vmatmul.mubr.bf16.gmra.mrb[0].mxu0 %v4703
      %v4789 = vpop.f32.mrb[0].mxu0
      %v4790 = vadd.f32 0.0, %v4789
      %v4791 = vpop.f32.mrb[0].mxu0
      %v4792 = vpop.f32.mrb[0].mxu0
      %v4793 = vpop.f32.mrb[0].mxu0
      %4794 = vdwg.mxu0
      %v4795 = vadd.f32 %v4666, %v4749
      %v4796 = vadd.f32 %v4667, %v4751
      %v4797 = vadd.f32 %v4668, %v4790
      %v4798 = vld [vmem:[%s165] sm:$0xff]
      %s4799 = scalar_lea.vmem %s1, 144
      %v4800 = vld [vmem:[%s4799] sm:$0xf]
      %v4802 = vcombine.high %v4798, %v4798
      %v4804 = vunpack.c.l.s4 1983009808
      %v4805 = vunpack.c.0.s8 %v4804
      %v4806 = vlaneseq
      %v4807 = vshrl.u32 %v4806, 7
      %v4808 = vsub.s32 %v4805, %v4807
      %v4809 = vrot.slane %v4798, %v4808
      %v4811 = vunpack.c.l.s4 1983009808
      %v4812 = vunpack.c.0.s8 %v4811
      %v4813 = vlaneseq
      %v4814 = vshrl.u32 %v4813, 7
      %v4815 = vsub.s32 %v4812, %v4814
      %v4816 = vrot.slane %v4802, %v4815
      %v4817 = vcombine.high %v4809, %v4809
      %v4818 = vcombine.high %v4816, %v4816
      %4819 = vrot.lane.b32.xlu0 %v4809, 17
      %v4820 = vpop.permute.xlu0 %4819
      %4821 = vrot.lane.b32.xlu0 %v4817, 17
      %v4822 = vpop.permute.xlu0 %4821
      %4823 = vrot.lane.b32.xlu0 %v4816, 17
      %v4824 = vpop.permute.xlu0 %4823
      %4825 = vrot.lane.b32.xlu0 %v4818, 17
      %v4826 = vpop.permute.xlu0 %4825
      %vm4827 = vcmask 138240
      %v4828 = vsel %vm4827, %v4820, %v4822
      %v4829 = vsel %vm4827, %v4822, %v4824
      %v4830 = vsel %vm4827, %v4824, %v4826
      %v4832 = vsel %vm207, %v4800, 0
      %v4835 = vsel %vm211, %v4828, 0
      %v4838 = vsel %vm211, %v4829, 0
      %v4841 = vsel %vm211, %v4830, 0
      %4843 = vmatprep.subr.bf16.mxu0 %v4838
      %4844 = vmatpush1.bf16.msra.mxu0 %v4835
      %4845 = vmatprep.subr.bf16.mxu0 0
      %4846 = vmatpush1.bf16.msra.mxu0 0
      %4847 = vmatprep.subr.bf16.mxu0 0
      %4848 = vmatpush1.bf16.msra.mxu0 0
      %4849 = vmatprep.subr.bf16.mxu0 0
      %4850 = vmatpush1.bf16.msra.mxu0 0
      %4851 = vmatprep.subr.bf16.mxu0 0
      %4852 = vmatpush1.bf16.msra.mxu0 0
      %4853 = vmatprep.subr.bf16.mxu0 0
      %4854 = vmatpush1.bf16.msra.mxu0 0
      %4855 = vmatprep.subr.bf16.mxu0 0
      %4856 = vmatpush1.bf16.msra.mxu0 0
      %4857 = vmatprep.subr.bf16.mxu0 0
      %4858 = vmatpush1.bf16.msra.mxu0 0
      %4859 = vmatprep.subr.bf16.mxu0 0
      %4860 = vmatpush1.bf16.msra.mxu0 0
      %4861 = vmatprep.subr.bf16.mxu0 0
      %4862 = vmatpush1.bf16.msra.mxu0 0
      %4863 = vmatprep.subr.bf16.mxu0 0
      %4864 = vmatpush1.bf16.msra.mxu0 0
      %4865 = vmatprep.subr.bf16.mxu0 0
      %4866 = vmatpush1.bf16.msra.mxu0 0
      %4867 = vmatprep.subr.bf16.mxu0 0
      %4868 = vmatpush1.bf16.msra.mxu0 0
      %4869 = vmatprep.subr.bf16.mxu0 0
      %4870 = vmatpush1.bf16.msra.mxu0 0
      %4871 = vmatprep.subr.bf16.mxu0 0
      %4872 = vmatpush1.bf16.msra.mxu0 0
      %4873 = vmatprep.subr.bf16.mxu0 0
      %4874 = vmatpush1.bf16.msra.mxu0 0
      %4875 = vmatprep.mubr.bf16.mxu0 0
      %4876 = vmatmul.mubr.bf16.gmra.mrb[0].mxu0 %v4832
      %v4877 = vpop.f32.mrb[0].mxu0
      %v4878 = vadd.f32 0.0, %v4877
      %v4879 = vpop.f32.mrb[0].mxu0
      %v4880 = vadd.f32 0.0, %v4879
      %v4881 = vpop.f32.mrb[0].mxu0
      %v4882 = vpop.f32.mrb[0].mxu0
      %4883 = vdwg.mxu0
      %4884 = vmatprep.subr.bf16.mxu0 0
      %4885 = vmatpush1.bf16.msra.mxu0 %v4841
      %4886 = vmatprep.subr.bf16.mxu0 0
      %4887 = vmatpush1.bf16.msra.mxu0 0
      %4888 = vmatprep.subr.bf16.mxu0 0
      %4889 = vmatpush1.bf16.msra.mxu0 0
      %4890 = vmatprep.subr.bf16.mxu0 0
      %4891 = vmatpush1.bf16.msra.mxu0 0
      %4892 = vmatprep.subr.bf16.mxu0 0
      %4893 = vmatpush1.bf16.msra.mxu0 0
      %4894 = vmatprep.subr.bf16.mxu0 0
      %4895 = vmatpush1.bf16.msra.mxu0 0
      %4896 = vmatprep.subr.bf16.mxu0 0
      %4897 = vmatpush1.bf16.msra.mxu0 0
      %4898 = vmatprep.subr.bf16.mxu0 0
      %4899 = vmatpush1.bf16.msra.mxu0 0
      %4900 = vmatprep.subr.bf16.mxu0 0
      %4901 = vmatpush1.bf16.msra.mxu0 0
      %4902 = vmatprep.subr.bf16.mxu0 0
      %4903 = vmatpush1.bf16.msra.mxu0 0
      %4904 = vmatprep.subr.bf16.mxu0 0
      %4905 = vmatpush1.bf16.msra.mxu0 0
      %4906 = vmatprep.subr.bf16.mxu0 0
      %4907 = vmatpush1.bf16.msra.mxu0 0
      %4908 = vmatprep.subr.bf16.mxu0 0
      %4909 = vmatpush1.bf16.msra.mxu0 0
      %4910 = vmatprep.subr.bf16.mxu0 0
      %4911 = vmatpush1.bf16.msra.mxu0 0
      %4912 = vmatprep.subr.bf16.mxu0 0
      %4913 = vmatpush1.bf16.msra.mxu0 0
      %4914 = vmatprep.subr.bf16.mxu0 0
      %4915 = vmatpush1.bf16.msra.mxu0 0
      %4916 = vmatprep.mubr.bf16.mxu0 0
      %4917 = vmatmul.mubr.bf16.gmra.mrb[0].mxu0 %v4832
      %v4918 = vpop.f32.mrb[0].mxu0
      %v4919 = vadd.f32 0.0, %v4918
      %v4920 = vpop.f32.mrb[0].mxu0
      %v4921 = vpop.f32.mrb[0].mxu0
      %v4922 = vpop.f32.mrb[0].mxu0
      %4923 = vdwg.mxu0
      %v4924 = vadd.f32 %v4795, %v4878
      %v4925 = vadd.f32 %v4796, %v4880
      %v4926 = vadd.f32 %v4797, %v4919
      %v4927 = vld [vmem:[%s165] sm:$0xff]
      %s4928 = scalar_lea.vmem %s1, 148
      %v4929 = vld [vmem:[%s4928] sm:$0xf]
      %v4931 = vcombine.high %v4927, %v4927
      %v4933 = vunpack.c.l.s4 1983009808
      %v4934 = vunpack.c.0.s8 %v4933
      %v4935 = vlaneseq
      %v4936 = vshrl.u32 %v4935, 7
      %v4937 = vsub.s32 %v4934, %v4936
      %v4938 = vrot.slane %v4927, %v4937
      %v4940 = vunpack.c.l.s4 1983009808
      %v4941 = vunpack.c.0.s8 %v4940
      %v4942 = vlaneseq
      %v4943 = vshrl.u32 %v4942, 7
      %v4944 = vsub.s32 %v4941, %v4943
      %v4945 = vrot.slane %v4931, %v4944
      %v4946 = vcombine.high %v4938, %v4938
      %v4947 = vcombine.high %v4945, %v4945
      %4948 = vrot.lane.b32.xlu0 %v4938, 16
      %v4949 = vpop.permute.xlu0 %4948
      %4950 = vrot.lane.b32.xlu0 %v4946, 16
      %v4951 = vpop.permute.xlu0 %4950
      %4952 = vrot.lane.b32.xlu0 %v4945, 16
      %v4953 = vpop.permute.xlu0 %4952
      %4954 = vrot.lane.b32.xlu0 %v4947, 16
      %v4955 = vpop.permute.xlu0 %4954
      %vm4956 = vcmask 130048
      %v4957 = vsel %vm4956, %v4949, %v4951
      %v4958 = vsel %vm4956, %v4951, %v4953
      %v4959 = vsel %vm4956, %v4953, %v4955
      %v4961 = vsel %vm207, %v4929, 0
      %v4964 = vsel %vm211, %v4957, 0
      %v4967 = vsel %vm211, %v4958, 0
      %v4970 = vsel %vm211, %v4959, 0
      %4972 = vmatprep.subr.bf16.mxu0 %v4967
      %4973 = vmatpush1.bf16.msra.mxu0 %v4964
      %4974 = vmatprep.subr.bf16.mxu0 0
      %4975 = vmatpush1.bf16.msra.mxu0 0
      %4976 = vmatprep.subr.bf16.mxu0 0
      %4977 = vmatpush1.bf16.msra.mxu0 0
      %4978 = vmatprep.subr.bf16.mxu0 0
      %4979 = vmatpush1.bf16.msra.mxu0 0
      %4980 = vmatprep.subr.bf16.mxu0 0
      %4981 = vmatpush1.bf16.msra.mxu0 0
      %4982 = vmatprep.subr.bf16.mxu0 0
      %4983 = vmatpush1.bf16.msra.mxu0 0
      %4984 = vmatprep.subr.bf16.mxu0 0
      %4985 = vmatpush1.bf16.msra.mxu0 0
      %4986 = vmatprep.subr.bf16.mxu0 0
      %4987 = vmatpush1.bf16.msra.mxu0 0
      %4988 = vmatprep.subr.bf16.mxu0 0
      %4989 = vmatpush1.bf16.msra.mxu0 0
      %4990 = vmatprep.subr.bf16.mxu0 0
      %4991 = vmatpush1.bf16.msra.mxu0 0
      %4992 = vmatprep.subr.bf16.mxu0 0
      %4993 = vmatpush1.bf16.msra.mxu0 0
      %4994 = vmatprep.subr.bf16.mxu0 0
      %4995 = vmatpush1.bf16.msra.mxu0 0
      %4996 = vmatprep.subr.bf16.mxu0 0
      %4997 = vmatpush1.bf16.msra.mxu0 0
      %4998 = vmatprep.subr.bf16.mxu0 0
      %4999 = vmatpush1.bf16.msra.mxu0 0
      %5000 = vmatprep.subr.bf16.mxu0 0
      %5001 = vmatpush1.bf16.msra.mxu0 0
      %5002 = vmatprep.subr.bf16.mxu0 0
      %5003 = vmatpush1.bf16.msra.mxu0 0
      %5004 = vmatprep.mubr.bf16.mxu0 0
      %5005 = vmatmul.mubr.bf16.gmra.mrb[0].mxu0 %v4961
      %v5006 = vpop.f32.mrb[0].mxu0
      %v5007 = vadd.f32 0.0, %v5006
      %v5008 = vpop.f32.mrb[0].mxu0
      %v5009 = vadd.f32 0.0, %v5008
      %v5010 = vpop.f32.mrb[0].mxu0
      %v5011 = vpop.f32.mrb[0].mxu0
      %5012 = vdwg.mxu0
      %5013 = vmatprep.subr.bf16.mxu0 0
      %5014 = vmatpush1.bf16.msra.mxu0 %v4970
      %5015 = vmatprep.subr.bf16.mxu0 0
      %5016 = vmatpush1.bf16.msra.mxu0 0
      %5017 = vmatprep.subr.bf16.mxu0 0
      %5018 = vmatpush1.bf16.msra.mxu0 0
      %5019 = vmatprep.subr.bf16.mxu0 0
      %5020 = vmatpush1.bf16.msra.mxu0 0
      %5021 = vmatprep.subr.bf16.mxu0 0
      %5022 = vmatpush1.bf16.msra.mxu0 0
      %5023 = vmatprep.subr.bf16.mxu0 0
      %5024 = vmatpush1.bf16.msra.mxu0 0
      %5025 = vmatprep.subr.bf16.mxu0 0
      %5026 = vmatpush1.bf16.msra.mxu0 0
      %5027 = vmatprep.subr.bf16.mxu0 0
      %5028 = vmatpush1.bf16.msra.mxu0 0
      %5029 = vmatprep.subr.bf16.mxu0 0
      %5030 = vmatpush1.bf16.msra.mxu0 0
      %5031 = vmatprep.subr.bf16.mxu0 0
      %5032 = vmatpush1.bf16.msra.mxu0 0
      %5033 = vmatprep.subr.bf16.mxu0 0
      %5034 = vmatpush1.bf16.msra.mxu0 0
      %5035 = vmatprep.subr.bf16.mxu0 0
      %5036 = vmatpush1.bf16.msra.mxu0 0
      %5037 = vmatprep.subr.bf16.mxu0 0
      %5038 = vmatpush1.bf16.msra.mxu0 0
      %5039 = vmatprep.subr.bf16.mxu0 0
      %5040 = vmatpush1.bf16.msra.mxu0 0
      %5041 = vmatprep.subr.bf16.mxu0 0
      %5042 = vmatpush1.bf16.msra.mxu0 0
      %5043 = vmatprep.subr.bf16.mxu0 0
      %5044 = vmatpush1.bf16.msra.mxu0 0
      %5045 = vmatprep.mubr.bf16.mxu0 0
      %5046 = vmatmul.mubr.bf16.gmra.mrb[0].mxu0 %v4961
      %v5047 = vpop.f32.mrb[0].mxu0
      %v5048 = vadd.f32 0.0, %v5047
      %v5049 = vpop.f32.mrb[0].mxu0
      %v5050 = vpop.f32.mrb[0].mxu0
      %v5051 = vpop.f32.mrb[0].mxu0
      %5052 = vdwg.mxu0
      %v5053 = vadd.f32 %v4924, %v5007
      %v5054 = vadd.f32 %v4925, %v5009
      %v5055 = vadd.f32 %v4926, %v5048
      %v5056 = vld [vmem:[%s165] sm:$0xff]
      %s5057 = scalar_lea.vmem %s1, 152
      %v5058 = vld [vmem:[%s5057] sm:$0xf]
      %v5060 = vcombine.high %v5056, %v5056
      %v5062 = vunpack.c.l.s4 1983009808
      %v5063 = vunpack.c.0.s8 %v5062
      %v5064 = vlaneseq
      %v5065 = vshrl.u32 %v5064, 7
      %v5066 = vsub.s32 %v5063, %v5065
      %v5067 = vrot.slane %v5056, %v5066
      %v5069 = vunpack.c.l.s4 1983009808
      %v5070 = vunpack.c.0.s8 %v5069
      %v5071 = vlaneseq
      %v5072 = vshrl.u32 %v5071, 7
      %v5073 = vsub.s32 %v5070, %v5072
      %v5074 = vrot.slane %v5060, %v5073
      %v5075 = vcombine.high %v5067, %v5067
      %v5076 = vcombine.high %v5074, %v5074
      %5077 = vrot.lane.b32.xlu0 %v5067, 15
      %v5078 = vpop.permute.xlu0 %5077
      %5079 = vrot.lane.b32.xlu0 %v5075, 15
      %v5080 = vpop.permute.xlu0 %5079
      %5081 = vrot.lane.b32.xlu0 %v5074, 15
      %v5082 = vpop.permute.xlu0 %5081
      %5083 = vrot.lane.b32.xlu0 %v5076, 15
      %v5084 = vpop.permute.xlu0 %5083
      %vm5085 = vcmask 121856
      %v5086 = vsel %vm5085, %v5078, %v5080
      %v5087 = vsel %vm5085, %v5080, %v5082
      %v5088 = vsel %vm5085, %v5082, %v5084
      %v5090 = vsel %vm207, %v5058, 0
      %v5093 = vsel %vm211, %v5086, 0
      %v5096 = vsel %vm211, %v5087, 0
      %v5099 = vsel %vm211, %v5088, 0
      %5101 = vmatprep.subr.bf16.mxu0 %v5096
      %5102 = vmatpush1.bf16.msra.mxu0 %v5093
      %5103 = vmatprep.subr.bf16.mxu0 0
      %5104 = vmatpush1.bf16.msra.mxu0 0
      %5105 = vmatprep.subr.bf16.mxu0 0
      %5106 = vmatpush1.bf16.msra.mxu0 0
      %5107 = vmatprep.subr.bf16.mxu0 0
      %5108 = vmatpush1.bf16.msra.mxu0 0
      %5109 = vmatprep.subr.bf16.mxu0 0
      %5110 = vmatpush1.bf16.msra.mxu0 0
      %5111 = vmatprep.subr.bf16.mxu0 0
      %5112 = vmatpush1.bf16.msra.mxu0 0
      %5113 = vmatprep.subr.bf16.mxu0 0
      %5114 = vmatpush1.bf16.msra.mxu0 0
      %5115 = vmatprep.subr.bf16.mxu0 0
      %5116 = vmatpush1.bf16.msra.mxu0 0
      %5117 = vmatprep.subr.bf16.mxu0 0
      %5118 = vmatpush1.bf16.msra.mxu0 0
      %5119 = vmatprep.subr.bf16.mxu0 0
      %5120 = vmatpush1.bf16.msra.mxu0 0
      %5121 = vmatprep.subr.bf16.mxu0 0
      %5122 = vmatpush1.bf16.msra.mxu0 0
      %5123 = vmatprep.subr.bf16.mxu0 0
      %5124 = vmatpush1.bf16.msra.mxu0 0
      %5125 = vmatprep.subr.bf16.mxu0 0
      %5126 = vmatpush1.bf16.msra.mxu0 0
      %5127 = vmatprep.subr.bf16.mxu0 0
      %5128 = vmatpush1.bf16.msra.mxu0 0
      %5129 = vmatprep.subr.bf16.mxu0 0
      %5130 = vmatpush1.bf16.msra.mxu0 0
      %5131 = vmatprep.subr.bf16.mxu0 0
      %5132 = vmatpush1.bf16.msra.mxu0 0
      %5133 = vmatprep.mubr.bf16.mxu0 0
      %5134 = vmatmul.mubr.bf16.gmra.mrb[0].mxu0 %v5090
      %v5135 = vpop.f32.mrb[0].mxu0
      %v5136 = vadd.f32 0.0, %v5135
      %v5137 = vpop.f32.mrb[0].mxu0
      %v5138 = vadd.f32 0.0, %v5137
      %v5139 = vpop.f32.mrb[0].mxu0
      %v5140 = vpop.f32.mrb[0].mxu0
      %5141 = vdwg.mxu0
      %5142 = vmatprep.subr.bf16.mxu0 0
      %5143 = vmatpush1.bf16.msra.mxu0 %v5099
      %5144 = vmatprep.subr.bf16.mxu0 0
      %5145 = vmatpush1.bf16.msra.mxu0 0
      %5146 = vmatprep.subr.bf16.mxu0 0
      %5147 = vmatpush1.bf16.msra.mxu0 0
      %5148 = vmatprep.subr.bf16.mxu0 0
      %5149 = vmatpush1.bf16.msra.mxu0 0
      %5150 = vmatprep.subr.bf16.mxu0 0
      %5151 = vmatpush1.bf16.msra.mxu0 0
      %5152 = vmatprep.subr.bf16.mxu0 0
      %5153 = vmatpush1.bf16.msra.mxu0 0
      %5154 = vmatprep.subr.bf16.mxu0 0
      %5155 = vmatpush1.bf16.msra.mxu0 0
      %5156 = vmatprep.subr.bf16.mxu0 0
      %5157 = vmatpush1.bf16.msra.mxu0 0
      %5158 = vmatprep.subr.bf16.mxu0 0
      %5159 = vmatpush1.bf16.msra.mxu0 0
      %5160 = vmatprep.subr.bf16.mxu0 0
      %5161 = vmatpush1.bf16.msra.mxu0 0
      %5162 = vmatprep.subr.bf16.mxu0 0
      %5163 = vmatpush1.bf16.msra.mxu0 0
      %5164 = vmatprep.subr.bf16.mxu0 0
      %5165 = vmatpush1.bf16.msra.mxu0 0
      %5166 = vmatprep.subr.bf16.mxu0 0
      %5167 = vmatpush1.bf16.msra.mxu0 0
      %5168 = vmatprep.subr.bf16.mxu0 0
      %5169 = vmatpush1.bf16.msra.mxu0 0
      %5170 = vmatprep.subr.bf16.mxu0 0
      %5171 = vmatpush1.bf16.msra.mxu0 0
      %5172 = vmatprep.subr.bf16.mxu0 0
      %5173 = vmatpush1.bf16.msra.mxu0 0
      %5174 = vmatprep.mubr.bf16.mxu0 0
      %5175 = vmatmul.mubr.bf16.gmra.mrb[0].mxu0 %v5090
      %v5176 = vpop.f32.mrb[0].mxu0
      %v5177 = vadd.f32 0.0, %v5176
      %v5178 = vpop.f32.mrb[0].mxu0
      %v5179 = vpop.f32.mrb[0].mxu0
      %v5180 = vpop.f32.mrb[0].mxu0
      %5181 = vdwg.mxu0
      %v5182 = vadd.f32 %v5053, %v5136
      %v5183 = vadd.f32 %v5054, %v5138
      %v5184 = vadd.f32 %v5055, %v5177
      %v5185 = vld [vmem:[%s165] sm:$0xff]
      %s5186 = scalar_lea.vmem %s1, 156
      %v5187 = vld [vmem:[%s5186] sm:$0xf]
      %v5189 = vcombine.high %v5185, %v5185
      %v5191 = vunpack.c.l.s4 1983009808
      %v5192 = vunpack.c.0.s8 %v5191
      %v5193 = vlaneseq
      %v5194 = vshrl.u32 %v5193, 7
      %v5195 = vsub.s32 %v5192, %v5194
      %v5196 = vrot.slane %v5185, %v5195
      %v5198 = vunpack.c.l.s4 1983009808
      %v5199 = vunpack.c.0.s8 %v5198
      %v5200 = vlaneseq
      %v5201 = vshrl.u32 %v5200, 7
      %v5202 = vsub.s32 %v5199, %v5201
      %v5203 = vrot.slane %v5189, %v5202
      %v5204 = vcombine.high %v5196, %v5196
      %v5205 = vcombine.high %v5203, %v5203
      %5206 = vrot.lane.b32.xlu0 %v5196, 14
      %v5207 = vpop.permute.xlu0 %5206
      %5208 = vrot.lane.b32.xlu0 %v5204, 14
      %v5209 = vpop.permute.xlu0 %5208
      %5210 = vrot.lane.b32.xlu0 %v5203, 14
      %v5211 = vpop.permute.xlu0 %5210
      %5212 = vrot.lane.b32.xlu0 %v5205, 14
      %v5213 = vpop.permute.xlu0 %5212
      %vm5214 = vcmask 113664
      %v5215 = vsel %vm5214, %v5207, %v5209
      %v5216 = vsel %vm5214, %v5209, %v5211
      %v5217 = vsel %vm5214, %v5211, %v5213
      %v5219 = vsel %vm207, %v5187, 0
      %v5222 = vsel %vm211, %v5215, 0
      %v5225 = vsel %vm211, %v5216, 0
      %v5228 = vsel %vm211, %v5217, 0
      %5230 = vmatprep.subr.bf16.mxu0 %v5225
      %5231 = vmatpush1.bf16.msra.mxu0 %v5222
      %5232 = vmatprep.subr.bf16.mxu0 0
      %5233 = vmatpush1.bf16.msra.mxu0 0
      %5234 = vmatprep.subr.bf16.mxu0 0
      %5235 = vmatpush1.bf16.msra.mxu0 0
      %5236 = vmatprep.subr.bf16.mxu0 0
      %5237 = vmatpush1.bf16.msra.mxu0 0
      %5238 = vmatprep.subr.bf16.mxu0 0
      %5239 = vmatpush1.bf16.msra.mxu0 0
      %5240 = vmatprep.subr.bf16.mxu0 0
      %5241 = vmatpush1.bf16.msra.mxu0 0
      %5242 = vmatprep.subr.bf16.mxu0 0
      %5243 = vmatpush1.bf16.msra.mxu0 0
      %5244 = vmatprep.subr.bf16.mxu0 0
      %5245 = vmatpush1.bf16.msra.mxu0 0
      %5246 = vmatprep.subr.bf16.mxu0 0
      %5247 = vmatpush1.bf16.msra.mxu0 0
      %5248 = vmatprep.subr.bf16.mxu0 0
      %5249 = vmatpush1.bf16.msra.mxu0 0
      %5250 = vmatprep.subr.bf16.mxu0 0
      %5251 = vmatpush1.bf16.msra.mxu0 0
      %5252 = vmatprep.subr.bf16.mxu0 0
      %5253 = vmatpush1.bf16.msra.mxu0 0
      %5254 = vmatprep.subr.bf16.mxu0 0
      %5255 = vmatpush1.bf16.msra.mxu0 0
      %5256 = vmatprep.subr.bf16.mxu0 0
      %5257 = vmatpush1.bf16.msra.mxu0 0
      %5258 = vmatprep.subr.bf16.mxu0 0
      %5259 = vmatpush1.bf16.msra.mxu0 0
      %5260 = vmatprep.subr.bf16.mxu0 0
      %5261 = vmatpush1.bf16.msra.mxu0 0
      %5262 = vmatprep.mubr.bf16.mxu0 0
      %5263 = vmatmul.mubr.bf16.gmra.mrb[0].mxu0 %v5219
      %v5264 = vpop.f32.mrb[0].mxu0
      %v5265 = vadd.f32 0.0, %v5264
      %v5266 = vpop.f32.mrb[0].mxu0
      %v5267 = vadd.f32 0.0, %v5266
      %v5268 = vpop.f32.mrb[0].mxu0
      %v5269 = vpop.f32.mrb[0].mxu0
      %5270 = vdwg.mxu0
      %5271 = vmatprep.subr.bf16.mxu0 0
      %5272 = vmatpush1.bf16.msra.mxu0 %v5228
      %5273 = vmatprep.subr.bf16.mxu0 0
      %5274 = vmatpush1.bf16.msra.mxu0 0
      %5275 = vmatprep.subr.bf16.mxu0 0
      %5276 = vmatpush1.bf16.msra.mxu0 0
      %5277 = vmatprep.subr.bf16.mxu0 0
      %5278 = vmatpush1.bf16.msra.mxu0 0
      %5279 = vmatprep.subr.bf16.mxu0 0
      %5280 = vmatpush1.bf16.msra.mxu0 0
      %5281 = vmatprep.subr.bf16.mxu0 0
      %5282 = vmatpush1.bf16.msra.mxu0 0
      %5283 = vmatprep.subr.bf16.mxu0 0
      %5284 = vmatpush1.bf16.msra.mxu0 0
      %5285 = vmatprep.subr.bf16.mxu0 0
      %5286 = vmatpush1.bf16.msra.mxu0 0
      %5287 = vmatprep.subr.bf16.mxu0 0
      %5288 = vmatpush1.bf16.msra.mxu0 0
      %5289 = vmatprep.subr.bf16.mxu0 0
      %5290 = vmatpush1.bf16.msra.mxu0 0
      %5291 = vmatprep.subr.bf16.mxu0 0
      %5292 = vmatpush1.bf16.msra.mxu0 0
      %5293 = vmatprep.subr.bf16.mxu0 0
      %5294 = vmatpush1.bf16.msra.mxu0 0
      %5295 = vmatprep.subr.bf16.mxu0 0
      %5296 = vmatpush1.bf16.msra.mxu0 0
      %5297 = vmatprep.subr.bf16.mxu0 0
      %5298 = vmatpush1.bf16.msra.mxu0 0
      %5299 = vmatprep.subr.bf16.mxu0 0
      %5300 = vmatpush1.bf16.msra.mxu0 0
      %5301 = vmatprep.subr.bf16.mxu0 0
      %5302 = vmatpush1.bf16.msra.mxu0 0
      %5303 = vmatprep.mubr.bf16.mxu0 0
      %5304 = vmatmul.mubr.bf16.gmra.mrb[0].mxu0 %v5219
      %v5305 = vpop.f32.mrb[0].mxu0
      %v5306 = vadd.f32 0.0, %v5305
      %v5307 = vpop.f32.mrb[0].mxu0
      %v5308 = vpop.f32.mrb[0].mxu0
      %v5309 = vpop.f32.mrb[0].mxu0
      %5310 = vdwg.mxu0
      %v5311 = vadd.f32 %v5182, %v5265
      %v5312 = vadd.f32 %v5183, %v5267
      %v5313 = vadd.f32 %v5184, %v5306
      %v5314 = vld [vmem:[%s165] sm:$0xff]
      %s5315 = scalar_lea.vmem %s1, 160
      %v5316 = vld [vmem:[%s5315] sm:$0xf]
      %v5318 = vcombine.high %v5314, %v5314
      %v5320 = vunpack.c.l.s4 1983009808
      %v5321 = vunpack.c.0.s8 %v5320
      %v5322 = vlaneseq
      %v5323 = vshrl.u32 %v5322, 7
      %v5324 = vsub.s32 %v5321, %v5323
      %v5325 = vrot.slane %v5314, %v5324
      %v5327 = vunpack.c.l.s4 1983009808
      %v5328 = vunpack.c.0.s8 %v5327
      %v5329 = vlaneseq
      %v5330 = vshrl.u32 %v5329, 7
      %v5331 = vsub.s32 %v5328, %v5330
      %v5332 = vrot.slane %v5318, %v5331
      %v5333 = vcombine.high %v5325, %v5325
      %v5334 = vcombine.high %v5332, %v5332
      %5335 = vrot.lane.b32.xlu0 %v5325, 13
      %v5336 = vpop.permute.xlu0 %5335
      %5337 = vrot.lane.b32.xlu0 %v5333, 13
      %v5338 = vpop.permute.xlu0 %5337
      %5339 = vrot.lane.b32.xlu0 %v5332, 13
      %v5340 = vpop.permute.xlu0 %5339
      %5341 = vrot.lane.b32.xlu0 %v5334, 13
      %v5342 = vpop.permute.xlu0 %5341
      %vm5343 = vcmask 105472
      %v5344 = vsel %vm5343, %v5336, %v5338
      %v5345 = vsel %vm5343, %v5338, %v5340
      %v5346 = vsel %vm5343, %v5340, %v5342
      %v5348 = vsel %vm207, %v5316, 0
      %v5351 = vsel %vm211, %v5344, 0
      %v5354 = vsel %vm211, %v5345, 0
      %v5357 = vsel %vm211, %v5346, 0
      %5359 = vmatprep.subr.bf16.mxu0 %v5354
      %5360 = vmatpush1.bf16.msra.mxu0 %v5351
      %5361 = vmatprep.subr.bf16.mxu0 0
      %5362 = vmatpush1.bf16.msra.mxu0 0
      %5363 = vmatprep.subr.bf16.mxu0 0
      %5364 = vmatpush1.bf16.msra.mxu0 0
      %5365 = vmatprep.subr.bf16.mxu0 0
      %5366 = vmatpush1.bf16.msra.mxu0 0
      %5367 = vmatprep.subr.bf16.mxu0 0
      %5368 = vmatpush1.bf16.msra.mxu0 0
      %5369 = vmatprep.subr.bf16.mxu0 0
      %5370 = vmatpush1.bf16.msra.mxu0 0
      %5371 = vmatprep.subr.bf16.mxu0 0
      %5372 = vmatpush1.bf16.msra.mxu0 0
      %5373 = vmatprep.subr.bf16.mxu0 0
      %5374 = vmatpush1.bf16.msra.mxu0 0
      %5375 = vmatprep.subr.bf16.mxu0 0
      %5376 = vmatpush1.bf16.msra.mxu0 0
      %5377 = vmatprep.subr.bf16.mxu0 0
      %5378 = vmatpush1.bf16.msra.mxu0 0
      %5379 = vmatprep.subr.bf16.mxu0 0
      %5380 = vmatpush1.bf16.msra.mxu0 0
      %5381 = vmatprep.subr.bf16.mxu0 0
      %5382 = vmatpush1.bf16.msra.mxu0 0
      %5383 = vmatprep.subr.bf16.mxu0 0
      %5384 = vmatpush1.bf16.msra.mxu0 0
      %5385 = vmatprep.subr.bf16.mxu0 0
      %5386 = vmatpush1.bf16.msra.mxu0 0
      %5387 = vmatprep.subr.bf16.mxu0 0
      %5388 = vmatpush1.bf16.msra.mxu0 0
      %5389 = vmatprep.subr.bf16.mxu0 0
      %5390 = vmatpush1.bf16.msra.mxu0 0
      %5391 = vmatprep.mubr.bf16.mxu0 0
      %5392 = vmatmul.mubr.bf16.gmra.mrb[0].mxu0 %v5348
      %v5393 = vpop.f32.mrb[0].mxu0
      %v5394 = vadd.f32 0.0, %v5393
      %v5395 = vpop.f32.mrb[0].mxu0
      %v5396 = vadd.f32 0.0, %v5395
      %v5397 = vpop.f32.mrb[0].mxu0
      %v5398 = vpop.f32.mrb[0].mxu0
      %5399 = vdwg.mxu0
      %5400 = vmatprep.subr.bf16.mxu0 0
      %5401 = vmatpush1.bf16.msra.mxu0 %v5357
      %5402 = vmatprep.subr.bf16.mxu0 0
      %5403 = vmatpush1.bf16.msra.mxu0 0
      %5404 = vmatprep.subr.bf16.mxu0 0
      %5405 = vmatpush1.bf16.msra.mxu0 0
      %5406 = vmatprep.subr.bf16.mxu0 0
      %5407 = vmatpush1.bf16.msra.mxu0 0
      %5408 = vmatprep.subr.bf16.mxu0 0
      %5409 = vmatpush1.bf16.msra.mxu0 0
      %5410 = vmatprep.subr.bf16.mxu0 0
      %5411 = vmatpush1.bf16.msra.mxu0 0
      %5412 = vmatprep.subr.bf16.mxu0 0
      %5413 = vmatpush1.bf16.msra.mxu0 0
      %5414 = vmatprep.subr.bf16.mxu0 0
      %5415 = vmatpush1.bf16.msra.mxu0 0
      %5416 = vmatprep.subr.bf16.mxu0 0
      %5417 = vmatpush1.bf16.msra.mxu0 0
      %5418 = vmatprep.subr.bf16.mxu0 0
      %5419 = vmatpush1.bf16.msra.mxu0 0
      %5420 = vmatprep.subr.bf16.mxu0 0
      %5421 = vmatpush1.bf16.msra.mxu0 0
      %5422 = vmatprep.subr.bf16.mxu0 0
      %5423 = vmatpush1.bf16.msra.mxu0 0
      %5424 = vmatprep.subr.bf16.mxu0 0
      %5425 = vmatpush1.bf16.msra.mxu0 0
      %5426 = vmatprep.subr.bf16.mxu0 0
      %5427 = vmatpush1.bf16.msra.mxu0 0
      %5428 = vmatprep.subr.bf16.mxu0 0
      %5429 = vmatpush1.bf16.msra.mxu0 0
      %5430 = vmatprep.subr.bf16.mxu0 0
      %5431 = vmatpush1.bf16.msra.mxu0 0
      %5432 = vmatprep.mubr.bf16.mxu0 0
      %5433 = vmatmul.mubr.bf16.gmra.mrb[0].mxu0 %v5348
      %v5434 = vpop.f32.mrb[0].mxu0
      %v5435 = vadd.f32 0.0, %v5434
      %v5436 = vpop.f32.mrb[0].mxu0
      %v5437 = vpop.f32.mrb[0].mxu0
      %v5438 = vpop.f32.mrb[0].mxu0
      %5439 = vdwg.mxu0
      %v5440 = vadd.f32 %v5311, %v5394
      %v5441 = vadd.f32 %v5312, %v5396
      %v5442 = vadd.f32 %v5313, %v5435
      %v5443 = vld [vmem:[%s165] sm:$0xff]
      %s5444 = scalar_lea.vmem %s1, 164
      %v5445 = vld [vmem:[%s5444] sm:$0xf]
      %v5447 = vcombine.high %v5443, %v5443
      %v5449 = vunpack.c.l.s4 1983009808
      %v5450 = vunpack.c.0.s8 %v5449
      %v5451 = vlaneseq
      %v5452 = vshrl.u32 %v5451, 7
      %v5453 = vsub.s32 %v5450, %v5452
      %v5454 = vrot.slane %v5443, %v5453
      %v5456 = vunpack.c.l.s4 1983009808
      %v5457 = vunpack.c.0.s8 %v5456
      %v5458 = vlaneseq
      %v5459 = vshrl.u32 %v5458, 7
      %v5460 = vsub.s32 %v5457, %v5459
      %v5461 = vrot.slane %v5447, %v5460
      %v5462 = vcombine.high %v5454, %v5454
      %v5463 = vcombine.high %v5461, %v5461
      %5464 = vrot.lane.b32.xlu0 %v5454, 12
      %v5465 = vpop.permute.xlu0 %5464
      %5466 = vrot.lane.b32.xlu0 %v5462, 12
      %v5467 = vpop.permute.xlu0 %5466
      %5468 = vrot.lane.b32.xlu0 %v5461, 12
      %v5469 = vpop.permute.xlu0 %5468
      %5470 = vrot.lane.b32.xlu0 %v5463, 12
      %v5471 = vpop.permute.xlu0 %5470
      %vm5472 = vcmask 97280
      %v5473 = vsel %vm5472, %v5465, %v5467
      %v5474 = vsel %vm5472, %v5467, %v5469
      %v5475 = vsel %vm5472, %v5469, %v5471
      %v5477 = vsel %vm207, %v5445, 0
      %v5480 = vsel %vm211, %v5473, 0
      %v5483 = vsel %vm211, %v5474, 0
      %v5486 = vsel %vm211, %v5475, 0
      %5488 = vmatprep.subr.bf16.mxu0 %v5483
      %5489 = vmatpush1.bf16.msra.mxu0 %v5480
      %5490 = vmatprep.subr.bf16.mxu0 0
      %5491 = vmatpush1.bf16.msra.mxu0 0
      %5492 = vmatprep.subr.bf16.mxu0 0
      %5493 = vmatpush1.bf16.msra.mxu0 0
      %5494 = vmatprep.subr.bf16.mxu0 0
      %5495 = vmatpush1.bf16.msra.mxu0 0
      %5496 = vmatprep.subr.bf16.mxu0 0
      %5497 = vmatpush1.bf16.msra.mxu0 0
      %5498 = vmatprep.subr.bf16.mxu0 0
      %5499 = vmatpush1.bf16.msra.mxu0 0
      %5500 = vmatprep.subr.bf16.mxu0 0
      %5501 = vmatpush1.bf16.msra.mxu0 0
      %5502 = vmatprep.subr.bf16.mxu0 0
      %5503 = vmatpush1.bf16.msra.mxu0 0
      %5504 = vmatprep.subr.bf16.mxu0 0
      %5505 = vmatpush1.bf16.msra.mxu0 0
      %5506 = vmatprep.subr.bf16.mxu0 0
      %5507 = vmatpush1.bf16.msra.mxu0 0
      %5508 = vmatprep.subr.bf16.mxu0 0
      %5509 = vmatpush1.bf16.msra.mxu0 0
      %5510 = vmatprep.subr.bf16.mxu0 0
      %5511 = vmatpush1.bf16.msra.mxu0 0
      %5512 = vmatprep.subr.bf16.mxu0 0
      %5513 = vmatpush1.bf16.msra.mxu0 0
      %5514 = vmatprep.subr.bf16.mxu0 0
      %5515 = vmatpush1.bf16.msra.mxu0 0
      %5516 = vmatprep.subr.bf16.mxu0 0
      %5517 = vmatpush1.bf16.msra.mxu0 0
      %5518 = vmatprep.subr.bf16.mxu0 0
      %5519 = vmatpush1.bf16.msra.mxu0 0
      %5520 = vmatprep.mubr.bf16.mxu0 0
      %5521 = vmatmul.mubr.bf16.gmra.mrb[0].mxu0 %v5477
      %v5522 = vpop.f32.mrb[0].mxu0
      %v5523 = vadd.f32 0.0, %v5522
      %v5524 = vpop.f32.mrb[0].mxu0
      %v5525 = vadd.f32 0.0, %v5524
      %v5526 = vpop.f32.mrb[0].mxu0
      %v5527 = vpop.f32.mrb[0].mxu0
      %5528 = vdwg.mxu0
      %5529 = vmatprep.subr.bf16.mxu0 0
      %5530 = vmatpush1.bf16.msra.mxu0 %v5486
      %5531 = vmatprep.subr.bf16.mxu0 0
      %5532 = vmatpush1.bf16.msra.mxu0 0
      %5533 = vmatprep.subr.bf16.mxu0 0
      %5534 = vmatpush1.bf16.msra.mxu0 0
      %5535 = vmatprep.subr.bf16.mxu0 0
      %5536 = vmatpush1.bf16.msra.mxu0 0
      %5537 = vmatprep.subr.bf16.mxu0 0
      %5538 = vmatpush1.bf16.msra.mxu0 0
      %5539 = vmatprep.subr.bf16.mxu0 0
      %5540 = vmatpush1.bf16.msra.mxu0 0
      %5541 = vmatprep.subr.bf16.mxu0 0
      %5542 = vmatpush1.bf16.msra.mxu0 0
      %5543 = vmatprep.subr.bf16.mxu0 0
      %5544 = vmatpush1.bf16.msra.mxu0 0
      %5545 = vmatprep.subr.bf16.mxu0 0
      %5546 = vmatpush1.bf16.msra.mxu0 0
      %5547 = vmatprep.subr.bf16.mxu0 0
      %5548 = vmatpush1.bf16.msra.mxu0 0
      %5549 = vmatprep.subr.bf16.mxu0 0
      %5550 = vmatpush1.bf16.msra.mxu0 0
      %5551 = vmatprep.subr.bf16.mxu0 0
      %5552 = vmatpush1.bf16.msra.mxu0 0
      %5553 = vmatprep.subr.bf16.mxu0 0
      %5554 = vmatpush1.bf16.msra.mxu0 0
      %5555 = vmatprep.subr.bf16.mxu0 0
      %5556 = vmatpush1.bf16.msra.mxu0 0
      %5557 = vmatprep.subr.bf16.mxu0 0
      %5558 = vmatpush1.bf16.msra.mxu0 0
      %5559 = vmatprep.subr.bf16.mxu0 0
      %5560 = vmatpush1.bf16.msra.mxu0 0
      %5561 = vmatprep.mubr.bf16.mxu0 0
      %5562 = vmatmul.mubr.bf16.gmra.mrb[0].mxu0 %v5477
      %v5563 = vpop.f32.mrb[0].mxu0
      %v5564 = vadd.f32 0.0, %v5563
      %v5565 = vpop.f32.mrb[0].mxu0
      %v5566 = vpop.f32.mrb[0].mxu0
      %v5567 = vpop.f32.mrb[0].mxu0
      %5568 = vdwg.mxu0
      %v5569 = vadd.f32 %v5440, %v5523
      %v5570 = vadd.f32 %v5441, %v5525
      %v5571 = vadd.f32 %v5442, %v5564
      %v5572 = vld [vmem:[%s165 + $0x2] sm:$0xff]
      %s5573 = scalar_lea.vmem %s1, 168
      %v5574 = vld [vmem:[%s5573] sm:$0xf]
      %v5576 = vcombine.high %v5572, %v5572
      %v5578 = vunpack.c.l.s4 1983009808
      %v5579 = vunpack.c.0.s8 %v5578
      %v5580 = vlaneseq
      %v5581 = vshrl.u32 %v5580, 7
      %v5582 = vsub.s32 %v5579, %v5581
      %v5583 = vrot.slane %v5572, %v5582
      %v5585 = vunpack.c.l.s4 1983009808
      %v5586 = vunpack.c.0.s8 %v5585
      %v5587 = vlaneseq
      %v5588 = vshrl.u32 %v5587, 7
      %v5589 = vsub.s32 %v5586, %v5588
      %v5590 = vrot.slane %v5576, %v5589
      %v5591 = vcombine.high %v5583, %v5583
      %v5592 = vcombine.high %v5590, %v5590
      %5593 = vrot.lane.b32.xlu0 %v5583, 124
      %v5594 = vpop.permute.xlu0 %5593
      %5595 = vrot.lane.b32.xlu0 %v5591, 124
      %v5596 = vpop.permute.xlu0 %5595
      %5597 = vrot.lane.b32.xlu0 %v5590, 124
      %v5598 = vpop.permute.xlu0 %5597
      %5599 = vrot.lane.b32.xlu0 %v5592, 124
      %v5600 = vpop.permute.xlu0 %5599
      %v5601 = vsel %vm699, %v5594, %v5596
      %v5602 = vsel %vm699, %v5596, %v5598
      %v5603 = vsel %vm699, %v5598, %v5600
      %v5605 = vsel %vm207, %v5574, 0
      %v5608 = vsel %vm211, %v5601, 0
      %v5611 = vsel %vm211, %v5602, 0
      %v5614 = vsel %vm211, %v5603, 0
      %5616 = vmatprep.subr.bf16.mxu0 %v5611
      %5617 = vmatpush1.bf16.msra.mxu0 %v5608
      %5618 = vmatprep.subr.bf16.mxu0 0
      %5619 = vmatpush1.bf16.msra.mxu0 0
      %5620 = vmatprep.subr.bf16.mxu0 0
      %5621 = vmatpush1.bf16.msra.mxu0 0
      %5622 = vmatprep.subr.bf16.mxu0 0
      %5623 = vmatpush1.bf16.msra.mxu0 0
      %5624 = vmatprep.subr.bf16.mxu0 0
      %5625 = vmatpush1.bf16.msra.mxu0 0
      %5626 = vmatprep.subr.bf16.mxu0 0
      %5627 = vmatpush1.bf16.msra.mxu0 0
      %5628 = vmatprep.subr.bf16.mxu0 0
      %5629 = vmatpush1.bf16.msra.mxu0 0
      %5630 = vmatprep.subr.bf16.mxu0 0
      %5631 = vmatpush1.bf16.msra.mxu0 0
      %5632 = vmatprep.subr.bf16.mxu0 0
      %5633 = vmatpush1.bf16.msra.mxu0 0
      %5634 = vmatprep.subr.bf16.mxu0 0
      %5635 = vmatpush1.bf16.msra.mxu0 0
      %5636 = vmatprep.subr.bf16.mxu0 0
      %5637 = vmatpush1.bf16.msra.mxu0 0
      %5638 = vmatprep.subr.bf16.mxu0 0
      %5639 = vmatpush1.bf16.msra.mxu0 0
      %5640 = vmatprep.subr.bf16.mxu0 0
      %5641 = vmatpush1.bf16.msra.mxu0 0
      %5642 = vmatprep.subr.bf16.mxu0 0
      %5643 = vmatpush1.bf16.msra.mxu0 0
      %5644 = vmatprep.subr.bf16.mxu0 0
      %5645 = vmatpush1.bf16.msra.mxu0 0
      %5646 = vmatprep.subr.bf16.mxu0 0
      %5647 = vmatpush1.bf16.msra.mxu0 0
      %5648 = vmatprep.mubr.bf16.mxu0 0
      %5649 = vmatmul.mubr.bf16.gmra.mrb[0].mxu0 %v5605
      %v5650 = vpop.f32.mrb[0].mxu0
      %v5651 = vadd.f32 0.0, %v5650
      %v5652 = vpop.f32.mrb[0].mxu0
      %v5653 = vadd.f32 0.0, %v5652
      %v5654 = vpop.f32.mrb[0].mxu0
      %v5655 = vpop.f32.mrb[0].mxu0
      %5656 = vdwg.mxu0
      %5657 = vmatprep.subr.bf16.mxu0 0
      %5658 = vmatpush1.bf16.msra.mxu0 %v5614
      %5659 = vmatprep.subr.bf16.mxu0 0
      %5660 = vmatpush1.bf16.msra.mxu0 0
      %5661 = vmatprep.subr.bf16.mxu0 0
      %5662 = vmatpush1.bf16.msra.mxu0 0
      %5663 = vmatprep.subr.bf16.mxu0 0
      %5664 = vmatpush1.bf16.msra.mxu0 0
      %5665 = vmatprep.subr.bf16.mxu0 0
      %5666 = vmatpush1.bf16.msra.mxu0 0
      %5667 = vmatprep.subr.bf16.mxu0 0
      %5668 = vmatpush1.bf16.msra.mxu0 0
      %5669 = vmatprep.subr.bf16.mxu0 0
      %5670 = vmatpush1.bf16.msra.mxu0 0
      %5671 = vmatprep.subr.bf16.mxu0 0
      %5672 = vmatpush1.bf16.msra.mxu0 0
      %5673 = vmatprep.subr.bf16.mxu0 0
      %5674 = vmatpush1.bf16.msra.mxu0 0
      %5675 = vmatprep.subr.bf16.mxu0 0
      %5676 = vmatpush1.bf16.msra.mxu0 0
      %5677 = vmatprep.subr.bf16.mxu0 0
      %5678 = vmatpush1.bf16.msra.mxu0 0
      %5679 = vmatprep.subr.bf16.mxu0 0
      %5680 = vmatpush1.bf16.msra.mxu0 0
      %5681 = vmatprep.subr.bf16.mxu0 0
      %5682 = vmatpush1.bf16.msra.mxu0 0
      %5683 = vmatprep.subr.bf16.mxu0 0
      %5684 = vmatpush1.bf16.msra.mxu0 0
      %5685 = vmatprep.subr.bf16.mxu0 0
      %5686 = vmatpush1.bf16.msra.mxu0 0
      %5687 = vmatprep.subr.bf16.mxu0 0
      %5688 = vmatpush1.bf16.msra.mxu0 0
      %5689 = vmatprep.mubr.bf16.mxu0 0
      %5690 = vmatmul.mubr.bf16.gmra.mrb[0].mxu0 %v5605
      %v5691 = vpop.f32.mrb[0].mxu0
      %v5692 = vadd.f32 0.0, %v5691
      %v5693 = vpop.f32.mrb[0].mxu0
      %v5694 = vpop.f32.mrb[0].mxu0
      %v5695 = vpop.f32.mrb[0].mxu0
      %5696 = vdwg.mxu0
      %v5697 = vadd.f32 %v5569, %v5651
      %v5698 = vadd.f32 %v5570, %v5653
      %v5699 = vadd.f32 %v5571, %v5692
      %v5700 = vld [vmem:[%s165 + $0x2] sm:$0xff]
      %s5701 = scalar_lea.vmem %s1, 172
      %v5702 = vld [vmem:[%s5701] sm:$0xf]
      %v5704 = vcombine.high %v5700, %v5700
      %v5706 = vunpack.c.l.s4 1983009808
      %v5707 = vunpack.c.0.s8 %v5706
      %v5708 = vlaneseq
      %v5709 = vshrl.u32 %v5708, 7
      %v5710 = vsub.s32 %v5707, %v5709
      %v5711 = vrot.slane %v5700, %v5710
      %v5713 = vunpack.c.l.s4 1983009808
      %v5714 = vunpack.c.0.s8 %v5713
      %v5715 = vlaneseq
      %v5716 = vshrl.u32 %v5715, 7
      %v5717 = vsub.s32 %v5714, %v5716
      %v5718 = vrot.slane %v5704, %v5717
      %v5719 = vcombine.high %v5711, %v5711
      %v5720 = vcombine.high %v5718, %v5718
      %5721 = vrot.lane.b32.xlu0 %v5711, 123
      %v5722 = vpop.permute.xlu0 %5721
      %5723 = vrot.lane.b32.xlu0 %v5719, 123
      %v5724 = vpop.permute.xlu0 %5723
      %5725 = vrot.lane.b32.xlu0 %v5718, 123
      %v5726 = vpop.permute.xlu0 %5725
      %5727 = vrot.lane.b32.xlu0 %v5720, 123
      %v5728 = vpop.permute.xlu0 %5727
      %v5729 = vsel %vm828, %v5722, %v5724
      %v5730 = vsel %vm828, %v5724, %v5726
      %v5731 = vsel %vm828, %v5726, %v5728
      %v5733 = vsel %vm207, %v5702, 0
      %v5736 = vsel %vm211, %v5729, 0
      %v5739 = vsel %vm211, %v5730, 0
      %v5742 = vsel %vm211, %v5731, 0
      %5744 = vmatprep.subr.bf16.mxu0 %v5739
      %5745 = vmatpush1.bf16.msra.mxu0 %v5736
      %5746 = vmatprep.subr.bf16.mxu0 0
      %5747 = vmatpush1.bf16.msra.mxu0 0
      %5748 = vmatprep.subr.bf16.mxu0 0
      %5749 = vmatpush1.bf16.msra.mxu0 0
      %5750 = vmatprep.subr.bf16.mxu0 0
      %5751 = vmatpush1.bf16.msra.mxu0 0
      %5752 = vmatprep.subr.bf16.mxu0 0
      %5753 = vmatpush1.bf16.msra.mxu0 0
      %5754 = vmatprep.subr.bf16.mxu0 0
      %5755 = vmatpush1.bf16.msra.mxu0 0
      %5756 = vmatprep.subr.bf16.mxu0 0
      %5757 = vmatpush1.bf16.msra.mxu0 0
      %5758 = vmatprep.subr.bf16.mxu0 0
      %5759 = vmatpush1.bf16.msra.mxu0 0
      %5760 = vmatprep.subr.bf16.mxu0 0
      %5761 = vmatpush1.bf16.msra.mxu0 0
      %5762 = vmatprep.subr.bf16.mxu0 0
      %5763 = vmatpush1.bf16.msra.mxu0 0
      %5764 = vmatprep.subr.bf16.mxu0 0
      %5765 = vmatpush1.bf16.msra.mxu0 0
      %5766 = vmatprep.subr.bf16.mxu0 0
      %5767 = vmatpush1.bf16.msra.mxu0 0
      %5768 = vmatprep.subr.bf16.mxu0 0
      %5769 = vmatpush1.bf16.msra.mxu0 0
      %5770 = vmatprep.subr.bf16.mxu0 0
      %5771 = vmatpush1.bf16.msra.mxu0 0
      %5772 = vmatprep.subr.bf16.mxu0 0
      %5773 = vmatpush1.bf16.msra.mxu0 0
      %5774 = vmatprep.subr.bf16.mxu0 0
      %5775 = vmatpush1.bf16.msra.mxu0 0
      %5776 = vmatprep.mubr.bf16.mxu0 0
      %5777 = vmatmul.mubr.bf16.gmra.mrb[0].mxu0 %v5733
      %v5778 = vpop.f32.mrb[0].mxu0
      %v5779 = vadd.f32 0.0, %v5778
      %v5780 = vpop.f32.mrb[0].mxu0
      %v5781 = vadd.f32 0.0, %v5780
      %v5782 = vpop.f32.mrb[0].mxu0
      %v5783 = vpop.f32.mrb[0].mxu0
      %5784 = vdwg.mxu0
      %5785 = vmatprep.subr.bf16.mxu0 0
      %5786 = vmatpush1.bf16.msra.mxu0 %v5742
      %5787 = vmatprep.subr.bf16.mxu0 0
      %5788 = vmatpush1.bf16.msra.mxu0 0
      %5789 = vmatprep.subr.bf16.mxu0 0
      %5790 = vmatpush1.bf16.msra.mxu0 0
      %5791 = vmatprep.subr.bf16.mxu0 0
      %5792 = vmatpush1.bf16.msra.mxu0 0
      %5793 = vmatprep.subr.bf16.mxu0 0
      %5794 = vmatpush1.bf16.msra.mxu0 0
      %5795 = vmatprep.subr.bf16.mxu0 0
      %5796 = vmatpush1.bf16.msra.mxu0 0
      %5797 = vmatprep.subr.bf16.mxu0 0
      %5798 = vmatpush1.bf16.msra.mxu0 0
      %5799 = vmatprep.subr.bf16.mxu0 0
      %5800 = vmatpush1.bf16.msra.mxu0 0
      %5801 = vmatprep.subr.bf16.mxu0 0
      %5802 = vmatpush1.bf16.msra.mxu0 0
      %5803 = vmatprep.subr.bf16.mxu0 0
      %5804 = vmatpush1.bf16.msra.mxu0 0
      %5805 = vmatprep.subr.bf16.mxu0 0
      %5806 = vmatpush1.bf16.msra.mxu0 0
      %5807 = vmatprep.subr.bf16.mxu0 0
      %5808 = vmatpush1.bf16.msra.mxu0 0
      %5809 = vmatprep.subr.bf16.mxu0 0
      %5810 = vmatpush1.bf16.msra.mxu0 0
      %5811 = vmatprep.subr.bf16.mxu0 0
      %5812 = vmatpush1.bf16.msra.mxu0 0
      %5813 = vmatprep.subr.bf16.mxu0 0
      %5814 = vmatpush1.bf16.msra.mxu0 0
      %5815 = vmatprep.subr.bf16.mxu0 0
      %5816 = vmatpush1.bf16.msra.mxu0 0
      %5817 = vmatprep.mubr.bf16.mxu0 0
      %5818 = vmatmul.mubr.bf16.gmra.mrb[0].mxu0 %v5733
      %v5819 = vpop.f32.mrb[0].mxu0
      %v5820 = vadd.f32 0.0, %v5819
      %v5821 = vpop.f32.mrb[0].mxu0
      %v5822 = vpop.f32.mrb[0].mxu0
      %v5823 = vpop.f32.mrb[0].mxu0
      %5824 = vdwg.mxu0
      %v5825 = vadd.f32 %v5697, %v5779
      %v5826 = vadd.f32 %v5698, %v5781
      %v5827 = vadd.f32 %v5699, %v5820
      %v5828 = vld [vmem:[%s165 + $0x2] sm:$0xff]
      %s5829 = scalar_lea.vmem %s1, 176
      %v5830 = vld [vmem:[%s5829] sm:$0xf]
      %v5832 = vcombine.high %v5828, %v5828
      %v5834 = vunpack.c.l.s4 1983009808
      %v5835 = vunpack.c.0.s8 %v5834
      %v5836 = vlaneseq
      %v5837 = vshrl.u32 %v5836, 7
      %v5838 = vsub.s32 %v5835, %v5837
      %v5839 = vrot.slane %v5828, %v5838
      %v5841 = vunpack.c.l.s4 1983009808
      %v5842 = vunpack.c.0.s8 %v5841
      %v5843 = vlaneseq
      %v5844 = vshrl.u32 %v5843, 7
      %v5845 = vsub.s32 %v5842, %v5844
      %v5846 = vrot.slane %v5832, %v5845
      %v5847 = vcombine.high %v5839, %v5839
      %v5848 = vcombine.high %v5846, %v5846
      %5849 = vrot.lane.b32.xlu0 %v5839, 122
      %v5850 = vpop.permute.xlu0 %5849
      %5851 = vrot.lane.b32.xlu0 %v5847, 122
      %v5852 = vpop.permute.xlu0 %5851
      %5853 = vrot.lane.b32.xlu0 %v5846, 122
      %v5854 = vpop.permute.xlu0 %5853
      %5855 = vrot.lane.b32.xlu0 %v5848, 122
      %v5856 = vpop.permute.xlu0 %5855
      %v5857 = vsel %vm957, %v5850, %v5852
      %v5858 = vsel %vm957, %v5852, %v5854
      %v5859 = vsel %vm957, %v5854, %v5856
      %v5861 = vsel %vm207, %v5830, 0
      %v5864 = vsel %vm211, %v5857, 0
      %v5867 = vsel %vm211, %v5858, 0
      %v5870 = vsel %vm211, %v5859, 0
      %5872 = vmatprep.subr.bf16.mxu0 %v5867
      %5873 = vmatpush1.bf16.msra.mxu0 %v5864
      %5874 = vmatprep.subr.bf16.mxu0 0
      %5875 = vmatpush1.bf16.msra.mxu0 0
      %5876 = vmatprep.subr.bf16.mxu0 0
      %5877 = vmatpush1.bf16.msra.mxu0 0
      %5878 = vmatprep.subr.bf16.mxu0 0
      %5879 = vmatpush1.bf16.msra.mxu0 0
      %5880 = vmatprep.subr.bf16.mxu0 0
      %5881 = vmatpush1.bf16.msra.mxu0 0
      %5882 = vmatprep.subr.bf16.mxu0 0
      %5883 = vmatpush1.bf16.msra.mxu0 0
      %5884 = vmatprep.subr.bf16.mxu0 0
      %5885 = vmatpush1.bf16.msra.mxu0 0
      %5886 = vmatprep.subr.bf16.mxu0 0
      %5887 = vmatpush1.bf16.msra.mxu0 0
      %5888 = vmatprep.subr.bf16.mxu0 0
      %5889 = vmatpush1.bf16.msra.mxu0 0
      %5890 = vmatprep.subr.bf16.mxu0 0
      %5891 = vmatpush1.bf16.msra.mxu0 0
      %5892 = vmatprep.subr.bf16.mxu0 0
      %5893 = vmatpush1.bf16.msra.mxu0 0
      %5894 = vmatprep.subr.bf16.mxu0 0
      %5895 = vmatpush1.bf16.msra.mxu0 0
      %5896 = vmatprep.subr.bf16.mxu0 0
      %5897 = vmatpush1.bf16.msra.mxu0 0
      %5898 = vmatprep.subr.bf16.mxu0 0
      %5899 = vmatpush1.bf16.msra.mxu0 0
      %5900 = vmatprep.subr.bf16.mxu0 0
      %5901 = vmatpush1.bf16.msra.mxu0 0
      %5902 = vmatprep.subr.bf16.mxu0 0
      %5903 = vmatpush1.bf16.msra.mxu0 0
      %5904 = vmatprep.mubr.bf16.mxu0 0
      %5905 = vmatmul.mubr.bf16.gmra.mrb[0].mxu0 %v5861
      %v5906 = vpop.f32.mrb[0].mxu0
      %v5907 = vadd.f32 0.0, %v5906
      %v5908 = vpop.f32.mrb[0].mxu0
      %v5909 = vadd.f32 0.0, %v5908
      %v5910 = vpop.f32.mrb[0].mxu0
      %v5911 = vpop.f32.mrb[0].mxu0
      %5912 = vdwg.mxu0
      %5913 = vmatprep.subr.bf16.mxu0 0
      %5914 = vmatpush1.bf16.msra.mxu0 %v5870
      %5915 = vmatprep.subr.bf16.mxu0 0
      %5916 = vmatpush1.bf16.msra.mxu0 0
      %5917 = vmatprep.subr.bf16.mxu0 0
      %5918 = vmatpush1.bf16.msra.mxu0 0
      %5919 = vmatprep.subr.bf16.mxu0 0
      %5920 = vmatpush1.bf16.msra.mxu0 0
      %5921 = vmatprep.subr.bf16.mxu0 0
      %5922 = vmatpush1.bf16.msra.mxu0 0
      %5923 = vmatprep.subr.bf16.mxu0 0
      %5924 = vmatpush1.bf16.msra.mxu0 0
      %5925 = vmatprep.subr.bf16.mxu0 0
      %5926 = vmatpush1.bf16.msra.mxu0 0
      %5927 = vmatprep.subr.bf16.mxu0 0
      %5928 = vmatpush1.bf16.msra.mxu0 0
      %5929 = vmatprep.subr.bf16.mxu0 0
      %5930 = vmatpush1.bf16.msra.mxu0 0
      %5931 = vmatprep.subr.bf16.mxu0 0
      %5932 = vmatpush1.bf16.msra.mxu0 0
      %5933 = vmatprep.subr.bf16.mxu0 0
      %5934 = vmatpush1.bf16.msra.mxu0 0
      %5935 = vmatprep.subr.bf16.mxu0 0
      %5936 = vmatpush1.bf16.msra.mxu0 0
      %5937 = vmatprep.subr.bf16.mxu0 0
      %5938 = vmatpush1.bf16.msra.mxu0 0
      %5939 = vmatprep.subr.bf16.mxu0 0
      %5940 = vmatpush1.bf16.msra.mxu0 0
      %5941 = vmatprep.subr.bf16.mxu0 0
      %5942 = vmatpush1.bf16.msra.mxu0 0
      %5943 = vmatprep.subr.bf16.mxu0 0
      %5944 = vmatpush1.bf16.msra.mxu0 0
      %5945 = vmatprep.mubr.bf16.mxu0 0
      %5946 = vmatmul.mubr.bf16.gmra.mrb[0].mxu0 %v5861
      %v5947 = vpop.f32.mrb[0].mxu0
      %v5948 = vadd.f32 0.0, %v5947
      %v5949 = vpop.f32.mrb[0].mxu0
      %v5950 = vpop.f32.mrb[0].mxu0
      %v5951 = vpop.f32.mrb[0].mxu0
      %5952 = vdwg.mxu0
      %v5953 = vadd.f32 %v5825, %v5907
      %v5954 = vadd.f32 %v5826, %v5909
      %v5955 = vadd.f32 %v5827, %v5948
      %v5956 = vld [vmem:[%s165 + $0x2] sm:$0xff]
      %s5957 = scalar_lea.vmem %s1, 180
      %v5958 = vld [vmem:[%s5957] sm:$0xf]
      %v5960 = vcombine.high %v5956, %v5956
      %v5962 = vunpack.c.l.s4 1983009808
      %v5963 = vunpack.c.0.s8 %v5962
      %v5964 = vlaneseq
      %v5965 = vshrl.u32 %v5964, 7
      %v5966 = vsub.s32 %v5963, %v5965
      %v5967 = vrot.slane %v5956, %v5966
      %v5969 = vunpack.c.l.s4 1983009808
      %v5970 = vunpack.c.0.s8 %v5969
      %v5971 = vlaneseq
      %v5972 = vshrl.u32 %v5971, 7
      %v5973 = vsub.s32 %v5970, %v5972
      %v5974 = vrot.slane %v5960, %v5973
      %v5975 = vcombine.high %v5967, %v5967
      %v5976 = vcombine.high %v5974, %v5974
      %5977 = vrot.lane.b32.xlu0 %v5967, 121
      %v5978 = vpop.permute.xlu0 %5977
      %5979 = vrot.lane.b32.xlu0 %v5975, 121
      %v5980 = vpop.permute.xlu0 %5979
      %5981 = vrot.lane.b32.xlu0 %v5974, 121
      %v5982 = vpop.permute.xlu0 %5981
      %5983 = vrot.lane.b32.xlu0 %v5976, 121
      %v5984 = vpop.permute.xlu0 %5983
      %vm5985 = vcmask 990208
      %v5986 = vsel %vm5985, %v5978, %v5980
      %v5987 = vsel %vm5985, %v5980, %v5982
      %v5988 = vsel %vm5985, %v5982, %v5984
      %v5990 = vsel %vm207, %v5958, 0
      %v5993 = vsel %vm211, %v5986, 0
      %v5996 = vsel %vm211, %v5987, 0
      %v5999 = vsel %vm211, %v5988, 0
      %6001 = vmatprep.subr.bf16.mxu0 %v5996
      %6002 = vmatpush1.bf16.msra.mxu0 %v5993
      %6003 = vmatprep.subr.bf16.mxu0 0
      %6004 = vmatpush1.bf16.msra.mxu0 0
      %6005 = vmatprep.subr.bf16.mxu0 0
      %6006 = vmatpush1.bf16.msra.mxu0 0
      %6007 = vmatprep.subr.bf16.mxu0 0
      %6008 = vmatpush1.bf16.msra.mxu0 0
      %6009 = vmatprep.subr.bf16.mxu0 0
      %6010 = vmatpush1.bf16.msra.mxu0 0
      %6011 = vmatprep.subr.bf16.mxu0 0
      %6012 = vmatpush1.bf16.msra.mxu0 0
      %6013 = vmatprep.subr.bf16.mxu0 0
      %6014 = vmatpush1.bf16.msra.mxu0 0
      %6015 = vmatprep.subr.bf16.mxu0 0
      %6016 = vmatpush1.bf16.msra.mxu0 0
      %6017 = vmatprep.subr.bf16.mxu0 0
      %6018 = vmatpush1.bf16.msra.mxu0 0
      %6019 = vmatprep.subr.bf16.mxu0 0
      %6020 = vmatpush1.bf16.msra.mxu0 0
      %6021 = vmatprep.subr.bf16.mxu0 0
      %6022 = vmatpush1.bf16.msra.mxu0 0
      %6023 = vmatprep.subr.bf16.mxu0 0
      %6024 = vmatpush1.bf16.msra.mxu0 0
      %6025 = vmatprep.subr.bf16.mxu0 0
      %6026 = vmatpush1.bf16.msra.mxu0 0
      %6027 = vmatprep.subr.bf16.mxu0 0
      %6028 = vmatpush1.bf16.msra.mxu0 0
      %6029 = vmatprep.subr.bf16.mxu0 0
      %6030 = vmatpush1.bf16.msra.mxu0 0
      %6031 = vmatprep.subr.bf16.mxu0 0
      %6032 = vmatpush1.bf16.msra.mxu0 0
      %6033 = vmatprep.mubr.bf16.mxu0 0
      %6034 = vmatmul.mubr.bf16.gmra.mrb[0].mxu0 %v5990
      %v6035 = vpop.f32.mrb[0].mxu0
      %v6036 = vadd.f32 0.0, %v6035
      %v6037 = vpop.f32.mrb[0].mxu0
      %v6038 = vadd.f32 0.0, %v6037
      %v6039 = vpop.f32.mrb[0].mxu0
      %v6040 = vpop.f32.mrb[0].mxu0
      %6041 = vdwg.mxu0
      %6042 = vmatprep.subr.bf16.mxu0 0
      %6043 = vmatpush1.bf16.msra.mxu0 %v5999
      %6044 = vmatprep.subr.bf16.mxu0 0
      %6045 = vmatpush1.bf16.msra.mxu0 0
      %6046 = vmatprep.subr.bf16.mxu0 0
      %6047 = vmatpush1.bf16.msra.mxu0 0
      %6048 = vmatprep.subr.bf16.mxu0 0
      %6049 = vmatpush1.bf16.msra.mxu0 0
      %6050 = vmatprep.subr.bf16.mxu0 0
      %6051 = vmatpush1.bf16.msra.mxu0 0
      %6052 = vmatprep.subr.bf16.mxu0 0
      %6053 = vmatpush1.bf16.msra.mxu0 0
      %6054 = vmatprep.subr.bf16.mxu0 0
      %6055 = vmatpush1.bf16.msra.mxu0 0
      %6056 = vmatprep.subr.bf16.mxu0 0
      %6057 = vmatpush1.bf16.msra.mxu0 0
      %6058 = vmatprep.subr.bf16.mxu0 0
      %6059 = vmatpush1.bf16.msra.mxu0 0
      %6060 = vmatprep.subr.bf16.mxu0 0
      %6061 = vmatpush1.bf16.msra.mxu0 0
      %6062 = vmatprep.subr.bf16.mxu0 0
      %6063 = vmatpush1.bf16.msra.mxu0 0
      %6064 = vmatprep.subr.bf16.mxu0 0
      %6065 = vmatpush1.bf16.msra.mxu0 0
      %6066 = vmatprep.subr.bf16.mxu0 0
      %6067 = vmatpush1.bf16.msra.mxu0 0
      %6068 = vmatprep.subr.bf16.mxu0 0
      %6069 = vmatpush1.bf16.msra.mxu0 0
      %6070 = vmatprep.subr.bf16.mxu0 0
      %6071 = vmatpush1.bf16.msra.mxu0 0
      %6072 = vmatprep.subr.bf16.mxu0 0
      %6073 = vmatpush1.bf16.msra.mxu0 0
      %6074 = vmatprep.mubr.bf16.mxu0 0
      %6075 = vmatmul.mubr.bf16.gmra.mrb[0].mxu0 %v5990
      %v6076 = vpop.f32.mrb[0].mxu0
      %v6077 = vadd.f32 0.0, %v6076
      %v6078 = vpop.f32.mrb[0].mxu0
      %v6079 = vpop.f32.mrb[0].mxu0
      %v6080 = vpop.f32.mrb[0].mxu0
      %6081 = vdwg.mxu0
      %v6082 = vadd.f32 %v5953, %v6036
      %v6083 = vadd.f32 %v5954, %v6038
      %v6084 = vadd.f32 %v5955, %v6077
      %v6085 = vld [vmem:[%s165 + $0x2] sm:$0xff]
      %s6086 = scalar_lea.vmem %s1, 184
      %v6087 = vld [vmem:[%s6086] sm:$0xf]
      %v6089 = vcombine.high %v6085, %v6085
      %v6091 = vunpack.c.l.s4 1983009808
      %v6092 = vunpack.c.0.s8 %v6091
      %v6093 = vlaneseq
      %v6094 = vshrl.u32 %v6093, 7
      %v6095 = vsub.s32 %v6092, %v6094
      %v6096 = vrot.slane %v6085, %v6095
      %v6098 = vunpack.c.l.s4 1983009808
      %v6099 = vunpack.c.0.s8 %v6098
      %v6100 = vlaneseq
      %v6101 = vshrl.u32 %v6100, 7
      %v6102 = vsub.s32 %v6099, %v6101
      %v6103 = vrot.slane %v6089, %v6102
      %v6104 = vcombine.high %v6096, %v6096
      %v6105 = vcombine.high %v6103, %v6103
      %6106 = vrot.lane.b32.xlu0 %v6096, 120
      %v6107 = vpop.permute.xlu0 %6106
      %6108 = vrot.lane.b32.xlu0 %v6104, 120
      %v6109 = vpop.permute.xlu0 %6108
      %6110 = vrot.lane.b32.xlu0 %v6103, 120
      %v6111 = vpop.permute.xlu0 %6110
      %6112 = vrot.lane.b32.xlu0 %v6105, 120
      %v6113 = vpop.permute.xlu0 %6112
      %vm6114 = vcmask 982016
      %v6115 = vsel %vm6114, %v6107, %v6109
      %v6116 = vsel %vm6114, %v6109, %v6111
      %v6117 = vsel %vm6114, %v6111, %v6113
      %v6119 = vsel %vm207, %v6087, 0
      %v6122 = vsel %vm211, %v6115, 0
      %v6125 = vsel %vm211, %v6116, 0
      %v6128 = vsel %vm211, %v6117, 0
      %6130 = vmatprep.subr.bf16.mxu0 %v6125
      %6131 = vmatpush1.bf16.msra.mxu0 %v6122
      %6132 = vmatprep.subr.bf16.mxu0 0
      %6133 = vmatpush1.bf16.msra.mxu0 0
      %6134 = vmatprep.subr.bf16.mxu0 0
      %6135 = vmatpush1.bf16.msra.mxu0 0
      %6136 = vmatprep.subr.bf16.mxu0 0
      %6137 = vmatpush1.bf16.msra.mxu0 0
      %6138 = vmatprep.subr.bf16.mxu0 0
      %6139 = vmatpush1.bf16.msra.mxu0 0
      %6140 = vmatprep.subr.bf16.mxu0 0
      %6141 = vmatpush1.bf16.msra.mxu0 0
      %6142 = vmatprep.subr.bf16.mxu0 0
      %6143 = vmatpush1.bf16.msra.mxu0 0
      %6144 = vmatprep.subr.bf16.mxu0 0
      %6145 = vmatpush1.bf16.msra.mxu0 0
      %6146 = vmatprep.subr.bf16.mxu0 0
      %6147 = vmatpush1.bf16.msra.mxu0 0
      %6148 = vmatprep.subr.bf16.mxu0 0
      %6149 = vmatpush1.bf16.msra.mxu0 0
      %6150 = vmatprep.subr.bf16.mxu0 0
      %6151 = vmatpush1.bf16.msra.mxu0 0
      %6152 = vmatprep.subr.bf16.mxu0 0
      %6153 = vmatpush1.bf16.msra.mxu0 0
      %6154 = vmatprep.subr.bf16.mxu0 0
      %6155 = vmatpush1.bf16.msra.mxu0 0
      %6156 = vmatprep.subr.bf16.mxu0 0
      %6157 = vmatpush1.bf16.msra.mxu0 0
      %6158 = vmatprep.subr.bf16.mxu0 0
      %6159 = vmatpush1.bf16.msra.mxu0 0
      %6160 = vmatprep.subr.bf16.mxu0 0
      %6161 = vmatpush1.bf16.msra.mxu0 0
      %6162 = vmatprep.mubr.bf16.mxu0 0
      %6163 = vmatmul.mubr.bf16.gmra.mrb[0].mxu0 %v6119
      %v6164 = vpop.f32.mrb[0].mxu0
      %v6165 = vadd.f32 0.0, %v6164
      %v6166 = vpop.f32.mrb[0].mxu0
      %v6167 = vadd.f32 0.0, %v6166
      %v6168 = vpop.f32.mrb[0].mxu0
      %v6169 = vpop.f32.mrb[0].mxu0
      %6170 = vdwg.mxu0
      %6171 = vmatprep.subr.bf16.mxu0 0
      %6172 = vmatpush1.bf16.msra.mxu0 %v6128
      %6173 = vmatprep.subr.bf16.mxu0 0
      %6174 = vmatpush1.bf16.msra.mxu0 0
      %6175 = vmatprep.subr.bf16.mxu0 0
      %6176 = vmatpush1.bf16.msra.mxu0 0
      %6177 = vmatprep.subr.bf16.mxu0 0
      %6178 = vmatpush1.bf16.msra.mxu0 0
      %6179 = vmatprep.subr.bf16.mxu0 0
      %6180 = vmatpush1.bf16.msra.mxu0 0
      %6181 = vmatprep.subr.bf16.mxu0 0
      %6182 = vmatpush1.bf16.msra.mxu0 0
      %6183 = vmatprep.subr.bf16.mxu0 0
      %6184 = vmatpush1.bf16.msra.mxu0 0
      %6185 = vmatprep.subr.bf16.mxu0 0
      %6186 = vmatpush1.bf16.msra.mxu0 0
      %6187 = vmatprep.subr.bf16.mxu0 0
      %6188 = vmatpush1.bf16.msra.mxu0 0
      %6189 = vmatprep.subr.bf16.mxu0 0
      %6190 = vmatpush1.bf16.msra.mxu0 0
      %6191 = vmatprep.subr.bf16.mxu0 0
      %6192 = vmatpush1.bf16.msra.mxu0 0
      %6193 = vmatprep.subr.bf16.mxu0 0
      %6194 = vmatpush1.bf16.msra.mxu0 0
      %6195 = vmatprep.subr.bf16.mxu0 0
      %6196 = vmatpush1.bf16.msra.mxu0 0
      %6197 = vmatprep.subr.bf16.mxu0 0
      %6198 = vmatpush1.bf16.msra.mxu0 0
      %6199 = vmatprep.subr.bf16.mxu0 0
      %6200 = vmatpush1.bf16.msra.mxu0 0
      %6201 = vmatprep.subr.bf16.mxu0 0
      %6202 = vmatpush1.bf16.msra.mxu0 0
      %6203 = vmatprep.mubr.bf16.mxu0 0
      %6204 = vmatmul.mubr.bf16.gmra.mrb[0].mxu0 %v6119
      %v6205 = vpop.f32.mrb[0].mxu0
      %v6206 = vadd.f32 0.0, %v6205
      %v6207 = vpop.f32.mrb[0].mxu0
      %v6208 = vpop.f32.mrb[0].mxu0
      %v6209 = vpop.f32.mrb[0].mxu0
      %6210 = vdwg.mxu0
      %v6211 = vadd.f32 %v6082, %v6165
      %v6212 = vadd.f32 %v6083, %v6167
      %v6213 = vadd.f32 %v6084, %v6206
      %v6214 = vld [vmem:[%s165 + $0x2] sm:$0xff]
      %s6215 = scalar_lea.vmem %s1, 188
      %v6216 = vld [vmem:[%s6215] sm:$0xf]
      %v6218 = vcombine.high %v6214, %v6214
      %v6220 = vunpack.c.l.s4 1983009808
      %v6221 = vunpack.c.0.s8 %v6220
      %v6222 = vlaneseq
      %v6223 = vshrl.u32 %v6222, 7
      %v6224 = vsub.s32 %v6221, %v6223
      %v6225 = vrot.slane %v6214, %v6224
      %v6227 = vunpack.c.l.s4 1983009808
      %v6228 = vunpack.c.0.s8 %v6227
      %v6229 = vlaneseq
      %v6230 = vshrl.u32 %v6229, 7
      %v6231 = vsub.s32 %v6228, %v6230
      %v6232 = vrot.slane %v6218, %v6231
      %v6233 = vcombine.high %v6225, %v6225
      %v6234 = vcombine.high %v6232, %v6232
      %6235 = vrot.lane.b32.xlu0 %v6225, 119
      %v6236 = vpop.permute.xlu0 %6235
      %6237 = vrot.lane.b32.xlu0 %v6233, 119
      %v6238 = vpop.permute.xlu0 %6237
      %6239 = vrot.lane.b32.xlu0 %v6232, 119
      %v6240 = vpop.permute.xlu0 %6239
      %6241 = vrot.lane.b32.xlu0 %v6234, 119
      %v6242 = vpop.permute.xlu0 %6241
      %vm6243 = vcmask 973824
      %v6244 = vsel %vm6243, %v6236, %v6238
      %v6245 = vsel %vm6243, %v6238, %v6240
      %v6246 = vsel %vm6243, %v6240, %v6242
      %v6248 = vsel %vm207, %v6216, 0
      %v6251 = vsel %vm211, %v6244, 0
      %v6254 = vsel %vm211, %v6245, 0
      %v6257 = vsel %vm211, %v6246, 0
      %6259 = vmatprep.subr.bf16.mxu0 %v6254
      %6260 = vmatpush1.bf16.msra.mxu0 %v6251
      %6261 = vmatprep.subr.bf16.mxu0 0
      %6262 = vmatpush1.bf16.msra.mxu0 0
      %6263 = vmatprep.subr.bf16.mxu0 0
      %6264 = vmatpush1.bf16.msra.mxu0 0
      %6265 = vmatprep.subr.bf16.mxu0 0
      %6266 = vmatpush1.bf16.msra.mxu0 0
      %6267 = vmatprep.subr.bf16.mxu0 0
      %6268 = vmatpush1.bf16.msra.mxu0 0
      %6269 = vmatprep.subr.bf16.mxu0 0
      %6270 = vmatpush1.bf16.msra.mxu0 0
      %6271 = vmatprep.subr.bf16.mxu0 0
      %6272 = vmatpush1.bf16.msra.mxu0 0
      %6273 = vmatprep.subr.bf16.mxu0 0
      %6274 = vmatpush1.bf16.msra.mxu0 0
      %6275 = vmatprep.subr.bf16.mxu0 0
      %6276 = vmatpush1.bf16.msra.mxu0 0
      %6277 = vmatprep.subr.bf16.mxu0 0
      %6278 = vmatpush1.bf16.msra.mxu0 0
      %6279 = vmatprep.subr.bf16.mxu0 0
      %6280 = vmatpush1.bf16.msra.mxu0 0
      %6281 = vmatprep.subr.bf16.mxu0 0
      %6282 = vmatpush1.bf16.msra.mxu0 0
      %6283 = vmatprep.subr.bf16.mxu0 0
      %6284 = vmatpush1.bf16.msra.mxu0 0
      %6285 = vmatprep.subr.bf16.mxu0 0
      %6286 = vmatpush1.bf16.msra.mxu0 0
      %6287 = vmatprep.subr.bf16.mxu0 0
      %6288 = vmatpush1.bf16.msra.mxu0 0
      %6289 = vmatprep.subr.bf16.mxu0 0
      %6290 = vmatpush1.bf16.msra.mxu0 0
      %6291 = vmatprep.mubr.bf16.mxu0 0
      %6292 = vmatmul.mubr.bf16.gmra.mrb[0].mxu0 %v6248
      %v6293 = vpop.f32.mrb[0].mxu0
      %v6294 = vadd.f32 0.0, %v6293
      %v6295 = vpop.f32.mrb[0].mxu0
      %v6296 = vadd.f32 0.0, %v6295
      %v6297 = vpop.f32.mrb[0].mxu0
      %v6298 = vpop.f32.mrb[0].mxu0
      %6299 = vdwg.mxu0
      %6300 = vmatprep.subr.bf16.mxu0 0
      %6301 = vmatpush1.bf16.msra.mxu0 %v6257
      %6302 = vmatprep.subr.bf16.mxu0 0
      %6303 = vmatpush1.bf16.msra.mxu0 0
      %6304 = vmatprep.subr.bf16.mxu0 0
      %6305 = vmatpush1.bf16.msra.mxu0 0
      %6306 = vmatprep.subr.bf16.mxu0 0
      %6307 = vmatpush1.bf16.msra.mxu0 0
      %6308 = vmatprep.subr.bf16.mxu0 0
      %6309 = vmatpush1.bf16.msra.mxu0 0
      %6310 = vmatprep.subr.bf16.mxu0 0
      %6311 = vmatpush1.bf16.msra.mxu0 0
      %6312 = vmatprep.subr.bf16.mxu0 0
      %6313 = vmatpush1.bf16.msra.mxu0 0
      %6314 = vmatprep.subr.bf16.mxu0 0
      %6315 = vmatpush1.bf16.msra.mxu0 0
      %6316 = vmatprep.subr.bf16.mxu0 0
      %6317 = vmatpush1.bf16.msra.mxu0 0
      %6318 = vmatprep.subr.bf16.mxu0 0
      %6319 = vmatpush1.bf16.msra.mxu0 0
      %6320 = vmatprep.subr.bf16.mxu0 0
      %6321 = vmatpush1.bf16.msra.mxu0 0
      %6322 = vmatprep.subr.bf16.mxu0 0
      %6323 = vmatpush1.bf16.msra.mxu0 0
      %6324 = vmatprep.subr.bf16.mxu0 0
      %6325 = vmatpush1.bf16.msra.mxu0 0
      %6326 = vmatprep.subr.bf16.mxu0 0
      %6327 = vmatpush1.bf16.msra.mxu0 0
      %6328 = vmatprep.subr.bf16.mxu0 0
      %6329 = vmatpush1.bf16.msra.mxu0 0
      %6330 = vmatprep.subr.bf16.mxu0 0
      %6331 = vmatpush1.bf16.msra.mxu0 0
      %6332 = vmatprep.mubr.bf16.mxu0 0
      %6333 = vmatmul.mubr.bf16.gmra.mrb[0].mxu0 %v6248
      %v6334 = vpop.f32.mrb[0].mxu0
      %v6335 = vadd.f32 0.0, %v6334
      %v6336 = vpop.f32.mrb[0].mxu0
      %v6337 = vpop.f32.mrb[0].mxu0
      %v6338 = vpop.f32.mrb[0].mxu0
      %6339 = vdwg.mxu0
      %v6340 = vadd.f32 %v6211, %v6294
      %v6341 = vadd.f32 %v6212, %v6296
      %v6342 = vadd.f32 %v6213, %v6335
      %v6343 = vld [vmem:[%s165 + $0x2] sm:$0xff]
      %s6344 = scalar_lea.vmem %s1, 192
      %v6345 = vld [vmem:[%s6344] sm:$0xf]
      %v6347 = vcombine.high %v6343, %v6343
      %v6349 = vunpack.c.l.s4 1983009808
      %v6350 = vunpack.c.0.s8 %v6349
      %v6351 = vlaneseq
      %v6352 = vshrl.u32 %v6351, 7
      %v6353 = vsub.s32 %v6350, %v6352
      %v6354 = vrot.slane %v6343, %v6353
      %v6356 = vunpack.c.l.s4 1983009808
      %v6357 = vunpack.c.0.s8 %v6356
      %v6358 = vlaneseq
      %v6359 = vshrl.u32 %v6358, 7
      %v6360 = vsub.s32 %v6357, %v6359
      %v6361 = vrot.slane %v6347, %v6360
      %v6362 = vcombine.high %v6354, %v6354
      %v6363 = vcombine.high %v6361, %v6361
      %6364 = vrot.lane.b32.xlu0 %v6354, 118
      %v6365 = vpop.permute.xlu0 %6364
      %6366 = vrot.lane.b32.xlu0 %v6362, 118
      %v6367 = vpop.permute.xlu0 %6366
      %6368 = vrot.lane.b32.xlu0 %v6361, 118
      %v6369 = vpop.permute.xlu0 %6368
      %6370 = vrot.lane.b32.xlu0 %v6363, 118
      %v6371 = vpop.permute.xlu0 %6370
      %vm6372 = vcmask 965632
      %v6373 = vsel %vm6372, %v6365, %v6367
      %v6374 = vsel %vm6372, %v6367, %v6369
      %v6375 = vsel %vm6372, %v6369, %v6371
      %v6377 = vsel %vm207, %v6345, 0
      %v6380 = vsel %vm211, %v6373, 0
      %v6383 = vsel %vm211, %v6374, 0
      %v6386 = vsel %vm211, %v6375, 0
      %6388 = vmatprep.subr.bf16.mxu0 %v6383
      %6389 = vmatpush1.bf16.msra.mxu0 %v6380
      %6390 = vmatprep.subr.bf16.mxu0 0
      %6391 = vmatpush1.bf16.msra.mxu0 0
      %6392 = vmatprep.subr.bf16.mxu0 0
      %6393 = vmatpush1.bf16.msra.mxu0 0
      %6394 = vmatprep.subr.bf16.mxu0 0
      %6395 = vmatpush1.bf16.msra.mxu0 0
      %6396 = vmatprep.subr.bf16.mxu0 0
      %6397 = vmatpush1.bf16.msra.mxu0 0
      %6398 = vmatprep.subr.bf16.mxu0 0
      %6399 = vmatpush1.bf16.msra.mxu0 0
      %6400 = vmatprep.subr.bf16.mxu0 0
      %6401 = vmatpush1.bf16.msra.mxu0 0
      %6402 = vmatprep.subr.bf16.mxu0 0
      %6403 = vmatpush1.bf16.msra.mxu0 0
      %6404 = vmatprep.subr.bf16.mxu0 0
      %6405 = vmatpush1.bf16.msra.mxu0 0
      %6406 = vmatprep.subr.bf16.mxu0 0
      %6407 = vmatpush1.bf16.msra.mxu0 0
      %6408 = vmatprep.subr.bf16.mxu0 0
      %6409 = vmatpush1.bf16.msra.mxu0 0
      %6410 = vmatprep.subr.bf16.mxu0 0
      %6411 = vmatpush1.bf16.msra.mxu0 0
      %6412 = vmatprep.subr.bf16.mxu0 0
      %6413 = vmatpush1.bf16.msra.mxu0 0
      %6414 = vmatprep.subr.bf16.mxu0 0
      %6415 = vmatpush1.bf16.msra.mxu0 0
      %6416 = vmatprep.subr.bf16.mxu0 0
      %6417 = vmatpush1.bf16.msra.mxu0 0
      %6418 = vmatprep.subr.bf16.mxu0 0
      %6419 = vmatpush1.bf16.msra.mxu0 0
      %6420 = vmatprep.mubr.bf16.mxu0 0
      %6421 = vmatmul.mubr.bf16.gmra.mrb[0].mxu0 %v6377
      %v6422 = vpop.f32.mrb[0].mxu0
      %v6423 = vadd.f32 0.0, %v6422
      %v6424 = vpop.f32.mrb[0].mxu0
      %v6425 = vadd.f32 0.0, %v6424
      %v6426 = vpop.f32.mrb[0].mxu0
      %v6427 = vpop.f32.mrb[0].mxu0
      %6428 = vdwg.mxu0
      %6429 = vmatprep.subr.bf16.mxu0 0
      %6430 = vmatpush1.bf16.msra.mxu0 %v6386
      %6431 = vmatprep.subr.bf16.mxu0 0
      %6432 = vmatpush1.bf16.msra.mxu0 0
      %6433 = vmatprep.subr.bf16.mxu0 0
      %6434 = vmatpush1.bf16.msra.mxu0 0
      %6435 = vmatprep.subr.bf16.mxu0 0
      %6436 = vmatpush1.bf16.msra.mxu0 0
      %6437 = vmatprep.subr.bf16.mxu0 0
      %6438 = vmatpush1.bf16.msra.mxu0 0
      %6439 = vmatprep.subr.bf16.mxu0 0
      %6440 = vmatpush1.bf16.msra.mxu0 0
      %6441 = vmatprep.subr.bf16.mxu0 0
      %6442 = vmatpush1.bf16.msra.mxu0 0
      %6443 = vmatprep.subr.bf16.mxu0 0
      %6444 = vmatpush1.bf16.msra.mxu0 0
      %6445 = vmatprep.subr.bf16.mxu0 0
      %6446 = vmatpush1.bf16.msra.mxu0 0
      %6447 = vmatprep.subr.bf16.mxu0 0
      %6448 = vmatpush1.bf16.msra.mxu0 0
      %6449 = vmatprep.subr.bf16.mxu0 0
      %6450 = vmatpush1.bf16.msra.mxu0 0
      %6451 = vmatprep.subr.bf16.mxu0 0
      %6452 = vmatpush1.bf16.msra.mxu0 0
      %6453 = vmatprep.subr.bf16.mxu0 0
      %6454 = vmatpush1.bf16.msra.mxu0 0
      %6455 = vmatprep.subr.bf16.mxu0 0
      %6456 = vmatpush1.bf16.msra.mxu0 0
      %6457 = vmatprep.subr.bf16.mxu0 0
      %6458 = vmatpush1.bf16.msra.mxu0 0
      %6459 = vmatprep.subr.bf16.mxu0 0
      %6460 = vmatpush1.bf16.msra.mxu0 0
      %6461 = vmatprep.mubr.bf16.mxu0 0
      %6462 = vmatmul.mubr.bf16.gmra.mrb[0].mxu0 %v6377
      %v6463 = vpop.f32.mrb[0].mxu0
      %v6464 = vadd.f32 0.0, %v6463
      %v6465 = vpop.f32.mrb[0].mxu0
      %v6466 = vpop.f32.mrb[0].mxu0
      %v6467 = vpop.f32.mrb[0].mxu0
      %6468 = vdwg.mxu0
      %v6469 = vadd.f32 %v6340, %v6423
      %v6470 = vadd.f32 %v6341, %v6425
      %v6471 = vadd.f32 %v6342, %v6464
      %v6472 = vld [vmem:[%s2] sm:$0xff]
      %6474 = vset.pattern.permute.xlu0 0
      %6475 = vperm.xlu0 %6474, %v6472
      %v6476 = vpop.permute.xlu0 %6475
      %v6478 = vadd.f32 %v6469, %v6476
      %v6479 = vadd.f32 %v6470, %v6476
      %v6480 = vadd.f32 %v6471, %v6476
      %v6481 = vmax.f32 %v6478, 0.0
      %v6482 = vmax.f32 %v6479, 0.0
      %v6483 = vmax.f32 %v6480, 0.0
      %6484 = vst [vmem:[%s170] sm:$0xff] %v6481
      %6485 = vst [vmem:[%s170 + $0x8] sm:$0xff] %v6482
      %6486 = vst [vmem:[%s170 + $0x10] sm:$0xff] %v6483
      %p6487 = scmp.lt.s32.totalorder %s14, 1
      %s6488 = scalar_select %p6487, %s14, 1
      %s6489 = smul.addr %s6488, 3
      %s6490 = smul.addr %s6489, 8
      %s6491 = scalar_lea.vmem %s3, %s6490
      // Predicated region
      $region33: #{conv2d_block_forward.1} parent=31 // pred_check
        %p6492 = pneg %p100
      $region34: #{conv2d_block_forward.1} parent=31 // pred_check_branch
        %6494 = sbr.rel (%p6492) target = $region36
      $region35: #{conv2d_block_forward.1} parent=31 // pred_region
        _
      $region36: #{conv2d_block_forward.1} parent=31 // pred_fallthru
        _
    $region32: #{conv2d_block_forward.1} parent=5 // pred_fallthru
      _
    %p6495 = scmp.le.s32.totalorder 2, %s9
    // Predicated region
    $region37: #{conv2d_block_forward.1} parent=5 // pred_check
      %p6496 = pneg %p6495
    $region38: #{conv2d_block_forward.1} parent=5 // pred_check_branch
      %6498 = sbr.rel (%p6496) target = $region40
    $region39: #{conv2d_block_forward.1} parent=5 // pred_region
      %s6499 = ssub.s32 %s9, 2
      // Predicated region
      $region41: #{conv2d_block_forward.1} parent=39 // pred_check
        %p6500 = pneg %p106
      $region42: #{conv2d_block_forward.1} parent=39 // pred_check_branch
        %6502 = sbr.rel (%p6500) target = $region44
      $region43: #{conv2d_block_forward.1} parent=39 // pred_region
        %p6503 = scmp.lt.s32.totalorder %s15, 1
        %s6504 = scalar_select %p6503, %s15, 1
        %s6505 = smul.addr %s6504, 3
        %s6506 = smul.addr %s6505, 8
        %s6507 = scalar_lea.vmem %s3, %s6506
      $region44: #{conv2d_block_forward.1} parent=39 // pred_fallthru
        _
    $region40: #{conv2d_block_forward.1} parent=5 // pred_fallthru
      _
  $region6: #{conv2d_block_forward.1} parent=0 // loop_footer
    %s13 = sadd.s32 1, %s9
  $region7: #{conv2d_block_forward.1} parent=0 // loop_footer_branch
    %8 = sbr.rel target = $region3
  $region8: #{conv2d_block_forward.1} parent=0 // loop_exit
    _

</llo_original>
